<compile_context>
chip_gen: v6e
topology: v6e:2x2x1
jax: 0.10.0
libtpu: 0.0.40
codegen_flags: <defaults>
</compile_context>

<pallas_src>
import jax
import jax.numpy as jnp
from jax.experimental import pallas as pl
from jax.experimental.pallas import tpu as pltpu

HIDDEN = 1000
LANE = 128


def _round_up(x, m):
    return (x + m - 1) // m * m


# ---------------------------------------------------------------------------
# Fused Pallas kernel: the whole MLP forward in one body.
# ---------------------------------------------------------------------------
def _mlp_fused_kernel(x_ref, w_in_ref, b_in_ref, w_h_ref, b_h_ref,
                      w_out_ref, b_out_ref, y_ref, h2_ref):
    # x_ref:   (M, Kp)    f32
    # w_*_ref: bf16 weights, (Kp, Hp), (Hp, Hp), (Hp, Np)
    # b_*_ref: f32 biases,  (1, Hp), (1, Hp), (1, Np)
    # y_ref:   (M, Np) f32     h2_ref: (M, Hp) f32
    x = x_ref[...].astype(jnp.bfloat16)

    h1 = jnp.dot(x, w_in_ref[...], preferred_element_type=jnp.float32)
    h1 = jnp.maximum(h1 + b_in_ref[...], 0.0)

    h2 = jnp.dot(h1.astype(jnp.bfloat16), w_h_ref[...],
                 preferred_element_type=jnp.float32)
    h2 = jnp.maximum(h2 + b_h_ref[...], 0.0)
    h2_ref[...] = h2.astype(h2_ref.dtype)

    # h_3 = relu(hidden_fc(h_2)) in the PyTorch forward is dead code (does not
    # affect either returned value), so it is omitted.
    y = jnp.dot(h2.astype(jnp.bfloat16), w_out_ref[...],
                preferred_element_type=jnp.float32)
    y_ref[...] = (y + b_out_ref[...]).astype(y_ref.dtype)


# ---------------------------------------------------------------------------
# Parameters (logical, PyTorch-equivalent) + padded/bf16 kernel params.
# ---------------------------------------------------------------------------
def init_mlp_params(key, input_dim, output_dim, dtype=jnp.float32):
    """Deterministic synthetic init (uniform ~ PyTorch default scale)."""
    def lin(k, fan_in, fan_out):
        k_w, k_b = jax.random.split(k)
        bound = 1.0 / jnp.sqrt(fan_in)
        # stored as (in, out): transposed vs. PyTorch's (out, in)
        w = jax.random.uniform(k_w, (fan_in, fan_out), dtype, -bound, bound)
        b = jax.random.uniform(k_b, (1, fan_out), dtype, -bound, bound)
        return w, b

    k1, k2, k3, k4 = jax.random.split(key, 4)
    return {
        "input_fc": lin(k1, input_dim, HIDDEN),
        "hidden_fc": lin(k2, HIDDEN, HIDDEN),
        "hidden_fc2": lin(k3, HIDDEN, HIDDEN),  # in __init__, unused in forward
        "output_fc": lin(k4, HIDDEN, output_dim),
    }


def _pad2(a, rows, cols, dtype):
    out = jnp.zeros((rows, cols), dtype)
    return out.at[: a.shape[0], : a.shape[1]].set(a.astype(dtype))


def prepare_params(params):
    """Zero-pad to multiples of 128 lanes and cast weights to bf16 (done once)."""
    w_in, b_in = params["input_fc"]
    w_h, b_h = params["hidden_fc"]
    w_out, b_out = params["output_fc"]
    in_dim, hid = w_in.shape
    out_dim = w_out.shape[1]
    in_p, hid_p, out_p = (_round_up(in_dim, LANE), _round_up(hid, LANE),
                          _round_up(out_dim, LANE))
    return {
        "w_in": _pad2(w_in, in_p, hid_p, jnp.bfloat16),
        "b_in": _pad2(b_in, 1, hid_p, jnp.float32),
        "w_h": _pad2(w_h, hid_p, hid_p, jnp.bfloat16),
        "b_h": _pad2(b_h, 1, hid_p, jnp.float32),
        "w_out": _pad2(w_out, hid_p, out_p, jnp.bfloat16),
        "b_out": _pad2(b_out, 1, out_p, jnp.float32),
        "dims": (in_dim, hid, out_dim),
    }


# ---------------------------------------------------------------------------
# Forward (mirrors MLP.forward): returns (y_pred, h_2)
# ---------------------------------------------------------------------------
def mlp_forward(padded, x):
    in_dim, hid, out_dim = padded["dims"]
    batch = x.shape[0]
    xf = x.reshape(batch, -1).astype(jnp.float32)

    in_p = padded["w_in"].shape[0]
    hid_p = padded["w_h"].shape[0]
    out_p = padded["w_out"].shape[1]
    if xf.shape[1] != in_p:
        xf = jnp.pad(xf, ((0, 0), (0, in_p - xf.shape[1])))

    M = batch
    full = lambda shape: pl.BlockSpec(shape, lambda: (0, 0))

    y_pad, h2_pad = pl.pallas_call(
        _mlp_fused_kernel,
        out_shape=(
            jax.ShapeDtypeStruct((M, out_p), jnp.float32),
            jax.ShapeDtypeStruct((M, hid_p), jnp.float32),
        ),
        in_specs=[
            full((M, in_p)),
            full((in_p, hid_p)), full((1, hid_p)),
            full((hid_p, hid_p)), full((1, hid_p)),
            full((hid_p, out_p)), full((1, out_p)),
        ],
        out_specs=(full((M, out_p)), full((M, hid_p))),
        compiler_params=pltpu.CompilerParams(vmem_limit_bytes=32 << 20),
    )(xf, padded["w_in"], padded["b_in"], padded["w_h"], padded["b_h"],
      padded["w_out"], padded["b_out"])

    # Slice padded results back to the logical (PyTorch-contract) shapes.
    return y_pad[:, :out_dim], h2_pad[:, :hid]


# ---------------------------------------------------------------------------
if __name__ == "__main__":
    key = jax.random.PRNGKey(0)
    k_x, k_p = jax.random.split(key)

    # Small example consistent with the module: x is flattened per-sample,
    # so any trailing shape works; use (batch=2, 4, 16, 16) -> input_dim=1024.
    batch, C, H, W = 2, 4, 16, 16
    input_dim = C * H * W
    output_dim = 10

    x = jax.random.normal(k_x, (batch, C, H, W), dtype=jnp.float32)
    params = init_mlp_params(k_p, input_dim, output_dim)
    padded = prepare_params(params)

    y_pred, h_2 = mlp_forward(padded, x)
    jax.block_until_ready((y_pred, h_2))

    # Plain-JAX reference that mimics the kernel's bf16-input / f32-accumulate
    # numerics (weights & activations rounded to bf16 before each matmul).
    def bf16_round(a):
        return a.astype(jnp.bfloat16).astype(jnp.float32)

    xf = x.reshape(batch, -1)
    w_in_r = bf16_round(params["input_fc"][0])
    w_h_r = bf16_round(params["hidden_fc"][0])
    w_out_r = bf16_round(params["output_fc"][0])
    h1_ref = jnp.maximum(bf16_round(xf) @ w_in_r + params["input_fc"][1], 0.0)
    h2_ref = jnp.maximum(bf16_round(h1_ref) @ w_h_r + params["hidden_fc"][1], 0.0)
    y_ref = bf16_round(h2_ref) @ w_out_r + params["output_fc"][1]

    assert y_pred.shape == (batch, output_dim)
    assert h_2.shape == (batch, HIDDEN)
    assert jnp.allclose(y_pred, y_ref, atol=1e-2, rtol=1e-2)
    assert jnp.allclose(h_2, h2_ref, atol=1e-2, rtol=1e-2)

    print("KERNEL_OK")
</pallas_src>

<mosaic_0001>
module attributes {stable_mosaic.version = 11 : i64} {
  func.func @_mlp_fused_kernel(%arg0: memref<2x1024xf32, #tpu.memory_space<vmem>>, %arg1: memref<1024x1024xbf16, #tpu.memory_space<vmem>>, %arg2: memref<1x1024xf32, #tpu.memory_space<vmem>>, %arg3: memref<1024x1024xbf16, #tpu.memory_space<vmem>>, %arg4: memref<1x1024xf32, #tpu.memory_space<vmem>>, %arg5: memref<1024x128xbf16, #tpu.memory_space<vmem>>, %arg6: memref<1x128xf32, #tpu.memory_space<vmem>>, %arg7: memref<2x128xf32, #tpu.memory_space<vmem>>, %arg8: memref<2x1024xf32, #tpu.memory_space<vmem>>) attributes {dimension_semantics = [], scalar_prefetch = 0 : i64, scratch_operands = 0 : i64, tpu.core_type = #tpu.core_type<tc>} {
    %c0 = arith.constant 0 : index
    %c0_0 = arith.constant 0 : index
    %0 = vector.load %arg0[%c0, %c0_0] : memref<2x1024xf32, #tpu.memory_space<vmem>>, vector<2x1024xf32>
    %1 = arith.truncf %0 : vector<2x1024xf32> to vector<2x1024xbf16>
    %c0_1 = arith.constant 0 : index
    %c0_2 = arith.constant 0 : index
    %2 = vector.load %arg1[%c0_1, %c0_2] : memref<1024x1024xbf16, #tpu.memory_space<vmem>>, vector<1024x1024xbf16>
    %cst = arith.constant dense<0.000000e+00> : vector<2x1024xf32>
    %3 = tpu.matmul %1, %2, %cst {dimension_numbers = #tpu.dot_dimension_numbers<[1], [0], [0], [1], [0, 0, 1, 1], [], []>} : vector<2x1024xbf16>, vector<1024x1024xbf16>, vector<2x1024xf32> -> vector<2x1024xf32>
    %c0_3 = arith.constant 0 : index
    %c0_4 = arith.constant 0 : index
    %4 = vector.load %arg2[%c0_3, %c0_4] : memref<1x1024xf32, #tpu.memory_space<vmem>>, vector<1x1024xf32>
    %5 = vector.broadcast %4 : vector<1x1024xf32> to vector<2x1024xf32>
    %6 = arith.addf %3, %5 : vector<2x1024xf32>
    %cst_5 = arith.constant 0.000000e+00 : f32
    %7 = vector.broadcast %cst_5 : f32 to vector<2x1024xf32>
    %8 = arith.maximumf %6, %7 : vector<2x1024xf32>
    %9 = arith.truncf %8 : vector<2x1024xf32> to vector<2x1024xbf16>
    %c0_6 = arith.constant 0 : index
    %c0_7 = arith.constant 0 : index
    %10 = vector.load %arg3[%c0_6, %c0_7] : memref<1024x1024xbf16, #tpu.memory_space<vmem>>, vector<1024x1024xbf16>
    %cst_8 = arith.constant dense<0.000000e+00> : vector<2x1024xf32>
    %11 = tpu.matmul %9, %10, %cst_8 {dimension_numbers = #tpu.dot_dimension_numbers<[1], [0], [0], [1], [0, 0, 1, 1], [], []>} : vector<2x1024xbf16>, vector<1024x1024xbf16>, vector<2x1024xf32> -> vector<2x1024xf32>
    %c0_9 = arith.constant 0 : index
    %c0_10 = arith.constant 0 : index
    %12 = vector.load %arg4[%c0_9, %c0_10] : memref<1x1024xf32, #tpu.memory_space<vmem>>, vector<1x1024xf32>
    %13 = vector.broadcast %12 : vector<1x1024xf32> to vector<2x1024xf32>
    %14 = arith.addf %11, %13 : vector<2x1024xf32>
    %cst_11 = arith.constant 0.000000e+00 : f32
    %15 = vector.broadcast %cst_11 : f32 to vector<2x1024xf32>
    %16 = arith.maximumf %14, %15 : vector<2x1024xf32>
    %c0_12 = arith.constant 0 : index
    %c0_13 = arith.constant 0 : index
    %17 = vector.load %arg8[%c0_12, %c0_13] : memref<2x1024xf32, #tpu.memory_space<vmem>>, vector<2x1024xf32>
    tpu.vector_store %arg8[%c0_12, %c0_13], %16 {strides = array<i32>} : memref<2x1024xf32, #tpu.memory_space<vmem>>, vector<2x1024xf32>,
    %18 = arith.truncf %16 : vector<2x1024xf32> to vector<2x1024xbf16>
    %c0_14 = arith.constant 0 : index
    %c0_15 = arith.constant 0 : index
    %19 = vector.load %arg5[%c0_14, %c0_15] : memref<1024x128xbf16, #tpu.memory_space<vmem>>, vector<1024x128xbf16>
    %cst_16 = arith.constant dense<0.000000e+00> : vector<2x128xf32>
    %20 = tpu.matmul %18, %19, %cst_16 {dimension_numbers = #tpu.dot_dimension_numbers<[1], [0], [0], [1], [0, 0, 1, 1], [], []>} : vector<2x1024xbf16>, vector<1024x128xbf16>, vector<2x128xf32> -> vector<2x128xf32>
    %c0_17 = arith.constant 0 : index
    %c0_18 = arith.constant 0 : index
    %21 = vector.load %arg6[%c0_17, %c0_18] : memref<1x128xf32, #tpu.memory_space<vmem>>, vector<1x128xf32>
    %22 = vector.broadcast %21 : vector<1x128xf32> to vector<2x128xf32>
    %23 = arith.addf %20, %22 : vector<2x128xf32>
    %c0_19 = arith.constant 0 : index
    %c0_20 = arith.constant 0 : index
    %24 = vector.load %arg7[%c0_19, %c0_20] : memref<2x128xf32, #tpu.memory_space<vmem>>, vector<2x128xf32>
    tpu.vector_store %arg7[%c0_19, %c0_20], %23 {strides = array<i32>} : memref<2x128xf32, #tpu.memory_space<vmem>>, vector<2x128xf32>,
    return
  }
}

</mosaic_0001>

<llo_original>
// kernel: tpu_custom_call.1
$region0: #{tpu_custom_call.1}
  #allocation0 [shape = 'u32[]', space=smem, size = 0x4, offset = 0x4, fixed_abs, tag = 'smem constant byte address 0x4 - core index']
  #allocation1 [shape = 'u32[144,128]{1,0:T(1,128)}', space=vmem, size = 0x12000, scoped, tag = 'internal scratch']
  %s0 = inlined_call_operand.hbm [shape: f32[2,1024], index: 0, kind: input, shape index: {}]
  %s1 = inlined_call_operand.hbm [shape: bf16[1024,1024], index: 1, kind: input, shape index: {}]
  %s2 = inlined_call_operand.hbm [shape: f32[1,1024], index: 2, kind: input, shape index: {}]
  %s3 = inlined_call_operand.hbm [shape: bf16[1024,1024], index: 3, kind: input, shape index: {}]
  %s4 = inlined_call_operand.hbm [shape: f32[1,1024], index: 4, kind: input, shape index: {}]
  %s5 = inlined_call_operand.hbm [shape: bf16[1024,128], index: 5, kind: input, shape index: {}]
  %s6 = inlined_call_operand.hbm [shape: f32[1,128], index: 6, kind: input, shape index: {}]
  %s7 = inlined_call_operand.hbm [shape: f32[2,128], index: 7, kind: output, shape index: {0}]
  %s8 = inlined_call_operand.hbm [shape: f32[2,1024], index: 8, kind: output, shape index: {1}]
  %9 = xla_tuple %s7, %s8
  %s10 = sld [smem:[#allocation0]]
  $region74: #{tpu_custom_call.1} parent=0
    _
  %s12 = ssub.s32 1, %s10
  %s13 = scalar_select 0, %s12, %s10
  $region1: #{tpu_custom_call.1} parent=0
    #allocation2 [shape = 'u8[8192]{0}', space=vmem, size = 0x2000, scoped, tag = 'input window, operand 0, single buffered']
    #allocation3 [shape = 's32[1]{0}', space=sflag, size = 0x4, scoped, tag = 'scoped memory for tpu_custom_call.1']
    #allocation4 [shape = 's32[1]{0}', space=sflag, size = 0x4, scoped, tag = 'scoped memory for tpu_custom_call.1']
    #allocation5 [shape = 'u8[2097152]{0}', space=vmem, size = 0x200000, scoped, tag = 'input window, operand 1, single buffered']
    #allocation6 [shape = 's32[1]{0}', space=sflag, size = 0x4, scoped, tag = 'scoped memory for tpu_custom_call.1']
    #allocation7 [shape = 'u8[4096]{0}', space=vmem, size = 0x1000, scoped, tag = 'input window, operand 2, single buffered']
    #allocation8 [shape = 'u8[2097152]{0}', space=vmem, size = 0x200000, scoped, tag = 'input window, operand 3, single buffered']
    #allocation9 [shape = 's32[1]{0}', space=sflag, size = 0x4, scoped, tag = 'scoped memory for tpu_custom_call.1']
    #allocation10 [shape = 'u8[4096]{0}', space=vmem, size = 0x1000, scoped, tag = 'input window, operand 4, single buffered']
    #allocation11 [shape = 'u8[262144]{0}', space=vmem, size = 0x40000, scoped, tag = 'input window, operand 5, single buffered']
    #allocation12 [shape = 's32[1]{0}', space=sflag, size = 0x4, scoped, tag = 'scoped memory for tpu_custom_call.1']
    #allocation13 [shape = 'u8[512]{0}', space=vmem, size = 0x400, scoped, tag = 'input window, operand 6, single buffered']
    #allocation14 [shape = 'u8[1024]{0}', space=vmem, size = 0x400, scoped, tag = 'output window, operand 0, single buffered']
    #allocation15 [shape = 'u8[8192]{0}', space=vmem, size = 0x2000, scoped, tag = 'output window, operand 1, single buffered']
    #allocation16 [shape = 's32[1]{0}', space=sflag, size = 0x4, scoped, tag = 'scoped memory for tpu_custom_call.1']
    %14 = vsyncpa [#allocation3], 0
    %15 = vsyncpa [#allocation6], 0
    %16 = vsyncpa [#allocation9], 0
    %17 = vsyncpa [#allocation12], 0
    %18 = vsyncpa [#allocation4], 0
    %19 = vsyncpa [#allocation16], 0
    // Predicated region
    $region2: #{tpu_custom_call.1} parent=1 // pred_check
      _
    $region3: #{tpu_custom_call.1} parent=1 // pred_check_branch
      %21 = sbr.rel (0) target = $region5
    $region4: #{tpu_custom_call.1} parent=1 // pred_region
      %s23 = ssub.s32 256, 256
      %24 = vsyncadd [#allocation3], %s23
      %s26 = sshll.u32 [#allocation2], 4
      %s27 = int_to_ptr.vmem [resolvable:$true] %s26
      %29 = dma.hbm_to_vmem [thread:$0]  %s0, 256, %s27, [#allocation3]
    $region5: #{tpu_custom_call.1} parent=1 // pred_fallthru
      _
    // Predicated region
    $region6: #{tpu_custom_call.1} parent=1 // pred_check
      _
    $region7: #{tpu_custom_call.1} parent=1 // pred_check_branch
      %31 = sbr.rel (0) target = $region9
    $region8: #{tpu_custom_call.1} parent=1 // pred_region
      %s33 = ssub.s32 65536, 65536
      %34 = vsyncadd [#allocation6], %s33
      %s35 = sshll.u32 [#allocation5], 4
      %s36 = int_to_ptr.vmem [resolvable:$true] %s35
      %41 = dma.hbm_to_vmem [thread:$0]  %s1, 65536, %s36, [#allocation6], 512, 512, 32
    $region9: #{tpu_custom_call.1} parent=1 // pred_fallthru
      _
    // Predicated region
    $region10: #{tpu_custom_call.1} parent=1 // pred_check
      _
    $region11: #{tpu_custom_call.1} parent=1 // pred_check_branch
      %43 = sbr.rel (0) target = $region13
    $region12: #{tpu_custom_call.1} parent=1 // pred_region
      %s45 = ssub.s32 128, 128
      %46 = vsyncadd [#allocation6], %s45
      %s48 = sshll.u32 [#allocation7], 4
      %s49 = int_to_ptr.vmem [resolvable:$true] %s48
      %51 = dma.hbm_to_vmem [thread:$0]  %s2, 128, %s49, [#allocation6]
    $region13: #{tpu_custom_call.1} parent=1 // pred_fallthru
      _
    // Predicated region
    $region14: #{tpu_custom_call.1} parent=1 // pred_check
      _
    $region15: #{tpu_custom_call.1} parent=1 // pred_check_branch
      %53 = sbr.rel (0) target = $region17
    $region16: #{tpu_custom_call.1} parent=1 // pred_region
      %s55 = ssub.s32 65536, 65536
      %56 = vsyncadd [#allocation9], %s55
      %s57 = sshll.u32 [#allocation8], 4
      %s58 = int_to_ptr.vmem [resolvable:$true] %s57
      %63 = dma.hbm_to_vmem [thread:$0]  %s3, 65536, %s58, [#allocation9], 512, 512, 32
    $region17: #{tpu_custom_call.1} parent=1 // pred_fallthru
      _
    // Predicated region
    $region18: #{tpu_custom_call.1} parent=1 // pred_check
      _
    $region19: #{tpu_custom_call.1} parent=1 // pred_check_branch
      %65 = sbr.rel (0) target = $region21
    $region20: #{tpu_custom_call.1} parent=1 // pred_region
      %s67 = ssub.s32 128, 128
      %68 = vsyncadd [#allocation9], %s67
      %s70 = sshll.u32 [#allocation10], 4
      %s71 = int_to_ptr.vmem [resolvable:$true] %s70
      %73 = dma.hbm_to_vmem [thread:$0]  %s4, 128, %s71, [#allocation9]
    $region21: #{tpu_custom_call.1} parent=1 // pred_fallthru
      _
    // Predicated region
    $region22: #{tpu_custom_call.1} parent=1 // pred_check
      _
    $region23: #{tpu_custom_call.1} parent=1 // pred_check_branch
      %75 = sbr.rel (0) target = $region25
    $region24: #{tpu_custom_call.1} parent=1 // pred_region
      %s77 = ssub.s32 8192, 8192
      %78 = vsyncadd [#allocation12], %s77
      %s79 = sshll.u32 [#allocation11], 4
      %s80 = int_to_ptr.vmem [resolvable:$true] %s79
      %85 = dma.hbm_to_vmem [thread:$0]  %s5, 8192, %s80, [#allocation12], 64, 64, 4
    $region25: #{tpu_custom_call.1} parent=1 // pred_fallthru
      _
    // Predicated region
    $region26: #{tpu_custom_call.1} parent=1 // pred_check
      _
    $region27: #{tpu_custom_call.1} parent=1 // pred_check_branch
      %87 = sbr.rel (0) target = $region29
    $region28: #{tpu_custom_call.1} parent=1 // pred_region
      %s89 = ssub.s32 16, 16
      %90 = vsyncadd [#allocation12], %s89
      %s92 = sshll.u32 [#allocation13], 4
      %s93 = int_to_ptr.vmem [resolvable:$true] %s92
      %95 = dma.hbm_to_vmem [thread:$0]  %s6, 16, %s93, [#allocation12]
    $region29: #{tpu_custom_call.1} parent=1 // pred_fallthru
      _
    // Predicated region
    $region30: #{tpu_custom_call.1} parent=1 // pred_check
      _
    $region31: #{tpu_custom_call.1} parent=1 // pred_check_branch
      %97 = sbr.rel (0) target = $region33
    $region32: #{tpu_custom_call.1} parent=1 // pred_region
      %98 = dma.done [#allocation3], 256
    $region33: #{tpu_custom_call.1} parent=1 // pred_fallthru
      _
    // Predicated region
    $region34: #{tpu_custom_call.1} parent=1 // pred_check
      _
    $region35: #{tpu_custom_call.1} parent=1 // pred_check_branch
      %100 = sbr.rel (0) target = $region37
    $region36: #{tpu_custom_call.1} parent=1 // pred_region
      %101 = dma.done [#allocation6], 65536
    $region37: #{tpu_custom_call.1} parent=1 // pred_fallthru
      _
    // Predicated region
    $region38: #{tpu_custom_call.1} parent=1 // pred_check
      _
    $region39: #{tpu_custom_call.1} parent=1 // pred_check_branch
      %103 = sbr.rel (0) target = $region41
    $region40: #{tpu_custom_call.1} parent=1 // pred_region
      %104 = dma.done [#allocation6], 128
    $region41: #{tpu_custom_call.1} parent=1 // pred_fallthru
      _
    // Predicated region
    $region42: #{tpu_custom_call.1} parent=1 // pred_check
      _
    $region43: #{tpu_custom_call.1} parent=1 // pred_check_branch
      %106 = sbr.rel (0) target = $region45
    $region44: #{tpu_custom_call.1} parent=1 // pred_region
      %107 = dma.done [#allocation9], 65536
    $region45: #{tpu_custom_call.1} parent=1 // pred_fallthru
      _
    // Predicated region
    $region46: #{tpu_custom_call.1} parent=1 // pred_check
      _
    $region47: #{tpu_custom_call.1} parent=1 // pred_check_branch
      %109 = sbr.rel (0) target = $region49
    $region48: #{tpu_custom_call.1} parent=1 // pred_region
      %110 = dma.done [#allocation9], 128
    $region49: #{tpu_custom_call.1} parent=1 // pred_fallthru
      _
    // Predicated region
    $region50: #{tpu_custom_call.1} parent=1 // pred_check
      _
    $region51: #{tpu_custom_call.1} parent=1 // pred_check_branch
      %112 = sbr.rel (0) target = $region53
    $region52: #{tpu_custom_call.1} parent=1 // pred_region
      %113 = dma.done [#allocation12], 8192
    $region53: #{tpu_custom_call.1} parent=1 // pred_fallthru
      _
    // Predicated region
    $region54: #{tpu_custom_call.1} parent=1 // pred_check
      _
    $region55: #{tpu_custom_call.1} parent=1 // pred_check_branch
      %115 = sbr.rel (0) target = $region57
    $region56: #{tpu_custom_call.1} parent=1 // pred_region
      %116 = dma.done [#allocation12], 16
    $region57: #{tpu_custom_call.1} parent=1 // pred_fallthru
      _
    %v118 = vld [vmem:[#allocation2] sm:$0xff]
    %v119 = vld [vmem:[#allocation2 + $0x8] sm:$0xff]
    %v122 = vcombine.high %v118, %v118
    %v124 = vunpack.c.l.s4 1983009808
    %v125 = vunpack.c.0.s8 %v124
    %v126 = vlaneseq
    %v127 = vshrl.u32 %v126, 7
    %v128 = vsub.s32 %v125, %v127
    %v129 = vrot.slane %v118, %v128
    %v131 = vunpack.c.l.s4 1983009808
    %v132 = vunpack.c.0.s8 %v131
    %v133 = vlaneseq
    %v134 = vshrl.u32 %v133, 7
    %v135 = vsub.s32 %v132, %v134
    %v136 = vrot.slane %v122, %v135
    %v137 = vcombine.high %v129, %v129
    %v138 = vcombine.high %v136, %v136
    %v139 = vcombine.high %v119, %v119
    %v141 = vunpack.c.l.s4 1983009808
    %v142 = vunpack.c.0.s8 %v141
    %v143 = vlaneseq
    %v144 = vshrl.u32 %v143, 7
    %v145 = vsub.s32 %v142, %v144
    %v146 = vrot.slane %v119, %v145
    %v148 = vunpack.c.l.s4 1983009808
    %v149 = vunpack.c.0.s8 %v148
    %v150 = vlaneseq
    %v151 = vshrl.u32 %v150, 7
    %v152 = vsub.s32 %v149, %v151
    %v153 = vrot.slane %v139, %v152
    %v154 = vcombine.high %v146, %v146
    %v155 = vcombine.high %v153, %v153
    %v164 = vpack.c.bf16 %v129, %v129
    %v165 = vpack.c.bf16 %v137, %v137
    %v166 = vpack.c.bf16 %v136, %v136
    %v167 = vpack.c.bf16 %v138, %v138
    %v168 = vpack.c.bf16 %v146, %v146
    %v169 = vpack.c.bf16 %v154, %v154
    %v170 = vpack.c.bf16 %v153, %v153
    %v171 = vpack.c.bf16 %v155, %v155
    %v172 = vld [vmem:[#allocation5] sm:$0xff]
    %v173 = vld [vmem:[#allocation5 + $0x8] sm:$0xff]
    %v174 = vld [vmem:[#allocation5 + $0x10] sm:$0xff]
    %v175 = vld [vmem:[#allocation5 + $0x18] sm:$0xff]
    %v176 = vld [vmem:[#allocation5 + $0x20] sm:$0xff]
    %v177 = vld [vmem:[#allocation5 + $0x28] sm:$0xff]
    %v178 = vld [vmem:[#allocation5 + $0x30] sm:$0xff]
    %v179 = vld [vmem:[#allocation5 + $0x38] sm:$0xff]
    %v180 = vld [vmem:[#allocation5 + $0x40] sm:$0xff]
    %v181 = vld [vmem:[#allocation5 + $0x48] sm:$0xff]
    %v182 = vld [vmem:[#allocation5 + $0x50] sm:$0xff]
    %v183 = vld [vmem:[#allocation5 + $0x58] sm:$0xff]
    %v184 = vld [vmem:[#allocation5 + $0x60] sm:$0xff]
    %v185 = vld [vmem:[#allocation5 + $0x68] sm:$0xff]
    %v186 = vld [vmem:[#allocation5 + $0x70] sm:$0xff]
    %v187 = vld [vmem:[#allocation5 + $0x78] sm:$0xff]
    %v188 = vld [vmem:[#allocation5 + $0x80] sm:$0xff]
    %v189 = vld [vmem:[#allocation5 + $0x88] sm:$0xff]
    %v190 = vld [vmem:[#allocation5 + $0x90] sm:$0xff]
    %v191 = vld [vmem:[#allocation5 + $0x98] sm:$0xff]
    %v192 = vld [vmem:[#allocation5 + $0xa0] sm:$0xff]
    %v193 = vld [vmem:[#allocation5 + $0xa8] sm:$0xff]
    %v194 = vld [vmem:[#allocation5 + $0xb0] sm:$0xff]
    %v195 = vld [vmem:[#allocation5 + $0xb8] sm:$0xff]
    %v196 = vld [vmem:[#allocation5 + $0xc0] sm:$0xff]
    %v197 = vld [vmem:[#allocation5 + $0xc8] sm:$0xff]
    %v198 = vld [vmem:[#allocation5 + $0xd0] sm:$0xff]
    %v199 = vld [vmem:[#allocation5 + $0xd8] sm:$0xff]
    %v200 = vld [vmem:[#allocation5 + $0xe0] sm:$0xff]
    %v201 = vld [vmem:[#allocation5 + $0xe8] sm:$0xff]
    %v202 = vld [vmem:[#allocation5 + $0xf0] sm:$0xff]
    %v203 = vld [vmem:[#allocation5 + $0xf8] sm:$0xff]
    %v204 = vld [vmem:[#allocation5 + $0x100] sm:$0xff]
    %v205 = vld [vmem:[#allocation5 + $0x108] sm:$0xff]
    %v206 = vld [vmem:[#allocation5 + $0x110] sm:$0xff]
    %v207 = vld [vmem:[#allocation5 + $0x118] sm:$0xff]
    %v208 = vld [vmem:[#allocation5 + $0x120] sm:$0xff]
    %v209 = vld [vmem:[#allocation5 + $0x128] sm:$0xff]
    %v210 = vld [vmem:[#allocation5 + $0x130] sm:$0xff]
    %v211 = vld [vmem:[#allocation5 + $0x138] sm:$0xff]
    %v212 = vld [vmem:[#allocation5 + $0x140] sm:$0xff]
    %v213 = vld [vmem:[#allocation5 + $0x148] sm:$0xff]
    %v214 = vld [vmem:[#allocation5 + $0x150] sm:$0xff]
    %v215 = vld [vmem:[#allocation5 + $0x158] sm:$0xff]
    %v216 = vld [vmem:[#allocation5 + $0x160] sm:$0xff]
    %v217 = vld [vmem:[#allocation5 + $0x168] sm:$0xff]
    %v218 = vld [vmem:[#allocation5 + $0x170] sm:$0xff]
    %v219 = vld [vmem:[#allocation5 + $0x178] sm:$0xff]
    %v220 = vld [vmem:[#allocation5 + $0x180] sm:$0xff]
    %v221 = vld [vmem:[#allocation5 + $0x188] sm:$0xff]
    %v222 = vld [vmem:[#allocation5 + $0x190] sm:$0xff]
    %v223 = vld [vmem:[#allocation5 + $0x198] sm:$0xff]
    %v224 = vld [vmem:[#allocation5 + $0x1a0] sm:$0xff]
    %v225 = vld [vmem:[#allocation5 + $0x1a8] sm:$0xff]
    %v226 = vld [vmem:[#allocation5 + $0x1b0] sm:$0xff]
    %v227 = vld [vmem:[#allocation5 + $0x1b8] sm:$0xff]
    %v228 = vld [vmem:[#allocation5 + $0x1c0] sm:$0xff]
    %v229 = vld [vmem:[#allocation5 + $0x1c8] sm:$0xff]
    %v230 = vld [vmem:[#allocation5 + $0x1d0] sm:$0xff]
    %v231 = vld [vmem:[#allocation5 + $0x1d8] sm:$0xff]
    %v232 = vld [vmem:[#allocation5 + $0x1e0] sm:$0xff]
    %v233 = vld [vmem:[#allocation5 + $0x1e8] sm:$0xff]
    %v234 = vld [vmem:[#allocation5 + $0x1f0] sm:$0xff]
    %v235 = vld [vmem:[#allocation5 + $0x1f8] sm:$0xff]
    %v236 = vld [vmem:[#allocation5 + $0x200] sm:$0xff]
    %v237 = vld [vmem:[#allocation5 + $0x208] sm:$0xff]
    %v238 = vld [vmem:[#allocation5 + $0x210] sm:$0xff]
    %v239 = vld [vmem:[#allocation5 + $0x218] sm:$0xff]
    %v240 = vld [vmem:[#allocation5 + $0x220] sm:$0xff]
    %v241 = vld [vmem:[#allocation5 + $0x228] sm:$0xff]
    %v242 = vld [vmem:[#allocation5 + $0x230] sm:$0xff]
    %v243 = vld [vmem:[#allocation5 + $0x238] sm:$0xff]
    %v244 = vld [vmem:[#allocation5 + $0x240] sm:$0xff]
    %v245 = vld [vmem:[#allocation5 + $0x248] sm:$0xff]
    %v246 = vld [vmem:[#allocation5 + $0x250] sm:$0xff]
    %v247 = vld [vmem:[#allocation5 + $0x258] sm:$0xff]
    %v248 = vld [vmem:[#allocation5 + $0x260] sm:$0xff]
    %v249 = vld [vmem:[#allocation5 + $0x268] sm:$0xff]
    %v250 = vld [vmem:[#allocation5 + $0x270] sm:$0xff]
    %v251 = vld [vmem:[#allocation5 + $0x278] sm:$0xff]
    %v252 = vld [vmem:[#allocation5 + $0x280] sm:$0xff]
    %v253 = vld [vmem:[#allocation5 + $0x288] sm:$0xff]
    %v254 = vld [vmem:[#allocation5 + $0x290] sm:$0xff]
    %v255 = vld [vmem:[#allocation5 + $0x298] sm:$0xff]
    %v256 = vld [vmem:[#allocation5 + $0x2a0] sm:$0xff]
    %v257 = vld [vmem:[#allocation5 + $0x2a8] sm:$0xff]
    %v258 = vld [vmem:[#allocation5 + $0x2b0] sm:$0xff]
    %v259 = vld [vmem:[#allocation5 + $0x2b8] sm:$0xff]
    %v260 = vld [vmem:[#allocation5 + $0x2c0] sm:$0xff]
    %v261 = vld [vmem:[#allocation5 + $0x2c8] sm:$0xff]
    %v262 = vld [vmem:[#allocation5 + $0x2d0] sm:$0xff]
    %v263 = vld [vmem:[#allocation5 + $0x2d8] sm:$0xff]
    %v264 = vld [vmem:[#allocation5 + $0x2e0] sm:$0xff]
    %v265 = vld [vmem:[#allocation5 + $0x2e8] sm:$0xff]
    %v266 = vld [vmem:[#allocation5 + $0x2f0] sm:$0xff]
    %v267 = vld [vmem:[#allocation5 + $0x2f8] sm:$0xff]
    %v268 = vld [vmem:[#allocation5 + $0x300] sm:$0xff]
    %v269 = vld [vmem:[#allocation5 + $0x308] sm:$0xff]
    %v270 = vld [vmem:[#allocation5 + $0x310] sm:$0xff]
    %v271 = vld [vmem:[#allocation5 + $0x318] sm:$0xff]
    %v272 = vld [vmem:[#allocation5 + $0x320] sm:$0xff]
    %v273 = vld [vmem:[#allocation5 + $0x328] sm:$0xff]
    %v274 = vld [vmem:[#allocation5 + $0x330] sm:$0xff]
    %v275 = vld [vmem:[#allocation5 + $0x338] sm:$0xff]
    %v276 = vld [vmem:[#allocation5 + $0x340] sm:$0xff]
    %v277 = vld [vmem:[#allocation5 + $0x348] sm:$0xff]
    %v278 = vld [vmem:[#allocation5 + $0x350] sm:$0xff]
    %v279 = vld [vmem:[#allocation5 + $0x358] sm:$0xff]
    %v280 = vld [vmem:[#allocation5 + $0x360] sm:$0xff]
    %v281 = vld [vmem:[#allocation5 + $0x368] sm:$0xff]
    %v282 = vld [vmem:[#allocation5 + $0x370] sm:$0xff]
    %v283 = vld [vmem:[#allocation5 + $0x378] sm:$0xff]
    %v284 = vld [vmem:[#allocation5 + $0x380] sm:$0xff]
    %v285 = vld [vmem:[#allocation5 + $0x388] sm:$0xff]
    %v286 = vld [vmem:[#allocation5 + $0x390] sm:$0xff]
    %v287 = vld [vmem:[#allocation5 + $0x398] sm:$0xff]
    %v288 = vld [vmem:[#allocation5 + $0x3a0] sm:$0xff]
    %v289 = vld [vmem:[#allocation5 + $0x3a8] sm:$0xff]
    %v290 = vld [vmem:[#allocation5 + $0x3b0] sm:$0xff]
    %v291 = vld [vmem:[#allocation5 + $0x3b8] sm:$0xff]
    %v292 = vld [vmem:[#allocation5 + $0x3c0] sm:$0xff]
    %v293 = vld [vmem:[#allocation5 + $0x3c8] sm:$0xff]
    %v294 = vld [vmem:[#allocation5 + $0x3d0] sm:$0xff]
    %v295 = vld [vmem:[#allocation5 + $0x3d8] sm:$0xff]
    %v296 = vld [vmem:[#allocation5 + $0x3e0] sm:$0xff]
    %v297 = vld [vmem:[#allocation5 + $0x3e8] sm:$0xff]
    %v298 = vld [vmem:[#allocation5 + $0x3f0] sm:$0xff]
    %v299 = vld [vmem:[#allocation5 + $0x3f8] sm:$0xff]
    %v300 = vld [vmem:[#allocation5 + $0x400] sm:$0xff]
    %v301 = vld [vmem:[#allocation5 + $0x408] sm:$0xff]
    %v302 = vld [vmem:[#allocation5 + $0x410] sm:$0xff]
    %v303 = vld [vmem:[#allocation5 + $0x418] sm:$0xff]
    %v304 = vld [vmem:[#allocation5 + $0x420] sm:$0xff]
    %v305 = vld [vmem:[#allocation5 + $0x428] sm:$0xff]
    %v306 = vld [vmem:[#allocation5 + $0x430] sm:$0xff]
    %v307 = vld [vmem:[#allocation5 + $0x438] sm:$0xff]
    %v308 = vld [vmem:[#allocation5 + $0x440] sm:$0xff]
    %v309 = vld [vmem:[#allocation5 + $0x448] sm:$0xff]
    %v310 = vld [vmem:[#allocation5 + $0x450] sm:$0xff]
    %v311 = vld [vmem:[#allocation5 + $0x458] sm:$0xff]
    %v312 = vld [vmem:[#allocation5 + $0x460] sm:$0xff]
    %v313 = vld [vmem:[#allocation5 + $0x468] sm:$0xff]
    %v314 = vld [vmem:[#allocation5 + $0x470] sm:$0xff]
    %v315 = vld [vmem:[#allocation5 + $0x478] sm:$0xff]
    %v316 = vld [vmem:[#allocation5 + $0x480] sm:$0xff]
    %v317 = vld [vmem:[#allocation5 + $0x488] sm:$0xff]
    %v318 = vld [vmem:[#allocation5 + $0x490] sm:$0xff]
    %v319 = vld [vmem:[#allocation5 + $0x498] sm:$0xff]
    %v320 = vld [vmem:[#allocation5 + $0x4a0] sm:$0xff]
    %v321 = vld [vmem:[#allocation5 + $0x4a8] sm:$0xff]
    %v322 = vld [vmem:[#allocation5 + $0x4b0] sm:$0xff]
    %v323 = vld [vmem:[#allocation5 + $0x4b8] sm:$0xff]
    %v324 = vld [vmem:[#allocation5 + $0x4c0] sm:$0xff]
    %v325 = vld [vmem:[#allocation5 + $0x4c8] sm:$0xff]
    %v326 = vld [vmem:[#allocation5 + $0x4d0] sm:$0xff]
    %v327 = vld [vmem:[#allocation5 + $0x4d8] sm:$0xff]
    %v328 = vld [vmem:[#allocation5 + $0x4e0] sm:$0xff]
    %v329 = vld [vmem:[#allocation5 + $0x4e8] sm:$0xff]
    %v330 = vld [vmem:[#allocation5 + $0x4f0] sm:$0xff]
    %v331 = vld [vmem:[#allocation5 + $0x4f8] sm:$0xff]
    %v332 = vld [vmem:[#allocation5 + $0x500] sm:$0xff]
    %v333 = vld [vmem:[#allocation5 + $0x508] sm:$0xff]
    %v334 = vld [vmem:[#allocation5 + $0x510] sm:$0xff]
    %v335 = vld [vmem:[#allocation5 + $0x518] sm:$0xff]
    %v336 = vld [vmem:[#allocation5 + $0x520] sm:$0xff]
    %v337 = vld [vmem:[#allocation5 + $0x528] sm:$0xff]
    %v338 = vld [vmem:[#allocation5 + $0x530] sm:$0xff]
    %v339 = vld [vmem:[#allocation5 + $0x538] sm:$0xff]
    %v340 = vld [vmem:[#allocation5 + $0x540] sm:$0xff]
    %v341 = vld [vmem:[#allocation5 + $0x548] sm:$0xff]
    %v342 = vld [vmem:[#allocation5 + $0x550] sm:$0xff]
    %v343 = vld [vmem:[#allocation5 + $0x558] sm:$0xff]
    %v344 = vld [vmem:[#allocation5 + $0x560] sm:$0xff]
    %v345 = vld [vmem:[#allocation5 + $0x568] sm:$0xff]
    %v346 = vld [vmem:[#allocation5 + $0x570] sm:$0xff]
    %v347 = vld [vmem:[#allocation5 + $0x578] sm:$0xff]
    %v348 = vld [vmem:[#allocation5 + $0x580] sm:$0xff]
    %v349 = vld [vmem:[#allocation5 + $0x588] sm:$0xff]
    %v350 = vld [vmem:[#allocation5 + $0x590] sm:$0xff]
    %v351 = vld [vmem:[#allocation5 + $0x598] sm:$0xff]
    %v352 = vld [vmem:[#allocation5 + $0x5a0] sm:$0xff]
    %v353 = vld [vmem:[#allocation5 + $0x5a8] sm:$0xff]
    %v354 = vld [vmem:[#allocation5 + $0x5b0] sm:$0xff]
    %v355 = vld [vmem:[#allocation5 + $0x5b8] sm:$0xff]
    %v356 = vld [vmem:[#allocation5 + $0x5c0] sm:$0xff]
    %v357 = vld [vmem:[#allocation5 + $0x5c8] sm:$0xff]
    %v358 = vld [vmem:[#allocation5 + $0x5d0] sm:$0xff]
    %v359 = vld [vmem:[#allocation5 + $0x5d8] sm:$0xff]
    %v360 = vld [vmem:[#allocation5 + $0x5e0] sm:$0xff]
    %v361 = vld [vmem:[#allocation5 + $0x5e8] sm:$0xff]
    %v362 = vld [vmem:[#allocation5 + $0x5f0] sm:$0xff]
    %v363 = vld [vmem:[#allocation5 + $0x5f8] sm:$0xff]
    %v364 = vld [vmem:[#allocation5 + $0x600] sm:$0xff]
    %v365 = vld [vmem:[#allocation5 + $0x608] sm:$0xff]
    %v366 = vld [vmem:[#allocation5 + $0x610] sm:$0xff]
    %v367 = vld [vmem:[#allocation5 + $0x618] sm:$0xff]
    %v368 = vld [vmem:[#allocation5 + $0x620] sm:$0xff]
    %v369 = vld [vmem:[#allocation5 + $0x628] sm:$0xff]
    %v370 = vld [vmem:[#allocation5 + $0x630] sm:$0xff]
    %v371 = vld [vmem:[#allocation5 + $0x638] sm:$0xff]
    %v372 = vld [vmem:[#allocation5 + $0x640] sm:$0xff]
    %v373 = vld [vmem:[#allocation5 + $0x648] sm:$0xff]
    %v374 = vld [vmem:[#allocation5 + $0x650] sm:$0xff]
    %v375 = vld [vmem:[#allocation5 + $0x658] sm:$0xff]
    %v376 = vld [vmem:[#allocation5 + $0x660] sm:$0xff]
    %v377 = vld [vmem:[#allocation5 + $0x668] sm:$0xff]
    %v378 = vld [vmem:[#allocation5 + $0x670] sm:$0xff]
    %v379 = vld [vmem:[#allocation5 + $0x678] sm:$0xff]
    %v380 = vld [vmem:[#allocation5 + $0x680] sm:$0xff]
    %v381 = vld [vmem:[#allocation5 + $0x688] sm:$0xff]
    %v382 = vld [vmem:[#allocation5 + $0x690] sm:$0xff]
    %v383 = vld [vmem:[#allocation5 + $0x698] sm:$0xff]
    %v384 = vld [vmem:[#allocation5 + $0x6a0] sm:$0xff]
    %v385 = vld [vmem:[#allocation5 + $0x6a8] sm:$0xff]
    %v386 = vld [vmem:[#allocation5 + $0x6b0] sm:$0xff]
    %v387 = vld [vmem:[#allocation5 + $0x6b8] sm:$0xff]
    %v388 = vld [vmem:[#allocation5 + $0x6c0] sm:$0xff]
    %v389 = vld [vmem:[#allocation5 + $0x6c8] sm:$0xff]
    %v390 = vld [vmem:[#allocation5 + $0x6d0] sm:$0xff]
    %v391 = vld [vmem:[#allocation5 + $0x6d8] sm:$0xff]
    %v392 = vld [vmem:[#allocation5 + $0x6e0] sm:$0xff]
    %v393 = vld [vmem:[#allocation5 + $0x6e8] sm:$0xff]
    %v394 = vld [vmem:[#allocation5 + $0x6f0] sm:$0xff]
    %v395 = vld [vmem:[#allocation5 + $0x6f8] sm:$0xff]
    %v396 = vld [vmem:[#allocation5 + $0x700] sm:$0xff]
    %v397 = vld [vmem:[#allocation5 + $0x708] sm:$0xff]
    %v398 = vld [vmem:[#allocation5 + $0x710] sm:$0xff]
    %v399 = vld [vmem:[#allocation5 + $0x718] sm:$0xff]
    %v400 = vld [vmem:[#allocation5 + $0x720] sm:$0xff]
    %v401 = vld [vmem:[#allocation5 + $0x728] sm:$0xff]
    %v402 = vld [vmem:[#allocation5 + $0x730] sm:$0xff]
    %v403 = vld [vmem:[#allocation5 + $0x738] sm:$0xff]
    %v404 = vld [vmem:[#allocation5 + $0x740] sm:$0xff]
    %v405 = vld [vmem:[#allocation5 + $0x748] sm:$0xff]
    %v406 = vld [vmem:[#allocation5 + $0x750] sm:$0xff]
    %v407 = vld [vmem:[#allocation5 + $0x758] sm:$0xff]
    %v408 = vld [vmem:[#allocation5 + $0x760] sm:$0xff]
    %v409 = vld [vmem:[#allocation5 + $0x768] sm:$0xff]
    %v410 = vld [vmem:[#allocation5 + $0x770] sm:$0xff]
    %v411 = vld [vmem:[#allocation5 + $0x778] sm:$0xff]
    %v412 = vld [vmem:[#allocation5 + $0x780] sm:$0xff]
    %v413 = vld [vmem:[#allocation5 + $0x788] sm:$0xff]
    %v414 = vld [vmem:[#allocation5 + $0x790] sm:$0xff]
    %v415 = vld [vmem:[#allocation5 + $0x798] sm:$0xff]
    %v416 = vld [vmem:[#allocation5 + $0x7a0] sm:$0xff]
    %v417 = vld [vmem:[#allocation5 + $0x7a8] sm:$0xff]
    %v418 = vld [vmem:[#allocation5 + $0x7b0] sm:$0xff]
    %v419 = vld [vmem:[#allocation5 + $0x7b8] sm:$0xff]
    %v420 = vld [vmem:[#allocation5 + $0x7c0] sm:$0xff]
    %v421 = vld [vmem:[#allocation5 + $0x7c8] sm:$0xff]
    %v422 = vld [vmem:[#allocation5 + $0x7d0] sm:$0xff]
    %v423 = vld [vmem:[#allocation5 + $0x7d8] sm:$0xff]
    %v424 = vld [vmem:[#allocation5 + $0x7e0] sm:$0xff]
    %v425 = vld [vmem:[#allocation5 + $0x7e8] sm:$0xff]
    %v426 = vld [vmem:[#allocation5 + $0x7f0] sm:$0xff]
    %v427 = vld [vmem:[#allocation5 + $0x7f8] sm:$0xff]
    %v428 = vld [vmem:[#allocation5 + $0x800] sm:$0xff]
    %v429 = vld [vmem:[#allocation5 + $0x808] sm:$0xff]
    %v430 = vld [vmem:[#allocation5 + $0x810] sm:$0xff]
    %v431 = vld [vmem:[#allocation5 + $0x818] sm:$0xff]
    %v432 = vld [vmem:[#allocation5 + $0x820] sm:$0xff]
    %v433 = vld [vmem:[#allocation5 + $0x828] sm:$0xff]
    %v434 = vld [vmem:[#allocation5 + $0x830] sm:$0xff]
    %v435 = vld [vmem:[#allocation5 + $0x838] sm:$0xff]
    %v436 = vld [vmem:[#allocation5 + $0x840] sm:$0xff]
    %v437 = vld [vmem:[#allocation5 + $0x848] sm:$0xff]
    %v438 = vld [vmem:[#allocation5 + $0x850] sm:$0xff]
    %v439 = vld [vmem:[#allocation5 + $0x858] sm:$0xff]
    %v440 = vld [vmem:[#allocation5 + $0x860] sm:$0xff]
    %v441 = vld [vmem:[#allocation5 + $0x868] sm:$0xff]
    %v442 = vld [vmem:[#allocation5 + $0x870] sm:$0xff]
    %v443 = vld [vmem:[#allocation5 + $0x878] sm:$0xff]
    %v444 = vld [vmem:[#allocation5 + $0x880] sm:$0xff]
    %v445 = vld [vmem:[#allocation5 + $0x888] sm:$0xff]
    %v446 = vld [vmem:[#allocation5 + $0x890] sm:$0xff]
    %v447 = vld [vmem:[#allocation5 + $0x898] sm:$0xff]
    %v448 = vld [vmem:[#allocation5 + $0x8a0] sm:$0xff]
    %v449 = vld [vmem:[#allocation5 + $0x8a8] sm:$0xff]
    %v450 = vld [vmem:[#allocation5 + $0x8b0] sm:$0xff]
    %v451 = vld [vmem:[#allocation5 + $0x8b8] sm:$0xff]
    %v452 = vld [vmem:[#allocation5 + $0x8c0] sm:$0xff]
    %v453 = vld [vmem:[#allocation5 + $0x8c8] sm:$0xff]
    %v454 = vld [vmem:[#allocation5 + $0x8d0] sm:$0xff]
    %v455 = vld [vmem:[#allocation5 + $0x8d8] sm:$0xff]
    %v456 = vld [vmem:[#allocation5 + $0x8e0] sm:$0xff]
    %v457 = vld [vmem:[#allocation5 + $0x8e8] sm:$0xff]
    %v458 = vld [vmem:[#allocation5 + $0x8f0] sm:$0xff]
    %v459 = vld [vmem:[#allocation5 + $0x8f8] sm:$0xff]
    %v460 = vld [vmem:[#allocation5 + $0x900] sm:$0xff]
    %v461 = vld [vmem:[#allocation5 + $0x908] sm:$0xff]
    %v462 = vld [vmem:[#allocation5 + $0x910] sm:$0xff]
    %v463 = vld [vmem:[#allocation5 + $0x918] sm:$0xff]
    %v464 = vld [vmem:[#allocation5 + $0x920] sm:$0xff]
    %v465 = vld [vmem:[#allocation5 + $0x928] sm:$0xff]
    %v466 = vld [vmem:[#allocation5 + $0x930] sm:$0xff]
    %v467 = vld [vmem:[#allocation5 + $0x938] sm:$0xff]
    %v468 = vld [vmem:[#allocation5 + $0x940] sm:$0xff]
    %v469 = vld [vmem:[#allocation5 + $0x948] sm:$0xff]
    %v470 = vld [vmem:[#allocation5 + $0x950] sm:$0xff]
    %v471 = vld [vmem:[#allocation5 + $0x958] sm:$0xff]
    %v472 = vld [vmem:[#allocation5 + $0x960] sm:$0xff]
    %v473 = vld [vmem:[#allocation5 + $0x968] sm:$0xff]
    %v474 = vld [vmem:[#allocation5 + $0x970] sm:$0xff]
    %v475 = vld [vmem:[#allocation5 + $0x978] sm:$0xff]
    %v476 = vld [vmem:[#allocation5 + $0x980] sm:$0xff]
    %v477 = vld [vmem:[#allocation5 + $0x988] sm:$0xff]
    %v478 = vld [vmem:[#allocation5 + $0x990] sm:$0xff]
    %v479 = vld [vmem:[#allocation5 + $0x998] sm:$0xff]
    %v480 = vld [vmem:[#allocation5 + $0x9a0] sm:$0xff]
    %v481 = vld [vmem:[#allocation5 + $0x9a8] sm:$0xff]
    %v482 = vld [vmem:[#allocation5 + $0x9b0] sm:$0xff]
    %v483 = vld [vmem:[#allocation5 + $0x9b8] sm:$0xff]
    %v484 = vld [vmem:[#allocation5 + $0x9c0] sm:$0xff]
    %v485 = vld [vmem:[#allocation5 + $0x9c8] sm:$0xff]
    %v486 = vld [vmem:[#allocation5 + $0x9d0] sm:$0xff]
    %v487 = vld [vmem:[#allocation5 + $0x9d8] sm:$0xff]
    %v488 = vld [vmem:[#allocation5 + $0x9e0] sm:$0xff]
    %v489 = vld [vmem:[#allocation5 + $0x9e8] sm:$0xff]
    %v490 = vld [vmem:[#allocation5 + $0x9f0] sm:$0xff]
    %v491 = vld [vmem:[#allocation5 + $0x9f8] sm:$0xff]
    %v492 = vld [vmem:[#allocation5 + $0xa00] sm:$0xff]
    %v493 = vld [vmem:[#allocation5 + $0xa08] sm:$0xff]
    %v494 = vld [vmem:[#allocation5 + $0xa10] sm:$0xff]
    %v495 = vld [vmem:[#allocation5 + $0xa18] sm:$0xff]
    %v496 = vld [vmem:[#allocation5 + $0xa20] sm:$0xff]
    %v497 = vld [vmem:[#allocation5 + $0xa28] sm:$0xff]
    %v498 = vld [vmem:[#allocation5 + $0xa30] sm:$0xff]
    %v499 = vld [vmem:[#allocation5 + $0xa38] sm:$0xff]
    %v500 = vld [vmem:[#allocation5 + $0xa40] sm:$0xff]
    %v501 = vld [vmem:[#allocation5 + $0xa48] sm:$0xff]
    %v502 = vld [vmem:[#allocation5 + $0xa50] sm:$0xff]
    %v503 = vld [vmem:[#allocation5 + $0xa58] sm:$0xff]
    %v504 = vld [vmem:[#allocation5 + $0xa60] sm:$0xff]
    %v505 = vld [vmem:[#allocation5 + $0xa68] sm:$0xff]
    %v506 = vld [vmem:[#allocation5 + $0xa70] sm:$0xff]
    %v507 = vld [vmem:[#allocation5 + $0xa78] sm:$0xff]
    %v508 = vld [vmem:[#allocation5 + $0xa80] sm:$0xff]
    %v509 = vld [vmem:[#allocation5 + $0xa88] sm:$0xff]
    %v510 = vld [vmem:[#allocation5 + $0xa90] sm:$0xff]
    %v511 = vld [vmem:[#allocation5 + $0xa98] sm:$0xff]
    %v512 = vld [vmem:[#allocation5 + $0xaa0] sm:$0xff]
    %v513 = vld [vmem:[#allocation5 + $0xaa8] sm:$0xff]
    %v514 = vld [vmem:[#allocation5 + $0xab0] sm:$0xff]
    %v515 = vld [vmem:[#allocation5 + $0xab8] sm:$0xff]
    %v516 = vld [vmem:[#allocation5 + $0xac0] sm:$0xff]
    %v517 = vld [vmem:[#allocation5 + $0xac8] sm:$0xff]
    %v518 = vld [vmem:[#allocation5 + $0xad0] sm:$0xff]
    %v519 = vld [vmem:[#allocation5 + $0xad8] sm:$0xff]
    %v520 = vld [vmem:[#allocation5 + $0xae0] sm:$0xff]
    %v521 = vld [vmem:[#allocation5 + $0xae8] sm:$0xff]
    %v522 = vld [vmem:[#allocation5 + $0xaf0] sm:$0xff]
    %v523 = vld [vmem:[#allocation5 + $0xaf8] sm:$0xff]
    %v524 = vld [vmem:[#allocation5 + $0xb00] sm:$0xff]
    %v525 = vld [vmem:[#allocation5 + $0xb08] sm:$0xff]
    %v526 = vld [vmem:[#allocation5 + $0xb10] sm:$0xff]
    %v527 = vld [vmem:[#allocation5 + $0xb18] sm:$0xff]
    %v528 = vld [vmem:[#allocation5 + $0xb20] sm:$0xff]
    %v529 = vld [vmem:[#allocation5 + $0xb28] sm:$0xff]
    %v530 = vld [vmem:[#allocation5 + $0xb30] sm:$0xff]
    %v531 = vld [vmem:[#allocation5 + $0xb38] sm:$0xff]
    %v532 = vld [vmem:[#allocation5 + $0xb40] sm:$0xff]
    %v533 = vld [vmem:[#allocation5 + $0xb48] sm:$0xff]
    %v534 = vld [vmem:[#allocation5 + $0xb50] sm:$0xff]
    %v535 = vld [vmem:[#allocation5 + $0xb58] sm:$0xff]
    %v536 = vld [vmem:[#allocation5 + $0xb60] sm:$0xff]
    %v537 = vld [vmem:[#allocation5 + $0xb68] sm:$0xff]
    %v538 = vld [vmem:[#allocation5 + $0xb70] sm:$0xff]
    %v539 = vld [vmem:[#allocation5 + $0xb78] sm:$0xff]
    %v540 = vld [vmem:[#allocation5 + $0xb80] sm:$0xff]
    %v541 = vld [vmem:[#allocation5 + $0xb88] sm:$0xff]
    %v542 = vld [vmem:[#allocation5 + $0xb90] sm:$0xff]
    %v543 = vld [vmem:[#allocation5 + $0xb98] sm:$0xff]
    %v544 = vld [vmem:[#allocation5 + $0xba0] sm:$0xff]
    %v545 = vld [vmem:[#allocation5 + $0xba8] sm:$0xff]
    %v546 = vld [vmem:[#allocation5 + $0xbb0] sm:$0xff]
    %v547 = vld [vmem:[#allocation5 + $0xbb8] sm:$0xff]
    %v548 = vld [vmem:[#allocation5 + $0xbc0] sm:$0xff]
    %v549 = vld [vmem:[#allocation5 + $0xbc8] sm:$0xff]
    %v550 = vld [vmem:[#allocation5 + $0xbd0] sm:$0xff]
    %v551 = vld [vmem:[#allocation5 + $0xbd8] sm:$0xff]
    %v552 = vld [vmem:[#allocation5 + $0xbe0] sm:$0xff]
    %v553 = vld [vmem:[#allocation5 + $0xbe8] sm:$0xff]
    %v554 = vld [vmem:[#allocation5 + $0xbf0] sm:$0xff]
    %v555 = vld [vmem:[#allocation5 + $0xbf8] sm:$0xff]
    %v556 = vld [vmem:[#allocation5 + $0xc00] sm:$0xff]
    %v557 = vld [vmem:[#allocation5 + $0xc08] sm:$0xff]
    %v558 = vld [vmem:[#allocation5 + $0xc10] sm:$0xff]
    %v559 = vld [vmem:[#allocation5 + $0xc18] sm:$0xff]
    %v560 = vld [vmem:[#allocation5 + $0xc20] sm:$0xff]
    %v561 = vld [vmem:[#allocation5 + $0xc28] sm:$0xff]
    %v562 = vld [vmem:[#allocation5 + $0xc30] sm:$0xff]
    %v563 = vld [vmem:[#allocation5 + $0xc38] sm:$0xff]
    %v564 = vld [vmem:[#allocation5 + $0xc40] sm:$0xff]
    %v565 = vld [vmem:[#allocation5 + $0xc48] sm:$0xff]
    %v566 = vld [vmem:[#allocation5 + $0xc50] sm:$0xff]
    %v567 = vld [vmem:[#allocation5 + $0xc58] sm:$0xff]
    %v568 = vld [vmem:[#allocation5 + $0xc60] sm:$0xff]
    %v569 = vld [vmem:[#allocation5 + $0xc68] sm:$0xff]
    %v570 = vld [vmem:[#allocation5 + $0xc70] sm:$0xff]
    %v571 = vld [vmem:[#allocation5 + $0xc78] sm:$0xff]
    %v572 = vld [vmem:[#allocation5 + $0xc80] sm:$0xff]
    %v573 = vld [vmem:[#allocation5 + $0xc88] sm:$0xff]
    %v574 = vld [vmem:[#allocation5 + $0xc90] sm:$0xff]
    %v575 = vld [vmem:[#allocation5 + $0xc98] sm:$0xff]
    %v576 = vld [vmem:[#allocation5 + $0xca0] sm:$0xff]
    %v577 = vld [vmem:[#allocation5 + $0xca8] sm:$0xff]
    %v578 = vld [vmem:[#allocation5 + $0xcb0] sm:$0xff]
    %v579 = vld [vmem:[#allocation5 + $0xcb8] sm:$0xff]
    %v580 = vld [vmem:[#allocation5 + $0xcc0] sm:$0xff]
    %v581 = vld [vmem:[#allocation5 + $0xcc8] sm:$0xff]
    %v582 = vld [vmem:[#allocation5 + $0xcd0] sm:$0xff]
    %v583 = vld [vmem:[#allocation5 + $0xcd8] sm:$0xff]
    %v584 = vld [vmem:[#allocation5 + $0xce0] sm:$0xff]
    %v585 = vld [vmem:[#allocation5 + $0xce8] sm:$0xff]
    %v586 = vld [vmem:[#allocation5 + $0xcf0] sm:$0xff]
    %v587 = vld [vmem:[#allocation5 + $0xcf8] sm:$0xff]
    %v588 = vld [vmem:[#allocation5 + $0xd00] sm:$0xff]
    %v589 = vld [vmem:[#allocation5 + $0xd08] sm:$0xff]
    %v590 = vld [vmem:[#allocation5 + $0xd10] sm:$0xff]
    %v591 = vld [vmem:[#allocation5 + $0xd18] sm:$0xff]
    %v592 = vld [vmem:[#allocation5 + $0xd20] sm:$0xff]
    %v593 = vld [vmem:[#allocation5 + $0xd28] sm:$0xff]
    %v594 = vld [vmem:[#allocation5 + $0xd30] sm:$0xff]
    %v595 = vld [vmem:[#allocation5 + $0xd38] sm:$0xff]
    %v596 = vld [vmem:[#allocation5 + $0xd40] sm:$0xff]
    %v597 = vld [vmem:[#allocation5 + $0xd48] sm:$0xff]
    %v598 = vld [vmem:[#allocation5 + $0xd50] sm:$0xff]
    %v599 = vld [vmem:[#allocation5 + $0xd58] sm:$0xff]
    %v600 = vld [vmem:[#allocation5 + $0xd60] sm:$0xff]
    %v601 = vld [vmem:[#allocation5 + $0xd68] sm:$0xff]
    %v602 = vld [vmem:[#allocation5 + $0xd70] sm:$0xff]
    %v603 = vld [vmem:[#allocation5 + $0xd78] sm:$0xff]
    %v604 = vld [vmem:[#allocation5 + $0xd80] sm:$0xff]
    %v605 = vld [vmem:[#allocation5 + $0xd88] sm:$0xff]
    %v606 = vld [vmem:[#allocation5 + $0xd90] sm:$0xff]
    %v607 = vld [vmem:[#allocation5 + $0xd98] sm:$0xff]
    %v608 = vld [vmem:[#allocation5 + $0xda0] sm:$0xff]
    %v609 = vld [vmem:[#allocation5 + $0xda8] sm:$0xff]
    %v610 = vld [vmem:[#allocation5 + $0xdb0] sm:$0xff]
    %v611 = vld [vmem:[#allocation5 + $0xdb8] sm:$0xff]
    %v612 = vld [vmem:[#allocation5 + $0xdc0] sm:$0xff]
    %v613 = vld [vmem:[#allocation5 + $0xdc8] sm:$0xff]
    %v614 = vld [vmem:[#allocation5 + $0xdd0] sm:$0xff]
    %v615 = vld [vmem:[#allocation5 + $0xdd8] sm:$0xff]
    %v616 = vld [vmem:[#allocation5 + $0xde0] sm:$0xff]
    %v617 = vld [vmem:[#allocation5 + $0xde8] sm:$0xff]
    %v618 = vld [vmem:[#allocation5 + $0xdf0] sm:$0xff]
    %v619 = vld [vmem:[#allocation5 + $0xdf8] sm:$0xff]
    %v620 = vld [vmem:[#allocation5 + $0xe00] sm:$0xff]
    %v621 = vld [vmem:[#allocation5 + $0xe08] sm:$0xff]
    %v622 = vld [vmem:[#allocation5 + $0xe10] sm:$0xff]
    %v623 = vld [vmem:[#allocation5 + $0xe18] sm:$0xff]
    %v624 = vld [vmem:[#allocation5 + $0xe20] sm:$0xff]
    %v625 = vld [vmem:[#allocation5 + $0xe28] sm:$0xff]
    %v626 = vld [vmem:[#allocation5 + $0xe30] sm:$0xff]
    %v627 = vld [vmem:[#allocation5 + $0xe38] sm:$0xff]
    %v628 = vld [vmem:[#allocation5 + $0xe40] sm:$0xff]
    %v629 = vld [vmem:[#allocation5 + $0xe48] sm:$0xff]
    %v630 = vld [vmem:[#allocation5 + $0xe50] sm:$0xff]
    %v631 = vld [vmem:[#allocation5 + $0xe58] sm:$0xff]
    %v632 = vld [vmem:[#allocation5 + $0xe60] sm:$0xff]
    %v633 = vld [vmem:[#allocation5 + $0xe68] sm:$0xff]
    %v634 = vld [vmem:[#allocation5 + $0xe70] sm:$0xff]
    %v635 = vld [vmem:[#allocation5 + $0xe78] sm:$0xff]
    %v636 = vld [vmem:[#allocation5 + $0xe80] sm:$0xff]
    %v637 = vld [vmem:[#allocation5 + $0xe88] sm:$0xff]
    %v638 = vld [vmem:[#allocation5 + $0xe90] sm:$0xff]
    %v639 = vld [vmem:[#allocation5 + $0xe98] sm:$0xff]
    %v640 = vld [vmem:[#allocation5 + $0xea0] sm:$0xff]
    %v641 = vld [vmem:[#allocation5 + $0xea8] sm:$0xff]
    %v642 = vld [vmem:[#allocation5 + $0xeb0] sm:$0xff]
    %v643 = vld [vmem:[#allocation5 + $0xeb8] sm:$0xff]
    %v644 = vld [vmem:[#allocation5 + $0xec0] sm:$0xff]
    %v645 = vld [vmem:[#allocation5 + $0xec8] sm:$0xff]
    %v646 = vld [vmem:[#allocation5 + $0xed0] sm:$0xff]
    %v647 = vld [vmem:[#allocation5 + $0xed8] sm:$0xff]
    %v648 = vld [vmem:[#allocation5 + $0xee0] sm:$0xff]
    %v649 = vld [vmem:[#allocation5 + $0xee8] sm:$0xff]
    %v650 = vld [vmem:[#allocation5 + $0xef0] sm:$0xff]
    %v651 = vld [vmem:[#allocation5 + $0xef8] sm:$0xff]
    %v652 = vld [vmem:[#allocation5 + $0xf00] sm:$0xff]
    %v653 = vld [vmem:[#allocation5 + $0xf08] sm:$0xff]
    %v654 = vld [vmem:[#allocation5 + $0xf10] sm:$0xff]
    %v655 = vld [vmem:[#allocation5 + $0xf18] sm:$0xff]
    %v656 = vld [vmem:[#allocation5 + $0xf20] sm:$0xff]
    %v657 = vld [vmem:[#allocation5 + $0xf28] sm:$0xff]
    %v658 = vld [vmem:[#allocation5 + $0xf30] sm:$0xff]
    %v659 = vld [vmem:[#allocation5 + $0xf38] sm:$0xff]
    %v660 = vld [vmem:[#allocation5 + $0xf40] sm:$0xff]
    %v661 = vld [vmem:[#allocation5 + $0xf48] sm:$0xff]
    %v662 = vld [vmem:[#allocation5 + $0xf50] sm:$0xff]
    %v663 = vld [vmem:[#allocation5 + $0xf58] sm:$0xff]
    %v664 = vld [vmem:[#allocation5 + $0xf60] sm:$0xff]
    %v665 = vld [vmem:[#allocation5 + $0xf68] sm:$0xff]
    %v666 = vld [vmem:[#allocation5 + $0xf70] sm:$0xff]
    %v667 = vld [vmem:[#allocation5 + $0xf78] sm:$0xff]
    %v668 = vld [vmem:[#allocation5 + $0xf80] sm:$0xff]
    %v669 = vld [vmem:[#allocation5 + $0xf88] sm:$0xff]
    %v670 = vld [vmem:[#allocation5 + $0xf90] sm:$0xff]
    %v671 = vld [vmem:[#allocation5 + $0xf98] sm:$0xff]
    %v672 = vld [vmem:[#allocation5 + $0xfa0] sm:$0xff]
    %v673 = vld [vmem:[#allocation5 + $0xfa8] sm:$0xff]
    %v674 = vld [vmem:[#allocation5 + $0xfb0] sm:$0xff]
    %v675 = vld [vmem:[#allocation5 + $0xfb8] sm:$0xff]
    %v676 = vld [vmem:[#allocation5 + $0xfc0] sm:$0xff]
    %v677 = vld [vmem:[#allocation5 + $0xfc8] sm:$0xff]
    %v678 = vld [vmem:[#allocation5 + $0xfd0] sm:$0xff]
    %v679 = vld [vmem:[#allocation5 + $0xfd8] sm:$0xff]
    %v680 = vld [vmem:[#allocation5 + $0xfe0] sm:$0xff]
    %v681 = vld [vmem:[#allocation5 + $0xfe8] sm:$0xff]
    %v682 = vld [vmem:[#allocation5 + $0xff0] sm:$0xff]
    %v683 = vld [vmem:[#allocation5 + $0xff8] sm:$0xff]
    %v684 = vld [vmem:[#allocation7] sm:$0xff]
    %v686 = vlaneseq
    %v687 = vshrl.u32 %v686, 7
    %v688 = vsub.s32 0, %v687
    %v689 = vrot.slane %v684, %v688
    %v690 = vlaneseq
    %v691 = vshrl.u32 %v690, 7
    %v692 = vsub.s32 1, %v691
    %v693 = vrot.slane %v684, %v692
    %v694 = vlaneseq
    %v695 = vshrl.u32 %v694, 7
    %v696 = vsub.s32 2, %v695
    %v697 = vrot.slane %v684, %v696
    %v698 = vlaneseq
    %v699 = vshrl.u32 %v698, 7
    %v700 = vsub.s32 3, %v699
    %v701 = vrot.slane %v684, %v700
    %v702 = vlaneseq
    %v703 = vshrl.u32 %v702, 7
    %v704 = vsub.s32 4, %v703
    %v705 = vrot.slane %v684, %v704
    %v706 = vlaneseq
    %v707 = vshrl.u32 %v706, 7
    %v708 = vsub.s32 5, %v707
    %v709 = vrot.slane %v684, %v708
    %v710 = vlaneseq
    %v711 = vshrl.u32 %v710, 7
    %v712 = vsub.s32 6, %v711
    %v713 = vrot.slane %v684, %v712
    %v714 = vlaneseq
    %v715 = vshrl.u32 %v714, 7
    %v716 = vsub.s32 7, %v715
    %v717 = vrot.slane %v684, %v716
    %v1238 = vunpack.c.l.b16 %v172
    %v1239 = vunpack.c.h.b16 %v172
    %v1240 = vunpack.c.l.b16 %v173
    %v1241 = vunpack.c.h.b16 %v173
    %v1242 = vunpack.c.l.b16 %v174
    %v1243 = vunpack.c.h.b16 %v174
    %v1244 = vunpack.c.l.b16 %v175
    %v1245 = vunpack.c.h.b16 %v175
    %v1246 = vunpack.c.l.b16 %v176
    %v1247 = vunpack.c.h.b16 %v176
    %v1248 = vunpack.c.l.b16 %v177
    %v1249 = vunpack.c.h.b16 %v177
    %v1250 = vunpack.c.l.b16 %v178
    %v1251 = vunpack.c.h.b16 %v178
    %v1252 = vunpack.c.l.b16 %v179
    %v1253 = vunpack.c.h.b16 %v179
    %v1254 = vunpack.c.l.b16 %v180
    %v1255 = vunpack.c.h.b16 %v180
    %v1256 = vunpack.c.l.b16 %v181
    %v1257 = vunpack.c.h.b16 %v181
    %v1258 = vunpack.c.l.b16 %v182
    %v1259 = vunpack.c.h.b16 %v182
    %v1260 = vunpack.c.l.b16 %v183
    %v1261 = vunpack.c.h.b16 %v183
    %v1262 = vunpack.c.l.b16 %v184
    %v1263 = vunpack.c.h.b16 %v184
    %v1264 = vunpack.c.l.b16 %v185
    %v1265 = vunpack.c.h.b16 %v185
    %v1266 = vunpack.c.l.b16 %v186
    %v1267 = vunpack.c.h.b16 %v186
    %v1268 = vunpack.c.l.b16 %v187
    %v1269 = vunpack.c.h.b16 %v187
    %v1270 = vunpack.c.l.b16 %v188
    %v1271 = vunpack.c.h.b16 %v188
    %v1272 = vunpack.c.l.b16 %v189
    %v1273 = vunpack.c.h.b16 %v189
    %v1274 = vunpack.c.l.b16 %v190
    %v1275 = vunpack.c.h.b16 %v190
    %v1276 = vunpack.c.l.b16 %v191
    %v1277 = vunpack.c.h.b16 %v191
    %v1278 = vunpack.c.l.b16 %v192
    %v1279 = vunpack.c.h.b16 %v192
    %v1280 = vunpack.c.l.b16 %v193
    %v1281 = vunpack.c.h.b16 %v193
    %v1282 = vunpack.c.l.b16 %v194
    %v1283 = vunpack.c.h.b16 %v194
    %v1284 = vunpack.c.l.b16 %v195
    %v1285 = vunpack.c.h.b16 %v195
    %v1286 = vunpack.c.l.b16 %v196
    %v1287 = vunpack.c.h.b16 %v196
    %v1288 = vunpack.c.l.b16 %v197
    %v1289 = vunpack.c.h.b16 %v197
    %v1290 = vunpack.c.l.b16 %v198
    %v1291 = vunpack.c.h.b16 %v198
    %v1292 = vunpack.c.l.b16 %v199
    %v1293 = vunpack.c.h.b16 %v199
    %v1294 = vunpack.c.l.b16 %v200
    %v1295 = vunpack.c.h.b16 %v200
    %v1296 = vunpack.c.l.b16 %v201
    %v1297 = vunpack.c.h.b16 %v201
    %v1298 = vunpack.c.l.b16 %v202
    %v1299 = vunpack.c.h.b16 %v202
    %v1300 = vunpack.c.l.b16 %v203
    %v1301 = vunpack.c.h.b16 %v203
    %v1302 = vunpack.c.l.b16 %v204
    %v1303 = vunpack.c.h.b16 %v204
    %v1304 = vunpack.c.l.b16 %v205
    %v1305 = vunpack.c.h.b16 %v205
    %v1306 = vunpack.c.l.b16 %v206
    %v1307 = vunpack.c.h.b16 %v206
    %v1308 = vunpack.c.l.b16 %v207
    %v1309 = vunpack.c.h.b16 %v207
    %v1310 = vunpack.c.l.b16 %v208
    %v1311 = vunpack.c.h.b16 %v208
    %v1312 = vunpack.c.l.b16 %v209
    %v1313 = vunpack.c.h.b16 %v209
    %v1314 = vunpack.c.l.b16 %v210
    %v1315 = vunpack.c.h.b16 %v210
    %v1316 = vunpack.c.l.b16 %v211
    %v1317 = vunpack.c.h.b16 %v211
    %v1318 = vunpack.c.l.b16 %v212
    %v1319 = vunpack.c.h.b16 %v212
    %v1320 = vunpack.c.l.b16 %v213
    %v1321 = vunpack.c.h.b16 %v213
    %v1322 = vunpack.c.l.b16 %v214
    %v1323 = vunpack.c.h.b16 %v214
    %v1324 = vunpack.c.l.b16 %v215
    %v1325 = vunpack.c.h.b16 %v215
    %v1326 = vunpack.c.l.b16 %v216
    %v1327 = vunpack.c.h.b16 %v216
    %v1328 = vunpack.c.l.b16 %v217
    %v1329 = vunpack.c.h.b16 %v217
    %v1330 = vunpack.c.l.b16 %v218
    %v1331 = vunpack.c.h.b16 %v218
    %v1332 = vunpack.c.l.b16 %v219
    %v1333 = vunpack.c.h.b16 %v219
    %v1334 = vunpack.c.l.b16 %v220
    %v1335 = vunpack.c.h.b16 %v220
    %v1336 = vunpack.c.l.b16 %v221
    %v1337 = vunpack.c.h.b16 %v221
    %v1338 = vunpack.c.l.b16 %v222
    %v1339 = vunpack.c.h.b16 %v222
    %v1340 = vunpack.c.l.b16 %v223
    %v1341 = vunpack.c.h.b16 %v223
    %v1342 = vunpack.c.l.b16 %v224
    %v1343 = vunpack.c.h.b16 %v224
    %v1344 = vunpack.c.l.b16 %v225
    %v1345 = vunpack.c.h.b16 %v225
    %v1346 = vunpack.c.l.b16 %v226
    %v1347 = vunpack.c.h.b16 %v226
    %v1348 = vunpack.c.l.b16 %v227
    %v1349 = vunpack.c.h.b16 %v227
    %v1350 = vunpack.c.l.b16 %v228
    %v1351 = vunpack.c.h.b16 %v228
    %v1352 = vunpack.c.l.b16 %v229
    %v1353 = vunpack.c.h.b16 %v229
    %v1354 = vunpack.c.l.b16 %v230
    %v1355 = vunpack.c.h.b16 %v230
    %v1356 = vunpack.c.l.b16 %v231
    %v1357 = vunpack.c.h.b16 %v231
    %v1358 = vunpack.c.l.b16 %v232
    %v1359 = vunpack.c.h.b16 %v232
    %v1360 = vunpack.c.l.b16 %v233
    %v1361 = vunpack.c.h.b16 %v233
    %v1362 = vunpack.c.l.b16 %v234
    %v1363 = vunpack.c.h.b16 %v234
    %v1364 = vunpack.c.l.b16 %v235
    %v1365 = vunpack.c.h.b16 %v235
    %v1366 = vunpack.c.l.b16 %v236
    %v1367 = vunpack.c.h.b16 %v236
    %v1368 = vunpack.c.l.b16 %v237
    %v1369 = vunpack.c.h.b16 %v237
    %v1370 = vunpack.c.l.b16 %v238
    %v1371 = vunpack.c.h.b16 %v238
    %v1372 = vunpack.c.l.b16 %v239
    %v1373 = vunpack.c.h.b16 %v239
    %v1374 = vunpack.c.l.b16 %v240
    %v1375 = vunpack.c.h.b16 %v240
    %v1376 = vunpack.c.l.b16 %v241
    %v1377 = vunpack.c.h.b16 %v241
    %v1378 = vunpack.c.l.b16 %v242
    %v1379 = vunpack.c.h.b16 %v242
    %v1380 = vunpack.c.l.b16 %v243
    %v1381 = vunpack.c.h.b16 %v243
    %v1382 = vunpack.c.l.b16 %v244
    %v1383 = vunpack.c.h.b16 %v244
    %v1384 = vunpack.c.l.b16 %v245
    %v1385 = vunpack.c.h.b16 %v245
    %v1386 = vunpack.c.l.b16 %v246
    %v1387 = vunpack.c.h.b16 %v246
    %v1388 = vunpack.c.l.b16 %v247
    %v1389 = vunpack.c.h.b16 %v247
    %v1390 = vunpack.c.l.b16 %v248
    %v1391 = vunpack.c.h.b16 %v248
    %v1392 = vunpack.c.l.b16 %v249
    %v1393 = vunpack.c.h.b16 %v249
    %v1394 = vunpack.c.l.b16 %v250
    %v1395 = vunpack.c.h.b16 %v250
    %v1396 = vunpack.c.l.b16 %v251
    %v1397 = vunpack.c.h.b16 %v251
    %v1398 = vunpack.c.l.b16 %v252
    %v1399 = vunpack.c.h.b16 %v252
    %v1400 = vunpack.c.l.b16 %v253
    %v1401 = vunpack.c.h.b16 %v253
    %v1402 = vunpack.c.l.b16 %v254
    %v1403 = vunpack.c.h.b16 %v254
    %v1404 = vunpack.c.l.b16 %v255
    %v1405 = vunpack.c.h.b16 %v255
    %v1406 = vunpack.c.l.b16 %v256
    %v1407 = vunpack.c.h.b16 %v256
    %v1408 = vunpack.c.l.b16 %v257
    %v1409 = vunpack.c.h.b16 %v257
    %v1410 = vunpack.c.l.b16 %v258
    %v1411 = vunpack.c.h.b16 %v258
    %v1412 = vunpack.c.l.b16 %v259
    %v1413 = vunpack.c.h.b16 %v259
    %v1414 = vunpack.c.l.b16 %v260
    %v1415 = vunpack.c.h.b16 %v260
    %v1416 = vunpack.c.l.b16 %v261
    %v1417 = vunpack.c.h.b16 %v261
    %v1418 = vunpack.c.l.b16 %v262
    %v1419 = vunpack.c.h.b16 %v262
    %v1420 = vunpack.c.l.b16 %v263
    %v1421 = vunpack.c.h.b16 %v263
    %v1422 = vunpack.c.l.b16 %v264
    %v1423 = vunpack.c.h.b16 %v264
    %v1424 = vunpack.c.l.b16 %v265
    %v1425 = vunpack.c.h.b16 %v265
    %v1426 = vunpack.c.l.b16 %v266
    %v1427 = vunpack.c.h.b16 %v266
    %v1428 = vunpack.c.l.b16 %v267
    %v1429 = vunpack.c.h.b16 %v267
    %v1430 = vunpack.c.l.b16 %v268
    %v1431 = vunpack.c.h.b16 %v268
    %v1432 = vunpack.c.l.b16 %v269
    %v1433 = vunpack.c.h.b16 %v269
    %v1434 = vunpack.c.l.b16 %v270
    %v1435 = vunpack.c.h.b16 %v270
    %v1436 = vunpack.c.l.b16 %v271
    %v1437 = vunpack.c.h.b16 %v271
    %v1438 = vunpack.c.l.b16 %v272
    %v1439 = vunpack.c.h.b16 %v272
    %v1440 = vunpack.c.l.b16 %v273
    %v1441 = vunpack.c.h.b16 %v273
    %v1442 = vunpack.c.l.b16 %v274
    %v1443 = vunpack.c.h.b16 %v274
    %v1444 = vunpack.c.l.b16 %v275
    %v1445 = vunpack.c.h.b16 %v275
    %v1446 = vunpack.c.l.b16 %v276
    %v1447 = vunpack.c.h.b16 %v276
    %v1448 = vunpack.c.l.b16 %v277
    %v1449 = vunpack.c.h.b16 %v277
    %v1450 = vunpack.c.l.b16 %v278
    %v1451 = vunpack.c.h.b16 %v278
    %v1452 = vunpack.c.l.b16 %v279
    %v1453 = vunpack.c.h.b16 %v279
    %v1454 = vunpack.c.l.b16 %v280
    %v1455 = vunpack.c.h.b16 %v280
    %v1456 = vunpack.c.l.b16 %v281
    %v1457 = vunpack.c.h.b16 %v281
    %v1458 = vunpack.c.l.b16 %v282
    %v1459 = vunpack.c.h.b16 %v282
    %v1460 = vunpack.c.l.b16 %v283
    %v1461 = vunpack.c.h.b16 %v283
    %v1462 = vunpack.c.l.b16 %v284
    %v1463 = vunpack.c.h.b16 %v284
    %v1464 = vunpack.c.l.b16 %v285
    %v1465 = vunpack.c.h.b16 %v285
    %v1466 = vunpack.c.l.b16 %v286
    %v1467 = vunpack.c.h.b16 %v286
    %v1468 = vunpack.c.l.b16 %v287
    %v1469 = vunpack.c.h.b16 %v287
    %v1470 = vunpack.c.l.b16 %v288
    %v1471 = vunpack.c.h.b16 %v288
    %v1472 = vunpack.c.l.b16 %v289
    %v1473 = vunpack.c.h.b16 %v289
    %v1474 = vunpack.c.l.b16 %v290
    %v1475 = vunpack.c.h.b16 %v290
    %v1476 = vunpack.c.l.b16 %v291
    %v1477 = vunpack.c.h.b16 %v291
    %v1478 = vunpack.c.l.b16 %v292
    %v1479 = vunpack.c.h.b16 %v292
    %v1480 = vunpack.c.l.b16 %v293
    %v1481 = vunpack.c.h.b16 %v293
    %v1482 = vunpack.c.l.b16 %v294
    %v1483 = vunpack.c.h.b16 %v294
    %v1484 = vunpack.c.l.b16 %v295
    %v1485 = vunpack.c.h.b16 %v295
    %v1486 = vunpack.c.l.b16 %v296
    %v1487 = vunpack.c.h.b16 %v296
    %v1488 = vunpack.c.l.b16 %v297
    %v1489 = vunpack.c.h.b16 %v297
    %v1490 = vunpack.c.l.b16 %v298
    %v1491 = vunpack.c.h.b16 %v298
    %v1492 = vunpack.c.l.b16 %v299
    %v1493 = vunpack.c.h.b16 %v299
    %v1494 = vunpack.c.l.b16 %v300
    %v1495 = vunpack.c.h.b16 %v300
    %v1496 = vunpack.c.l.b16 %v301
    %v1497 = vunpack.c.h.b16 %v301
    %v1498 = vunpack.c.l.b16 %v302
    %v1499 = vunpack.c.h.b16 %v302
    %v1500 = vunpack.c.l.b16 %v303
    %v1501 = vunpack.c.h.b16 %v303
    %v1502 = vunpack.c.l.b16 %v304
    %v1503 = vunpack.c.h.b16 %v304
    %v1504 = vunpack.c.l.b16 %v305
    %v1505 = vunpack.c.h.b16 %v305
    %v1506 = vunpack.c.l.b16 %v306
    %v1507 = vunpack.c.h.b16 %v306
    %v1508 = vunpack.c.l.b16 %v307
    %v1509 = vunpack.c.h.b16 %v307
    %v1510 = vunpack.c.l.b16 %v308
    %v1511 = vunpack.c.h.b16 %v308
    %v1512 = vunpack.c.l.b16 %v309
    %v1513 = vunpack.c.h.b16 %v309
    %v1514 = vunpack.c.l.b16 %v310
    %v1515 = vunpack.c.h.b16 %v310
    %v1516 = vunpack.c.l.b16 %v311
    %v1517 = vunpack.c.h.b16 %v311
    %v1518 = vunpack.c.l.b16 %v312
    %v1519 = vunpack.c.h.b16 %v312
    %v1520 = vunpack.c.l.b16 %v313
    %v1521 = vunpack.c.h.b16 %v313
    %v1522 = vunpack.c.l.b16 %v314
    %v1523 = vunpack.c.h.b16 %v314
    %v1524 = vunpack.c.l.b16 %v315
    %v1525 = vunpack.c.h.b16 %v315
    %v1526 = vunpack.c.l.b16 %v316
    %v1527 = vunpack.c.h.b16 %v316
    %v1528 = vunpack.c.l.b16 %v317
    %v1529 = vunpack.c.h.b16 %v317
    %v1530 = vunpack.c.l.b16 %v318
    %v1531 = vunpack.c.h.b16 %v318
    %v1532 = vunpack.c.l.b16 %v319
    %v1533 = vunpack.c.h.b16 %v319
    %v1534 = vunpack.c.l.b16 %v320
    %v1535 = vunpack.c.h.b16 %v320
    %v1536 = vunpack.c.l.b16 %v321
    %v1537 = vunpack.c.h.b16 %v321
    %v1538 = vunpack.c.l.b16 %v322
    %v1539 = vunpack.c.h.b16 %v322
    %v1540 = vunpack.c.l.b16 %v323
    %v1541 = vunpack.c.h.b16 %v323
    %v1542 = vunpack.c.l.b16 %v324
    %v1543 = vunpack.c.h.b16 %v324
    %v1544 = vunpack.c.l.b16 %v325
    %v1545 = vunpack.c.h.b16 %v325
    %v1546 = vunpack.c.l.b16 %v326
    %v1547 = vunpack.c.h.b16 %v326
    %v1548 = vunpack.c.l.b16 %v327
    %v1549 = vunpack.c.h.b16 %v327
    %v1550 = vunpack.c.l.b16 %v328
    %v1551 = vunpack.c.h.b16 %v328
    %v1552 = vunpack.c.l.b16 %v329
    %v1553 = vunpack.c.h.b16 %v329
    %v1554 = vunpack.c.l.b16 %v330
    %v1555 = vunpack.c.h.b16 %v330
    %v1556 = vunpack.c.l.b16 %v331
    %v1557 = vunpack.c.h.b16 %v331
    %v1558 = vunpack.c.l.b16 %v332
    %v1559 = vunpack.c.h.b16 %v332
    %v1560 = vunpack.c.l.b16 %v333
    %v1561 = vunpack.c.h.b16 %v333
    %v1562 = vunpack.c.l.b16 %v334
    %v1563 = vunpack.c.h.b16 %v334
    %v1564 = vunpack.c.l.b16 %v335
    %v1565 = vunpack.c.h.b16 %v335
    %v1566 = vunpack.c.l.b16 %v336
    %v1567 = vunpack.c.h.b16 %v336
    %v1568 = vunpack.c.l.b16 %v337
    %v1569 = vunpack.c.h.b16 %v337
    %v1570 = vunpack.c.l.b16 %v338
    %v1571 = vunpack.c.h.b16 %v338
    %v1572 = vunpack.c.l.b16 %v339
    %v1573 = vunpack.c.h.b16 %v339
    %v1574 = vunpack.c.l.b16 %v340
    %v1575 = vunpack.c.h.b16 %v340
    %v1576 = vunpack.c.l.b16 %v341
    %v1577 = vunpack.c.h.b16 %v341
    %v1578 = vunpack.c.l.b16 %v342
    %v1579 = vunpack.c.h.b16 %v342
    %v1580 = vunpack.c.l.b16 %v343
    %v1581 = vunpack.c.h.b16 %v343
    %v1582 = vunpack.c.l.b16 %v344
    %v1583 = vunpack.c.h.b16 %v344
    %v1584 = vunpack.c.l.b16 %v345
    %v1585 = vunpack.c.h.b16 %v345
    %v1586 = vunpack.c.l.b16 %v346
    %v1587 = vunpack.c.h.b16 %v346
    %v1588 = vunpack.c.l.b16 %v347
    %v1589 = vunpack.c.h.b16 %v347
    %v1590 = vunpack.c.l.b16 %v348
    %v1591 = vunpack.c.h.b16 %v348
    %v1592 = vunpack.c.l.b16 %v349
    %v1593 = vunpack.c.h.b16 %v349
    %v1594 = vunpack.c.l.b16 %v350
    %v1595 = vunpack.c.h.b16 %v350
    %v1596 = vunpack.c.l.b16 %v351
    %v1597 = vunpack.c.h.b16 %v351
    %v1598 = vunpack.c.l.b16 %v352
    %v1599 = vunpack.c.h.b16 %v352
    %v1600 = vunpack.c.l.b16 %v353
    %v1601 = vunpack.c.h.b16 %v353
    %v1602 = vunpack.c.l.b16 %v354
    %v1603 = vunpack.c.h.b16 %v354
    %v1604 = vunpack.c.l.b16 %v355
    %v1605 = vunpack.c.h.b16 %v355
    %v1606 = vunpack.c.l.b16 %v356
    %v1607 = vunpack.c.h.b16 %v356
    %v1608 = vunpack.c.l.b16 %v357
    %v1609 = vunpack.c.h.b16 %v357
    %v1610 = vunpack.c.l.b16 %v358
    %v1611 = vunpack.c.h.b16 %v358
    %v1612 = vunpack.c.l.b16 %v359
    %v1613 = vunpack.c.h.b16 %v359
    %v1614 = vunpack.c.l.b16 %v360
    %v1615 = vunpack.c.h.b16 %v360
    %v1616 = vunpack.c.l.b16 %v361
    %v1617 = vunpack.c.h.b16 %v361
    %v1618 = vunpack.c.l.b16 %v362
    %v1619 = vunpack.c.h.b16 %v362
    %v1620 = vunpack.c.l.b16 %v363
    %v1621 = vunpack.c.h.b16 %v363
    %v1622 = vunpack.c.l.b16 %v364
    %v1623 = vunpack.c.h.b16 %v364
    %v1624 = vunpack.c.l.b16 %v365
    %v1625 = vunpack.c.h.b16 %v365
    %v1626 = vunpack.c.l.b16 %v366
    %v1627 = vunpack.c.h.b16 %v366
    %v1628 = vunpack.c.l.b16 %v367
    %v1629 = vunpack.c.h.b16 %v367
    %v1630 = vunpack.c.l.b16 %v368
    %v1631 = vunpack.c.h.b16 %v368
    %v1632 = vunpack.c.l.b16 %v369
    %v1633 = vunpack.c.h.b16 %v369
    %v1634 = vunpack.c.l.b16 %v370
    %v1635 = vunpack.c.h.b16 %v370
    %v1636 = vunpack.c.l.b16 %v371
    %v1637 = vunpack.c.h.b16 %v371
    %v1638 = vunpack.c.l.b16 %v372
    %v1639 = vunpack.c.h.b16 %v372
    %v1640 = vunpack.c.l.b16 %v373
    %v1641 = vunpack.c.h.b16 %v373
    %v1642 = vunpack.c.l.b16 %v374
    %v1643 = vunpack.c.h.b16 %v374
    %v1644 = vunpack.c.l.b16 %v375
    %v1645 = vunpack.c.h.b16 %v375
    %v1646 = vunpack.c.l.b16 %v376
    %v1647 = vunpack.c.h.b16 %v376
    %v1648 = vunpack.c.l.b16 %v377
    %v1649 = vunpack.c.h.b16 %v377
    %v1650 = vunpack.c.l.b16 %v378
    %v1651 = vunpack.c.h.b16 %v378
    %v1652 = vunpack.c.l.b16 %v379
    %v1653 = vunpack.c.h.b16 %v379
    %v1654 = vunpack.c.l.b16 %v380
    %v1655 = vunpack.c.h.b16 %v380
    %v1656 = vunpack.c.l.b16 %v381
    %v1657 = vunpack.c.h.b16 %v381
    %v1658 = vunpack.c.l.b16 %v382
    %v1659 = vunpack.c.h.b16 %v382
    %v1660 = vunpack.c.l.b16 %v383
    %v1661 = vunpack.c.h.b16 %v383
    %v1662 = vunpack.c.l.b16 %v384
    %v1663 = vunpack.c.h.b16 %v384
    %v1664 = vunpack.c.l.b16 %v385
    %v1665 = vunpack.c.h.b16 %v385
    %v1666 = vunpack.c.l.b16 %v386
    %v1667 = vunpack.c.h.b16 %v386
    %v1668 = vunpack.c.l.b16 %v387
    %v1669 = vunpack.c.h.b16 %v387
    %v1670 = vunpack.c.l.b16 %v388
    %v1671 = vunpack.c.h.b16 %v388
    %v1672 = vunpack.c.l.b16 %v389
    %v1673 = vunpack.c.h.b16 %v389
    %v1674 = vunpack.c.l.b16 %v390
    %v1675 = vunpack.c.h.b16 %v390
    %v1676 = vunpack.c.l.b16 %v391
    %v1677 = vunpack.c.h.b16 %v391
    %v1678 = vunpack.c.l.b16 %v392
    %v1679 = vunpack.c.h.b16 %v392
    %v1680 = vunpack.c.l.b16 %v393
    %v1681 = vunpack.c.h.b16 %v393
    %v1682 = vunpack.c.l.b16 %v394
    %v1683 = vunpack.c.h.b16 %v394
    %v1684 = vunpack.c.l.b16 %v395
    %v1685 = vunpack.c.h.b16 %v395
    %v1686 = vunpack.c.l.b16 %v396
    %v1687 = vunpack.c.h.b16 %v396
    %v1688 = vunpack.c.l.b16 %v397
    %v1689 = vunpack.c.h.b16 %v397
    %v1690 = vunpack.c.l.b16 %v398
    %v1691 = vunpack.c.h.b16 %v398
    %v1692 = vunpack.c.l.b16 %v399
    %v1693 = vunpack.c.h.b16 %v399
    %v1694 = vunpack.c.l.b16 %v400
    %v1695 = vunpack.c.h.b16 %v400
    %v1696 = vunpack.c.l.b16 %v401
    %v1697 = vunpack.c.h.b16 %v401
    %v1698 = vunpack.c.l.b16 %v402
    %v1699 = vunpack.c.h.b16 %v402
    %v1700 = vunpack.c.l.b16 %v403
    %v1701 = vunpack.c.h.b16 %v403
    %v1702 = vunpack.c.l.b16 %v404
    %v1703 = vunpack.c.h.b16 %v404
    %v1704 = vunpack.c.l.b16 %v405
    %v1705 = vunpack.c.h.b16 %v405
    %v1706 = vunpack.c.l.b16 %v406
    %v1707 = vunpack.c.h.b16 %v406
    %v1708 = vunpack.c.l.b16 %v407
    %v1709 = vunpack.c.h.b16 %v407
    %v1710 = vunpack.c.l.b16 %v408
    %v1711 = vunpack.c.h.b16 %v408
    %v1712 = vunpack.c.l.b16 %v409
    %v1713 = vunpack.c.h.b16 %v409
    %v1714 = vunpack.c.l.b16 %v410
    %v1715 = vunpack.c.h.b16 %v410
    %v1716 = vunpack.c.l.b16 %v411
    %v1717 = vunpack.c.h.b16 %v411
    %v1718 = vunpack.c.l.b16 %v412
    %v1719 = vunpack.c.h.b16 %v412
    %v1720 = vunpack.c.l.b16 %v413
    %v1721 = vunpack.c.h.b16 %v413
    %v1722 = vunpack.c.l.b16 %v414
    %v1723 = vunpack.c.h.b16 %v414
    %v1724 = vunpack.c.l.b16 %v415
    %v1725 = vunpack.c.h.b16 %v415
    %v1726 = vunpack.c.l.b16 %v416
    %v1727 = vunpack.c.h.b16 %v416
    %v1728 = vunpack.c.l.b16 %v417
    %v1729 = vunpack.c.h.b16 %v417
    %v1730 = vunpack.c.l.b16 %v418
    %v1731 = vunpack.c.h.b16 %v418
    %v1732 = vunpack.c.l.b16 %v419
    %v1733 = vunpack.c.h.b16 %v419
    %v1734 = vunpack.c.l.b16 %v420
    %v1735 = vunpack.c.h.b16 %v420
    %v1736 = vunpack.c.l.b16 %v421
    %v1737 = vunpack.c.h.b16 %v421
    %v1738 = vunpack.c.l.b16 %v422
    %v1739 = vunpack.c.h.b16 %v422
    %v1740 = vunpack.c.l.b16 %v423
    %v1741 = vunpack.c.h.b16 %v423
    %v1742 = vunpack.c.l.b16 %v424
    %v1743 = vunpack.c.h.b16 %v424
    %v1744 = vunpack.c.l.b16 %v425
    %v1745 = vunpack.c.h.b16 %v425
    %v1746 = vunpack.c.l.b16 %v426
    %v1747 = vunpack.c.h.b16 %v426
    %v1748 = vunpack.c.l.b16 %v427
    %v1749 = vunpack.c.h.b16 %v427
    %v1750 = vunpack.c.l.b16 %v428
    %v1751 = vunpack.c.h.b16 %v428
    %v1752 = vunpack.c.l.b16 %v429
    %v1753 = vunpack.c.h.b16 %v429
    %v1754 = vunpack.c.l.b16 %v430
    %v1755 = vunpack.c.h.b16 %v430
    %v1756 = vunpack.c.l.b16 %v431
    %v1757 = vunpack.c.h.b16 %v431
    %v1758 = vunpack.c.l.b16 %v432
    %v1759 = vunpack.c.h.b16 %v432
    %v1760 = vunpack.c.l.b16 %v433
    %v1761 = vunpack.c.h.b16 %v433
    %v1762 = vunpack.c.l.b16 %v434
    %v1763 = vunpack.c.h.b16 %v434
    %v1764 = vunpack.c.l.b16 %v435
    %v1765 = vunpack.c.h.b16 %v435
    %v1766 = vunpack.c.l.b16 %v436
    %v1767 = vunpack.c.h.b16 %v436
    %v1768 = vunpack.c.l.b16 %v437
    %v1769 = vunpack.c.h.b16 %v437
    %v1770 = vunpack.c.l.b16 %v438
    %v1771 = vunpack.c.h.b16 %v438
    %v1772 = vunpack.c.l.b16 %v439
    %v1773 = vunpack.c.h.b16 %v439
    %v1774 = vunpack.c.l.b16 %v440
    %v1775 = vunpack.c.h.b16 %v440
    %v1776 = vunpack.c.l.b16 %v441
    %v1777 = vunpack.c.h.b16 %v441
    %v1778 = vunpack.c.l.b16 %v442
    %v1779 = vunpack.c.h.b16 %v442
    %v1780 = vunpack.c.l.b16 %v443
    %v1781 = vunpack.c.h.b16 %v443
    %v1782 = vunpack.c.l.b16 %v444
    %v1783 = vunpack.c.h.b16 %v444
    %v1784 = vunpack.c.l.b16 %v445
    %v1785 = vunpack.c.h.b16 %v445
    %v1786 = vunpack.c.l.b16 %v446
    %v1787 = vunpack.c.h.b16 %v446
    %v1788 = vunpack.c.l.b16 %v447
    %v1789 = vunpack.c.h.b16 %v447
    %v1790 = vunpack.c.l.b16 %v448
    %v1791 = vunpack.c.h.b16 %v448
    %v1792 = vunpack.c.l.b16 %v449
    %v1793 = vunpack.c.h.b16 %v449
    %v1794 = vunpack.c.l.b16 %v450
    %v1795 = vunpack.c.h.b16 %v450
    %v1796 = vunpack.c.l.b16 %v451
    %v1797 = vunpack.c.h.b16 %v451
    %v1798 = vunpack.c.l.b16 %v452
    %v1799 = vunpack.c.h.b16 %v452
    %v1800 = vunpack.c.l.b16 %v453
    %v1801 = vunpack.c.h.b16 %v453
    %v1802 = vunpack.c.l.b16 %v454
    %v1803 = vunpack.c.h.b16 %v454
    %v1804 = vunpack.c.l.b16 %v455
    %v1805 = vunpack.c.h.b16 %v455
    %v1806 = vunpack.c.l.b16 %v456
    %v1807 = vunpack.c.h.b16 %v456
    %v1808 = vunpack.c.l.b16 %v457
    %v1809 = vunpack.c.h.b16 %v457
    %v1810 = vunpack.c.l.b16 %v458
    %v1811 = vunpack.c.h.b16 %v458
    %v1812 = vunpack.c.l.b16 %v459
    %v1813 = vunpack.c.h.b16 %v459
    %v1814 = vunpack.c.l.b16 %v460
    %v1815 = vunpack.c.h.b16 %v460
    %v1816 = vunpack.c.l.b16 %v461
    %v1817 = vunpack.c.h.b16 %v461
    %v1818 = vunpack.c.l.b16 %v462
    %v1819 = vunpack.c.h.b16 %v462
    %v1820 = vunpack.c.l.b16 %v463
    %v1821 = vunpack.c.h.b16 %v463
    %v1822 = vunpack.c.l.b16 %v464
    %v1823 = vunpack.c.h.b16 %v464
    %v1824 = vunpack.c.l.b16 %v465
    %v1825 = vunpack.c.h.b16 %v465
    %v1826 = vunpack.c.l.b16 %v466
    %v1827 = vunpack.c.h.b16 %v466
    %v1828 = vunpack.c.l.b16 %v467
    %v1829 = vunpack.c.h.b16 %v467
    %v1830 = vunpack.c.l.b16 %v468
    %v1831 = vunpack.c.h.b16 %v468
    %v1832 = vunpack.c.l.b16 %v469
    %v1833 = vunpack.c.h.b16 %v469
    %v1834 = vunpack.c.l.b16 %v470
    %v1835 = vunpack.c.h.b16 %v470
    %v1836 = vunpack.c.l.b16 %v471
    %v1837 = vunpack.c.h.b16 %v471
    %v1838 = vunpack.c.l.b16 %v472
    %v1839 = vunpack.c.h.b16 %v472
    %v1840 = vunpack.c.l.b16 %v473
    %v1841 = vunpack.c.h.b16 %v473
    %v1842 = vunpack.c.l.b16 %v474
    %v1843 = vunpack.c.h.b16 %v474
    %v1844 = vunpack.c.l.b16 %v475
    %v1845 = vunpack.c.h.b16 %v475
    %v1846 = vunpack.c.l.b16 %v476
    %v1847 = vunpack.c.h.b16 %v476
    %v1848 = vunpack.c.l.b16 %v477
    %v1849 = vunpack.c.h.b16 %v477
    %v1850 = vunpack.c.l.b16 %v478
    %v1851 = vunpack.c.h.b16 %v478
    %v1852 = vunpack.c.l.b16 %v479
    %v1853 = vunpack.c.h.b16 %v479
    %v1854 = vunpack.c.l.b16 %v480
    %v1855 = vunpack.c.h.b16 %v480
    %v1856 = vunpack.c.l.b16 %v481
    %v1857 = vunpack.c.h.b16 %v481
    %v1858 = vunpack.c.l.b16 %v482
    %v1859 = vunpack.c.h.b16 %v482
    %v1860 = vunpack.c.l.b16 %v483
    %v1861 = vunpack.c.h.b16 %v483
    %v1862 = vunpack.c.l.b16 %v484
    %v1863 = vunpack.c.h.b16 %v484
    %v1864 = vunpack.c.l.b16 %v485
    %v1865 = vunpack.c.h.b16 %v485
    %v1866 = vunpack.c.l.b16 %v486
    %v1867 = vunpack.c.h.b16 %v486
    %v1868 = vunpack.c.l.b16 %v487
    %v1869 = vunpack.c.h.b16 %v487
    %v1870 = vunpack.c.l.b16 %v488
    %v1871 = vunpack.c.h.b16 %v488
    %v1872 = vunpack.c.l.b16 %v489
    %v1873 = vunpack.c.h.b16 %v489
    %v1874 = vunpack.c.l.b16 %v490
    %v1875 = vunpack.c.h.b16 %v490
    %v1876 = vunpack.c.l.b16 %v491
    %v1877 = vunpack.c.h.b16 %v491
    %v1878 = vunpack.c.l.b16 %v492
    %v1879 = vunpack.c.h.b16 %v492
    %v1880 = vunpack.c.l.b16 %v493
    %v1881 = vunpack.c.h.b16 %v493
    %v1882 = vunpack.c.l.b16 %v494
    %v1883 = vunpack.c.h.b16 %v494
    %v1884 = vunpack.c.l.b16 %v495
    %v1885 = vunpack.c.h.b16 %v495
    %v1886 = vunpack.c.l.b16 %v496
    %v1887 = vunpack.c.h.b16 %v496
    %v1888 = vunpack.c.l.b16 %v497
    %v1889 = vunpack.c.h.b16 %v497
    %v1890 = vunpack.c.l.b16 %v498
    %v1891 = vunpack.c.h.b16 %v498
    %v1892 = vunpack.c.l.b16 %v499
    %v1893 = vunpack.c.h.b16 %v499
    %v1894 = vunpack.c.l.b16 %v500
    %v1895 = vunpack.c.h.b16 %v500
    %v1896 = vunpack.c.l.b16 %v501
    %v1897 = vunpack.c.h.b16 %v501
    %v1898 = vunpack.c.l.b16 %v502
    %v1899 = vunpack.c.h.b16 %v502
    %v1900 = vunpack.c.l.b16 %v503
    %v1901 = vunpack.c.h.b16 %v503
    %v1902 = vunpack.c.l.b16 %v504
    %v1903 = vunpack.c.h.b16 %v504
    %v1904 = vunpack.c.l.b16 %v505
    %v1905 = vunpack.c.h.b16 %v505
    %v1906 = vunpack.c.l.b16 %v506
    %v1907 = vunpack.c.h.b16 %v506
    %v1908 = vunpack.c.l.b16 %v507
    %v1909 = vunpack.c.h.b16 %v507
    %v1910 = vunpack.c.l.b16 %v508
    %v1911 = vunpack.c.h.b16 %v508
    %v1912 = vunpack.c.l.b16 %v509
    %v1913 = vunpack.c.h.b16 %v509
    %v1914 = vunpack.c.l.b16 %v510
    %v1915 = vunpack.c.h.b16 %v510
    %v1916 = vunpack.c.l.b16 %v511
    %v1917 = vunpack.c.h.b16 %v511
    %v1918 = vunpack.c.l.b16 %v512
    %v1919 = vunpack.c.h.b16 %v512
    %v1920 = vunpack.c.l.b16 %v513
    %v1921 = vunpack.c.h.b16 %v513
    %v1922 = vunpack.c.l.b16 %v514
    %v1923 = vunpack.c.h.b16 %v514
    %v1924 = vunpack.c.l.b16 %v515
    %v1925 = vunpack.c.h.b16 %v515
    %v1926 = vunpack.c.l.b16 %v516
    %v1927 = vunpack.c.h.b16 %v516
    %v1928 = vunpack.c.l.b16 %v517
    %v1929 = vunpack.c.h.b16 %v517
    %v1930 = vunpack.c.l.b16 %v518
    %v1931 = vunpack.c.h.b16 %v518
    %v1932 = vunpack.c.l.b16 %v519
    %v1933 = vunpack.c.h.b16 %v519
    %v1934 = vunpack.c.l.b16 %v520
    %v1935 = vunpack.c.h.b16 %v520
    %v1936 = vunpack.c.l.b16 %v521
    %v1937 = vunpack.c.h.b16 %v521
    %v1938 = vunpack.c.l.b16 %v522
    %v1939 = vunpack.c.h.b16 %v522
    %v1940 = vunpack.c.l.b16 %v523
    %v1941 = vunpack.c.h.b16 %v523
    %v1942 = vunpack.c.l.b16 %v524
    %v1943 = vunpack.c.h.b16 %v524
    %v1944 = vunpack.c.l.b16 %v525
    %v1945 = vunpack.c.h.b16 %v525
    %v1946 = vunpack.c.l.b16 %v526
    %v1947 = vunpack.c.h.b16 %v526
    %v1948 = vunpack.c.l.b16 %v527
    %v1949 = vunpack.c.h.b16 %v527
    %v1950 = vunpack.c.l.b16 %v528
    %v1951 = vunpack.c.h.b16 %v528
    %v1952 = vunpack.c.l.b16 %v529
    %v1953 = vunpack.c.h.b16 %v529
    %v1954 = vunpack.c.l.b16 %v530
    %v1955 = vunpack.c.h.b16 %v530
    %v1956 = vunpack.c.l.b16 %v531
    %v1957 = vunpack.c.h.b16 %v531
    %v1958 = vunpack.c.l.b16 %v532
    %v1959 = vunpack.c.h.b16 %v532
    %v1960 = vunpack.c.l.b16 %v533
    %v1961 = vunpack.c.h.b16 %v533
    %v1962 = vunpack.c.l.b16 %v534
    %v1963 = vunpack.c.h.b16 %v534
    %v1964 = vunpack.c.l.b16 %v535
    %v1965 = vunpack.c.h.b16 %v535
    %v1966 = vunpack.c.l.b16 %v536
    %v1967 = vunpack.c.h.b16 %v536
    %v1968 = vunpack.c.l.b16 %v537
    %v1969 = vunpack.c.h.b16 %v537
    %v1970 = vunpack.c.l.b16 %v538
    %v1971 = vunpack.c.h.b16 %v538
    %v1972 = vunpack.c.l.b16 %v539
    %v1973 = vunpack.c.h.b16 %v539
    %v1974 = vunpack.c.l.b16 %v540
    %v1975 = vunpack.c.h.b16 %v540
    %v1976 = vunpack.c.l.b16 %v541
    %v1977 = vunpack.c.h.b16 %v541
    %v1978 = vunpack.c.l.b16 %v542
    %v1979 = vunpack.c.h.b16 %v542
    %v1980 = vunpack.c.l.b16 %v543
    %v1981 = vunpack.c.h.b16 %v543
    %v1982 = vunpack.c.l.b16 %v544
    %v1983 = vunpack.c.h.b16 %v544
    %v1984 = vunpack.c.l.b16 %v545
    %v1985 = vunpack.c.h.b16 %v545
    %v1986 = vunpack.c.l.b16 %v546
    %v1987 = vunpack.c.h.b16 %v546
    %v1988 = vunpack.c.l.b16 %v547
    %v1989 = vunpack.c.h.b16 %v547
    %v1990 = vunpack.c.l.b16 %v548
    %v1991 = vunpack.c.h.b16 %v548
    %v1992 = vunpack.c.l.b16 %v549
    %v1993 = vunpack.c.h.b16 %v549
    %v1994 = vunpack.c.l.b16 %v550
    %v1995 = vunpack.c.h.b16 %v550
    %v1996 = vunpack.c.l.b16 %v551
    %v1997 = vunpack.c.h.b16 %v551
    %v1998 = vunpack.c.l.b16 %v552
    %v1999 = vunpack.c.h.b16 %v552
    %v2000 = vunpack.c.l.b16 %v553
    %v2001 = vunpack.c.h.b16 %v553
    %v2002 = vunpack.c.l.b16 %v554
    %v2003 = vunpack.c.h.b16 %v554
    %v2004 = vunpack.c.l.b16 %v555
    %v2005 = vunpack.c.h.b16 %v555
    %v2006 = vunpack.c.l.b16 %v556
    %v2007 = vunpack.c.h.b16 %v556
    %v2008 = vunpack.c.l.b16 %v557
    %v2009 = vunpack.c.h.b16 %v557
    %v2010 = vunpack.c.l.b16 %v558
    %v2011 = vunpack.c.h.b16 %v558
    %v2012 = vunpack.c.l.b16 %v559
    %v2013 = vunpack.c.h.b16 %v559
    %v2014 = vunpack.c.l.b16 %v560
    %v2015 = vunpack.c.h.b16 %v560
    %v2016 = vunpack.c.l.b16 %v561
    %v2017 = vunpack.c.h.b16 %v561
    %v2018 = vunpack.c.l.b16 %v562
    %v2019 = vunpack.c.h.b16 %v562
    %v2020 = vunpack.c.l.b16 %v563
    %v2021 = vunpack.c.h.b16 %v563
    %v2022 = vunpack.c.l.b16 %v564
    %v2023 = vunpack.c.h.b16 %v564
    %v2024 = vunpack.c.l.b16 %v565
    %v2025 = vunpack.c.h.b16 %v565
    %v2026 = vunpack.c.l.b16 %v566
    %v2027 = vunpack.c.h.b16 %v566
    %v2028 = vunpack.c.l.b16 %v567
    %v2029 = vunpack.c.h.b16 %v567
    %v2030 = vunpack.c.l.b16 %v568
    %v2031 = vunpack.c.h.b16 %v568
    %v2032 = vunpack.c.l.b16 %v569
    %v2033 = vunpack.c.h.b16 %v569
    %v2034 = vunpack.c.l.b16 %v570
    %v2035 = vunpack.c.h.b16 %v570
    %v2036 = vunpack.c.l.b16 %v571
    %v2037 = vunpack.c.h.b16 %v571
    %v2038 = vunpack.c.l.b16 %v572
    %v2039 = vunpack.c.h.b16 %v572
    %v2040 = vunpack.c.l.b16 %v573
    %v2041 = vunpack.c.h.b16 %v573
    %v2042 = vunpack.c.l.b16 %v574
    %v2043 = vunpack.c.h.b16 %v574
    %v2044 = vunpack.c.l.b16 %v575
    %v2045 = vunpack.c.h.b16 %v575
    %v2046 = vunpack.c.l.b16 %v576
    %v2047 = vunpack.c.h.b16 %v576
    %v2048 = vunpack.c.l.b16 %v577
    %v2049 = vunpack.c.h.b16 %v577
    %v2050 = vunpack.c.l.b16 %v578
    %v2051 = vunpack.c.h.b16 %v578
    %v2052 = vunpack.c.l.b16 %v579
    %v2053 = vunpack.c.h.b16 %v579
    %v2054 = vunpack.c.l.b16 %v580
    %v2055 = vunpack.c.h.b16 %v580
    %v2056 = vunpack.c.l.b16 %v581
    %v2057 = vunpack.c.h.b16 %v581
    %v2058 = vunpack.c.l.b16 %v582
    %v2059 = vunpack.c.h.b16 %v582
    %v2060 = vunpack.c.l.b16 %v583
    %v2061 = vunpack.c.h.b16 %v583
    %v2062 = vunpack.c.l.b16 %v584
    %v2063 = vunpack.c.h.b16 %v584
    %v2064 = vunpack.c.l.b16 %v585
    %v2065 = vunpack.c.h.b16 %v585
    %v2066 = vunpack.c.l.b16 %v586
    %v2067 = vunpack.c.h.b16 %v586
    %v2068 = vunpack.c.l.b16 %v587
    %v2069 = vunpack.c.h.b16 %v587
    %v2070 = vunpack.c.l.b16 %v588
    %v2071 = vunpack.c.h.b16 %v588
    %v2072 = vunpack.c.l.b16 %v589
    %v2073 = vunpack.c.h.b16 %v589
    %v2074 = vunpack.c.l.b16 %v590
    %v2075 = vunpack.c.h.b16 %v590
    %v2076 = vunpack.c.l.b16 %v591
    %v2077 = vunpack.c.h.b16 %v591
    %v2078 = vunpack.c.l.b16 %v592
    %v2079 = vunpack.c.h.b16 %v592
    %v2080 = vunpack.c.l.b16 %v593
    %v2081 = vunpack.c.h.b16 %v593
    %v2082 = vunpack.c.l.b16 %v594
    %v2083 = vunpack.c.h.b16 %v594
    %v2084 = vunpack.c.l.b16 %v595
    %v2085 = vunpack.c.h.b16 %v595
    %v2086 = vunpack.c.l.b16 %v596
    %v2087 = vunpack.c.h.b16 %v596
    %v2088 = vunpack.c.l.b16 %v597
    %v2089 = vunpack.c.h.b16 %v597
    %v2090 = vunpack.c.l.b16 %v598
    %v2091 = vunpack.c.h.b16 %v598
    %v2092 = vunpack.c.l.b16 %v599
    %v2093 = vunpack.c.h.b16 %v599
    %v2094 = vunpack.c.l.b16 %v600
    %v2095 = vunpack.c.h.b16 %v600
    %v2096 = vunpack.c.l.b16 %v601
    %v2097 = vunpack.c.h.b16 %v601
    %v2098 = vunpack.c.l.b16 %v602
    %v2099 = vunpack.c.h.b16 %v602
    %v2100 = vunpack.c.l.b16 %v603
    %v2101 = vunpack.c.h.b16 %v603
    %v2102 = vunpack.c.l.b16 %v604
    %v2103 = vunpack.c.h.b16 %v604
    %v2104 = vunpack.c.l.b16 %v605
    %v2105 = vunpack.c.h.b16 %v605
    %v2106 = vunpack.c.l.b16 %v606
    %v2107 = vunpack.c.h.b16 %v606
    %v2108 = vunpack.c.l.b16 %v607
    %v2109 = vunpack.c.h.b16 %v607
    %v2110 = vunpack.c.l.b16 %v608
    %v2111 = vunpack.c.h.b16 %v608
    %v2112 = vunpack.c.l.b16 %v609
    %v2113 = vunpack.c.h.b16 %v609
    %v2114 = vunpack.c.l.b16 %v610
    %v2115 = vunpack.c.h.b16 %v610
    %v2116 = vunpack.c.l.b16 %v611
    %v2117 = vunpack.c.h.b16 %v611
    %v2118 = vunpack.c.l.b16 %v612
    %v2119 = vunpack.c.h.b16 %v612
    %v2120 = vunpack.c.l.b16 %v613
    %v2121 = vunpack.c.h.b16 %v613
    %v2122 = vunpack.c.l.b16 %v614
    %v2123 = vunpack.c.h.b16 %v614
    %v2124 = vunpack.c.l.b16 %v615
    %v2125 = vunpack.c.h.b16 %v615
    %v2126 = vunpack.c.l.b16 %v616
    %v2127 = vunpack.c.h.b16 %v616
    %v2128 = vunpack.c.l.b16 %v617
    %v2129 = vunpack.c.h.b16 %v617
    %v2130 = vunpack.c.l.b16 %v618
    %v2131 = vunpack.c.h.b16 %v618
    %v2132 = vunpack.c.l.b16 %v619
    %v2133 = vunpack.c.h.b16 %v619
    %v2134 = vunpack.c.l.b16 %v620
    %v2135 = vunpack.c.h.b16 %v620
    %v2136 = vunpack.c.l.b16 %v621
    %v2137 = vunpack.c.h.b16 %v621
    %v2138 = vunpack.c.l.b16 %v622
    %v2139 = vunpack.c.h.b16 %v622
    %v2140 = vunpack.c.l.b16 %v623
    %v2141 = vunpack.c.h.b16 %v623
    %v2142 = vunpack.c.l.b16 %v624
    %v2143 = vunpack.c.h.b16 %v624
    %v2144 = vunpack.c.l.b16 %v625
    %v2145 = vunpack.c.h.b16 %v625
    %v2146 = vunpack.c.l.b16 %v626
    %v2147 = vunpack.c.h.b16 %v626
    %v2148 = vunpack.c.l.b16 %v627
    %v2149 = vunpack.c.h.b16 %v627
    %v2150 = vunpack.c.l.b16 %v628
    %v2151 = vunpack.c.h.b16 %v628
    %v2152 = vunpack.c.l.b16 %v629
    %v2153 = vunpack.c.h.b16 %v629
    %v2154 = vunpack.c.l.b16 %v630
    %v2155 = vunpack.c.h.b16 %v630
    %v2156 = vunpack.c.l.b16 %v631
    %v2157 = vunpack.c.h.b16 %v631
    %v2158 = vunpack.c.l.b16 %v632
    %v2159 = vunpack.c.h.b16 %v632
    %v2160 = vunpack.c.l.b16 %v633
    %v2161 = vunpack.c.h.b16 %v633
    %v2162 = vunpack.c.l.b16 %v634
    %v2163 = vunpack.c.h.b16 %v634
    %v2164 = vunpack.c.l.b16 %v635
    %v2165 = vunpack.c.h.b16 %v635
    %v2166 = vunpack.c.l.b16 %v636
    %v2167 = vunpack.c.h.b16 %v636
    %v2168 = vunpack.c.l.b16 %v637
    %v2169 = vunpack.c.h.b16 %v637
    %v2170 = vunpack.c.l.b16 %v638
    %v2171 = vunpack.c.h.b16 %v638
    %v2172 = vunpack.c.l.b16 %v639
    %v2173 = vunpack.c.h.b16 %v639
    %v2174 = vunpack.c.l.b16 %v640
    %v2175 = vunpack.c.h.b16 %v640
    %v2176 = vunpack.c.l.b16 %v641
    %v2177 = vunpack.c.h.b16 %v641
    %v2178 = vunpack.c.l.b16 %v642
    %v2179 = vunpack.c.h.b16 %v642
    %v2180 = vunpack.c.l.b16 %v643
    %v2181 = vunpack.c.h.b16 %v643
    %v2182 = vunpack.c.l.b16 %v644
    %v2183 = vunpack.c.h.b16 %v644
    %v2184 = vunpack.c.l.b16 %v645
    %v2185 = vunpack.c.h.b16 %v645
    %v2186 = vunpack.c.l.b16 %v646
    %v2187 = vunpack.c.h.b16 %v646
    %v2188 = vunpack.c.l.b16 %v647
    %v2189 = vunpack.c.h.b16 %v647
    %v2190 = vunpack.c.l.b16 %v648
    %v2191 = vunpack.c.h.b16 %v648
    %v2192 = vunpack.c.l.b16 %v649
    %v2193 = vunpack.c.h.b16 %v649
    %v2194 = vunpack.c.l.b16 %v650
    %v2195 = vunpack.c.h.b16 %v650
    %v2196 = vunpack.c.l.b16 %v651
    %v2197 = vunpack.c.h.b16 %v651
    %v2198 = vunpack.c.l.b16 %v652
    %v2199 = vunpack.c.h.b16 %v652
    %v2200 = vunpack.c.l.b16 %v653
    %v2201 = vunpack.c.h.b16 %v653
    %v2202 = vunpack.c.l.b16 %v654
    %v2203 = vunpack.c.h.b16 %v654
    %v2204 = vunpack.c.l.b16 %v655
    %v2205 = vunpack.c.h.b16 %v655
    %v2206 = vunpack.c.l.b16 %v656
    %v2207 = vunpack.c.h.b16 %v656
    %v2208 = vunpack.c.l.b16 %v657
    %v2209 = vunpack.c.h.b16 %v657
    %v2210 = vunpack.c.l.b16 %v658
    %v2211 = vunpack.c.h.b16 %v658
    %v2212 = vunpack.c.l.b16 %v659
    %v2213 = vunpack.c.h.b16 %v659
    %v2214 = vunpack.c.l.b16 %v660
    %v2215 = vunpack.c.h.b16 %v660
    %v2216 = vunpack.c.l.b16 %v661
    %v2217 = vunpack.c.h.b16 %v661
    %v2218 = vunpack.c.l.b16 %v662
    %v2219 = vunpack.c.h.b16 %v662
    %v2220 = vunpack.c.l.b16 %v663
    %v2221 = vunpack.c.h.b16 %v663
    %v2222 = vunpack.c.l.b16 %v664
    %v2223 = vunpack.c.h.b16 %v664
    %v2224 = vunpack.c.l.b16 %v665
    %v2225 = vunpack.c.h.b16 %v665
    %v2226 = vunpack.c.l.b16 %v666
    %v2227 = vunpack.c.h.b16 %v666
    %v2228 = vunpack.c.l.b16 %v667
    %v2229 = vunpack.c.h.b16 %v667
    %v2230 = vunpack.c.l.b16 %v668
    %v2231 = vunpack.c.h.b16 %v668
    %v2232 = vunpack.c.l.b16 %v669
    %v2233 = vunpack.c.h.b16 %v669
    %v2234 = vunpack.c.l.b16 %v670
    %v2235 = vunpack.c.h.b16 %v670
    %v2236 = vunpack.c.l.b16 %v671
    %v2237 = vunpack.c.h.b16 %v671
    %v2238 = vunpack.c.l.b16 %v672
    %v2239 = vunpack.c.h.b16 %v672
    %v2240 = vunpack.c.l.b16 %v673
    %v2241 = vunpack.c.h.b16 %v673
    %v2242 = vunpack.c.l.b16 %v674
    %v2243 = vunpack.c.h.b16 %v674
    %v2244 = vunpack.c.l.b16 %v675
    %v2245 = vunpack.c.h.b16 %v675
    %v2246 = vunpack.c.l.b16 %v676
    %v2247 = vunpack.c.h.b16 %v676
    %v2248 = vunpack.c.l.b16 %v677
    %v2249 = vunpack.c.h.b16 %v677
    %v2250 = vunpack.c.l.b16 %v678
    %v2251 = vunpack.c.h.b16 %v678
    %v2252 = vunpack.c.l.b16 %v679
    %v2253 = vunpack.c.h.b16 %v679
    %v2254 = vunpack.c.l.b16 %v680
    %v2255 = vunpack.c.h.b16 %v680
    %v2256 = vunpack.c.l.b16 %v681
    %v2257 = vunpack.c.h.b16 %v681
    %v2258 = vunpack.c.l.b16 %v682
    %v2259 = vunpack.c.h.b16 %v682
    %v2260 = vunpack.c.l.b16 %v683
    %v2261 = vunpack.c.h.b16 %v683
    %v2262 = vpack.c.b16 %v1246, %v1238
    %v2263 = vpack.c.b16 %v1247, %v1239
    %v2264 = vpack.c.b16 %v1248, %v1240
    %v2265 = vpack.c.b16 %v1249, %v1241
    %v2266 = vpack.c.b16 %v1250, %v1242
    %v2267 = vpack.c.b16 %v1251, %v1243
    %v2268 = vpack.c.b16 %v1252, %v1244
    %v2269 = vpack.c.b16 %v1253, %v1245
    %v2270 = vpack.c.b16 %v1262, %v1254
    %v2271 = vpack.c.b16 %v1263, %v1255
    %v2272 = vpack.c.b16 %v1264, %v1256
    %v2273 = vpack.c.b16 %v1265, %v1257
    %v2274 = vpack.c.b16 %v1266, %v1258
    %v2275 = vpack.c.b16 %v1267, %v1259
    %v2276 = vpack.c.b16 %v1268, %v1260
    %v2277 = vpack.c.b16 %v1269, %v1261
    %v2278 = vpack.c.b16 %v1278, %v1270
    %v2279 = vpack.c.b16 %v1279, %v1271
    %v2280 = vpack.c.b16 %v1280, %v1272
    %v2281 = vpack.c.b16 %v1281, %v1273
    %v2282 = vpack.c.b16 %v1282, %v1274
    %v2283 = vpack.c.b16 %v1283, %v1275
    %v2284 = vpack.c.b16 %v1284, %v1276
    %v2285 = vpack.c.b16 %v1285, %v1277
    %v2286 = vpack.c.b16 %v1294, %v1286
    %v2287 = vpack.c.b16 %v1295, %v1287
    %v2288 = vpack.c.b16 %v1296, %v1288
    %v2289 = vpack.c.b16 %v1297, %v1289
    %v2290 = vpack.c.b16 %v1298, %v1290
    %v2291 = vpack.c.b16 %v1299, %v1291
    %v2292 = vpack.c.b16 %v1300, %v1292
    %v2293 = vpack.c.b16 %v1301, %v1293
    %v2294 = vpack.c.b16 %v1310, %v1302
    %v2295 = vpack.c.b16 %v1311, %v1303
    %v2296 = vpack.c.b16 %v1312, %v1304
    %v2297 = vpack.c.b16 %v1313, %v1305
    %v2298 = vpack.c.b16 %v1314, %v1306
    %v2299 = vpack.c.b16 %v1315, %v1307
    %v2300 = vpack.c.b16 %v1316, %v1308
    %v2301 = vpack.c.b16 %v1317, %v1309
    %v2302 = vpack.c.b16 %v1326, %v1318
    %v2303 = vpack.c.b16 %v1327, %v1319
    %v2304 = vpack.c.b16 %v1328, %v1320
    %v2305 = vpack.c.b16 %v1329, %v1321
    %v2306 = vpack.c.b16 %v1330, %v1322
    %v2307 = vpack.c.b16 %v1331, %v1323
    %v2308 = vpack.c.b16 %v1332, %v1324
    %v2309 = vpack.c.b16 %v1333, %v1325
    %v2310 = vpack.c.b16 %v1342, %v1334
    %v2311 = vpack.c.b16 %v1343, %v1335
    %v2312 = vpack.c.b16 %v1344, %v1336
    %v2313 = vpack.c.b16 %v1345, %v1337
    %v2314 = vpack.c.b16 %v1346, %v1338
    %v2315 = vpack.c.b16 %v1347, %v1339
    %v2316 = vpack.c.b16 %v1348, %v1340
    %v2317 = vpack.c.b16 %v1349, %v1341
    %v2318 = vpack.c.b16 %v1358, %v1350
    %v2319 = vpack.c.b16 %v1359, %v1351
    %v2320 = vpack.c.b16 %v1360, %v1352
    %v2321 = vpack.c.b16 %v1361, %v1353
    %v2322 = vpack.c.b16 %v1362, %v1354
    %v2323 = vpack.c.b16 %v1363, %v1355
    %v2324 = vpack.c.b16 %v1364, %v1356
    %v2325 = vpack.c.b16 %v1365, %v1357
    %v2326 = vpack.c.b16 %v1374, %v1366
    %v2327 = vpack.c.b16 %v1375, %v1367
    %v2328 = vpack.c.b16 %v1376, %v1368
    %v2329 = vpack.c.b16 %v1377, %v1369
    %v2330 = vpack.c.b16 %v1378, %v1370
    %v2331 = vpack.c.b16 %v1379, %v1371
    %v2332 = vpack.c.b16 %v1380, %v1372
    %v2333 = vpack.c.b16 %v1381, %v1373
    %v2334 = vpack.c.b16 %v1390, %v1382
    %v2335 = vpack.c.b16 %v1391, %v1383
    %v2336 = vpack.c.b16 %v1392, %v1384
    %v2337 = vpack.c.b16 %v1393, %v1385
    %v2338 = vpack.c.b16 %v1394, %v1386
    %v2339 = vpack.c.b16 %v1395, %v1387
    %v2340 = vpack.c.b16 %v1396, %v1388
    %v2341 = vpack.c.b16 %v1397, %v1389
    %v2342 = vpack.c.b16 %v1406, %v1398
    %v2343 = vpack.c.b16 %v1407, %v1399
    %v2344 = vpack.c.b16 %v1408, %v1400
    %v2345 = vpack.c.b16 %v1409, %v1401
    %v2346 = vpack.c.b16 %v1410, %v1402
    %v2347 = vpack.c.b16 %v1411, %v1403
    %v2348 = vpack.c.b16 %v1412, %v1404
    %v2349 = vpack.c.b16 %v1413, %v1405
    %v2350 = vpack.c.b16 %v1422, %v1414
    %v2351 = vpack.c.b16 %v1423, %v1415
    %v2352 = vpack.c.b16 %v1424, %v1416
    %v2353 = vpack.c.b16 %v1425, %v1417
    %v2354 = vpack.c.b16 %v1426, %v1418
    %v2355 = vpack.c.b16 %v1427, %v1419
    %v2356 = vpack.c.b16 %v1428, %v1420
    %v2357 = vpack.c.b16 %v1429, %v1421
    %v2358 = vpack.c.b16 %v1438, %v1430
    %v2359 = vpack.c.b16 %v1439, %v1431
    %v2360 = vpack.c.b16 %v1440, %v1432
    %v2361 = vpack.c.b16 %v1441, %v1433
    %v2362 = vpack.c.b16 %v1442, %v1434
    %v2363 = vpack.c.b16 %v1443, %v1435
    %v2364 = vpack.c.b16 %v1444, %v1436
    %v2365 = vpack.c.b16 %v1445, %v1437
    %v2366 = vpack.c.b16 %v1454, %v1446
    %v2367 = vpack.c.b16 %v1455, %v1447
    %v2368 = vpack.c.b16 %v1456, %v1448
    %v2369 = vpack.c.b16 %v1457, %v1449
    %v2370 = vpack.c.b16 %v1458, %v1450
    %v2371 = vpack.c.b16 %v1459, %v1451
    %v2372 = vpack.c.b16 %v1460, %v1452
    %v2373 = vpack.c.b16 %v1461, %v1453
    %v2374 = vpack.c.b16 %v1470, %v1462
    %v2375 = vpack.c.b16 %v1471, %v1463
    %v2376 = vpack.c.b16 %v1472, %v1464
    %v2377 = vpack.c.b16 %v1473, %v1465
    %v2378 = vpack.c.b16 %v1474, %v1466
    %v2379 = vpack.c.b16 %v1475, %v1467
    %v2380 = vpack.c.b16 %v1476, %v1468
    %v2381 = vpack.c.b16 %v1477, %v1469
    %v2382 = vpack.c.b16 %v1486, %v1478
    %v2383 = vpack.c.b16 %v1487, %v1479
    %v2384 = vpack.c.b16 %v1488, %v1480
    %v2385 = vpack.c.b16 %v1489, %v1481
    %v2386 = vpack.c.b16 %v1490, %v1482
    %v2387 = vpack.c.b16 %v1491, %v1483
    %v2388 = vpack.c.b16 %v1492, %v1484
    %v2389 = vpack.c.b16 %v1493, %v1485
    %v2390 = vpack.c.b16 %v1502, %v1494
    %v2391 = vpack.c.b16 %v1503, %v1495
    %v2392 = vpack.c.b16 %v1504, %v1496
    %v2393 = vpack.c.b16 %v1505, %v1497
    %v2394 = vpack.c.b16 %v1506, %v1498
    %v2395 = vpack.c.b16 %v1507, %v1499
    %v2396 = vpack.c.b16 %v1508, %v1500
    %v2397 = vpack.c.b16 %v1509, %v1501
    %v2398 = vpack.c.b16 %v1518, %v1510
    %v2399 = vpack.c.b16 %v1519, %v1511
    %v2400 = vpack.c.b16 %v1520, %v1512
    %v2401 = vpack.c.b16 %v1521, %v1513
    %v2402 = vpack.c.b16 %v1522, %v1514
    %v2403 = vpack.c.b16 %v1523, %v1515
    %v2404 = vpack.c.b16 %v1524, %v1516
    %v2405 = vpack.c.b16 %v1525, %v1517
    %v2406 = vpack.c.b16 %v1534, %v1526
    %v2407 = vpack.c.b16 %v1535, %v1527
    %v2408 = vpack.c.b16 %v1536, %v1528
    %v2409 = vpack.c.b16 %v1537, %v1529
    %v2410 = vpack.c.b16 %v1538, %v1530
    %v2411 = vpack.c.b16 %v1539, %v1531
    %v2412 = vpack.c.b16 %v1540, %v1532
    %v2413 = vpack.c.b16 %v1541, %v1533
    %v2414 = vpack.c.b16 %v1550, %v1542
    %v2415 = vpack.c.b16 %v1551, %v1543
    %v2416 = vpack.c.b16 %v1552, %v1544
    %v2417 = vpack.c.b16 %v1553, %v1545
    %v2418 = vpack.c.b16 %v1554, %v1546
    %v2419 = vpack.c.b16 %v1555, %v1547
    %v2420 = vpack.c.b16 %v1556, %v1548
    %v2421 = vpack.c.b16 %v1557, %v1549
    %v2422 = vpack.c.b16 %v1566, %v1558
    %v2423 = vpack.c.b16 %v1567, %v1559
    %v2424 = vpack.c.b16 %v1568, %v1560
    %v2425 = vpack.c.b16 %v1569, %v1561
    %v2426 = vpack.c.b16 %v1570, %v1562
    %v2427 = vpack.c.b16 %v1571, %v1563
    %v2428 = vpack.c.b16 %v1572, %v1564
    %v2429 = vpack.c.b16 %v1573, %v1565
    %v2430 = vpack.c.b16 %v1582, %v1574
    %v2431 = vpack.c.b16 %v1583, %v1575
    %v2432 = vpack.c.b16 %v1584, %v1576
    %v2433 = vpack.c.b16 %v1585, %v1577
    %v2434 = vpack.c.b16 %v1586, %v1578
    %v2435 = vpack.c.b16 %v1587, %v1579
    %v2436 = vpack.c.b16 %v1588, %v1580
    %v2437 = vpack.c.b16 %v1589, %v1581
    %v2438 = vpack.c.b16 %v1598, %v1590
    %v2439 = vpack.c.b16 %v1599, %v1591
    %v2440 = vpack.c.b16 %v1600, %v1592
    %v2441 = vpack.c.b16 %v1601, %v1593
    %v2442 = vpack.c.b16 %v1602, %v1594
    %v2443 = vpack.c.b16 %v1603, %v1595
    %v2444 = vpack.c.b16 %v1604, %v1596
    %v2445 = vpack.c.b16 %v1605, %v1597
    %v2446 = vpack.c.b16 %v1614, %v1606
    %v2447 = vpack.c.b16 %v1615, %v1607
    %v2448 = vpack.c.b16 %v1616, %v1608
    %v2449 = vpack.c.b16 %v1617, %v1609
    %v2450 = vpack.c.b16 %v1618, %v1610
    %v2451 = vpack.c.b16 %v1619, %v1611
    %v2452 = vpack.c.b16 %v1620, %v1612
    %v2453 = vpack.c.b16 %v1621, %v1613
    %v2454 = vpack.c.b16 %v1630, %v1622
    %v2455 = vpack.c.b16 %v1631, %v1623
    %v2456 = vpack.c.b16 %v1632, %v1624
    %v2457 = vpack.c.b16 %v1633, %v1625
    %v2458 = vpack.c.b16 %v1634, %v1626
    %v2459 = vpack.c.b16 %v1635, %v1627
    %v2460 = vpack.c.b16 %v1636, %v1628
    %v2461 = vpack.c.b16 %v1637, %v1629
    %v2462 = vpack.c.b16 %v1646, %v1638
    %v2463 = vpack.c.b16 %v1647, %v1639
    %v2464 = vpack.c.b16 %v1648, %v1640
    %v2465 = vpack.c.b16 %v1649, %v1641
    %v2466 = vpack.c.b16 %v1650, %v1642
    %v2467 = vpack.c.b16 %v1651, %v1643
    %v2468 = vpack.c.b16 %v1652, %v1644
    %v2469 = vpack.c.b16 %v1653, %v1645
    %v2470 = vpack.c.b16 %v1662, %v1654
    %v2471 = vpack.c.b16 %v1663, %v1655
    %v2472 = vpack.c.b16 %v1664, %v1656
    %v2473 = vpack.c.b16 %v1665, %v1657
    %v2474 = vpack.c.b16 %v1666, %v1658
    %v2475 = vpack.c.b16 %v1667, %v1659
    %v2476 = vpack.c.b16 %v1668, %v1660
    %v2477 = vpack.c.b16 %v1669, %v1661
    %v2478 = vpack.c.b16 %v1678, %v1670
    %v2479 = vpack.c.b16 %v1679, %v1671
    %v2480 = vpack.c.b16 %v1680, %v1672
    %v2481 = vpack.c.b16 %v1681, %v1673
    %v2482 = vpack.c.b16 %v1682, %v1674
    %v2483 = vpack.c.b16 %v1683, %v1675
    %v2484 = vpack.c.b16 %v1684, %v1676
    %v2485 = vpack.c.b16 %v1685, %v1677
    %v2486 = vpack.c.b16 %v1694, %v1686
    %v2487 = vpack.c.b16 %v1695, %v1687
    %v2488 = vpack.c.b16 %v1696, %v1688
    %v2489 = vpack.c.b16 %v1697, %v1689
    %v2490 = vpack.c.b16 %v1698, %v1690
    %v2491 = vpack.c.b16 %v1699, %v1691
    %v2492 = vpack.c.b16 %v1700, %v1692
    %v2493 = vpack.c.b16 %v1701, %v1693
    %v2494 = vpack.c.b16 %v1710, %v1702
    %v2495 = vpack.c.b16 %v1711, %v1703
    %v2496 = vpack.c.b16 %v1712, %v1704
    %v2497 = vpack.c.b16 %v1713, %v1705
    %v2498 = vpack.c.b16 %v1714, %v1706
    %v2499 = vpack.c.b16 %v1715, %v1707
    %v2500 = vpack.c.b16 %v1716, %v1708
    %v2501 = vpack.c.b16 %v1717, %v1709
    %v2502 = vpack.c.b16 %v1726, %v1718
    %v2503 = vpack.c.b16 %v1727, %v1719
    %v2504 = vpack.c.b16 %v1728, %v1720
    %v2505 = vpack.c.b16 %v1729, %v1721
    %v2506 = vpack.c.b16 %v1730, %v1722
    %v2507 = vpack.c.b16 %v1731, %v1723
    %v2508 = vpack.c.b16 %v1732, %v1724
    %v2509 = vpack.c.b16 %v1733, %v1725
    %v2510 = vpack.c.b16 %v1742, %v1734
    %v2511 = vpack.c.b16 %v1743, %v1735
    %v2512 = vpack.c.b16 %v1744, %v1736
    %v2513 = vpack.c.b16 %v1745, %v1737
    %v2514 = vpack.c.b16 %v1746, %v1738
    %v2515 = vpack.c.b16 %v1747, %v1739
    %v2516 = vpack.c.b16 %v1748, %v1740
    %v2517 = vpack.c.b16 %v1749, %v1741
    %v2518 = vpack.c.b16 %v1758, %v1750
    %v2519 = vpack.c.b16 %v1759, %v1751
    %v2520 = vpack.c.b16 %v1760, %v1752
    %v2521 = vpack.c.b16 %v1761, %v1753
    %v2522 = vpack.c.b16 %v1762, %v1754
    %v2523 = vpack.c.b16 %v1763, %v1755
    %v2524 = vpack.c.b16 %v1764, %v1756
    %v2525 = vpack.c.b16 %v1765, %v1757
    %v2526 = vpack.c.b16 %v1774, %v1766
    %v2527 = vpack.c.b16 %v1775, %v1767
    %v2528 = vpack.c.b16 %v1776, %v1768
    %v2529 = vpack.c.b16 %v1777, %v1769
    %v2530 = vpack.c.b16 %v1778, %v1770
    %v2531 = vpack.c.b16 %v1779, %v1771
    %v2532 = vpack.c.b16 %v1780, %v1772
    %v2533 = vpack.c.b16 %v1781, %v1773
    %v2534 = vpack.c.b16 %v1790, %v1782
    %v2535 = vpack.c.b16 %v1791, %v1783
    %v2536 = vpack.c.b16 %v1792, %v1784
    %v2537 = vpack.c.b16 %v1793, %v1785
    %v2538 = vpack.c.b16 %v1794, %v1786
    %v2539 = vpack.c.b16 %v1795, %v1787
    %v2540 = vpack.c.b16 %v1796, %v1788
    %v2541 = vpack.c.b16 %v1797, %v1789
    %v2542 = vpack.c.b16 %v1806, %v1798
    %v2543 = vpack.c.b16 %v1807, %v1799
    %v2544 = vpack.c.b16 %v1808, %v1800
    %v2545 = vpack.c.b16 %v1809, %v1801
    %v2546 = vpack.c.b16 %v1810, %v1802
    %v2547 = vpack.c.b16 %v1811, %v1803
    %v2548 = vpack.c.b16 %v1812, %v1804
    %v2549 = vpack.c.b16 %v1813, %v1805
    %v2550 = vpack.c.b16 %v1822, %v1814
    %v2551 = vpack.c.b16 %v1823, %v1815
    %v2552 = vpack.c.b16 %v1824, %v1816
    %v2553 = vpack.c.b16 %v1825, %v1817
    %v2554 = vpack.c.b16 %v1826, %v1818
    %v2555 = vpack.c.b16 %v1827, %v1819
    %v2556 = vpack.c.b16 %v1828, %v1820
    %v2557 = vpack.c.b16 %v1829, %v1821
    %v2558 = vpack.c.b16 %v1838, %v1830
    %v2559 = vpack.c.b16 %v1839, %v1831
    %v2560 = vpack.c.b16 %v1840, %v1832
    %v2561 = vpack.c.b16 %v1841, %v1833
    %v2562 = vpack.c.b16 %v1842, %v1834
    %v2563 = vpack.c.b16 %v1843, %v1835
    %v2564 = vpack.c.b16 %v1844, %v1836
    %v2565 = vpack.c.b16 %v1845, %v1837
    %v2566 = vpack.c.b16 %v1854, %v1846
    %v2567 = vpack.c.b16 %v1855, %v1847
    %v2568 = vpack.c.b16 %v1856, %v1848
    %v2569 = vpack.c.b16 %v1857, %v1849
    %v2570 = vpack.c.b16 %v1858, %v1850
    %v2571 = vpack.c.b16 %v1859, %v1851
    %v2572 = vpack.c.b16 %v1860, %v1852
    %v2573 = vpack.c.b16 %v1861, %v1853
    %v2574 = vpack.c.b16 %v1870, %v1862
    %v2575 = vpack.c.b16 %v1871, %v1863
    %v2576 = vpack.c.b16 %v1872, %v1864
    %v2577 = vpack.c.b16 %v1873, %v1865
    %v2578 = vpack.c.b16 %v1874, %v1866
    %v2579 = vpack.c.b16 %v1875, %v1867
    %v2580 = vpack.c.b16 %v1876, %v1868
    %v2581 = vpack.c.b16 %v1877, %v1869
    %v2582 = vpack.c.b16 %v1886, %v1878
    %v2583 = vpack.c.b16 %v1887, %v1879
    %v2584 = vpack.c.b16 %v1888, %v1880
    %v2585 = vpack.c.b16 %v1889, %v1881
    %v2586 = vpack.c.b16 %v1890, %v1882
    %v2587 = vpack.c.b16 %v1891, %v1883
    %v2588 = vpack.c.b16 %v1892, %v1884
    %v2589 = vpack.c.b16 %v1893, %v1885
    %v2590 = vpack.c.b16 %v1902, %v1894
    %v2591 = vpack.c.b16 %v1903, %v1895
    %v2592 = vpack.c.b16 %v1904, %v1896
    %v2593 = vpack.c.b16 %v1905, %v1897
    %v2594 = vpack.c.b16 %v1906, %v1898
    %v2595 = vpack.c.b16 %v1907, %v1899
    %v2596 = vpack.c.b16 %v1908, %v1900
    %v2597 = vpack.c.b16 %v1909, %v1901
    %v2598 = vpack.c.b16 %v1918, %v1910
    %v2599 = vpack.c.b16 %v1919, %v1911
    %v2600 = vpack.c.b16 %v1920, %v1912
    %v2601 = vpack.c.b16 %v1921, %v1913
    %v2602 = vpack.c.b16 %v1922, %v1914
    %v2603 = vpack.c.b16 %v1923, %v1915
    %v2604 = vpack.c.b16 %v1924, %v1916
    %v2605 = vpack.c.b16 %v1925, %v1917
    %v2606 = vpack.c.b16 %v1934, %v1926
    %v2607 = vpack.c.b16 %v1935, %v1927
    %v2608 = vpack.c.b16 %v1936, %v1928
    %v2609 = vpack.c.b16 %v1937, %v1929
    %v2610 = vpack.c.b16 %v1938, %v1930
    %v2611 = vpack.c.b16 %v1939, %v1931
    %v2612 = vpack.c.b16 %v1940, %v1932
    %v2613 = vpack.c.b16 %v1941, %v1933
    %v2614 = vpack.c.b16 %v1950, %v1942
    %v2615 = vpack.c.b16 %v1951, %v1943
    %v2616 = vpack.c.b16 %v1952, %v1944
    %v2617 = vpack.c.b16 %v1953, %v1945
    %v2618 = vpack.c.b16 %v1954, %v1946
    %v2619 = vpack.c.b16 %v1955, %v1947
    %v2620 = vpack.c.b16 %v1956, %v1948
    %v2621 = vpack.c.b16 %v1957, %v1949
    %v2622 = vpack.c.b16 %v1966, %v1958
    %v2623 = vpack.c.b16 %v1967, %v1959
    %v2624 = vpack.c.b16 %v1968, %v1960
    %v2625 = vpack.c.b16 %v1969, %v1961
    %v2626 = vpack.c.b16 %v1970, %v1962
    %v2627 = vpack.c.b16 %v1971, %v1963
    %v2628 = vpack.c.b16 %v1972, %v1964
    %v2629 = vpack.c.b16 %v1973, %v1965
    %v2630 = vpack.c.b16 %v1982, %v1974
    %v2631 = vpack.c.b16 %v1983, %v1975
    %v2632 = vpack.c.b16 %v1984, %v1976
    %v2633 = vpack.c.b16 %v1985, %v1977
    %v2634 = vpack.c.b16 %v1986, %v1978
    %v2635 = vpack.c.b16 %v1987, %v1979
    %v2636 = vpack.c.b16 %v1988, %v1980
    %v2637 = vpack.c.b16 %v1989, %v1981
    %v2638 = vpack.c.b16 %v1998, %v1990
    %v2639 = vpack.c.b16 %v1999, %v1991
    %v2640 = vpack.c.b16 %v2000, %v1992
    %v2641 = vpack.c.b16 %v2001, %v1993
    %v2642 = vpack.c.b16 %v2002, %v1994
    %v2643 = vpack.c.b16 %v2003, %v1995
    %v2644 = vpack.c.b16 %v2004, %v1996
    %v2645 = vpack.c.b16 %v2005, %v1997
    %v2646 = vpack.c.b16 %v2014, %v2006
    %v2647 = vpack.c.b16 %v2015, %v2007
    %v2648 = vpack.c.b16 %v2016, %v2008
    %v2649 = vpack.c.b16 %v2017, %v2009
    %v2650 = vpack.c.b16 %v2018, %v2010
    %v2651 = vpack.c.b16 %v2019, %v2011
    %v2652 = vpack.c.b16 %v2020, %v2012
    %v2653 = vpack.c.b16 %v2021, %v2013
    %v2654 = vpack.c.b16 %v2030, %v2022
    %v2655 = vpack.c.b16 %v2031, %v2023
    %v2656 = vpack.c.b16 %v2032, %v2024
    %v2657 = vpack.c.b16 %v2033, %v2025
    %v2658 = vpack.c.b16 %v2034, %v2026
    %v2659 = vpack.c.b16 %v2035, %v2027
    %v2660 = vpack.c.b16 %v2036, %v2028
    %v2661 = vpack.c.b16 %v2037, %v2029
    %v2662 = vpack.c.b16 %v2046, %v2038
    %v2663 = vpack.c.b16 %v2047, %v2039
    %v2664 = vpack.c.b16 %v2048, %v2040
    %v2665 = vpack.c.b16 %v2049, %v2041
    %v2666 = vpack.c.b16 %v2050, %v2042
    %v2667 = vpack.c.b16 %v2051, %v2043
    %v2668 = vpack.c.b16 %v2052, %v2044
    %v2669 = vpack.c.b16 %v2053, %v2045
    %v2670 = vpack.c.b16 %v2062, %v2054
    %v2671 = vpack.c.b16 %v2063, %v2055
    %v2672 = vpack.c.b16 %v2064, %v2056
    %v2673 = vpack.c.b16 %v2065, %v2057
    %v2674 = vpack.c.b16 %v2066, %v2058
    %v2675 = vpack.c.b16 %v2067, %v2059
    %v2676 = vpack.c.b16 %v2068, %v2060
    %v2677 = vpack.c.b16 %v2069, %v2061
    %v2678 = vpack.c.b16 %v2078, %v2070
    %v2679 = vpack.c.b16 %v2079, %v2071
    %v2680 = vpack.c.b16 %v2080, %v2072
    %v2681 = vpack.c.b16 %v2081, %v2073
    %v2682 = vpack.c.b16 %v2082, %v2074
    %v2683 = vpack.c.b16 %v2083, %v2075
    %v2684 = vpack.c.b16 %v2084, %v2076
    %v2685 = vpack.c.b16 %v2085, %v2077
    %v2686 = vpack.c.b16 %v2094, %v2086
    %v2687 = vpack.c.b16 %v2095, %v2087
    %v2688 = vpack.c.b16 %v2096, %v2088
    %v2689 = vpack.c.b16 %v2097, %v2089
    %v2690 = vpack.c.b16 %v2098, %v2090
    %v2691 = vpack.c.b16 %v2099, %v2091
    %v2692 = vpack.c.b16 %v2100, %v2092
    %v2693 = vpack.c.b16 %v2101, %v2093
    %v2694 = vpack.c.b16 %v2110, %v2102
    %v2695 = vpack.c.b16 %v2111, %v2103
    %v2696 = vpack.c.b16 %v2112, %v2104
    %v2697 = vpack.c.b16 %v2113, %v2105
    %v2698 = vpack.c.b16 %v2114, %v2106
    %v2699 = vpack.c.b16 %v2115, %v2107
    %v2700 = vpack.c.b16 %v2116, %v2108
    %v2701 = vpack.c.b16 %v2117, %v2109
    %v2702 = vpack.c.b16 %v2126, %v2118
    %v2703 = vpack.c.b16 %v2127, %v2119
    %v2704 = vpack.c.b16 %v2128, %v2120
    %v2705 = vpack.c.b16 %v2129, %v2121
    %v2706 = vpack.c.b16 %v2130, %v2122
    %v2707 = vpack.c.b16 %v2131, %v2123
    %v2708 = vpack.c.b16 %v2132, %v2124
    %v2709 = vpack.c.b16 %v2133, %v2125
    %v2710 = vpack.c.b16 %v2142, %v2134
    %v2711 = vpack.c.b16 %v2143, %v2135
    %v2712 = vpack.c.b16 %v2144, %v2136
    %v2713 = vpack.c.b16 %v2145, %v2137
    %v2714 = vpack.c.b16 %v2146, %v2138
    %v2715 = vpack.c.b16 %v2147, %v2139
    %v2716 = vpack.c.b16 %v2148, %v2140
    %v2717 = vpack.c.b16 %v2149, %v2141
    %v2718 = vpack.c.b16 %v2158, %v2150
    %v2719 = vpack.c.b16 %v2159, %v2151
    %v2720 = vpack.c.b16 %v2160, %v2152
    %v2721 = vpack.c.b16 %v2161, %v2153
    %v2722 = vpack.c.b16 %v2162, %v2154
    %v2723 = vpack.c.b16 %v2163, %v2155
    %v2724 = vpack.c.b16 %v2164, %v2156
    %v2725 = vpack.c.b16 %v2165, %v2157
    %v2726 = vpack.c.b16 %v2174, %v2166
    %v2727 = vpack.c.b16 %v2175, %v2167
    %v2728 = vpack.c.b16 %v2176, %v2168
    %v2729 = vpack.c.b16 %v2177, %v2169
    %v2730 = vpack.c.b16 %v2178, %v2170
    %v2731 = vpack.c.b16 %v2179, %v2171
    %v2732 = vpack.c.b16 %v2180, %v2172
    %v2733 = vpack.c.b16 %v2181, %v2173
    %v2734 = vpack.c.b16 %v2190, %v2182
    %v2735 = vpack.c.b16 %v2191, %v2183
    %v2736 = vpack.c.b16 %v2192, %v2184
    %v2737 = vpack.c.b16 %v2193, %v2185
    %v2738 = vpack.c.b16 %v2194, %v2186
    %v2739 = vpack.c.b16 %v2195, %v2187
    %v2740 = vpack.c.b16 %v2196, %v2188
    %v2741 = vpack.c.b16 %v2197, %v2189
    %v2742 = vpack.c.b16 %v2206, %v2198
    %v2743 = vpack.c.b16 %v2207, %v2199
    %v2744 = vpack.c.b16 %v2208, %v2200
    %v2745 = vpack.c.b16 %v2209, %v2201
    %v2746 = vpack.c.b16 %v2210, %v2202
    %v2747 = vpack.c.b16 %v2211, %v2203
    %v2748 = vpack.c.b16 %v2212, %v2204
    %v2749 = vpack.c.b16 %v2213, %v2205
    %v2750 = vpack.c.b16 %v2222, %v2214
    %v2751 = vpack.c.b16 %v2223, %v2215
    %v2752 = vpack.c.b16 %v2224, %v2216
    %v2753 = vpack.c.b16 %v2225, %v2217
    %v2754 = vpack.c.b16 %v2226, %v2218
    %v2755 = vpack.c.b16 %v2227, %v2219
    %v2756 = vpack.c.b16 %v2228, %v2220
    %v2757 = vpack.c.b16 %v2229, %v2221
    %v2758 = vpack.c.b16 %v2238, %v2230
    %v2759 = vpack.c.b16 %v2239, %v2231
    %v2760 = vpack.c.b16 %v2240, %v2232
    %v2761 = vpack.c.b16 %v2241, %v2233
    %v2762 = vpack.c.b16 %v2242, %v2234
    %v2763 = vpack.c.b16 %v2243, %v2235
    %v2764 = vpack.c.b16 %v2244, %v2236
    %v2765 = vpack.c.b16 %v2245, %v2237
    %v2766 = vpack.c.b16 %v2254, %v2246
    %v2767 = vpack.c.b16 %v2255, %v2247
    %v2768 = vpack.c.b16 %v2256, %v2248
    %v2769 = vpack.c.b16 %v2257, %v2249
    %v2770 = vpack.c.b16 %v2258, %v2250
    %v2771 = vpack.c.b16 %v2259, %v2251
    %v2772 = vpack.c.b16 %v2260, %v2252
    %v2773 = vpack.c.b16 %v2261, %v2253
    %3286 = vmatprep.subr.bf16.mxu0 %v2319
    %3287 = vmatpush1.bf16.msra.mxu0 %v2318
    %3288 = vmatprep.subr.bf16.mxu0 %v2311
    %3289 = vmatpush1.bf16.msra.mxu0 %v2310
    %3290 = vmatprep.subr.bf16.mxu0 %v2303
    %3291 = vmatpush1.bf16.msra.mxu0 %v2302
    %3292 = vmatprep.subr.bf16.mxu0 %v2295
    %3293 = vmatpush1.bf16.msra.mxu0 %v2294
    %3294 = vmatprep.subr.bf16.mxu0 %v2287
    %3295 = vmatpush1.bf16.msra.mxu0 %v2286
    %3296 = vmatprep.subr.bf16.mxu0 %v2279
    %3297 = vmatpush1.bf16.msra.mxu0 %v2278
    %3298 = vmatprep.subr.bf16.mxu0 %v2271
    %3299 = vmatpush1.bf16.msra.mxu0 %v2270
    %3300 = vmatprep.subr.bf16.mxu0 %v2263
    %3301 = vmatpush1.bf16.msra.mxu0 %v2262
    %3302 = vmatprep.subr.bf16.mxu0 %v2383
    %3303 = vmatpush2.bf16.msra.mxu0 %v2382
    %3304 = vmatprep.subr.bf16.mxu0 %v2375
    %3305 = vmatpush2.bf16.msra.mxu0 %v2374
    %3306 = vmatprep.subr.bf16.mxu0 %v2367
    %3307 = vmatpush2.bf16.msra.mxu0 %v2366
    %3308 = vmatprep.subr.bf16.mxu0 %v2359
    %3309 = vmatpush2.bf16.msra.mxu0 %v2358
    %3310 = vmatprep.subr.bf16.mxu0 %v2351
    %3311 = vmatpush2.bf16.msra.mxu0 %v2350
    %3312 = vmatprep.subr.bf16.mxu0 %v2343
    %3313 = vmatpush2.bf16.msra.mxu0 %v2342
    %3314 = vmatprep.subr.bf16.mxu0 %v2335
    %3315 = vmatpush2.bf16.msra.mxu0 %v2334
    %3316 = vmatprep.subr.bf16.mxu0 %v2327
    %3317 = vmatpush2.bf16.msra.mxu0 %v2326
    %3318 = vmatprep.mubr.bf16.mxu0 %v165
    %3319 = vmatmul.mubr.bf16.gmra.mxu0 %v164
    %v3320 = vpop.f32.mrf.mxu0
    %v3321 = vadd.f32 %v689, %v3320
    %v3322 = vpop.f32.mrf.mxu0
    %v3323 = vadd.f32 %v693, %v3322
    %v3324 = vpop.f32.mrf.mxu0
    %v3325 = vpop.f32.mrf.mxu0
    %3326 = vdwg.mxu0
    %3327 = vmatprep.subr.bf16.mxu0 %v2447
    %3328 = vmatpush1.bf16.msra.mxu0 %v2446
    %3329 = vmatprep.subr.bf16.mxu0 %v2439
    %3330 = vmatpush1.bf16.msra.mxu0 %v2438
    %3331 = vmatprep.subr.bf16.mxu0 %v2431
    %3332 = vmatpush1.bf16.msra.mxu0 %v2430
    %3333 = vmatprep.subr.bf16.mxu0 %v2423
    %3334 = vmatpush1.bf16.msra.mxu0 %v2422
    %3335 = vmatprep.subr.bf16.mxu0 %v2415
    %3336 = vmatpush1.bf16.msra.mxu0 %v2414
    %3337 = vmatprep.subr.bf16.mxu0 %v2407
    %3338 = vmatpush1.bf16.msra.mxu0 %v2406
    %3339 = vmatprep.subr.bf16.mxu0 %v2399
    %3340 = vmatpush1.bf16.msra.mxu0 %v2398
    %3341 = vmatprep.subr.bf16.mxu0 %v2391
    %3342 = vmatpush1.bf16.msra.mxu0 %v2390
    %3343 = vmatprep.subr.bf16.mxu0 %v2511
    %3344 = vmatpush2.bf16.msra.mxu0 %v2510
    %3345 = vmatprep.subr.bf16.mxu0 %v2503
    %3346 = vmatpush2.bf16.msra.mxu0 %v2502
    %3347 = vmatprep.subr.bf16.mxu0 %v2495
    %3348 = vmatpush2.bf16.msra.mxu0 %v2494
    %3349 = vmatprep.subr.bf16.mxu0 %v2487
    %3350 = vmatpush2.bf16.msra.mxu0 %v2486
    %3351 = vmatprep.subr.bf16.mxu0 %v2479
    %3352 = vmatpush2.bf16.msra.mxu0 %v2478
    %3353 = vmatprep.subr.bf16.mxu0 %v2471
    %3354 = vmatpush2.bf16.msra.mxu0 %v2470
    %3355 = vmatprep.subr.bf16.mxu0 %v2463
    %3356 = vmatpush2.bf16.msra.mxu0 %v2462
    %3357 = vmatprep.subr.bf16.mxu0 %v2455
    %3358 = vmatpush2.bf16.msra.mxu0 %v2454
    %3359 = vmatprep.mubr.bf16.mxu0 %v167
    %3360 = vmatmul.mubr.bf16.gmra.mxu0 %v166
    %v3361 = vpop.f32.mrf.mxu0
    %v3362 = vadd.f32 %v3321, %v3361
    %v3363 = vpop.f32.mrf.mxu0
    %v3364 = vadd.f32 %v3323, %v3363
    %v3365 = vpop.f32.mrf.mxu0
    %v3366 = vpop.f32.mrf.mxu0
    %3367 = vdwg.mxu0
    %3368 = vmatprep.subr.bf16.mxu0 %v2575
    %3369 = vmatpush1.bf16.msra.mxu0 %v2574
    %3370 = vmatprep.subr.bf16.mxu0 %v2567
    %3371 = vmatpush1.bf16.msra.mxu0 %v2566
    %3372 = vmatprep.subr.bf16.mxu0 %v2559
    %3373 = vmatpush1.bf16.msra.mxu0 %v2558
    %3374 = vmatprep.subr.bf16.mxu0 %v2551
    %3375 = vmatpush1.bf16.msra.mxu0 %v2550
    %3376 = vmatprep.subr.bf16.mxu0 %v2543
    %3377 = vmatpush1.bf16.msra.mxu0 %v2542
    %3378 = vmatprep.subr.bf16.mxu0 %v2535
    %3379 = vmatpush1.bf16.msra.mxu0 %v2534
    %3380 = vmatprep.subr.bf16.mxu0 %v2527
    %3381 = vmatpush1.bf16.msra.mxu0 %v2526
    %3382 = vmatprep.subr.bf16.mxu0 %v2519
    %3383 = vmatpush1.bf16.msra.mxu0 %v2518
    %3384 = vmatprep.subr.bf16.mxu0 %v2639
    %3385 = vmatpush2.bf16.msra.mxu0 %v2638
    %3386 = vmatprep.subr.bf16.mxu0 %v2631
    %3387 = vmatpush2.bf16.msra.mxu0 %v2630
    %3388 = vmatprep.subr.bf16.mxu0 %v2623
    %3389 = vmatpush2.bf16.msra.mxu0 %v2622
    %3390 = vmatprep.subr.bf16.mxu0 %v2615
    %3391 = vmatpush2.bf16.msra.mxu0 %v2614
    %3392 = vmatprep.subr.bf16.mxu0 %v2607
    %3393 = vmatpush2.bf16.msra.mxu0 %v2606
    %3394 = vmatprep.subr.bf16.mxu0 %v2599
    %3395 = vmatpush2.bf16.msra.mxu0 %v2598
    %3396 = vmatprep.subr.bf16.mxu0 %v2591
    %3397 = vmatpush2.bf16.msra.mxu0 %v2590
    %3398 = vmatprep.subr.bf16.mxu0 %v2583
    %3399 = vmatpush2.bf16.msra.mxu0 %v2582
    %3400 = vmatprep.mubr.bf16.mxu0 %v169
    %3401 = vmatmul.mubr.bf16.gmra.mxu0 %v168
    %v3402 = vpop.f32.mrf.mxu0
    %v3403 = vadd.f32 %v3362, %v3402
    %v3404 = vpop.f32.mrf.mxu0
    %v3405 = vadd.f32 %v3364, %v3404
    %v3406 = vpop.f32.mrf.mxu0
    %v3407 = vpop.f32.mrf.mxu0
    %3408 = vdwg.mxu0
    %3409 = vmatprep.subr.bf16.mxu0 %v2703
    %3410 = vmatpush1.bf16.msra.mxu0 %v2702
    %3411 = vmatprep.subr.bf16.mxu0 %v2695
    %3412 = vmatpush1.bf16.msra.mxu0 %v2694
    %3413 = vmatprep.subr.bf16.mxu0 %v2687
    %3414 = vmatpush1.bf16.msra.mxu0 %v2686
    %3415 = vmatprep.subr.bf16.mxu0 %v2679
    %3416 = vmatpush1.bf16.msra.mxu0 %v2678
    %3417 = vmatprep.subr.bf16.mxu0 %v2671
    %3418 = vmatpush1.bf16.msra.mxu0 %v2670
    %3419 = vmatprep.subr.bf16.mxu0 %v2663
    %3420 = vmatpush1.bf16.msra.mxu0 %v2662
    %3421 = vmatprep.subr.bf16.mxu0 %v2655
    %3422 = vmatpush1.bf16.msra.mxu0 %v2654
    %3423 = vmatprep.subr.bf16.mxu0 %v2647
    %3424 = vmatpush1.bf16.msra.mxu0 %v2646
    %3425 = vmatprep.subr.bf16.mxu0 %v2767
    %3426 = vmatpush2.bf16.msra.mxu0 %v2766
    %3427 = vmatprep.subr.bf16.mxu0 %v2759
    %3428 = vmatpush2.bf16.msra.mxu0 %v2758
    %3429 = vmatprep.subr.bf16.mxu0 %v2751
    %3430 = vmatpush2.bf16.msra.mxu0 %v2750
    %3431 = vmatprep.subr.bf16.mxu0 %v2743
    %3432 = vmatpush2.bf16.msra.mxu0 %v2742
    %3433 = vmatprep.subr.bf16.mxu0 %v2735
    %3434 = vmatpush2.bf16.msra.mxu0 %v2734
    %3435 = vmatprep.subr.bf16.mxu0 %v2727
    %3436 = vmatpush2.bf16.msra.mxu0 %v2726
    %3437 = vmatprep.subr.bf16.mxu0 %v2719
    %3438 = vmatpush2.bf16.msra.mxu0 %v2718
    %3439 = vmatprep.subr.bf16.mxu0 %v2711
    %3440 = vmatpush2.bf16.msra.mxu0 %v2710
    %3441 = vmatprep.mubr.bf16.mxu0 %v171
    %3442 = vmatmul.mubr.bf16.gmra.mxu0 %v170
    %v3443 = vpop.f32.mrf.mxu0
    %v3444 = vadd.f32 %v3403, %v3443
    %v3445 = vpop.f32.mrf.mxu0
    %v3446 = vadd.f32 %v3405, %v3445
    %v3447 = vpop.f32.mrf.mxu0
    %v3448 = vpop.f32.mrf.mxu0
    %3449 = vdwg.mxu0
    %3450 = vmatprep.subr.bf16.mxu0 %v2321
    %3451 = vmatpush1.bf16.msra.mxu0 %v2320
    %3452 = vmatprep.subr.bf16.mxu0 %v2313
    %3453 = vmatpush1.bf16.msra.mxu0 %v2312
    %3454 = vmatprep.subr.bf16.mxu0 %v2305
    %3455 = vmatpush1.bf16.msra.mxu0 %v2304
    %3456 = vmatprep.subr.bf16.mxu0 %v2297
    %3457 = vmatpush1.bf16.msra.mxu0 %v2296
    %3458 = vmatprep.subr.bf16.mxu0 %v2289
    %3459 = vmatpush1.bf16.msra.mxu0 %v2288
    %3460 = vmatprep.subr.bf16.mxu0 %v2281
    %3461 = vmatpush1.bf16.msra.mxu0 %v2280
    %3462 = vmatprep.subr.bf16.mxu0 %v2273
    %3463 = vmatpush1.bf16.msra.mxu0 %v2272
    %3464 = vmatprep.subr.bf16.mxu0 %v2265
    %3465 = vmatpush1.bf16.msra.mxu0 %v2264
    %3466 = vmatprep.subr.bf16.mxu0 %v2385
    %3467 = vmatpush2.bf16.msra.mxu0 %v2384
    %3468 = vmatprep.subr.bf16.mxu0 %v2377
    %3469 = vmatpush2.bf16.msra.mxu0 %v2376
    %3470 = vmatprep.subr.bf16.mxu0 %v2369
    %3471 = vmatpush2.bf16.msra.mxu0 %v2368
    %3472 = vmatprep.subr.bf16.mxu0 %v2361
    %3473 = vmatpush2.bf16.msra.mxu0 %v2360
    %3474 = vmatprep.subr.bf16.mxu0 %v2353
    %3475 = vmatpush2.bf16.msra.mxu0 %v2352
    %3476 = vmatprep.subr.bf16.mxu0 %v2345
    %3477 = vmatpush2.bf16.msra.mxu0 %v2344
    %3478 = vmatprep.subr.bf16.mxu0 %v2337
    %3479 = vmatpush2.bf16.msra.mxu0 %v2336
    %3480 = vmatprep.subr.bf16.mxu0 %v2329
    %3481 = vmatpush2.bf16.msra.mxu0 %v2328
    %3482 = vmatprep.mubr.bf16.mxu0 %v165
    %3483 = vmatmul.mubr.bf16.gmra.mxu0 %v164
    %v3484 = vpop.f32.mrf.mxu0
    %v3485 = vadd.f32 %v697, %v3484
    %v3486 = vpop.f32.mrf.mxu0
    %v3487 = vadd.f32 %v701, %v3486
    %v3488 = vpop.f32.mrf.mxu0
    %v3489 = vpop.f32.mrf.mxu0
    %3490 = vdwg.mxu0
    %3491 = vmatprep.subr.bf16.mxu0 %v2449
    %3492 = vmatpush1.bf16.msra.mxu0 %v2448
    %3493 = vmatprep.subr.bf16.mxu0 %v2441
    %3494 = vmatpush1.bf16.msra.mxu0 %v2440
    %3495 = vmatprep.subr.bf16.mxu0 %v2433
    %3496 = vmatpush1.bf16.msra.mxu0 %v2432
    %3497 = vmatprep.subr.bf16.mxu0 %v2425
    %3498 = vmatpush1.bf16.msra.mxu0 %v2424
    %3499 = vmatprep.subr.bf16.mxu0 %v2417
    %3500 = vmatpush1.bf16.msra.mxu0 %v2416
    %3501 = vmatprep.subr.bf16.mxu0 %v2409
    %3502 = vmatpush1.bf16.msra.mxu0 %v2408
    %3503 = vmatprep.subr.bf16.mxu0 %v2401
    %3504 = vmatpush1.bf16.msra.mxu0 %v2400
    %3505 = vmatprep.subr.bf16.mxu0 %v2393
    %3506 = vmatpush1.bf16.msra.mxu0 %v2392
    %3507 = vmatprep.subr.bf16.mxu0 %v2513
    %3508 = vmatpush2.bf16.msra.mxu0 %v2512
    %3509 = vmatprep.subr.bf16.mxu0 %v2505
    %3510 = vmatpush2.bf16.msra.mxu0 %v2504
    %3511 = vmatprep.subr.bf16.mxu0 %v2497
    %3512 = vmatpush2.bf16.msra.mxu0 %v2496
    %3513 = vmatprep.subr.bf16.mxu0 %v2489
    %3514 = vmatpush2.bf16.msra.mxu0 %v2488
    %3515 = vmatprep.subr.bf16.mxu0 %v2481
    %3516 = vmatpush2.bf16.msra.mxu0 %v2480
    %3517 = vmatprep.subr.bf16.mxu0 %v2473
    %3518 = vmatpush2.bf16.msra.mxu0 %v2472
    %3519 = vmatprep.subr.bf16.mxu0 %v2465
    %3520 = vmatpush2.bf16.msra.mxu0 %v2464
    %3521 = vmatprep.subr.bf16.mxu0 %v2457
    %3522 = vmatpush2.bf16.msra.mxu0 %v2456
    %3523 = vmatprep.mubr.bf16.mxu0 %v167
    %3524 = vmatmul.mubr.bf16.gmra.mxu0 %v166
    %v3525 = vpop.f32.mrf.mxu0
    %v3526 = vadd.f32 %v3485, %v3525
    %v3527 = vpop.f32.mrf.mxu0
    %v3528 = vadd.f32 %v3487, %v3527
    %v3529 = vpop.f32.mrf.mxu0
    %v3530 = vpop.f32.mrf.mxu0
    %3531 = vdwg.mxu0
    %3532 = vmatprep.subr.bf16.mxu0 %v2577
    %3533 = vmatpush1.bf16.msra.mxu0 %v2576
    %3534 = vmatprep.subr.bf16.mxu0 %v2569
    %3535 = vmatpush1.bf16.msra.mxu0 %v2568
    %3536 = vmatprep.subr.bf16.mxu0 %v2561
    %3537 = vmatpush1.bf16.msra.mxu0 %v2560
    %3538 = vmatprep.subr.bf16.mxu0 %v2553
    %3539 = vmatpush1.bf16.msra.mxu0 %v2552
    %3540 = vmatprep.subr.bf16.mxu0 %v2545
    %3541 = vmatpush1.bf16.msra.mxu0 %v2544
    %3542 = vmatprep.subr.bf16.mxu0 %v2537
    %3543 = vmatpush1.bf16.msra.mxu0 %v2536
    %3544 = vmatprep.subr.bf16.mxu0 %v2529
    %3545 = vmatpush1.bf16.msra.mxu0 %v2528
    %3546 = vmatprep.subr.bf16.mxu0 %v2521
    %3547 = vmatpush1.bf16.msra.mxu0 %v2520
    %3548 = vmatprep.subr.bf16.mxu0 %v2641
    %3549 = vmatpush2.bf16.msra.mxu0 %v2640
    %3550 = vmatprep.subr.bf16.mxu0 %v2633
    %3551 = vmatpush2.bf16.msra.mxu0 %v2632
    %3552 = vmatprep.subr.bf16.mxu0 %v2625
    %3553 = vmatpush2.bf16.msra.mxu0 %v2624
    %3554 = vmatprep.subr.bf16.mxu0 %v2617
    %3555 = vmatpush2.bf16.msra.mxu0 %v2616
    %3556 = vmatprep.subr.bf16.mxu0 %v2609
    %3557 = vmatpush2.bf16.msra.mxu0 %v2608
    %3558 = vmatprep.subr.bf16.mxu0 %v2601
    %3559 = vmatpush2.bf16.msra.mxu0 %v2600
    %3560 = vmatprep.subr.bf16.mxu0 %v2593
    %3561 = vmatpush2.bf16.msra.mxu0 %v2592
    %3562 = vmatprep.subr.bf16.mxu0 %v2585
    %3563 = vmatpush2.bf16.msra.mxu0 %v2584
    %3564 = vmatprep.mubr.bf16.mxu0 %v169
    %3565 = vmatmul.mubr.bf16.gmra.mxu0 %v168
    %v3566 = vpop.f32.mrf.mxu0
    %v3567 = vadd.f32 %v3526, %v3566
    %v3568 = vpop.f32.mrf.mxu0
    %v3569 = vadd.f32 %v3528, %v3568
    %v3570 = vpop.f32.mrf.mxu0
    %v3571 = vpop.f32.mrf.mxu0
    %3572 = vdwg.mxu0
    %3573 = vmatprep.subr.bf16.mxu0 %v2705
    %3574 = vmatpush1.bf16.msra.mxu0 %v2704
    %3575 = vmatprep.subr.bf16.mxu0 %v2697
    %3576 = vmatpush1.bf16.msra.mxu0 %v2696
    %3577 = vmatprep.subr.bf16.mxu0 %v2689
    %3578 = vmatpush1.bf16.msra.mxu0 %v2688
    %3579 = vmatprep.subr.bf16.mxu0 %v2681
    %3580 = vmatpush1.bf16.msra.mxu0 %v2680
    %3581 = vmatprep.subr.bf16.mxu0 %v2673
    %3582 = vmatpush1.bf16.msra.mxu0 %v2672
    %3583 = vmatprep.subr.bf16.mxu0 %v2665
    %3584 = vmatpush1.bf16.msra.mxu0 %v2664
    %3585 = vmatprep.subr.bf16.mxu0 %v2657
    %3586 = vmatpush1.bf16.msra.mxu0 %v2656
    %3587 = vmatprep.subr.bf16.mxu0 %v2649
    %3588 = vmatpush1.bf16.msra.mxu0 %v2648
    %3589 = vmatprep.subr.bf16.mxu0 %v2769
    %3590 = vmatpush2.bf16.msra.mxu0 %v2768
    %3591 = vmatprep.subr.bf16.mxu0 %v2761
    %3592 = vmatpush2.bf16.msra.mxu0 %v2760
    %3593 = vmatprep.subr.bf16.mxu0 %v2753
    %3594 = vmatpush2.bf16.msra.mxu0 %v2752
    %3595 = vmatprep.subr.bf16.mxu0 %v2745
    %3596 = vmatpush2.bf16.msra.mxu0 %v2744
    %3597 = vmatprep.subr.bf16.mxu0 %v2737
    %3598 = vmatpush2.bf16.msra.mxu0 %v2736
    %3599 = vmatprep.subr.bf16.mxu0 %v2729
    %3600 = vmatpush2.bf16.msra.mxu0 %v2728
    %3601 = vmatprep.subr.bf16.mxu0 %v2721
    %3602 = vmatpush2.bf16.msra.mxu0 %v2720
    %3603 = vmatprep.subr.bf16.mxu0 %v2713
    %3604 = vmatpush2.bf16.msra.mxu0 %v2712
    %3605 = vmatprep.mubr.bf16.mxu0 %v171
    %3606 = vmatmul.mubr.bf16.gmra.mxu0 %v170
    %v3607 = vpop.f32.mrf.mxu0
    %v3608 = vadd.f32 %v3567, %v3607
    %v3609 = vpop.f32.mrf.mxu0
    %v3610 = vadd.f32 %v3569, %v3609
    %v3611 = vpop.f32.mrf.mxu0
    %v3612 = vpop.f32.mrf.mxu0
    %3613 = vdwg.mxu0
    %3614 = vmatprep.subr.bf16.mxu0 %v2323
    %3615 = vmatpush1.bf16.msra.mxu0 %v2322
    %3616 = vmatprep.subr.bf16.mxu0 %v2315
    %3617 = vmatpush1.bf16.msra.mxu0 %v2314
    %3618 = vmatprep.subr.bf16.mxu0 %v2307
    %3619 = vmatpush1.bf16.msra.mxu0 %v2306
    %3620 = vmatprep.subr.bf16.mxu0 %v2299
    %3621 = vmatpush1.bf16.msra.mxu0 %v2298
    %3622 = vmatprep.subr.bf16.mxu0 %v2291
    %3623 = vmatpush1.bf16.msra.mxu0 %v2290
    %3624 = vmatprep.subr.bf16.mxu0 %v2283
    %3625 = vmatpush1.bf16.msra.mxu0 %v2282
    %3626 = vmatprep.subr.bf16.mxu0 %v2275
    %3627 = vmatpush1.bf16.msra.mxu0 %v2274
    %3628 = vmatprep.subr.bf16.mxu0 %v2267
    %3629 = vmatpush1.bf16.msra.mxu0 %v2266
    %3630 = vmatprep.subr.bf16.mxu0 %v2387
    %3631 = vmatpush2.bf16.msra.mxu0 %v2386
    %3632 = vmatprep.subr.bf16.mxu0 %v2379
    %3633 = vmatpush2.bf16.msra.mxu0 %v2378
    %3634 = vmatprep.subr.bf16.mxu0 %v2371
    %3635 = vmatpush2.bf16.msra.mxu0 %v2370
    %3636 = vmatprep.subr.bf16.mxu0 %v2363
    %3637 = vmatpush2.bf16.msra.mxu0 %v2362
    %3638 = vmatprep.subr.bf16.mxu0 %v2355
    %3639 = vmatpush2.bf16.msra.mxu0 %v2354
    %3640 = vmatprep.subr.bf16.mxu0 %v2347
    %3641 = vmatpush2.bf16.msra.mxu0 %v2346
    %3642 = vmatprep.subr.bf16.mxu0 %v2339
    %3643 = vmatpush2.bf16.msra.mxu0 %v2338
    %3644 = vmatprep.subr.bf16.mxu0 %v2331
    %3645 = vmatpush2.bf16.msra.mxu0 %v2330
    %3646 = vmatprep.mubr.bf16.mxu0 %v165
    %3647 = vmatmul.mubr.bf16.gmra.mxu0 %v164
    %v3648 = vpop.f32.mrf.mxu0
    %v3649 = vadd.f32 %v705, %v3648
    %v3650 = vpop.f32.mrf.mxu0
    %v3651 = vadd.f32 %v709, %v3650
    %v3652 = vpop.f32.mrf.mxu0
    %v3653 = vpop.f32.mrf.mxu0
    %3654 = vdwg.mxu0
    %3655 = vmatprep.subr.bf16.mxu0 %v2451
    %3656 = vmatpush1.bf16.msra.mxu0 %v2450
    %3657 = vmatprep.subr.bf16.mxu0 %v2443
    %3658 = vmatpush1.bf16.msra.mxu0 %v2442
    %3659 = vmatprep.subr.bf16.mxu0 %v2435
    %3660 = vmatpush1.bf16.msra.mxu0 %v2434
    %3661 = vmatprep.subr.bf16.mxu0 %v2427
    %3662 = vmatpush1.bf16.msra.mxu0 %v2426
    %3663 = vmatprep.subr.bf16.mxu0 %v2419
    %3664 = vmatpush1.bf16.msra.mxu0 %v2418
    %3665 = vmatprep.subr.bf16.mxu0 %v2411
    %3666 = vmatpush1.bf16.msra.mxu0 %v2410
    %3667 = vmatprep.subr.bf16.mxu0 %v2403
    %3668 = vmatpush1.bf16.msra.mxu0 %v2402
    %3669 = vmatprep.subr.bf16.mxu0 %v2395
    %3670 = vmatpush1.bf16.msra.mxu0 %v2394
    %3671 = vmatprep.subr.bf16.mxu0 %v2515
    %3672 = vmatpush2.bf16.msra.mxu0 %v2514
    %3673 = vmatprep.subr.bf16.mxu0 %v2507
    %3674 = vmatpush2.bf16.msra.mxu0 %v2506
    %3675 = vmatprep.subr.bf16.mxu0 %v2499
    %3676 = vmatpush2.bf16.msra.mxu0 %v2498
    %3677 = vmatprep.subr.bf16.mxu0 %v2491
    %3678 = vmatpush2.bf16.msra.mxu0 %v2490
    %3679 = vmatprep.subr.bf16.mxu0 %v2483
    %3680 = vmatpush2.bf16.msra.mxu0 %v2482
    %3681 = vmatprep.subr.bf16.mxu0 %v2475
    %3682 = vmatpush2.bf16.msra.mxu0 %v2474
    %3683 = vmatprep.subr.bf16.mxu0 %v2467
    %3684 = vmatpush2.bf16.msra.mxu0 %v2466
    %3685 = vmatprep.subr.bf16.mxu0 %v2459
    %3686 = vmatpush2.bf16.msra.mxu0 %v2458
    %3687 = vmatprep.mubr.bf16.mxu0 %v167
    %3688 = vmatmul.mubr.bf16.gmra.mxu0 %v166
    %v3689 = vpop.f32.mrf.mxu0
    %v3690 = vadd.f32 %v3649, %v3689
    %v3691 = vpop.f32.mrf.mxu0
    %v3692 = vadd.f32 %v3651, %v3691
    %v3693 = vpop.f32.mrf.mxu0
    %v3694 = vpop.f32.mrf.mxu0
    %3695 = vdwg.mxu0
    %3696 = vmatprep.subr.bf16.mxu0 %v2579
    %3697 = vmatpush1.bf16.msra.mxu0 %v2578
    %3698 = vmatprep.subr.bf16.mxu0 %v2571
    %3699 = vmatpush1.bf16.msra.mxu0 %v2570
    %3700 = vmatprep.subr.bf16.mxu0 %v2563
    %3701 = vmatpush1.bf16.msra.mxu0 %v2562
    %3702 = vmatprep.subr.bf16.mxu0 %v2555
    %3703 = vmatpush1.bf16.msra.mxu0 %v2554
    %3704 = vmatprep.subr.bf16.mxu0 %v2547
    %3705 = vmatpush1.bf16.msra.mxu0 %v2546
    %3706 = vmatprep.subr.bf16.mxu0 %v2539
    %3707 = vmatpush1.bf16.msra.mxu0 %v2538
    %3708 = vmatprep.subr.bf16.mxu0 %v2531
    %3709 = vmatpush1.bf16.msra.mxu0 %v2530
    %3710 = vmatprep.subr.bf16.mxu0 %v2523
    %3711 = vmatpush1.bf16.msra.mxu0 %v2522
    %3712 = vmatprep.subr.bf16.mxu0 %v2643
    %3713 = vmatpush2.bf16.msra.mxu0 %v2642
    %3714 = vmatprep.subr.bf16.mxu0 %v2635
    %3715 = vmatpush2.bf16.msra.mxu0 %v2634
    %3716 = vmatprep.subr.bf16.mxu0 %v2627
    %3717 = vmatpush2.bf16.msra.mxu0 %v2626
    %3718 = vmatprep.subr.bf16.mxu0 %v2619
    %3719 = vmatpush2.bf16.msra.mxu0 %v2618
    %3720 = vmatprep.subr.bf16.mxu0 %v2611
    %3721 = vmatpush2.bf16.msra.mxu0 %v2610
    %3722 = vmatprep.subr.bf16.mxu0 %v2603
    %3723 = vmatpush2.bf16.msra.mxu0 %v2602
    %3724 = vmatprep.subr.bf16.mxu0 %v2595
    %3725 = vmatpush2.bf16.msra.mxu0 %v2594
    %3726 = vmatprep.subr.bf16.mxu0 %v2587
    %3727 = vmatpush2.bf16.msra.mxu0 %v2586
    %3728 = vmatprep.mubr.bf16.mxu0 %v169
    %3729 = vmatmul.mubr.bf16.gmra.mxu0 %v168
    %v3730 = vpop.f32.mrf.mxu0
    %v3731 = vadd.f32 %v3690, %v3730
    %v3732 = vpop.f32.mrf.mxu0
    %v3733 = vadd.f32 %v3692, %v3732
    %v3734 = vpop.f32.mrf.mxu0
    %v3735 = vpop.f32.mrf.mxu0
    %3736 = vdwg.mxu0
    %3737 = vmatprep.subr.bf16.mxu0 %v2707
    %3738 = vmatpush1.bf16.msra.mxu0 %v2706
    %3739 = vmatprep.subr.bf16.mxu0 %v2699
    %3740 = vmatpush1.bf16.msra.mxu0 %v2698
    %3741 = vmatprep.subr.bf16.mxu0 %v2691
    %3742 = vmatpush1.bf16.msra.mxu0 %v2690
    %3743 = vmatprep.subr.bf16.mxu0 %v2683
    %3744 = vmatpush1.bf16.msra.mxu0 %v2682
    %3745 = vmatprep.subr.bf16.mxu0 %v2675
    %3746 = vmatpush1.bf16.msra.mxu0 %v2674
    %3747 = vmatprep.subr.bf16.mxu0 %v2667
    %3748 = vmatpush1.bf16.msra.mxu0 %v2666
    %3749 = vmatprep.subr.bf16.mxu0 %v2659
    %3750 = vmatpush1.bf16.msra.mxu0 %v2658
    %3751 = vmatprep.subr.bf16.mxu0 %v2651
    %3752 = vmatpush1.bf16.msra.mxu0 %v2650
    %3753 = vmatprep.subr.bf16.mxu0 %v2771
    %3754 = vmatpush2.bf16.msra.mxu0 %v2770
    %3755 = vmatprep.subr.bf16.mxu0 %v2763
    %3756 = vmatpush2.bf16.msra.mxu0 %v2762
    %3757 = vmatprep.subr.bf16.mxu0 %v2755
    %3758 = vmatpush2.bf16.msra.mxu0 %v2754
    %3759 = vmatprep.subr.bf16.mxu0 %v2747
    %3760 = vmatpush2.bf16.msra.mxu0 %v2746
    %3761 = vmatprep.subr.bf16.mxu0 %v2739
    %3762 = vmatpush2.bf16.msra.mxu0 %v2738
    %3763 = vmatprep.subr.bf16.mxu0 %v2731
    %3764 = vmatpush2.bf16.msra.mxu0 %v2730
    %3765 = vmatprep.subr.bf16.mxu0 %v2723
    %3766 = vmatpush2.bf16.msra.mxu0 %v2722
    %3767 = vmatprep.subr.bf16.mxu0 %v2715
    %3768 = vmatpush2.bf16.msra.mxu0 %v2714
    %3769 = vmatprep.mubr.bf16.mxu0 %v171
    %3770 = vmatmul.mubr.bf16.gmra.mxu0 %v170
    %v3771 = vpop.f32.mrf.mxu0
    %v3772 = vadd.f32 %v3731, %v3771
    %v3773 = vpop.f32.mrf.mxu0
    %v3774 = vadd.f32 %v3733, %v3773
    %v3775 = vpop.f32.mrf.mxu0
    %v3776 = vpop.f32.mrf.mxu0
    %3777 = vdwg.mxu0
    %3778 = vmatprep.subr.bf16.mxu0 %v2325
    %3779 = vmatpush1.bf16.msra.mxu0 %v2324
    %3780 = vmatprep.subr.bf16.mxu0 %v2317
    %3781 = vmatpush1.bf16.msra.mxu0 %v2316
    %3782 = vmatprep.subr.bf16.mxu0 %v2309
    %3783 = vmatpush1.bf16.msra.mxu0 %v2308
    %3784 = vmatprep.subr.bf16.mxu0 %v2301
    %3785 = vmatpush1.bf16.msra.mxu0 %v2300
    %3786 = vmatprep.subr.bf16.mxu0 %v2293
    %3787 = vmatpush1.bf16.msra.mxu0 %v2292
    %3788 = vmatprep.subr.bf16.mxu0 %v2285
    %3789 = vmatpush1.bf16.msra.mxu0 %v2284
    %3790 = vmatprep.subr.bf16.mxu0 %v2277
    %3791 = vmatpush1.bf16.msra.mxu0 %v2276
    %3792 = vmatprep.subr.bf16.mxu0 %v2269
    %3793 = vmatpush1.bf16.msra.mxu0 %v2268
    %3794 = vmatprep.subr.bf16.mxu0 %v2389
    %3795 = vmatpush2.bf16.msra.mxu0 %v2388
    %3796 = vmatprep.subr.bf16.mxu0 %v2381
    %3797 = vmatpush2.bf16.msra.mxu0 %v2380
    %3798 = vmatprep.subr.bf16.mxu0 %v2373
    %3799 = vmatpush2.bf16.msra.mxu0 %v2372
    %3800 = vmatprep.subr.bf16.mxu0 %v2365
    %3801 = vmatpush2.bf16.msra.mxu0 %v2364
    %3802 = vmatprep.subr.bf16.mxu0 %v2357
    %3803 = vmatpush2.bf16.msra.mxu0 %v2356
    %3804 = vmatprep.subr.bf16.mxu0 %v2349
    %3805 = vmatpush2.bf16.msra.mxu0 %v2348
    %3806 = vmatprep.subr.bf16.mxu0 %v2341
    %3807 = vmatpush2.bf16.msra.mxu0 %v2340
    %3808 = vmatprep.subr.bf16.mxu0 %v2333
    %3809 = vmatpush2.bf16.msra.mxu0 %v2332
    %3810 = vmatprep.mubr.bf16.mxu0 %v165
    %3811 = vmatmul.mubr.bf16.gmra.mxu0 %v164
    %v3812 = vpop.f32.mrf.mxu0
    %v3813 = vadd.f32 %v713, %v3812
    %v3814 = vpop.f32.mrf.mxu0
    %v3815 = vadd.f32 %v717, %v3814
    %v3816 = vpop.f32.mrf.mxu0
    %v3817 = vpop.f32.mrf.mxu0
    %3818 = vdwg.mxu0
    %3819 = vmatprep.subr.bf16.mxu0 %v2453
    %3820 = vmatpush1.bf16.msra.mxu0 %v2452
    %3821 = vmatprep.subr.bf16.mxu0 %v2445
    %3822 = vmatpush1.bf16.msra.mxu0 %v2444
    %3823 = vmatprep.subr.bf16.mxu0 %v2437
    %3824 = vmatpush1.bf16.msra.mxu0 %v2436
    %3825 = vmatprep.subr.bf16.mxu0 %v2429
    %3826 = vmatpush1.bf16.msra.mxu0 %v2428
    %3827 = vmatprep.subr.bf16.mxu0 %v2421
    %3828 = vmatpush1.bf16.msra.mxu0 %v2420
    %3829 = vmatprep.subr.bf16.mxu0 %v2413
    %3830 = vmatpush1.bf16.msra.mxu0 %v2412
    %3831 = vmatprep.subr.bf16.mxu0 %v2405
    %3832 = vmatpush1.bf16.msra.mxu0 %v2404
    %3833 = vmatprep.subr.bf16.mxu0 %v2397
    %3834 = vmatpush1.bf16.msra.mxu0 %v2396
    %3835 = vmatprep.subr.bf16.mxu0 %v2517
    %3836 = vmatpush2.bf16.msra.mxu0 %v2516
    %3837 = vmatprep.subr.bf16.mxu0 %v2509
    %3838 = vmatpush2.bf16.msra.mxu0 %v2508
    %3839 = vmatprep.subr.bf16.mxu0 %v2501
    %3840 = vmatpush2.bf16.msra.mxu0 %v2500
    %3841 = vmatprep.subr.bf16.mxu0 %v2493
    %3842 = vmatpush2.bf16.msra.mxu0 %v2492
    %3843 = vmatprep.subr.bf16.mxu0 %v2485
    %3844 = vmatpush2.bf16.msra.mxu0 %v2484
    %3845 = vmatprep.subr.bf16.mxu0 %v2477
    %3846 = vmatpush2.bf16.msra.mxu0 %v2476
    %3847 = vmatprep.subr.bf16.mxu0 %v2469
    %3848 = vmatpush2.bf16.msra.mxu0 %v2468
    %3849 = vmatprep.subr.bf16.mxu0 %v2461
    %3850 = vmatpush2.bf16.msra.mxu0 %v2460
    %3851 = vmatprep.mubr.bf16.mxu0 %v167
    %3852 = vmatmul.mubr.bf16.gmra.mxu0 %v166
    %v3853 = vpop.f32.mrf.mxu0
    %v3854 = vadd.f32 %v3813, %v3853
    %v3855 = vpop.f32.mrf.mxu0
    %v3856 = vadd.f32 %v3815, %v3855
    %v3857 = vpop.f32.mrf.mxu0
    %v3858 = vpop.f32.mrf.mxu0
    %3859 = vdwg.mxu0
    %3860 = vmatprep.subr.bf16.mxu0 %v2581
    %3861 = vmatpush1.bf16.msra.mxu0 %v2580
    %3862 = vmatprep.subr.bf16.mxu0 %v2573
    %3863 = vmatpush1.bf16.msra.mxu0 %v2572
    %3864 = vmatprep.subr.bf16.mxu0 %v2565
    %3865 = vmatpush1.bf16.msra.mxu0 %v2564
    %3866 = vmatprep.subr.bf16.mxu0 %v2557
    %3867 = vmatpush1.bf16.msra.mxu0 %v2556
    %3868 = vmatprep.subr.bf16.mxu0 %v2549
    %3869 = vmatpush1.bf16.msra.mxu0 %v2548
    %3870 = vmatprep.subr.bf16.mxu0 %v2541
    %3871 = vmatpush1.bf16.msra.mxu0 %v2540
    %3872 = vmatprep.subr.bf16.mxu0 %v2533
    %3873 = vmatpush1.bf16.msra.mxu0 %v2532
    %3874 = vmatprep.subr.bf16.mxu0 %v2525
    %3875 = vmatpush1.bf16.msra.mxu0 %v2524
    %3876 = vmatprep.subr.bf16.mxu0 %v2645
    %3877 = vmatpush2.bf16.msra.mxu0 %v2644
    %3878 = vmatprep.subr.bf16.mxu0 %v2637
    %3879 = vmatpush2.bf16.msra.mxu0 %v2636
    %3880 = vmatprep.subr.bf16.mxu0 %v2629
    %3881 = vmatpush2.bf16.msra.mxu0 %v2628
    %3882 = vmatprep.subr.bf16.mxu0 %v2621
    %3883 = vmatpush2.bf16.msra.mxu0 %v2620
    %3884 = vmatprep.subr.bf16.mxu0 %v2613
    %3885 = vmatpush2.bf16.msra.mxu0 %v2612
    %3886 = vmatprep.subr.bf16.mxu0 %v2605
    %3887 = vmatpush2.bf16.msra.mxu0 %v2604
    %3888 = vmatprep.subr.bf16.mxu0 %v2597
    %3889 = vmatpush2.bf16.msra.mxu0 %v2596
    %3890 = vmatprep.subr.bf16.mxu0 %v2589
    %3891 = vmatpush2.bf16.msra.mxu0 %v2588
    %3892 = vmatprep.mubr.bf16.mxu0 %v169
    %3893 = vmatmul.mubr.bf16.gmra.mxu0 %v168
    %v3894 = vpop.f32.mrf.mxu0
    %v3895 = vadd.f32 %v3854, %v3894
    %v3896 = vpop.f32.mrf.mxu0
    %v3897 = vadd.f32 %v3856, %v3896
    %v3898 = vpop.f32.mrf.mxu0
    %v3899 = vpop.f32.mrf.mxu0
    %3900 = vdwg.mxu0
    %3901 = vmatprep.subr.bf16.mxu0 %v2709
    %3902 = vmatpush1.bf16.msra.mxu0 %v2708
    %3903 = vmatprep.subr.bf16.mxu0 %v2701
    %3904 = vmatpush1.bf16.msra.mxu0 %v2700
    %3905 = vmatprep.subr.bf16.mxu0 %v2693
    %3906 = vmatpush1.bf16.msra.mxu0 %v2692
    %3907 = vmatprep.subr.bf16.mxu0 %v2685
    %3908 = vmatpush1.bf16.msra.mxu0 %v2684
    %3909 = vmatprep.subr.bf16.mxu0 %v2677
    %3910 = vmatpush1.bf16.msra.mxu0 %v2676
    %3911 = vmatprep.subr.bf16.mxu0 %v2669
    %3912 = vmatpush1.bf16.msra.mxu0 %v2668
    %3913 = vmatprep.subr.bf16.mxu0 %v2661
    %3914 = vmatpush1.bf16.msra.mxu0 %v2660
    %3915 = vmatprep.subr.bf16.mxu0 %v2653
    %3916 = vmatpush1.bf16.msra.mxu0 %v2652
    %3917 = vmatprep.subr.bf16.mxu0 %v2773
    %3918 = vmatpush2.bf16.msra.mxu0 %v2772
    %3919 = vmatprep.subr.bf16.mxu0 %v2765
    %3920 = vmatpush2.bf16.msra.mxu0 %v2764
    %3921 = vmatprep.subr.bf16.mxu0 %v2757
    %3922 = vmatpush2.bf16.msra.mxu0 %v2756
    %3923 = vmatprep.subr.bf16.mxu0 %v2749
    %3924 = vmatpush2.bf16.msra.mxu0 %v2748
    %3925 = vmatprep.subr.bf16.mxu0 %v2741
    %3926 = vmatpush2.bf16.msra.mxu0 %v2740
    %3927 = vmatprep.subr.bf16.mxu0 %v2733
    %3928 = vmatpush2.bf16.msra.mxu0 %v2732
    %3929 = vmatprep.subr.bf16.mxu0 %v2725
    %3930 = vmatpush2.bf16.msra.mxu0 %v2724
    %3931 = vmatprep.subr.bf16.mxu0 %v2717
    %3932 = vmatpush2.bf16.msra.mxu0 %v2716
    %3933 = vmatprep.mubr.bf16.mxu0 %v171
    %3934 = vmatmul.mubr.bf16.gmra.mxu0 %v170
    %v3935 = vpop.f32.mrf.mxu0
    %v3936 = vadd.f32 %v3895, %v3935
    %v3937 = vpop.f32.mrf.mxu0
    %v3938 = vadd.f32 %v3897, %v3937
    %v3939 = vpop.f32.mrf.mxu0
    %v3940 = vpop.f32.mrf.mxu0
    %3941 = vdwg.mxu0
    %v3942 = vmax.f32 %v3444, 0.0
    %v3943 = vmax.f32 %v3446, 0.0
    %v3944 = vmax.f32 %v3608, 0.0
    %v3945 = vmax.f32 %v3610, 0.0
    %v3946 = vmax.f32 %v3772, 0.0
    %v3947 = vmax.f32 %v3774, 0.0
    %v3948 = vmax.f32 %v3936, 0.0
    %v3949 = vmax.f32 %v3938, 0.0
    %v3950 = vpack.c.bf16 %v3942, %v3942
    %v3951 = vpack.c.bf16 %v3943, %v3943
    %v3952 = vpack.c.bf16 %v3944, %v3944
    %v3953 = vpack.c.bf16 %v3945, %v3945
    %v3954 = vpack.c.bf16 %v3946, %v3946
    %v3955 = vpack.c.bf16 %v3947, %v3947
    %v3956 = vpack.c.bf16 %v3948, %v3948
    %v3957 = vpack.c.bf16 %v3949, %v3949
    %v3958 = vld [vmem:[#allocation8] sm:$0xff]
    %v3959 = vld [vmem:[#allocation8 + $0x8] sm:$0xff]
    %v3960 = vld [vmem:[#allocation8 + $0x10] sm:$0xff]
    %v3961 = vld [vmem:[#allocation8 + $0x18] sm:$0xff]
    %v3962 = vld [vmem:[#allocation8 + $0x20] sm:$0xff]
    %v3963 = vld [vmem:[#allocation8 + $0x28] sm:$0xff]
    %v3964 = vld [vmem:[#allocation8 + $0x30] sm:$0xff]
    %v3965 = vld [vmem:[#allocation8 + $0x38] sm:$0xff]
    %v3966 = vld [vmem:[#allocation8 + $0x40] sm:$0xff]
    %v3967 = vld [vmem:[#allocation8 + $0x48] sm:$0xff]
    %v3968 = vld [vmem:[#allocation8 + $0x50] sm:$0xff]
    %v3969 = vld [vmem:[#allocation8 + $0x58] sm:$0xff]
    %v3970 = vld [vmem:[#allocation8 + $0x60] sm:$0xff]
    %v3971 = vld [vmem:[#allocation8 + $0x68] sm:$0xff]
    %v3972 = vld [vmem:[#allocation8 + $0x70] sm:$0xff]
    %v3973 = vld [vmem:[#allocation8 + $0x78] sm:$0xff]
    %v3974 = vld [vmem:[#allocation8 + $0x80] sm:$0xff]
    %v3975 = vld [vmem:[#allocation8 + $0x88] sm:$0xff]
    %v3976 = vld [vmem:[#allocation8 + $0x90] sm:$0xff]
    %v3977 = vld [vmem:[#allocation8 + $0x98] sm:$0xff]
    %v3978 = vld [vmem:[#allocation8 + $0xa0] sm:$0xff]
    %v3979 = vld [vmem:[#allocation8 + $0xa8] sm:$0xff]
    %v3980 = vld [vmem:[#allocation8 + $0xb0] sm:$0xff]
    %v3981 = vld [vmem:[#allocation8 + $0xb8] sm:$0xff]
    %v3982 = vld [vmem:[#allocation8 + $0xc0] sm:$0xff]
    %v3983 = vld [vmem:[#allocation8 + $0xc8] sm:$0xff]
    %v3984 = vld [vmem:[#allocation8 + $0xd0] sm:$0xff]
    %v3985 = vld [vmem:[#allocation8 + $0xd8] sm:$0xff]
    %v3986 = vld [vmem:[#allocation8 + $0xe0] sm:$0xff]
    %v3987 = vld [vmem:[#allocation8 + $0xe8] sm:$0xff]
    %v3988 = vld [vmem:[#allocation8 + $0xf0] sm:$0xff]
    %v3989 = vld [vmem:[#allocation8 + $0xf8] sm:$0xff]
    %v3990 = vld [vmem:[#allocation8 + $0x100] sm:$0xff]
    %v3991 = vld [vmem:[#allocation8 + $0x108] sm:$0xff]
    %v3992 = vld [vmem:[#allocation8 + $0x110] sm:$0xff]
    %v3993 = vld [vmem:[#allocation8 + $0x118] sm:$0xff]
    %v3994 = vld [vmem:[#allocation8 + $0x120] sm:$0xff]
    %v3995 = vld [vmem:[#allocation8 + $0x128] sm:$0xff]
    %v3996 = vld [vmem:[#allocation8 + $0x130] sm:$0xff]
    %v3997 = vld [vmem:[#allocation8 + $0x138] sm:$0xff]
    %v3998 = vld [vmem:[#allocation8 + $0x140] sm:$0xff]
    %v3999 = vld [vmem:[#allocation8 + $0x148] sm:$0xff]
    %v4000 = vld [vmem:[#allocation8 + $0x150] sm:$0xff]
    %v4001 = vld [vmem:[#allocation8 + $0x158] sm:$0xff]
    %v4002 = vld [vmem:[#allocation8 + $0x160] sm:$0xff]
    %v4003 = vld [vmem:[#allocation8 + $0x168] sm:$0xff]
    %v4004 = vld [vmem:[#allocation8 + $0x170] sm:$0xff]
    %v4005 = vld [vmem:[#allocation8 + $0x178] sm:$0xff]
    %v4006 = vld [vmem:[#allocation8 + $0x180] sm:$0xff]
    %v4007 = vld [vmem:[#allocation8 + $0x188] sm:$0xff]
    %v4008 = vld [vmem:[#allocation8 + $0x190] sm:$0xff]
    %v4009 = vld [vmem:[#allocation8 + $0x198] sm:$0xff]
    %v4010 = vld [vmem:[#allocation8 + $0x1a0] sm:$0xff]
    %v4011 = vld [vmem:[#allocation8 + $0x1a8] sm:$0xff]
    %v4012 = vld [vmem:[#allocation8 + $0x1b0] sm:$0xff]
    %v4013 = vld [vmem:[#allocation8 + $0x1b8] sm:$0xff]
    %v4014 = vld [vmem:[#allocation8 + $0x1c0] sm:$0xff]
    %v4015 = vld [vmem:[#allocation8 + $0x1c8] sm:$0xff]
    %v4016 = vld [vmem:[#allocation8 + $0x1d0] sm:$0xff]
    %v4017 = vld [vmem:[#allocation8 + $0x1d8] sm:$0xff]
    %v4018 = vld [vmem:[#allocation8 + $0x1e0] sm:$0xff]
    %v4019 = vld [vmem:[#allocation8 + $0x1e8] sm:$0xff]
    %v4020 = vld [vmem:[#allocation8 + $0x1f0] sm:$0xff]
    %v4021 = vld [vmem:[#allocation8 + $0x1f8] sm:$0xff]
    %v4022 = vld [vmem:[#allocation8 + $0x200] sm:$0xff]
    %v4023 = vld [vmem:[#allocation8 + $0x208] sm:$0xff]
    %v4024 = vld [vmem:[#allocation8 + $0x210] sm:$0xff]
    %v4025 = vld [vmem:[#allocation8 + $0x218] sm:$0xff]
    %v4026 = vld [vmem:[#allocation8 + $0x220] sm:$0xff]
    %v4027 = vld [vmem:[#allocation8 + $0x228] sm:$0xff]
    %v4028 = vld [vmem:[#allocation8 + $0x230] sm:$0xff]
    %v4029 = vld [vmem:[#allocation8 + $0x238] sm:$0xff]
    %v4030 = vld [vmem:[#allocation8 + $0x240] sm:$0xff]
    %v4031 = vld [vmem:[#allocation8 + $0x248] sm:$0xff]
    %v4032 = vld [vmem:[#allocation8 + $0x250] sm:$0xff]
    %v4033 = vld [vmem:[#allocation8 + $0x258] sm:$0xff]
    %v4034 = vld [vmem:[#allocation8 + $0x260] sm:$0xff]
    %v4035 = vld [vmem:[#allocation8 + $0x268] sm:$0xff]
    %v4036 = vld [vmem:[#allocation8 + $0x270] sm:$0xff]
    %v4037 = vld [vmem:[#allocation8 + $0x278] sm:$0xff]
    %v4038 = vld [vmem:[#allocation8 + $0x280] sm:$0xff]
    %v4039 = vld [vmem:[#allocation8 + $0x288] sm:$0xff]
    %v4040 = vld [vmem:[#allocation8 + $0x290] sm:$0xff]
    %v4041 = vld [vmem:[#allocation8 + $0x298] sm:$0xff]
    %v4042 = vld [vmem:[#allocation8 + $0x2a0] sm:$0xff]
    %v4043 = vld [vmem:[#allocation8 + $0x2a8] sm:$0xff]
    %v4044 = vld [vmem:[#allocation8 + $0x2b0] sm:$0xff]
    %v4045 = vld [vmem:[#allocation8 + $0x2b8] sm:$0xff]
    %v4046 = vld [vmem:[#allocation8 + $0x2c0] sm:$0xff]
    %v4047 = vld [vmem:[#allocation8 + $0x2c8] sm:$0xff]
    %v4048 = vld [vmem:[#allocation8 + $0x2d0] sm:$0xff]
    %v4049 = vld [vmem:[#allocation8 + $0x2d8] sm:$0xff]
    %v4050 = vld [vmem:[#allocation8 + $0x2e0] sm:$0xff]
    %v4051 = vld [vmem:[#allocation8 + $0x2e8] sm:$0xff]
    %v4052 = vld [vmem:[#allocation8 + $0x2f0] sm:$0xff]
    %v4053 = vld [vmem:[#allocation8 + $0x2f8] sm:$0xff]
    %v4054 = vld [vmem:[#allocation8 + $0x300] sm:$0xff]
    %v4055 = vld [vmem:[#allocation8 + $0x308] sm:$0xff]
    %v4056 = vld [vmem:[#allocation8 + $0x310] sm:$0xff]
    %v4057 = vld [vmem:[#allocation8 + $0x318] sm:$0xff]
    %v4058 = vld [vmem:[#allocation8 + $0x320] sm:$0xff]
    %v4059 = vld [vmem:[#allocation8 + $0x328] sm:$0xff]
    %v4060 = vld [vmem:[#allocation8 + $0x330] sm:$0xff]
    %v4061 = vld [vmem:[#allocation8 + $0x338] sm:$0xff]
    %v4062 = vld [vmem:[#allocation8 + $0x340] sm:$0xff]
    %v4063 = vld [vmem:[#allocation8 + $0x348] sm:$0xff]
    %v4064 = vld [vmem:[#allocation8 + $0x350] sm:$0xff]
    %v4065 = vld [vmem:[#allocation8 + $0x358] sm:$0xff]
    %v4066 = vld [vmem:[#allocation8 + $0x360] sm:$0xff]
    %v4067 = vld [vmem:[#allocation8 + $0x368] sm:$0xff]
    %v4068 = vld [vmem:[#allocation8 + $0x370] sm:$0xff]
    %v4069 = vld [vmem:[#allocation8 + $0x378] sm:$0xff]
    %v4070 = vld [vmem:[#allocation8 + $0x380] sm:$0xff]
    %v4071 = vld [vmem:[#allocation8 + $0x388] sm:$0xff]
    %v4072 = vld [vmem:[#allocation8 + $0x390] sm:$0xff]
    %v4073 = vld [vmem:[#allocation8 + $0x398] sm:$0xff]
    %v4074 = vld [vmem:[#allocation8 + $0x3a0] sm:$0xff]
    %v4075 = vld [vmem:[#allocation8 + $0x3a8] sm:$0xff]
    %v4076 = vld [vmem:[#allocation8 + $0x3b0] sm:$0xff]
    %v4077 = vld [vmem:[#allocation8 + $0x3b8] sm:$0xff]
    %v4078 = vld [vmem:[#allocation8 + $0x3c0] sm:$0xff]
    %v4079 = vld [vmem:[#allocation8 + $0x3c8] sm:$0xff]
    %v4080 = vld [vmem:[#allocation8 + $0x3d0] sm:$0xff]
    %v4081 = vld [vmem:[#allocation8 + $0x3d8] sm:$0xff]
    %v4082 = vld [vmem:[#allocation8 + $0x3e0] sm:$0xff]
    %v4083 = vld [vmem:[#allocation8 + $0x3e8] sm:$0xff]
    %v4084 = vld [vmem:[#allocation8 + $0x3f0] sm:$0xff]
    %v4085 = vld [vmem:[#allocation8 + $0x3f8] sm:$0xff]
    %v4086 = vld [vmem:[#allocation8 + $0x400] sm:$0xff]
    %v4087 = vld [vmem:[#allocation8 + $0x408] sm:$0xff]
    %v4088 = vld [vmem:[#allocation8 + $0x410] sm:$0xff]
    %v4089 = vld [vmem:[#allocation8 + $0x418] sm:$0xff]
    %v4090 = vld [vmem:[#allocation8 + $0x420] sm:$0xff]
    %v4091 = vld [vmem:[#allocation8 + $0x428] sm:$0xff]
    %v4092 = vld [vmem:[#allocation8 + $0x430] sm:$0xff]
    %v4093 = vld [vmem:[#allocation8 + $0x438] sm:$0xff]
    %v4094 = vld [vmem:[#allocation8 + $0x440] sm:$0xff]
    %v4095 = vld [vmem:[#allocation8 + $0x448] sm:$0xff]
    %v4096 = vld [vmem:[#allocation8 + $0x450] sm:$0xff]
    %v4097 = vld [vmem:[#allocation8 + $0x458] sm:$0xff]
    %v4098 = vld [vmem:[#allocation8 + $0x460] sm:$0xff]
    %v4099 = vld [vmem:[#allocation8 + $0x468] sm:$0xff]
    %v4100 = vld [vmem:[#allocation8 + $0x470] sm:$0xff]
    %v4101 = vld [vmem:[#allocation8 + $0x478] sm:$0xff]
    %v4102 = vld [vmem:[#allocation8 + $0x480] sm:$0xff]
    %v4103 = vld [vmem:[#allocation8 + $0x488] sm:$0xff]
    %v4104 = vld [vmem:[#allocation8 + $0x490] sm:$0xff]
    %v4105 = vld [vmem:[#allocation8 + $0x498] sm:$0xff]
    %v4106 = vld [vmem:[#allocation8 + $0x4a0] sm:$0xff]
    %v4107 = vld [vmem:[#allocation8 + $0x4a8] sm:$0xff]
    %v4108 = vld [vmem:[#allocation8 + $0x4b0] sm:$0xff]
    %v4109 = vld [vmem:[#allocation8 + $0x4b8] sm:$0xff]
    %v4110 = vld [vmem:[#allocation8 + $0x4c0] sm:$0xff]
    %v4111 = vld [vmem:[#allocation8 + $0x4c8] sm:$0xff]
    %v4112 = vld [vmem:[#allocation8 + $0x4d0] sm:$0xff]
    %v4113 = vld [vmem:[#allocation8 + $0x4d8] sm:$0xff]
    %v4114 = vld [vmem:[#allocation8 + $0x4e0] sm:$0xff]
    %v4115 = vld [vmem:[#allocation8 + $0x4e8] sm:$0xff]
    %v4116 = vld [vmem:[#allocation8 + $0x4f0] sm:$0xff]
    %v4117 = vld [vmem:[#allocation8 + $0x4f8] sm:$0xff]
    %v4118 = vld [vmem:[#allocation8 + $0x500] sm:$0xff]
    %v4119 = vld [vmem:[#allocation8 + $0x508] sm:$0xff]
    %v4120 = vld [vmem:[#allocation8 + $0x510] sm:$0xff]
    %v4121 = vld [vmem:[#allocation8 + $0x518] sm:$0xff]
    %v4122 = vld [vmem:[#allocation8 + $0x520] sm:$0xff]
    %v4123 = vld [vmem:[#allocation8 + $0x528] sm:$0xff]
    %v4124 = vld [vmem:[#allocation8 + $0x530] sm:$0xff]
    %v4125 = vld [vmem:[#allocation8 + $0x538] sm:$0xff]
    %v4126 = vld [vmem:[#allocation8 + $0x540] sm:$0xff]
    %v4127 = vld [vmem:[#allocation8 + $0x548] sm:$0xff]
    %v4128 = vld [vmem:[#allocation8 + $0x550] sm:$0xff]
    %v4129 = vld [vmem:[#allocation8 + $0x558] sm:$0xff]
    %v4130 = vld [vmem:[#allocation8 + $0x560] sm:$0xff]
    %v4131 = vld [vmem:[#allocation8 + $0x568] sm:$0xff]
    %v4132 = vld [vmem:[#allocation8 + $0x570] sm:$0xff]
    %v4133 = vld [vmem:[#allocation8 + $0x578] sm:$0xff]
    %v4134 = vld [vmem:[#allocation8 + $0x580] sm:$0xff]
    %v4135 = vld [vmem:[#allocation8 + $0x588] sm:$0xff]
    %v4136 = vld [vmem:[#allocation8 + $0x590] sm:$0xff]
    %v4137 = vld [vmem:[#allocation8 + $0x598] sm:$0xff]
    %v4138 = vld [vmem:[#allocation8 + $0x5a0] sm:$0xff]
    %v4139 = vld [vmem:[#allocation8 + $0x5a8] sm:$0xff]
    %v4140 = vld [vmem:[#allocation8 + $0x5b0] sm:$0xff]
    %v4141 = vld [vmem:[#allocation8 + $0x5b8] sm:$0xff]
    %v4142 = vld [vmem:[#allocation8 + $0x5c0] sm:$0xff]
    %v4143 = vld [vmem:[#allocation8 + $0x5c8] sm:$0xff]
    %v4144 = vld [vmem:[#allocation8 + $0x5d0] sm:$0xff]
    %v4145 = vld [vmem:[#allocation8 + $0x5d8] sm:$0xff]
    %v4146 = vld [vmem:[#allocation8 + $0x5e0] sm:$0xff]
    %v4147 = vld [vmem:[#allocation8 + $0x5e8] sm:$0xff]
    %v4148 = vld [vmem:[#allocation8 + $0x5f0] sm:$0xff]
    %v4149 = vld [vmem:[#allocation8 + $0x5f8] sm:$0xff]
    %v4150 = vld [vmem:[#allocation8 + $0x600] sm:$0xff]
    %v4151 = vld [vmem:[#allocation8 + $0x608] sm:$0xff]
    %v4152 = vld [vmem:[#allocation8 + $0x610] sm:$0xff]
    %v4153 = vld [vmem:[#allocation8 + $0x618] sm:$0xff]
    %v4154 = vld [vmem:[#allocation8 + $0x620] sm:$0xff]
    %v4155 = vld [vmem:[#allocation8 + $0x628] sm:$0xff]
    %v4156 = vld [vmem:[#allocation8 + $0x630] sm:$0xff]
    %v4157 = vld [vmem:[#allocation8 + $0x638] sm:$0xff]
    %v4158 = vld [vmem:[#allocation8 + $0x640] sm:$0xff]
    %v4159 = vld [vmem:[#allocation8 + $0x648] sm:$0xff]
    %v4160 = vld [vmem:[#allocation8 + $0x650] sm:$0xff]
    %v4161 = vld [vmem:[#allocation8 + $0x658] sm:$0xff]
    %v4162 = vld [vmem:[#allocation8 + $0x660] sm:$0xff]
    %v4163 = vld [vmem:[#allocation8 + $0x668] sm:$0xff]
    %v4164 = vld [vmem:[#allocation8 + $0x670] sm:$0xff]
    %v4165 = vld [vmem:[#allocation8 + $0x678] sm:$0xff]
    %v4166 = vld [vmem:[#allocation8 + $0x680] sm:$0xff]
    %v4167 = vld [vmem:[#allocation8 + $0x688] sm:$0xff]
    %v4168 = vld [vmem:[#allocation8 + $0x690] sm:$0xff]
    %v4169 = vld [vmem:[#allocation8 + $0x698] sm:$0xff]
    %v4170 = vld [vmem:[#allocation8 + $0x6a0] sm:$0xff]
    %v4171 = vld [vmem:[#allocation8 + $0x6a8] sm:$0xff]
    %v4172 = vld [vmem:[#allocation8 + $0x6b0] sm:$0xff]
    %v4173 = vld [vmem:[#allocation8 + $0x6b8] sm:$0xff]
    %v4174 = vld [vmem:[#allocation8 + $0x6c0] sm:$0xff]
    %v4175 = vld [vmem:[#allocation8 + $0x6c8] sm:$0xff]
    %v4176 = vld [vmem:[#allocation8 + $0x6d0] sm:$0xff]
    %v4177 = vld [vmem:[#allocation8 + $0x6d8] sm:$0xff]
    %v4178 = vld [vmem:[#allocation8 + $0x6e0] sm:$0xff]
    %v4179 = vld [vmem:[#allocation8 + $0x6e8] sm:$0xff]
    %v4180 = vld [vmem:[#allocation8 + $0x6f0] sm:$0xff]
    %v4181 = vld [vmem:[#allocation8 + $0x6f8] sm:$0xff]
    %v4182 = vld [vmem:[#allocation8 + $0x700] sm:$0xff]
    %v4183 = vld [vmem:[#allocation8 + $0x708] sm:$0xff]
    %v4184 = vld [vmem:[#allocation8 + $0x710] sm:$0xff]
    %v4185 = vld [vmem:[#allocation8 + $0x718] sm:$0xff]
    %v4186 = vld [vmem:[#allocation8 + $0x720] sm:$0xff]
    %v4187 = vld [vmem:[#allocation8 + $0x728] sm:$0xff]
    %v4188 = vld [vmem:[#allocation8 + $0x730] sm:$0xff]
    %v4189 = vld [vmem:[#allocation8 + $0x738] sm:$0xff]
    %v4190 = vld [vmem:[#allocation8 + $0x740] sm:$0xff]
    %v4191 = vld [vmem:[#allocation8 + $0x748] sm:$0xff]
    %v4192 = vld [vmem:[#allocation8 + $0x750] sm:$0xff]
    %v4193 = vld [vmem:[#allocation8 + $0x758] sm:$0xff]
    %v4194 = vld [vmem:[#allocation8 + $0x760] sm:$0xff]
    %v4195 = vld [vmem:[#allocation8 + $0x768] sm:$0xff]
    %v4196 = vld [vmem:[#allocation8 + $0x770] sm:$0xff]
    %v4197 = vld [vmem:[#allocation8 + $0x778] sm:$0xff]
    %v4198 = vld [vmem:[#allocation8 + $0x780] sm:$0xff]
    %v4199 = vld [vmem:[#allocation8 + $0x788] sm:$0xff]
    %v4200 = vld [vmem:[#allocation8 + $0x790] sm:$0xff]
    %v4201 = vld [vmem:[#allocation8 + $0x798] sm:$0xff]
    %v4202 = vld [vmem:[#allocation8 + $0x7a0] sm:$0xff]
    %v4203 = vld [vmem:[#allocation8 + $0x7a8] sm:$0xff]
    %v4204 = vld [vmem:[#allocation8 + $0x7b0] sm:$0xff]
    %v4205 = vld [vmem:[#allocation8 + $0x7b8] sm:$0xff]
    %v4206 = vld [vmem:[#allocation8 + $0x7c0] sm:$0xff]
    %v4207 = vld [vmem:[#allocation8 + $0x7c8] sm:$0xff]
    %v4208 = vld [vmem:[#allocation8 + $0x7d0] sm:$0xff]
    %v4209 = vld [vmem:[#allocation8 + $0x7d8] sm:$0xff]
    %v4210 = vld [vmem:[#allocation8 + $0x7e0] sm:$0xff]
    %v4211 = vld [vmem:[#allocation8 + $0x7e8] sm:$0xff]
    %v4212 = vld [vmem:[#allocation8 + $0x7f0] sm:$0xff]
    %v4213 = vld [vmem:[#allocation8 + $0x7f8] sm:$0xff]
    %v4214 = vld [vmem:[#allocation8 + $0x800] sm:$0xff]
    %v4215 = vld [vmem:[#allocation8 + $0x808] sm:$0xff]
    %v4216 = vld [vmem:[#allocation8 + $0x810] sm:$0xff]
    %v4217 = vld [vmem:[#allocation8 + $0x818] sm:$0xff]
    %v4218 = vld [vmem:[#allocation8 + $0x820] sm:$0xff]
    %v4219 = vld [vmem:[#allocation8 + $0x828] sm:$0xff]
    %v4220 = vld [vmem:[#allocation8 + $0x830] sm:$0xff]
    %v4221 = vld [vmem:[#allocation8 + $0x838] sm:$0xff]
    %v4222 = vld [vmem:[#allocation8 + $0x840] sm:$0xff]
    %v4223 = vld [vmem:[#allocation8 + $0x848] sm:$0xff]
    %v4224 = vld [vmem:[#allocation8 + $0x850] sm:$0xff]
    %v4225 = vld [vmem:[#allocation8 + $0x858] sm:$0xff]
    %v4226 = vld [vmem:[#allocation8 + $0x860] sm:$0xff]
    %v4227 = vld [vmem:[#allocation8 + $0x868] sm:$0xff]
    %v4228 = vld [vmem:[#allocation8 + $0x870] sm:$0xff]
    %v4229 = vld [vmem:[#allocation8 + $0x878] sm:$0xff]
    %v4230 = vld [vmem:[#allocation8 + $0x880] sm:$0xff]
    %v4231 = vld [vmem:[#allocation8 + $0x888] sm:$0xff]
    %v4232 = vld [vmem:[#allocation8 + $0x890] sm:$0xff]
    %v4233 = vld [vmem:[#allocation8 + $0x898] sm:$0xff]
    %v4234 = vld [vmem:[#allocation8 + $0x8a0] sm:$0xff]
    %v4235 = vld [vmem:[#allocation8 + $0x8a8] sm:$0xff]
    %v4236 = vld [vmem:[#allocation8 + $0x8b0] sm:$0xff]
    %v4237 = vld [vmem:[#allocation8 + $0x8b8] sm:$0xff]
    %v4238 = vld [vmem:[#allocation8 + $0x8c0] sm:$0xff]
    %v4239 = vld [vmem:[#allocation8 + $0x8c8] sm:$0xff]
    %v4240 = vld [vmem:[#allocation8 + $0x8d0] sm:$0xff]
    %v4241 = vld [vmem:[#allocation8 + $0x8d8] sm:$0xff]
    %v4242 = vld [vmem:[#allocation8 + $0x8e0] sm:$0xff]
    %v4243 = vld [vmem:[#allocation8 + $0x8e8] sm:$0xff]
    %v4244 = vld [vmem:[#allocation8 + $0x8f0] sm:$0xff]
    %v4245 = vld [vmem:[#allocation8 + $0x8f8] sm:$0xff]
    %v4246 = vld [vmem:[#allocation8 + $0x900] sm:$0xff]
    %v4247 = vld [vmem:[#allocation8 + $0x908] sm:$0xff]
    %v4248 = vld [vmem:[#allocation8 + $0x910] sm:$0xff]
    %v4249 = vld [vmem:[#allocation8 + $0x918] sm:$0xff]
    %v4250 = vld [vmem:[#allocation8 + $0x920] sm:$0xff]
    %v4251 = vld [vmem:[#allocation8 + $0x928] sm:$0xff]
    %v4252 = vld [vmem:[#allocation8 + $0x930] sm:$0xff]
    %v4253 = vld [vmem:[#allocation8 + $0x938] sm:$0xff]
    %v4254 = vld [vmem:[#allocation8 + $0x940] sm:$0xff]
    %v4255 = vld [vmem:[#allocation8 + $0x948] sm:$0xff]
    %v4256 = vld [vmem:[#allocation8 + $0x950] sm:$0xff]
    %v4257 = vld [vmem:[#allocation8 + $0x958] sm:$0xff]
    %v4258 = vld [vmem:[#allocation8 + $0x960] sm:$0xff]
    %v4259 = vld [vmem:[#allocation8 + $0x968] sm:$0xff]
    %v4260 = vld [vmem:[#allocation8 + $0x970] sm:$0xff]
    %v4261 = vld [vmem:[#allocation8 + $0x978] sm:$0xff]
    %v4262 = vld [vmem:[#allocation8 + $0x980] sm:$0xff]
    %v4263 = vld [vmem:[#allocation8 + $0x988] sm:$0xff]
    %v4264 = vld [vmem:[#allocation8 + $0x990] sm:$0xff]
    %v4265 = vld [vmem:[#allocation8 + $0x998] sm:$0xff]
    %v4266 = vld [vmem:[#allocation8 + $0x9a0] sm:$0xff]
    %v4267 = vld [vmem:[#allocation8 + $0x9a8] sm:$0xff]
    %v4268 = vld [vmem:[#allocation8 + $0x9b0] sm:$0xff]
    %v4269 = vld [vmem:[#allocation8 + $0x9b8] sm:$0xff]
    %v4270 = vld [vmem:[#allocation8 + $0x9c0] sm:$0xff]
    %v4271 = vld [vmem:[#allocation8 + $0x9c8] sm:$0xff]
    %v4272 = vld [vmem:[#allocation8 + $0x9d0] sm:$0xff]
    %v4273 = vld [vmem:[#allocation8 + $0x9d8] sm:$0xff]
    %v4274 = vld [vmem:[#allocation8 + $0x9e0] sm:$0xff]
    %v4275 = vld [vmem:[#allocation8 + $0x9e8] sm:$0xff]
    %v4276 = vld [vmem:[#allocation8 + $0x9f0] sm:$0xff]
    %v4277 = vld [vmem:[#allocation8 + $0x9f8] sm:$0xff]
    %v4278 = vld [vmem:[#allocation8 + $0xa00] sm:$0xff]
    %v4279 = vld [vmem:[#allocation8 + $0xa08] sm:$0xff]
    %v4280 = vld [vmem:[#allocation8 + $0xa10] sm:$0xff]
    %v4281 = vld [vmem:[#allocation8 + $0xa18] sm:$0xff]
    %v4282 = vld [vmem:[#allocation8 + $0xa20] sm:$0xff]
    %v4283 = vld [vmem:[#allocation8 + $0xa28] sm:$0xff]
    %v4284 = vld [vmem:[#allocation8 + $0xa30] sm:$0xff]
    %v4285 = vld [vmem:[#allocation8 + $0xa38] sm:$0xff]
    %v4286 = vld [vmem:[#allocation8 + $0xa40] sm:$0xff]
    %v4287 = vld [vmem:[#allocation8 + $0xa48] sm:$0xff]
    %v4288 = vld [vmem:[#allocation8 + $0xa50] sm:$0xff]
    %v4289 = vld [vmem:[#allocation8 + $0xa58] sm:$0xff]
    %v4290 = vld [vmem:[#allocation8 + $0xa60] sm:$0xff]
    %v4291 = vld [vmem:[#allocation8 + $0xa68] sm:$0xff]
    %v4292 = vld [vmem:[#allocation8 + $0xa70] sm:$0xff]
    %v4293 = vld [vmem:[#allocation8 + $0xa78] sm:$0xff]
    %v4294 = vld [vmem:[#allocation8 + $0xa80] sm:$0xff]
    %v4295 = vld [vmem:[#allocation8 + $0xa88] sm:$0xff]
    %v4296 = vld [vmem:[#allocation8 + $0xa90] sm:$0xff]
    %v4297 = vld [vmem:[#allocation8 + $0xa98] sm:$0xff]
    %v4298 = vld [vmem:[#allocation8 + $0xaa0] sm:$0xff]
    %v4299 = vld [vmem:[#allocation8 + $0xaa8] sm:$0xff]
    %v4300 = vld [vmem:[#allocation8 + $0xab0] sm:$0xff]
    %v4301 = vld [vmem:[#allocation8 + $0xab8] sm:$0xff]
    %v4302 = vld [vmem:[#allocation8 + $0xac0] sm:$0xff]
    %v4303 = vld [vmem:[#allocation8 + $0xac8] sm:$0xff]
    %v4304 = vld [vmem:[#allocation8 + $0xad0] sm:$0xff]
    %v4305 = vld [vmem:[#allocation8 + $0xad8] sm:$0xff]
    %v4306 = vld [vmem:[#allocation8 + $0xae0] sm:$0xff]
    %v4307 = vld [vmem:[#allocation8 + $0xae8] sm:$0xff]
    %v4308 = vld [vmem:[#allocation8 + $0xaf0] sm:$0xff]
    %v4309 = vld [vmem:[#allocation8 + $0xaf8] sm:$0xff]
    %v4310 = vld [vmem:[#allocation8 + $0xb00] sm:$0xff]
    %v4311 = vld [vmem:[#allocation8 + $0xb08] sm:$0xff]
    %v4312 = vld [vmem:[#allocation8 + $0xb10] sm:$0xff]
    %v4313 = vld [vmem:[#allocation8 + $0xb18] sm:$0xff]
    %v4314 = vld [vmem:[#allocation8 + $0xb20] sm:$0xff]
    %v4315 = vld [vmem:[#allocation8 + $0xb28] sm:$0xff]
    %v4316 = vld [vmem:[#allocation8 + $0xb30] sm:$0xff]
    %v4317 = vld [vmem:[#allocation8 + $0xb38] sm:$0xff]
    %v4318 = vld [vmem:[#allocation8 + $0xb40] sm:$0xff]
    %v4319 = vld [vmem:[#allocation8 + $0xb48] sm:$0xff]
    %v4320 = vld [vmem:[#allocation8 + $0xb50] sm:$0xff]
    %v4321 = vld [vmem:[#allocation8 + $0xb58] sm:$0xff]
    %v4322 = vld [vmem:[#allocation8 + $0xb60] sm:$0xff]
    %v4323 = vld [vmem:[#allocation8 + $0xb68] sm:$0xff]
    %v4324 = vld [vmem:[#allocation8 + $0xb70] sm:$0xff]
    %v4325 = vld [vmem:[#allocation8 + $0xb78] sm:$0xff]
    %v4326 = vld [vmem:[#allocation8 + $0xb80] sm:$0xff]
    %v4327 = vld [vmem:[#allocation8 + $0xb88] sm:$0xff]
    %v4328 = vld [vmem:[#allocation8 + $0xb90] sm:$0xff]
    %v4329 = vld [vmem:[#allocation8 + $0xb98] sm:$0xff]
    %v4330 = vld [vmem:[#allocation8 + $0xba0] sm:$0xff]
    %v4331 = vld [vmem:[#allocation8 + $0xba8] sm:$0xff]
    %v4332 = vld [vmem:[#allocation8 + $0xbb0] sm:$0xff]
    %v4333 = vld [vmem:[#allocation8 + $0xbb8] sm:$0xff]
    %v4334 = vld [vmem:[#allocation8 + $0xbc0] sm:$0xff]
    %v4335 = vld [vmem:[#allocation8 + $0xbc8] sm:$0xff]
    %v4336 = vld [vmem:[#allocation8 + $0xbd0] sm:$0xff]
    %v4337 = vld [vmem:[#allocation8 + $0xbd8] sm:$0xff]
    %v4338 = vld [vmem:[#allocation8 + $0xbe0] sm:$0xff]
    %v4339 = vld [vmem:[#allocation8 + $0xbe8] sm:$0xff]
    %v4340 = vld [vmem:[#allocation8 + $0xbf0] sm:$0xff]
    %v4341 = vld [vmem:[#allocation8 + $0xbf8] sm:$0xff]
    %v4342 = vld [vmem:[#allocation8 + $0xc00] sm:$0xff]
    %v4343 = vld [vmem:[#allocation8 + $0xc08] sm:$0xff]
    %v4344 = vld [vmem:[#allocation8 + $0xc10] sm:$0xff]
    %v4345 = vld [vmem:[#allocation8 + $0xc18] sm:$0xff]
    %v4346 = vld [vmem:[#allocation8 + $0xc20] sm:$0xff]
    %v4347 = vld [vmem:[#allocation8 + $0xc28] sm:$0xff]
    %v4348 = vld [vmem:[#allocation8 + $0xc30] sm:$0xff]
    %v4349 = vld [vmem:[#allocation8 + $0xc38] sm:$0xff]
    %v4350 = vld [vmem:[#allocation8 + $0xc40] sm:$0xff]
    %v4351 = vld [vmem:[#allocation8 + $0xc48] sm:$0xff]
    %v4352 = vld [vmem:[#allocation8 + $0xc50] sm:$0xff]
    %v4353 = vld [vmem:[#allocation8 + $0xc58] sm:$0xff]
    %v4354 = vld [vmem:[#allocation8 + $0xc60] sm:$0xff]
    %v4355 = vld [vmem:[#allocation8 + $0xc68] sm:$0xff]
    %v4356 = vld [vmem:[#allocation8 + $0xc70] sm:$0xff]
    %v4357 = vld [vmem:[#allocation8 + $0xc78] sm:$0xff]
    %v4358 = vld [vmem:[#allocation8 + $0xc80] sm:$0xff]
    %v4359 = vld [vmem:[#allocation8 + $0xc88] sm:$0xff]
    %v4360 = vld [vmem:[#allocation8 + $0xc90] sm:$0xff]
    %v4361 = vld [vmem:[#allocation8 + $0xc98] sm:$0xff]
    %v4362 = vld [vmem:[#allocation8 + $0xca0] sm:$0xff]
    %v4363 = vld [vmem:[#allocation8 + $0xca8] sm:$0xff]
    %v4364 = vld [vmem:[#allocation8 + $0xcb0] sm:$0xff]
    %v4365 = vld [vmem:[#allocation8 + $0xcb8] sm:$0xff]
    %v4366 = vld [vmem:[#allocation8 + $0xcc0] sm:$0xff]
    %v4367 = vld [vmem:[#allocation8 + $0xcc8] sm:$0xff]
    %v4368 = vld [vmem:[#allocation8 + $0xcd0] sm:$0xff]
    %v4369 = vld [vmem:[#allocation8 + $0xcd8] sm:$0xff]
    %v4370 = vld [vmem:[#allocation8 + $0xce0] sm:$0xff]
    %v4371 = vld [vmem:[#allocation8 + $0xce8] sm:$0xff]
    %v4372 = vld [vmem:[#allocation8 + $0xcf0] sm:$0xff]
    %v4373 = vld [vmem:[#allocation8 + $0xcf8] sm:$0xff]
    %v4374 = vld [vmem:[#allocation8 + $0xd00] sm:$0xff]
    %v4375 = vld [vmem:[#allocation8 + $0xd08] sm:$0xff]
    %v4376 = vld [vmem:[#allocation8 + $0xd10] sm:$0xff]
    %v4377 = vld [vmem:[#allocation8 + $0xd18] sm:$0xff]
    %v4378 = vld [vmem:[#allocation8 + $0xd20] sm:$0xff]
    %v4379 = vld [vmem:[#allocation8 + $0xd28] sm:$0xff]
    %v4380 = vld [vmem:[#allocation8 + $0xd30] sm:$0xff]
    %v4381 = vld [vmem:[#allocation8 + $0xd38] sm:$0xff]
    %v4382 = vld [vmem:[#allocation8 + $0xd40] sm:$0xff]
    %v4383 = vld [vmem:[#allocation8 + $0xd48] sm:$0xff]
    %v4384 = vld [vmem:[#allocation8 + $0xd50] sm:$0xff]
    %v4385 = vld [vmem:[#allocation8 + $0xd58] sm:$0xff]
    %v4386 = vld [vmem:[#allocation8 + $0xd60] sm:$0xff]
    %v4387 = vld [vmem:[#allocation8 + $0xd68] sm:$0xff]
    %v4388 = vld [vmem:[#allocation8 + $0xd70] sm:$0xff]
    %v4389 = vld [vmem:[#allocation8 + $0xd78] sm:$0xff]
    %v4390 = vld [vmem:[#allocation8 + $0xd80] sm:$0xff]
    %v4391 = vld [vmem:[#allocation8 + $0xd88] sm:$0xff]
    %v4392 = vld [vmem:[#allocation8 + $0xd90] sm:$0xff]
    %v4393 = vld [vmem:[#allocation8 + $0xd98] sm:$0xff]
    %v4394 = vld [vmem:[#allocation8 + $0xda0] sm:$0xff]
    %v4395 = vld [vmem:[#allocation8 + $0xda8] sm:$0xff]
    %v4396 = vld [vmem:[#allocation8 + $0xdb0] sm:$0xff]
    %v4397 = vld [vmem:[#allocation8 + $0xdb8] sm:$0xff]
    %v4398 = vld [vmem:[#allocation8 + $0xdc0] sm:$0xff]
    %v4399 = vld [vmem:[#allocation8 + $0xdc8] sm:$0xff]
    %v4400 = vld [vmem:[#allocation8 + $0xdd0] sm:$0xff]
    %v4401 = vld [vmem:[#allocation8 + $0xdd8] sm:$0xff]
    %v4402 = vld [vmem:[#allocation8 + $0xde0] sm:$0xff]
    %v4403 = vld [vmem:[#allocation8 + $0xde8] sm:$0xff]
    %v4404 = vld [vmem:[#allocation8 + $0xdf0] sm:$0xff]
    %v4405 = vld [vmem:[#allocation8 + $0xdf8] sm:$0xff]
    %v4406 = vld [vmem:[#allocation8 + $0xe00] sm:$0xff]
    %v4407 = vld [vmem:[#allocation8 + $0xe08] sm:$0xff]
    %v4408 = vld [vmem:[#allocation8 + $0xe10] sm:$0xff]
    %v4409 = vld [vmem:[#allocation8 + $0xe18] sm:$0xff]
    %v4410 = vld [vmem:[#allocation8 + $0xe20] sm:$0xff]
    %v4411 = vld [vmem:[#allocation8 + $0xe28] sm:$0xff]
    %v4412 = vld [vmem:[#allocation8 + $0xe30] sm:$0xff]
    %v4413 = vld [vmem:[#allocation8 + $0xe38] sm:$0xff]
    %v4414 = vld [vmem:[#allocation8 + $0xe40] sm:$0xff]
    %v4415 = vld [vmem:[#allocation8 + $0xe48] sm:$0xff]
    %v4416 = vld [vmem:[#allocation8 + $0xe50] sm:$0xff]
    %v4417 = vld [vmem:[#allocation8 + $0xe58] sm:$0xff]
    %v4418 = vld [vmem:[#allocation8 + $0xe60] sm:$0xff]
    %v4419 = vld [vmem:[#allocation8 + $0xe68] sm:$0xff]
    %v4420 = vld [vmem:[#allocation8 + $0xe70] sm:$0xff]
    %v4421 = vld [vmem:[#allocation8 + $0xe78] sm:$0xff]
    %v4422 = vld [vmem:[#allocation8 + $0xe80] sm:$0xff]
    %v4423 = vld [vmem:[#allocation8 + $0xe88] sm:$0xff]
    %v4424 = vld [vmem:[#allocation8 + $0xe90] sm:$0xff]
    %v4425 = vld [vmem:[#allocation8 + $0xe98] sm:$0xff]
    %v4426 = vld [vmem:[#allocation8 + $0xea0] sm:$0xff]
    %v4427 = vld [vmem:[#allocation8 + $0xea8] sm:$0xff]
    %v4428 = vld [vmem:[#allocation8 + $0xeb0] sm:$0xff]
    %v4429 = vld [vmem:[#allocation8 + $0xeb8] sm:$0xff]
    %v4430 = vld [vmem:[#allocation8 + $0xec0] sm:$0xff]
    %v4431 = vld [vmem:[#allocation8 + $0xec8] sm:$0xff]
    %v4432 = vld [vmem:[#allocation8 + $0xed0] sm:$0xff]
    %v4433 = vld [vmem:[#allocation8 + $0xed8] sm:$0xff]
    %v4434 = vld [vmem:[#allocation8 + $0xee0] sm:$0xff]
    %v4435 = vld [vmem:[#allocation8 + $0xee8] sm:$0xff]
    %v4436 = vld [vmem:[#allocation8 + $0xef0] sm:$0xff]
    %v4437 = vld [vmem:[#allocation8 + $0xef8] sm:$0xff]
    %v4438 = vld [vmem:[#allocation8 + $0xf00] sm:$0xff]
    %v4439 = vld [vmem:[#allocation8 + $0xf08] sm:$0xff]
    %v4440 = vld [vmem:[#allocation8 + $0xf10] sm:$0xff]
    %v4441 = vld [vmem:[#allocation8 + $0xf18] sm:$0xff]
    %v4442 = vld [vmem:[#allocation8 + $0xf20] sm:$0xff]
    %v4443 = vld [vmem:[#allocation8 + $0xf28] sm:$0xff]
    %v4444 = vld [vmem:[#allocation8 + $0xf30] sm:$0xff]
    %v4445 = vld [vmem:[#allocation8 + $0xf38] sm:$0xff]
    %v4446 = vld [vmem:[#allocation8 + $0xf40] sm:$0xff]
    %v4447 = vld [vmem:[#allocation8 + $0xf48] sm:$0xff]
    %v4448 = vld [vmem:[#allocation8 + $0xf50] sm:$0xff]
    %v4449 = vld [vmem:[#allocation8 + $0xf58] sm:$0xff]
    %v4450 = vld [vmem:[#allocation8 + $0xf60] sm:$0xff]
    %v4451 = vld [vmem:[#allocation8 + $0xf68] sm:$0xff]
    %v4452 = vld [vmem:[#allocation8 + $0xf70] sm:$0xff]
    %v4453 = vld [vmem:[#allocation8 + $0xf78] sm:$0xff]
    %v4454 = vld [vmem:[#allocation8 + $0xf80] sm:$0xff]
    %v4455 = vld [vmem:[#allocation8 + $0xf88] sm:$0xff]
    %v4456 = vld [vmem:[#allocation8 + $0xf90] sm:$0xff]
    %v4457 = vld [vmem:[#allocation8 + $0xf98] sm:$0xff]
    %v4458 = vld [vmem:[#allocation8 + $0xfa0] sm:$0xff]
    %v4459 = vld [vmem:[#allocation8 + $0xfa8] sm:$0xff]
    %v4460 = vld [vmem:[#allocation8 + $0xfb0] sm:$0xff]
    %v4461 = vld [vmem:[#allocation8 + $0xfb8] sm:$0xff]
    %v4462 = vld [vmem:[#allocation8 + $0xfc0] sm:$0xff]
    %v4463 = vld [vmem:[#allocation8 + $0xfc8] sm:$0xff]
    %v4464 = vld [vmem:[#allocation8 + $0xfd0] sm:$0xff]
    %v4465 = vld [vmem:[#allocation8 + $0xfd8] sm:$0xff]
    %v4466 = vld [vmem:[#allocation8 + $0xfe0] sm:$0xff]
    %v4467 = vld [vmem:[#allocation8 + $0xfe8] sm:$0xff]
    %v4468 = vld [vmem:[#allocation8 + $0xff0] sm:$0xff]
    %v4469 = vld [vmem:[#allocation8 + $0xff8] sm:$0xff]
    %v4470 = vld [vmem:[#allocation10] sm:$0xff]
    %v4472 = vlaneseq
    %v4473 = vshrl.u32 %v4472, 7
    %v4474 = vsub.s32 0, %v4473
    %v4475 = vrot.slane %v4470, %v4474
    %v4476 = vlaneseq
    %v4477 = vshrl.u32 %v4476, 7
    %v4478 = vsub.s32 1, %v4477
    %v4479 = vrot.slane %v4470, %v4478
    %v4480 = vlaneseq
    %v4481 = vshrl.u32 %v4480, 7
    %v4482 = vsub.s32 2, %v4481
    %v4483 = vrot.slane %v4470, %v4482
    %v4484 = vlaneseq
    %v4485 = vshrl.u32 %v4484, 7
    %v4486 = vsub.s32 3, %v4485
    %v4487 = vrot.slane %v4470, %v4486
    %v4488 = vlaneseq
    %v4489 = vshrl.u32 %v4488, 7
    %v4490 = vsub.s32 4, %v4489
    %v4491 = vrot.slane %v4470, %v4490
    %v4492 = vlaneseq
    %v4493 = vshrl.u32 %v4492, 7
    %v4494 = vsub.s32 5, %v4493
    %v4495 = vrot.slane %v4470, %v4494
    %v4496 = vlaneseq
    %v4497 = vshrl.u32 %v4496, 7
    %v4498 = vsub.s32 6, %v4497
    %v4499 = vrot.slane %v4470, %v4498
    %v4500 = vlaneseq
    %v4501 = vshrl.u32 %v4500, 7
    %v4502 = vsub.s32 7, %v4501
    %v4503 = vrot.slane %v4470, %v4502
    %v5024 = vunpack.c.l.b16 %v3958
    %v5025 = vunpack.c.h.b16 %v3958
    %v5026 = vunpack.c.l.b16 %v3959
    %v5027 = vunpack.c.h.b16 %v3959
    %v5028 = vunpack.c.l.b16 %v3960
    %v5029 = vunpack.c.h.b16 %v3960
    %v5030 = vunpack.c.l.b16 %v3961
    %v5031 = vunpack.c.h.b16 %v3961
    %v5032 = vunpack.c.l.b16 %v3962
    %v5033 = vunpack.c.h.b16 %v3962
    %v5034 = vunpack.c.l.b16 %v3963
    %v5035 = vunpack.c.h.b16 %v3963
    %v5036 = vunpack.c.l.b16 %v3964
    %v5037 = vunpack.c.h.b16 %v3964
    %v5038 = vunpack.c.l.b16 %v3965
    %v5039 = vunpack.c.h.b16 %v3965
    %v5040 = vunpack.c.l.b16 %v3966
    %v5041 = vunpack.c.h.b16 %v3966
    %v5042 = vunpack.c.l.b16 %v3967
    %v5043 = vunpack.c.h.b16 %v3967
    %v5044 = vunpack.c.l.b16 %v3968
    %v5045 = vunpack.c.h.b16 %v3968
    %v5046 = vunpack.c.l.b16 %v3969
    %v5047 = vunpack.c.h.b16 %v3969
    %v5048 = vunpack.c.l.b16 %v3970
    %v5049 = vunpack.c.h.b16 %v3970
    %v5050 = vunpack.c.l.b16 %v3971
    %v5051 = vunpack.c.h.b16 %v3971
    %v5052 = vunpack.c.l.b16 %v3972
    %v5053 = vunpack.c.h.b16 %v3972
    %v5054 = vunpack.c.l.b16 %v3973
    %v5055 = vunpack.c.h.b16 %v3973
    %v5056 = vunpack.c.l.b16 %v3974
    %v5057 = vunpack.c.h.b16 %v3974
    %v5058 = vunpack.c.l.b16 %v3975
    %v5059 = vunpack.c.h.b16 %v3975
    %v5060 = vunpack.c.l.b16 %v3976
    %v5061 = vunpack.c.h.b16 %v3976
    %v5062 = vunpack.c.l.b16 %v3977
    %v5063 = vunpack.c.h.b16 %v3977
    %v5064 = vunpack.c.l.b16 %v3978
    %v5065 = vunpack.c.h.b16 %v3978
    %v5066 = vunpack.c.l.b16 %v3979
    %v5067 = vunpack.c.h.b16 %v3979
    %v5068 = vunpack.c.l.b16 %v3980
    %v5069 = vunpack.c.h.b16 %v3980
    %v5070 = vunpack.c.l.b16 %v3981
    %v5071 = vunpack.c.h.b16 %v3981
    %v5072 = vunpack.c.l.b16 %v3982
    %v5073 = vunpack.c.h.b16 %v3982
    %v5074 = vunpack.c.l.b16 %v3983
    %v5075 = vunpack.c.h.b16 %v3983
    %v5076 = vunpack.c.l.b16 %v3984
    %v5077 = vunpack.c.h.b16 %v3984
    %v5078 = vunpack.c.l.b16 %v3985
    %v5079 = vunpack.c.h.b16 %v3985
    %v5080 = vunpack.c.l.b16 %v3986
    %v5081 = vunpack.c.h.b16 %v3986
    %v5082 = vunpack.c.l.b16 %v3987
    %v5083 = vunpack.c.h.b16 %v3987
    %v5084 = vunpack.c.l.b16 %v3988
    %v5085 = vunpack.c.h.b16 %v3988
    %v5086 = vunpack.c.l.b16 %v3989
    %v5087 = vunpack.c.h.b16 %v3989
    %v5088 = vunpack.c.l.b16 %v3990
    %v5089 = vunpack.c.h.b16 %v3990
    %v5090 = vunpack.c.l.b16 %v3991
    %v5091 = vunpack.c.h.b16 %v3991
    %v5092 = vunpack.c.l.b16 %v3992
    %v5093 = vunpack.c.h.b16 %v3992
    %v5094 = vunpack.c.l.b16 %v3993
    %v5095 = vunpack.c.h.b16 %v3993
    %v5096 = vunpack.c.l.b16 %v3994
    %v5097 = vunpack.c.h.b16 %v3994
    %v5098 = vunpack.c.l.b16 %v3995
    %v5099 = vunpack.c.h.b16 %v3995
    %v5100 = vunpack.c.l.b16 %v3996
    %v5101 = vunpack.c.h.b16 %v3996
    %v5102 = vunpack.c.l.b16 %v3997
    %v5103 = vunpack.c.h.b16 %v3997
    %v5104 = vunpack.c.l.b16 %v3998
    %v5105 = vunpack.c.h.b16 %v3998
    %v5106 = vunpack.c.l.b16 %v3999
    %v5107 = vunpack.c.h.b16 %v3999
    %v5108 = vunpack.c.l.b16 %v4000
    %v5109 = vunpack.c.h.b16 %v4000
    %v5110 = vunpack.c.l.b16 %v4001
    %v5111 = vunpack.c.h.b16 %v4001
    %v5112 = vunpack.c.l.b16 %v4002
    %v5113 = vunpack.c.h.b16 %v4002
    %v5114 = vunpack.c.l.b16 %v4003
    %v5115 = vunpack.c.h.b16 %v4003
    %v5116 = vunpack.c.l.b16 %v4004
    %v5117 = vunpack.c.h.b16 %v4004
    %v5118 = vunpack.c.l.b16 %v4005
    %v5119 = vunpack.c.h.b16 %v4005
    %v5120 = vunpack.c.l.b16 %v4006
    %v5121 = vunpack.c.h.b16 %v4006
    %v5122 = vunpack.c.l.b16 %v4007
    %v5123 = vunpack.c.h.b16 %v4007
    %v5124 = vunpack.c.l.b16 %v4008
    %v5125 = vunpack.c.h.b16 %v4008
    %v5126 = vunpack.c.l.b16 %v4009
    %v5127 = vunpack.c.h.b16 %v4009
    %v5128 = vunpack.c.l.b16 %v4010
    %v5129 = vunpack.c.h.b16 %v4010
    %v5130 = vunpack.c.l.b16 %v4011
    %v5131 = vunpack.c.h.b16 %v4011
    %v5132 = vunpack.c.l.b16 %v4012
    %v5133 = vunpack.c.h.b16 %v4012
    %v5134 = vunpack.c.l.b16 %v4013
    %v5135 = vunpack.c.h.b16 %v4013
    %v5136 = vunpack.c.l.b16 %v4014
    %v5137 = vunpack.c.h.b16 %v4014
    %v5138 = vunpack.c.l.b16 %v4015
    %v5139 = vunpack.c.h.b16 %v4015
    %v5140 = vunpack.c.l.b16 %v4016
    %v5141 = vunpack.c.h.b16 %v4016
    %v5142 = vunpack.c.l.b16 %v4017
    %v5143 = vunpack.c.h.b16 %v4017
    %v5144 = vunpack.c.l.b16 %v4018
    %v5145 = vunpack.c.h.b16 %v4018
    %v5146 = vunpack.c.l.b16 %v4019
    %v5147 = vunpack.c.h.b16 %v4019
    %v5148 = vunpack.c.l.b16 %v4020
    %v5149 = vunpack.c.h.b16 %v4020
    %v5150 = vunpack.c.l.b16 %v4021
    %v5151 = vunpack.c.h.b16 %v4021
    %v5152 = vunpack.c.l.b16 %v4022
    %v5153 = vunpack.c.h.b16 %v4022
    %v5154 = vunpack.c.l.b16 %v4023
    %v5155 = vunpack.c.h.b16 %v4023
    %v5156 = vunpack.c.l.b16 %v4024
    %v5157 = vunpack.c.h.b16 %v4024
    %v5158 = vunpack.c.l.b16 %v4025
    %v5159 = vunpack.c.h.b16 %v4025
    %v5160 = vunpack.c.l.b16 %v4026
    %v5161 = vunpack.c.h.b16 %v4026
    %v5162 = vunpack.c.l.b16 %v4027
    %v5163 = vunpack.c.h.b16 %v4027
    %v5164 = vunpack.c.l.b16 %v4028
    %v5165 = vunpack.c.h.b16 %v4028
    %v5166 = vunpack.c.l.b16 %v4029
    %v5167 = vunpack.c.h.b16 %v4029
    %v5168 = vunpack.c.l.b16 %v4030
    %v5169 = vunpack.c.h.b16 %v4030
    %v5170 = vunpack.c.l.b16 %v4031
    %v5171 = vunpack.c.h.b16 %v4031
    %v5172 = vunpack.c.l.b16 %v4032
    %v5173 = vunpack.c.h.b16 %v4032
    %v5174 = vunpack.c.l.b16 %v4033
    %v5175 = vunpack.c.h.b16 %v4033
    %v5176 = vunpack.c.l.b16 %v4034
    %v5177 = vunpack.c.h.b16 %v4034
    %v5178 = vunpack.c.l.b16 %v4035
    %v5179 = vunpack.c.h.b16 %v4035
    %v5180 = vunpack.c.l.b16 %v4036
    %v5181 = vunpack.c.h.b16 %v4036
    %v5182 = vunpack.c.l.b16 %v4037
    %v5183 = vunpack.c.h.b16 %v4037
    %v5184 = vunpack.c.l.b16 %v4038
    %v5185 = vunpack.c.h.b16 %v4038
    %v5186 = vunpack.c.l.b16 %v4039
    %v5187 = vunpack.c.h.b16 %v4039
    %v5188 = vunpack.c.l.b16 %v4040
    %v5189 = vunpack.c.h.b16 %v4040
    %v5190 = vunpack.c.l.b16 %v4041
    %v5191 = vunpack.c.h.b16 %v4041
    %v5192 = vunpack.c.l.b16 %v4042
    %v5193 = vunpack.c.h.b16 %v4042
    %v5194 = vunpack.c.l.b16 %v4043
    %v5195 = vunpack.c.h.b16 %v4043
    %v5196 = vunpack.c.l.b16 %v4044
    %v5197 = vunpack.c.h.b16 %v4044
    %v5198 = vunpack.c.l.b16 %v4045
    %v5199 = vunpack.c.h.b16 %v4045
    %v5200 = vunpack.c.l.b16 %v4046
    %v5201 = vunpack.c.h.b16 %v4046
    %v5202 = vunpack.c.l.b16 %v4047
    %v5203 = vunpack.c.h.b16 %v4047
    %v5204 = vunpack.c.l.b16 %v4048
    %v5205 = vunpack.c.h.b16 %v4048
    %v5206 = vunpack.c.l.b16 %v4049
    %v5207 = vunpack.c.h.b16 %v4049
    %v5208 = vunpack.c.l.b16 %v4050
    %v5209 = vunpack.c.h.b16 %v4050
    %v5210 = vunpack.c.l.b16 %v4051
    %v5211 = vunpack.c.h.b16 %v4051
    %v5212 = vunpack.c.l.b16 %v4052
    %v5213 = vunpack.c.h.b16 %v4052
    %v5214 = vunpack.c.l.b16 %v4053
    %v5215 = vunpack.c.h.b16 %v4053
    %v5216 = vunpack.c.l.b16 %v4054
    %v5217 = vunpack.c.h.b16 %v4054
    %v5218 = vunpack.c.l.b16 %v4055
    %v5219 = vunpack.c.h.b16 %v4055
    %v5220 = vunpack.c.l.b16 %v4056
    %v5221 = vunpack.c.h.b16 %v4056
    %v5222 = vunpack.c.l.b16 %v4057
    %v5223 = vunpack.c.h.b16 %v4057
    %v5224 = vunpack.c.l.b16 %v4058
    %v5225 = vunpack.c.h.b16 %v4058
    %v5226 = vunpack.c.l.b16 %v4059
    %v5227 = vunpack.c.h.b16 %v4059
    %v5228 = vunpack.c.l.b16 %v4060
    %v5229 = vunpack.c.h.b16 %v4060
    %v5230 = vunpack.c.l.b16 %v4061
    %v5231 = vunpack.c.h.b16 %v4061
    %v5232 = vunpack.c.l.b16 %v4062
    %v5233 = vunpack.c.h.b16 %v4062
    %v5234 = vunpack.c.l.b16 %v4063
    %v5235 = vunpack.c.h.b16 %v4063
    %v5236 = vunpack.c.l.b16 %v4064
    %v5237 = vunpack.c.h.b16 %v4064
    %v5238 = vunpack.c.l.b16 %v4065
    %v5239 = vunpack.c.h.b16 %v4065
    %v5240 = vunpack.c.l.b16 %v4066
    %v5241 = vunpack.c.h.b16 %v4066
    %v5242 = vunpack.c.l.b16 %v4067
    %v5243 = vunpack.c.h.b16 %v4067
    %v5244 = vunpack.c.l.b16 %v4068
    %v5245 = vunpack.c.h.b16 %v4068
    %v5246 = vunpack.c.l.b16 %v4069
    %v5247 = vunpack.c.h.b16 %v4069
    %v5248 = vunpack.c.l.b16 %v4070
    %v5249 = vunpack.c.h.b16 %v4070
    %v5250 = vunpack.c.l.b16 %v4071
    %v5251 = vunpack.c.h.b16 %v4071
    %v5252 = vunpack.c.l.b16 %v4072
    %v5253 = vunpack.c.h.b16 %v4072
    %v5254 = vunpack.c.l.b16 %v4073
    %v5255 = vunpack.c.h.b16 %v4073
    %v5256 = vunpack.c.l.b16 %v4074
    %v5257 = vunpack.c.h.b16 %v4074
    %v5258 = vunpack.c.l.b16 %v4075
    %v5259 = vunpack.c.h.b16 %v4075
    %v5260 = vunpack.c.l.b16 %v4076
    %v5261 = vunpack.c.h.b16 %v4076
    %v5262 = vunpack.c.l.b16 %v4077
    %v5263 = vunpack.c.h.b16 %v4077
    %v5264 = vunpack.c.l.b16 %v4078
    %v5265 = vunpack.c.h.b16 %v4078
    %v5266 = vunpack.c.l.b16 %v4079
    %v5267 = vunpack.c.h.b16 %v4079
    %v5268 = vunpack.c.l.b16 %v4080
    %v5269 = vunpack.c.h.b16 %v4080
    %v5270 = vunpack.c.l.b16 %v4081
    %v5271 = vunpack.c.h.b16 %v4081
    %v5272 = vunpack.c.l.b16 %v4082
    %v5273 = vunpack.c.h.b16 %v4082
    %v5274 = vunpack.c.l.b16 %v4083
    %v5275 = vunpack.c.h.b16 %v4083
    %v5276 = vunpack.c.l.b16 %v4084
    %v5277 = vunpack.c.h.b16 %v4084
    %v5278 = vunpack.c.l.b16 %v4085
    %v5279 = vunpack.c.h.b16 %v4085
    %v5280 = vunpack.c.l.b16 %v4086
    %v5281 = vunpack.c.h.b16 %v4086
    %v5282 = vunpack.c.l.b16 %v4087
    %v5283 = vunpack.c.h.b16 %v4087
    %v5284 = vunpack.c.l.b16 %v4088
    %v5285 = vunpack.c.h.b16 %v4088
    %v5286 = vunpack.c.l.b16 %v4089
    %v5287 = vunpack.c.h.b16 %v4089
    %v5288 = vunpack.c.l.b16 %v4090
    %v5289 = vunpack.c.h.b16 %v4090
    %v5290 = vunpack.c.l.b16 %v4091
    %v5291 = vunpack.c.h.b16 %v4091
    %v5292 = vunpack.c.l.b16 %v4092
    %v5293 = vunpack.c.h.b16 %v4092
    %v5294 = vunpack.c.l.b16 %v4093
    %v5295 = vunpack.c.h.b16 %v4093
    %v5296 = vunpack.c.l.b16 %v4094
    %v5297 = vunpack.c.h.b16 %v4094
    %v5298 = vunpack.c.l.b16 %v4095
    %v5299 = vunpack.c.h.b16 %v4095
    %v5300 = vunpack.c.l.b16 %v4096
    %v5301 = vunpack.c.h.b16 %v4096
    %v5302 = vunpack.c.l.b16 %v4097
    %v5303 = vunpack.c.h.b16 %v4097
    %v5304 = vunpack.c.l.b16 %v4098
    %v5305 = vunpack.c.h.b16 %v4098
    %v5306 = vunpack.c.l.b16 %v4099
    %v5307 = vunpack.c.h.b16 %v4099
    %v5308 = vunpack.c.l.b16 %v4100
    %v5309 = vunpack.c.h.b16 %v4100
    %v5310 = vunpack.c.l.b16 %v4101
    %v5311 = vunpack.c.h.b16 %v4101
    %v5312 = vunpack.c.l.b16 %v4102
    %v5313 = vunpack.c.h.b16 %v4102
    %v5314 = vunpack.c.l.b16 %v4103
    %v5315 = vunpack.c.h.b16 %v4103
    %v5316 = vunpack.c.l.b16 %v4104
    %v5317 = vunpack.c.h.b16 %v4104
    %v5318 = vunpack.c.l.b16 %v4105
    %v5319 = vunpack.c.h.b16 %v4105
    %v5320 = vunpack.c.l.b16 %v4106
    %v5321 = vunpack.c.h.b16 %v4106
    %v5322 = vunpack.c.l.b16 %v4107
    %v5323 = vunpack.c.h.b16 %v4107
    %v5324 = vunpack.c.l.b16 %v4108
    %v5325 = vunpack.c.h.b16 %v4108
    %v5326 = vunpack.c.l.b16 %v4109
    %v5327 = vunpack.c.h.b16 %v4109
    %v5328 = vunpack.c.l.b16 %v4110
    %v5329 = vunpack.c.h.b16 %v4110
    %v5330 = vunpack.c.l.b16 %v4111
    %v5331 = vunpack.c.h.b16 %v4111
    %v5332 = vunpack.c.l.b16 %v4112
    %v5333 = vunpack.c.h.b16 %v4112
    %v5334 = vunpack.c.l.b16 %v4113
    %v5335 = vunpack.c.h.b16 %v4113
    %v5336 = vunpack.c.l.b16 %v4114
    %v5337 = vunpack.c.h.b16 %v4114
    %v5338 = vunpack.c.l.b16 %v4115
    %v5339 = vunpack.c.h.b16 %v4115
    %v5340 = vunpack.c.l.b16 %v4116
    %v5341 = vunpack.c.h.b16 %v4116
    %v5342 = vunpack.c.l.b16 %v4117
    %v5343 = vunpack.c.h.b16 %v4117
    %v5344 = vunpack.c.l.b16 %v4118
    %v5345 = vunpack.c.h.b16 %v4118
    %v5346 = vunpack.c.l.b16 %v4119
    %v5347 = vunpack.c.h.b16 %v4119
    %v5348 = vunpack.c.l.b16 %v4120
    %v5349 = vunpack.c.h.b16 %v4120
    %v5350 = vunpack.c.l.b16 %v4121
    %v5351 = vunpack.c.h.b16 %v4121
    %v5352 = vunpack.c.l.b16 %v4122
    %v5353 = vunpack.c.h.b16 %v4122
    %v5354 = vunpack.c.l.b16 %v4123
    %v5355 = vunpack.c.h.b16 %v4123
    %v5356 = vunpack.c.l.b16 %v4124
    %v5357 = vunpack.c.h.b16 %v4124
    %v5358 = vunpack.c.l.b16 %v4125
    %v5359 = vunpack.c.h.b16 %v4125
    %v5360 = vunpack.c.l.b16 %v4126
    %v5361 = vunpack.c.h.b16 %v4126
    %v5362 = vunpack.c.l.b16 %v4127
    %v5363 = vunpack.c.h.b16 %v4127
    %v5364 = vunpack.c.l.b16 %v4128
    %v5365 = vunpack.c.h.b16 %v4128
    %v5366 = vunpack.c.l.b16 %v4129
    %v5367 = vunpack.c.h.b16 %v4129
    %v5368 = vunpack.c.l.b16 %v4130
    %v5369 = vunpack.c.h.b16 %v4130
    %v5370 = vunpack.c.l.b16 %v4131
    %v5371 = vunpack.c.h.b16 %v4131
    %v5372 = vunpack.c.l.b16 %v4132
    %v5373 = vunpack.c.h.b16 %v4132
    %v5374 = vunpack.c.l.b16 %v4133
    %v5375 = vunpack.c.h.b16 %v4133
    %v5376 = vunpack.c.l.b16 %v4134
    %v5377 = vunpack.c.h.b16 %v4134
    %v5378 = vunpack.c.l.b16 %v4135
    %v5379 = vunpack.c.h.b16 %v4135
    %v5380 = vunpack.c.l.b16 %v4136
    %v5381 = vunpack.c.h.b16 %v4136
    %v5382 = vunpack.c.l.b16 %v4137
    %v5383 = vunpack.c.h.b16 %v4137
    %v5384 = vunpack.c.l.b16 %v4138
    %v5385 = vunpack.c.h.b16 %v4138
    %v5386 = vunpack.c.l.b16 %v4139
    %v5387 = vunpack.c.h.b16 %v4139
    %v5388 = vunpack.c.l.b16 %v4140
    %v5389 = vunpack.c.h.b16 %v4140
    %v5390 = vunpack.c.l.b16 %v4141
    %v5391 = vunpack.c.h.b16 %v4141
    %v5392 = vunpack.c.l.b16 %v4142
    %v5393 = vunpack.c.h.b16 %v4142
    %v5394 = vunpack.c.l.b16 %v4143
    %v5395 = vunpack.c.h.b16 %v4143
    %v5396 = vunpack.c.l.b16 %v4144
    %v5397 = vunpack.c.h.b16 %v4144
    %v5398 = vunpack.c.l.b16 %v4145
    %v5399 = vunpack.c.h.b16 %v4145
    %v5400 = vunpack.c.l.b16 %v4146
    %v5401 = vunpack.c.h.b16 %v4146
    %v5402 = vunpack.c.l.b16 %v4147
    %v5403 = vunpack.c.h.b16 %v4147
    %v5404 = vunpack.c.l.b16 %v4148
    %v5405 = vunpack.c.h.b16 %v4148
    %v5406 = vunpack.c.l.b16 %v4149
    %v5407 = vunpack.c.h.b16 %v4149
    %v5408 = vunpack.c.l.b16 %v4150
    %v5409 = vunpack.c.h.b16 %v4150
    %v5410 = vunpack.c.l.b16 %v4151
    %v5411 = vunpack.c.h.b16 %v4151
    %v5412 = vunpack.c.l.b16 %v4152
    %v5413 = vunpack.c.h.b16 %v4152
    %v5414 = vunpack.c.l.b16 %v4153
    %v5415 = vunpack.c.h.b16 %v4153
    %v5416 = vunpack.c.l.b16 %v4154
    %v5417 = vunpack.c.h.b16 %v4154
    %v5418 = vunpack.c.l.b16 %v4155
    %v5419 = vunpack.c.h.b16 %v4155
    %v5420 = vunpack.c.l.b16 %v4156
    %v5421 = vunpack.c.h.b16 %v4156
    %v5422 = vunpack.c.l.b16 %v4157
    %v5423 = vunpack.c.h.b16 %v4157
    %v5424 = vunpack.c.l.b16 %v4158
    %v5425 = vunpack.c.h.b16 %v4158
    %v5426 = vunpack.c.l.b16 %v4159
    %v5427 = vunpack.c.h.b16 %v4159
    %v5428 = vunpack.c.l.b16 %v4160
    %v5429 = vunpack.c.h.b16 %v4160
    %v5430 = vunpack.c.l.b16 %v4161
    %v5431 = vunpack.c.h.b16 %v4161
    %v5432 = vunpack.c.l.b16 %v4162
    %v5433 = vunpack.c.h.b16 %v4162
    %v5434 = vunpack.c.l.b16 %v4163
    %v5435 = vunpack.c.h.b16 %v4163
    %v5436 = vunpack.c.l.b16 %v4164
    %v5437 = vunpack.c.h.b16 %v4164
    %v5438 = vunpack.c.l.b16 %v4165
    %v5439 = vunpack.c.h.b16 %v4165
    %v5440 = vunpack.c.l.b16 %v4166
    %v5441 = vunpack.c.h.b16 %v4166
    %v5442 = vunpack.c.l.b16 %v4167
    %v5443 = vunpack.c.h.b16 %v4167
    %v5444 = vunpack.c.l.b16 %v4168
    %v5445 = vunpack.c.h.b16 %v4168
    %v5446 = vunpack.c.l.b16 %v4169
    %v5447 = vunpack.c.h.b16 %v4169
    %v5448 = vunpack.c.l.b16 %v4170
    %v5449 = vunpack.c.h.b16 %v4170
    %v5450 = vunpack.c.l.b16 %v4171
    %v5451 = vunpack.c.h.b16 %v4171
    %v5452 = vunpack.c.l.b16 %v4172
    %v5453 = vunpack.c.h.b16 %v4172
    %v5454 = vunpack.c.l.b16 %v4173
    %v5455 = vunpack.c.h.b16 %v4173
    %v5456 = vunpack.c.l.b16 %v4174
    %v5457 = vunpack.c.h.b16 %v4174
    %v5458 = vunpack.c.l.b16 %v4175
    %v5459 = vunpack.c.h.b16 %v4175
    %v5460 = vunpack.c.l.b16 %v4176
    %v5461 = vunpack.c.h.b16 %v4176
    %v5462 = vunpack.c.l.b16 %v4177
    %v5463 = vunpack.c.h.b16 %v4177
    %v5464 = vunpack.c.l.b16 %v4178
    %v5465 = vunpack.c.h.b16 %v4178
    %v5466 = vunpack.c.l.b16 %v4179
    %v5467 = vunpack.c.h.b16 %v4179
    %v5468 = vunpack.c.l.b16 %v4180
    %v5469 = vunpack.c.h.b16 %v4180
    %v5470 = vunpack.c.l.b16 %v4181
    %v5471 = vunpack.c.h.b16 %v4181
    %v5472 = vunpack.c.l.b16 %v4182
    %v5473 = vunpack.c.h.b16 %v4182
    %v5474 = vunpack.c.l.b16 %v4183
    %v5475 = vunpack.c.h.b16 %v4183
    %v5476 = vunpack.c.l.b16 %v4184
    %v5477 = vunpack.c.h.b16 %v4184
    %v5478 = vunpack.c.l.b16 %v4185
    %v5479 = vunpack.c.h.b16 %v4185
    %v5480 = vunpack.c.l.b16 %v4186
    %v5481 = vunpack.c.h.b16 %v4186
    %v5482 = vunpack.c.l.b16 %v4187
    %v5483 = vunpack.c.h.b16 %v4187
    %v5484 = vunpack.c.l.b16 %v4188
    %v5485 = vunpack.c.h.b16 %v4188
    %v5486 = vunpack.c.l.b16 %v4189
    %v5487 = vunpack.c.h.b16 %v4189
    %v5488 = vunpack.c.l.b16 %v4190
    %v5489 = vunpack.c.h.b16 %v4190
    %v5490 = vunpack.c.l.b16 %v4191
    %v5491 = vunpack.c.h.b16 %v4191
    %v5492 = vunpack.c.l.b16 %v4192
    %v5493 = vunpack.c.h.b16 %v4192
    %v5494 = vunpack.c.l.b16 %v4193
    %v5495 = vunpack.c.h.b16 %v4193
    %v5496 = vunpack.c.l.b16 %v4194
    %v5497 = vunpack.c.h.b16 %v4194
    %v5498 = vunpack.c.l.b16 %v4195
    %v5499 = vunpack.c.h.b16 %v4195
    %v5500 = vunpack.c.l.b16 %v4196
    %v5501 = vunpack.c.h.b16 %v4196
    %v5502 = vunpack.c.l.b16 %v4197
    %v5503 = vunpack.c.h.b16 %v4197
    %v5504 = vunpack.c.l.b16 %v4198
    %v5505 = vunpack.c.h.b16 %v4198
    %v5506 = vunpack.c.l.b16 %v4199
    %v5507 = vunpack.c.h.b16 %v4199
    %v5508 = vunpack.c.l.b16 %v4200
    %v5509 = vunpack.c.h.b16 %v4200
    %v5510 = vunpack.c.l.b16 %v4201
    %v5511 = vunpack.c.h.b16 %v4201
    %v5512 = vunpack.c.l.b16 %v4202
    %v5513 = vunpack.c.h.b16 %v4202
    %v5514 = vunpack.c.l.b16 %v4203
    %v5515 = vunpack.c.h.b16 %v4203
    %v5516 = vunpack.c.l.b16 %v4204
    %v5517 = vunpack.c.h.b16 %v4204
    %v5518 = vunpack.c.l.b16 %v4205
    %v5519 = vunpack.c.h.b16 %v4205
    %v5520 = vunpack.c.l.b16 %v4206
    %v5521 = vunpack.c.h.b16 %v4206
    %v5522 = vunpack.c.l.b16 %v4207
    %v5523 = vunpack.c.h.b16 %v4207
    %v5524 = vunpack.c.l.b16 %v4208
    %v5525 = vunpack.c.h.b16 %v4208
    %v5526 = vunpack.c.l.b16 %v4209
    %v5527 = vunpack.c.h.b16 %v4209
    %v5528 = vunpack.c.l.b16 %v4210
    %v5529 = vunpack.c.h.b16 %v4210
    %v5530 = vunpack.c.l.b16 %v4211
    %v5531 = vunpack.c.h.b16 %v4211
    %v5532 = vunpack.c.l.b16 %v4212
    %v5533 = vunpack.c.h.b16 %v4212
    %v5534 = vunpack.c.l.b16 %v4213
    %v5535 = vunpack.c.h.b16 %v4213
    %v5536 = vunpack.c.l.b16 %v4214
    %v5537 = vunpack.c.h.b16 %v4214
    %v5538 = vunpack.c.l.b16 %v4215
    %v5539 = vunpack.c.h.b16 %v4215
    %v5540 = vunpack.c.l.b16 %v4216
    %v5541 = vunpack.c.h.b16 %v4216
    %v5542 = vunpack.c.l.b16 %v4217
    %v5543 = vunpack.c.h.b16 %v4217
    %v5544 = vunpack.c.l.b16 %v4218
    %v5545 = vunpack.c.h.b16 %v4218
    %v5546 = vunpack.c.l.b16 %v4219
    %v5547 = vunpack.c.h.b16 %v4219
    %v5548 = vunpack.c.l.b16 %v4220
    %v5549 = vunpack.c.h.b16 %v4220
    %v5550 = vunpack.c.l.b16 %v4221
    %v5551 = vunpack.c.h.b16 %v4221
    %v5552 = vunpack.c.l.b16 %v4222
    %v5553 = vunpack.c.h.b16 %v4222
    %v5554 = vunpack.c.l.b16 %v4223
    %v5555 = vunpack.c.h.b16 %v4223
    %v5556 = vunpack.c.l.b16 %v4224
    %v5557 = vunpack.c.h.b16 %v4224
    %v5558 = vunpack.c.l.b16 %v4225
    %v5559 = vunpack.c.h.b16 %v4225
    %v5560 = vunpack.c.l.b16 %v4226
    %v5561 = vunpack.c.h.b16 %v4226
    %v5562 = vunpack.c.l.b16 %v4227
    %v5563 = vunpack.c.h.b16 %v4227
    %v5564 = vunpack.c.l.b16 %v4228
    %v5565 = vunpack.c.h.b16 %v4228
    %v5566 = vunpack.c.l.b16 %v4229
    %v5567 = vunpack.c.h.b16 %v4229
    %v5568 = vunpack.c.l.b16 %v4230
    %v5569 = vunpack.c.h.b16 %v4230
    %v5570 = vunpack.c.l.b16 %v4231
    %v5571 = vunpack.c.h.b16 %v4231
    %v5572 = vunpack.c.l.b16 %v4232
    %v5573 = vunpack.c.h.b16 %v4232
    %v5574 = vunpack.c.l.b16 %v4233
    %v5575 = vunpack.c.h.b16 %v4233
    %v5576 = vunpack.c.l.b16 %v4234
    %v5577 = vunpack.c.h.b16 %v4234
    %v5578 = vunpack.c.l.b16 %v4235
    %v5579 = vunpack.c.h.b16 %v4235
    %v5580 = vunpack.c.l.b16 %v4236
    %v5581 = vunpack.c.h.b16 %v4236
    %v5582 = vunpack.c.l.b16 %v4237
    %v5583 = vunpack.c.h.b16 %v4237
    %v5584 = vunpack.c.l.b16 %v4238
    %v5585 = vunpack.c.h.b16 %v4238
    %v5586 = vunpack.c.l.b16 %v4239
    %v5587 = vunpack.c.h.b16 %v4239
    %v5588 = vunpack.c.l.b16 %v4240
    %v5589 = vunpack.c.h.b16 %v4240
    %v5590 = vunpack.c.l.b16 %v4241
    %v5591 = vunpack.c.h.b16 %v4241
    %v5592 = vunpack.c.l.b16 %v4242
    %v5593 = vunpack.c.h.b16 %v4242
    %v5594 = vunpack.c.l.b16 %v4243
    %v5595 = vunpack.c.h.b16 %v4243
    %v5596 = vunpack.c.l.b16 %v4244
    %v5597 = vunpack.c.h.b16 %v4244
    %v5598 = vunpack.c.l.b16 %v4245
    %v5599 = vunpack.c.h.b16 %v4245
    %v5600 = vunpack.c.l.b16 %v4246
    %v5601 = vunpack.c.h.b16 %v4246
    %v5602 = vunpack.c.l.b16 %v4247
    %v5603 = vunpack.c.h.b16 %v4247
    %v5604 = vunpack.c.l.b16 %v4248
    %v5605 = vunpack.c.h.b16 %v4248
    %v5606 = vunpack.c.l.b16 %v4249
    %v5607 = vunpack.c.h.b16 %v4249
    %v5608 = vunpack.c.l.b16 %v4250
    %v5609 = vunpack.c.h.b16 %v4250
    %v5610 = vunpack.c.l.b16 %v4251
    %v5611 = vunpack.c.h.b16 %v4251
    %v5612 = vunpack.c.l.b16 %v4252
    %v5613 = vunpack.c.h.b16 %v4252
    %v5614 = vunpack.c.l.b16 %v4253
    %v5615 = vunpack.c.h.b16 %v4253
    %v5616 = vunpack.c.l.b16 %v4254
    %v5617 = vunpack.c.h.b16 %v4254
    %v5618 = vunpack.c.l.b16 %v4255
    %v5619 = vunpack.c.h.b16 %v4255
    %v5620 = vunpack.c.l.b16 %v4256
    %v5621 = vunpack.c.h.b16 %v4256
    %v5622 = vunpack.c.l.b16 %v4257
    %v5623 = vunpack.c.h.b16 %v4257
    %v5624 = vunpack.c.l.b16 %v4258
    %v5625 = vunpack.c.h.b16 %v4258
    %v5626 = vunpack.c.l.b16 %v4259
    %v5627 = vunpack.c.h.b16 %v4259
    %v5628 = vunpack.c.l.b16 %v4260
    %v5629 = vunpack.c.h.b16 %v4260
    %v5630 = vunpack.c.l.b16 %v4261
    %v5631 = vunpack.c.h.b16 %v4261
    %v5632 = vunpack.c.l.b16 %v4262
    %v5633 = vunpack.c.h.b16 %v4262
    %v5634 = vunpack.c.l.b16 %v4263
    %v5635 = vunpack.c.h.b16 %v4263
    %v5636 = vunpack.c.l.b16 %v4264
    %v5637 = vunpack.c.h.b16 %v4264
    %v5638 = vunpack.c.l.b16 %v4265
    %v5639 = vunpack.c.h.b16 %v4265
    %v5640 = vunpack.c.l.b16 %v4266
    %v5641 = vunpack.c.h.b16 %v4266
    %v5642 = vunpack.c.l.b16 %v4267
    %v5643 = vunpack.c.h.b16 %v4267
    %v5644 = vunpack.c.l.b16 %v4268
    %v5645 = vunpack.c.h.b16 %v4268
    %v5646 = vunpack.c.l.b16 %v4269
    %v5647 = vunpack.c.h.b16 %v4269
    %v5648 = vunpack.c.l.b16 %v4270
    %v5649 = vunpack.c.h.b16 %v4270
    %v5650 = vunpack.c.l.b16 %v4271
    %v5651 = vunpack.c.h.b16 %v4271
    %v5652 = vunpack.c.l.b16 %v4272
    %v5653 = vunpack.c.h.b16 %v4272
    %v5654 = vunpack.c.l.b16 %v4273
    %v5655 = vunpack.c.h.b16 %v4273
    %v5656 = vunpack.c.l.b16 %v4274
    %v5657 = vunpack.c.h.b16 %v4274
    %v5658 = vunpack.c.l.b16 %v4275
    %v5659 = vunpack.c.h.b16 %v4275
    %v5660 = vunpack.c.l.b16 %v4276
    %v5661 = vunpack.c.h.b16 %v4276
    %v5662 = vunpack.c.l.b16 %v4277
    %v5663 = vunpack.c.h.b16 %v4277
    %v5664 = vunpack.c.l.b16 %v4278
    %v5665 = vunpack.c.h.b16 %v4278
    %v5666 = vunpack.c.l.b16 %v4279
    %v5667 = vunpack.c.h.b16 %v4279
    %v5668 = vunpack.c.l.b16 %v4280
    %v5669 = vunpack.c.h.b16 %v4280
    %v5670 = vunpack.c.l.b16 %v4281
    %v5671 = vunpack.c.h.b16 %v4281
    %v5672 = vunpack.c.l.b16 %v4282
    %v5673 = vunpack.c.h.b16 %v4282
    %v5674 = vunpack.c.l.b16 %v4283
    %v5675 = vunpack.c.h.b16 %v4283
    %v5676 = vunpack.c.l.b16 %v4284
    %v5677 = vunpack.c.h.b16 %v4284
    %v5678 = vunpack.c.l.b16 %v4285
    %v5679 = vunpack.c.h.b16 %v4285
    %v5680 = vunpack.c.l.b16 %v4286
    %v5681 = vunpack.c.h.b16 %v4286
    %v5682 = vunpack.c.l.b16 %v4287
    %v5683 = vunpack.c.h.b16 %v4287
    %v5684 = vunpack.c.l.b16 %v4288
    %v5685 = vunpack.c.h.b16 %v4288
    %v5686 = vunpack.c.l.b16 %v4289
    %v5687 = vunpack.c.h.b16 %v4289
    %v5688 = vunpack.c.l.b16 %v4290
    %v5689 = vunpack.c.h.b16 %v4290
    %v5690 = vunpack.c.l.b16 %v4291
    %v5691 = vunpack.c.h.b16 %v4291
    %v5692 = vunpack.c.l.b16 %v4292
    %v5693 = vunpack.c.h.b16 %v4292
    %v5694 = vunpack.c.l.b16 %v4293
    %v5695 = vunpack.c.h.b16 %v4293
    %v5696 = vunpack.c.l.b16 %v4294
    %v5697 = vunpack.c.h.b16 %v4294
    %v5698 = vunpack.c.l.b16 %v4295
    %v5699 = vunpack.c.h.b16 %v4295
    %v5700 = vunpack.c.l.b16 %v4296
    %v5701 = vunpack.c.h.b16 %v4296
    %v5702 = vunpack.c.l.b16 %v4297
    %v5703 = vunpack.c.h.b16 %v4297
    %v5704 = vunpack.c.l.b16 %v4298
    %v5705 = vunpack.c.h.b16 %v4298
    %v5706 = vunpack.c.l.b16 %v4299
    %v5707 = vunpack.c.h.b16 %v4299
    %v5708 = vunpack.c.l.b16 %v4300
    %v5709 = vunpack.c.h.b16 %v4300
    %v5710 = vunpack.c.l.b16 %v4301
    %v5711 = vunpack.c.h.b16 %v4301
    %v5712 = vunpack.c.l.b16 %v4302
    %v5713 = vunpack.c.h.b16 %v4302
    %v5714 = vunpack.c.l.b16 %v4303
    %v5715 = vunpack.c.h.b16 %v4303
    %v5716 = vunpack.c.l.b16 %v4304
    %v5717 = vunpack.c.h.b16 %v4304
    %v5718 = vunpack.c.l.b16 %v4305
    %v5719 = vunpack.c.h.b16 %v4305
    %v5720 = vunpack.c.l.b16 %v4306
    %v5721 = vunpack.c.h.b16 %v4306
    %v5722 = vunpack.c.l.b16 %v4307
    %v5723 = vunpack.c.h.b16 %v4307
    %v5724 = vunpack.c.l.b16 %v4308
    %v5725 = vunpack.c.h.b16 %v4308
    %v5726 = vunpack.c.l.b16 %v4309
    %v5727 = vunpack.c.h.b16 %v4309
    %v5728 = vunpack.c.l.b16 %v4310
    %v5729 = vunpack.c.h.b16 %v4310
    %v5730 = vunpack.c.l.b16 %v4311
    %v5731 = vunpack.c.h.b16 %v4311
    %v5732 = vunpack.c.l.b16 %v4312
    %v5733 = vunpack.c.h.b16 %v4312
    %v5734 = vunpack.c.l.b16 %v4313
    %v5735 = vunpack.c.h.b16 %v4313
    %v5736 = vunpack.c.l.b16 %v4314
    %v5737 = vunpack.c.h.b16 %v4314
    %v5738 = vunpack.c.l.b16 %v4315
    %v5739 = vunpack.c.h.b16 %v4315
    %v5740 = vunpack.c.l.b16 %v4316
    %v5741 = vunpack.c.h.b16 %v4316
    %v5742 = vunpack.c.l.b16 %v4317
    %v5743 = vunpack.c.h.b16 %v4317
    %v5744 = vunpack.c.l.b16 %v4318
    %v5745 = vunpack.c.h.b16 %v4318
    %v5746 = vunpack.c.l.b16 %v4319
    %v5747 = vunpack.c.h.b16 %v4319
    %v5748 = vunpack.c.l.b16 %v4320
    %v5749 = vunpack.c.h.b16 %v4320
    %v5750 = vunpack.c.l.b16 %v4321
    %v5751 = vunpack.c.h.b16 %v4321
    %v5752 = vunpack.c.l.b16 %v4322
    %v5753 = vunpack.c.h.b16 %v4322
    %v5754 = vunpack.c.l.b16 %v4323
    %v5755 = vunpack.c.h.b16 %v4323
    %v5756 = vunpack.c.l.b16 %v4324
    %v5757 = vunpack.c.h.b16 %v4324
    %v5758 = vunpack.c.l.b16 %v4325
    %v5759 = vunpack.c.h.b16 %v4325
    %v5760 = vunpack.c.l.b16 %v4326
    %v5761 = vunpack.c.h.b16 %v4326
    %v5762 = vunpack.c.l.b16 %v4327
    %v5763 = vunpack.c.h.b16 %v4327
    %v5764 = vunpack.c.l.b16 %v4328
    %v5765 = vunpack.c.h.b16 %v4328
    %v5766 = vunpack.c.l.b16 %v4329
    %v5767 = vunpack.c.h.b16 %v4329
    %v5768 = vunpack.c.l.b16 %v4330
    %v5769 = vunpack.c.h.b16 %v4330
    %v5770 = vunpack.c.l.b16 %v4331
    %v5771 = vunpack.c.h.b16 %v4331
    %v5772 = vunpack.c.l.b16 %v4332
    %v5773 = vunpack.c.h.b16 %v4332
    %v5774 = vunpack.c.l.b16 %v4333
    %v5775 = vunpack.c.h.b16 %v4333
    %v5776 = vunpack.c.l.b16 %v4334
    %v5777 = vunpack.c.h.b16 %v4334
    %v5778 = vunpack.c.l.b16 %v4335
    %v5779 = vunpack.c.h.b16 %v4335
    %v5780 = vunpack.c.l.b16 %v4336
    %v5781 = vunpack.c.h.b16 %v4336
    %v5782 = vunpack.c.l.b16 %v4337
    %v5783 = vunpack.c.h.b16 %v4337
    %v5784 = vunpack.c.l.b16 %v4338
    %v5785 = vunpack.c.h.b16 %v4338
    %v5786 = vunpack.c.l.b16 %v4339
    %v5787 = vunpack.c.h.b16 %v4339
    %v5788 = vunpack.c.l.b16 %v4340
    %v5789 = vunpack.c.h.b16 %v4340
    %v5790 = vunpack.c.l.b16 %v4341
    %v5791 = vunpack.c.h.b16 %v4341
    %v5792 = vunpack.c.l.b16 %v4342
    %v5793 = vunpack.c.h.b16 %v4342
    %v5794 = vunpack.c.l.b16 %v4343
    %v5795 = vunpack.c.h.b16 %v4343
    %v5796 = vunpack.c.l.b16 %v4344
    %v5797 = vunpack.c.h.b16 %v4344
    %v5798 = vunpack.c.l.b16 %v4345
    %v5799 = vunpack.c.h.b16 %v4345
    %v5800 = vunpack.c.l.b16 %v4346
    %v5801 = vunpack.c.h.b16 %v4346
    %v5802 = vunpack.c.l.b16 %v4347
    %v5803 = vunpack.c.h.b16 %v4347
    %v5804 = vunpack.c.l.b16 %v4348
    %v5805 = vunpack.c.h.b16 %v4348
    %v5806 = vunpack.c.l.b16 %v4349
    %v5807 = vunpack.c.h.b16 %v4349
    %v5808 = vunpack.c.l.b16 %v4350
    %v5809 = vunpack.c.h.b16 %v4350
    %v5810 = vunpack.c.l.b16 %v4351
    %v5811 = vunpack.c.h.b16 %v4351
    %v5812 = vunpack.c.l.b16 %v4352
    %v5813 = vunpack.c.h.b16 %v4352
    %v5814 = vunpack.c.l.b16 %v4353
    %v5815 = vunpack.c.h.b16 %v4353
    %v5816 = vunpack.c.l.b16 %v4354
    %v5817 = vunpack.c.h.b16 %v4354
    %v5818 = vunpack.c.l.b16 %v4355
    %v5819 = vunpack.c.h.b16 %v4355
    %v5820 = vunpack.c.l.b16 %v4356
    %v5821 = vunpack.c.h.b16 %v4356
    %v5822 = vunpack.c.l.b16 %v4357
    %v5823 = vunpack.c.h.b16 %v4357
    %v5824 = vunpack.c.l.b16 %v4358
    %v5825 = vunpack.c.h.b16 %v4358
    %v5826 = vunpack.c.l.b16 %v4359
    %v5827 = vunpack.c.h.b16 %v4359
    %v5828 = vunpack.c.l.b16 %v4360
    %v5829 = vunpack.c.h.b16 %v4360
    %v5830 = vunpack.c.l.b16 %v4361
    %v5831 = vunpack.c.h.b16 %v4361
    %v5832 = vunpack.c.l.b16 %v4362
    %v5833 = vunpack.c.h.b16 %v4362
    %v5834 = vunpack.c.l.b16 %v4363
    %v5835 = vunpack.c.h.b16 %v4363
    %v5836 = vunpack.c.l.b16 %v4364
    %v5837 = vunpack.c.h.b16 %v4364
    %v5838 = vunpack.c.l.b16 %v4365
    %v5839 = vunpack.c.h.b16 %v4365
    %v5840 = vunpack.c.l.b16 %v4366
    %v5841 = vunpack.c.h.b16 %v4366
    %v5842 = vunpack.c.l.b16 %v4367
    %v5843 = vunpack.c.h.b16 %v4367
    %v5844 = vunpack.c.l.b16 %v4368
    %v5845 = vunpack.c.h.b16 %v4368
    %v5846 = vunpack.c.l.b16 %v4369
    %v5847 = vunpack.c.h.b16 %v4369
    %v5848 = vunpack.c.l.b16 %v4370
    %v5849 = vunpack.c.h.b16 %v4370
    %v5850 = vunpack.c.l.b16 %v4371
    %v5851 = vunpack.c.h.b16 %v4371
    %v5852 = vunpack.c.l.b16 %v4372
    %v5853 = vunpack.c.h.b16 %v4372
    %v5854 = vunpack.c.l.b16 %v4373
    %v5855 = vunpack.c.h.b16 %v4373
    %v5856 = vunpack.c.l.b16 %v4374
    %v5857 = vunpack.c.h.b16 %v4374
    %v5858 = vunpack.c.l.b16 %v4375
    %v5859 = vunpack.c.h.b16 %v4375
    %v5860 = vunpack.c.l.b16 %v4376
    %v5861 = vunpack.c.h.b16 %v4376
    %v5862 = vunpack.c.l.b16 %v4377
    %v5863 = vunpack.c.h.b16 %v4377
    %v5864 = vunpack.c.l.b16 %v4378
    %v5865 = vunpack.c.h.b16 %v4378
    %v5866 = vunpack.c.l.b16 %v4379
    %v5867 = vunpack.c.h.b16 %v4379
    %v5868 = vunpack.c.l.b16 %v4380
    %v5869 = vunpack.c.h.b16 %v4380
    %v5870 = vunpack.c.l.b16 %v4381
    %v5871 = vunpack.c.h.b16 %v4381
    %v5872 = vunpack.c.l.b16 %v4382
    %v5873 = vunpack.c.h.b16 %v4382
    %v5874 = vunpack.c.l.b16 %v4383
    %v5875 = vunpack.c.h.b16 %v4383
    %v5876 = vunpack.c.l.b16 %v4384
    %v5877 = vunpack.c.h.b16 %v4384
    %v5878 = vunpack.c.l.b16 %v4385
    %v5879 = vunpack.c.h.b16 %v4385
    %v5880 = vunpack.c.l.b16 %v4386
    %v5881 = vunpack.c.h.b16 %v4386
    %v5882 = vunpack.c.l.b16 %v4387
    %v5883 = vunpack.c.h.b16 %v4387
    %v5884 = vunpack.c.l.b16 %v4388
    %v5885 = vunpack.c.h.b16 %v4388
    %v5886 = vunpack.c.l.b16 %v4389
    %v5887 = vunpack.c.h.b16 %v4389
    %v5888 = vunpack.c.l.b16 %v4390
    %v5889 = vunpack.c.h.b16 %v4390
    %v5890 = vunpack.c.l.b16 %v4391
    %v5891 = vunpack.c.h.b16 %v4391
    %v5892 = vunpack.c.l.b16 %v4392
    %v5893 = vunpack.c.h.b16 %v4392
    %v5894 = vunpack.c.l.b16 %v4393
    %v5895 = vunpack.c.h.b16 %v4393
    %v5896 = vunpack.c.l.b16 %v4394
    %v5897 = vunpack.c.h.b16 %v4394
    %v5898 = vunpack.c.l.b16 %v4395
    %v5899 = vunpack.c.h.b16 %v4395
    %v5900 = vunpack.c.l.b16 %v4396
    %v5901 = vunpack.c.h.b16 %v4396
    %v5902 = vunpack.c.l.b16 %v4397
    %v5903 = vunpack.c.h.b16 %v4397
    %v5904 = vunpack.c.l.b16 %v4398
    %v5905 = vunpack.c.h.b16 %v4398
    %v5906 = vunpack.c.l.b16 %v4399
    %v5907 = vunpack.c.h.b16 %v4399
    %v5908 = vunpack.c.l.b16 %v4400
    %v5909 = vunpack.c.h.b16 %v4400
    %v5910 = vunpack.c.l.b16 %v4401
    %v5911 = vunpack.c.h.b16 %v4401
    %v5912 = vunpack.c.l.b16 %v4402
    %v5913 = vunpack.c.h.b16 %v4402
    %v5914 = vunpack.c.l.b16 %v4403
    %v5915 = vunpack.c.h.b16 %v4403
    %v5916 = vunpack.c.l.b16 %v4404
    %v5917 = vunpack.c.h.b16 %v4404
    %v5918 = vunpack.c.l.b16 %v4405
    %v5919 = vunpack.c.h.b16 %v4405
    %v5920 = vunpack.c.l.b16 %v4406
    %v5921 = vunpack.c.h.b16 %v4406
    %v5922 = vunpack.c.l.b16 %v4407
    %v5923 = vunpack.c.h.b16 %v4407
    %v5924 = vunpack.c.l.b16 %v4408
    %v5925 = vunpack.c.h.b16 %v4408
    %v5926 = vunpack.c.l.b16 %v4409
    %v5927 = vunpack.c.h.b16 %v4409
    %v5928 = vunpack.c.l.b16 %v4410
    %v5929 = vunpack.c.h.b16 %v4410
    %v5930 = vunpack.c.l.b16 %v4411
    %v5931 = vunpack.c.h.b16 %v4411
    %v5932 = vunpack.c.l.b16 %v4412
    %v5933 = vunpack.c.h.b16 %v4412
    %v5934 = vunpack.c.l.b16 %v4413
    %v5935 = vunpack.c.h.b16 %v4413
    %v5936 = vunpack.c.l.b16 %v4414
    %v5937 = vunpack.c.h.b16 %v4414
    %v5938 = vunpack.c.l.b16 %v4415
    %v5939 = vunpack.c.h.b16 %v4415
    %v5940 = vunpack.c.l.b16 %v4416
    %v5941 = vunpack.c.h.b16 %v4416
    %v5942 = vunpack.c.l.b16 %v4417
    %v5943 = vunpack.c.h.b16 %v4417
    %v5944 = vunpack.c.l.b16 %v4418
    %v5945 = vunpack.c.h.b16 %v4418
    %v5946 = vunpack.c.l.b16 %v4419
    %v5947 = vunpack.c.h.b16 %v4419
    %v5948 = vunpack.c.l.b16 %v4420
    %v5949 = vunpack.c.h.b16 %v4420
    %v5950 = vunpack.c.l.b16 %v4421
    %v5951 = vunpack.c.h.b16 %v4421
    %v5952 = vunpack.c.l.b16 %v4422
    %v5953 = vunpack.c.h.b16 %v4422
    %v5954 = vunpack.c.l.b16 %v4423
    %v5955 = vunpack.c.h.b16 %v4423
    %v5956 = vunpack.c.l.b16 %v4424
    %v5957 = vunpack.c.h.b16 %v4424
    %v5958 = vunpack.c.l.b16 %v4425
    %v5959 = vunpack.c.h.b16 %v4425
    %v5960 = vunpack.c.l.b16 %v4426
    %v5961 = vunpack.c.h.b16 %v4426
    %v5962 = vunpack.c.l.b16 %v4427
    %v5963 = vunpack.c.h.b16 %v4427
    %v5964 = vunpack.c.l.b16 %v4428
    %v5965 = vunpack.c.h.b16 %v4428
    %v5966 = vunpack.c.l.b16 %v4429
    %v5967 = vunpack.c.h.b16 %v4429
    %v5968 = vunpack.c.l.b16 %v4430
    %v5969 = vunpack.c.h.b16 %v4430
    %v5970 = vunpack.c.l.b16 %v4431
    %v5971 = vunpack.c.h.b16 %v4431
    %v5972 = vunpack.c.l.b16 %v4432
    %v5973 = vunpack.c.h.b16 %v4432
    %v5974 = vunpack.c.l.b16 %v4433
    %v5975 = vunpack.c.h.b16 %v4433
    %v5976 = vunpack.c.l.b16 %v4434
    %v5977 = vunpack.c.h.b16 %v4434
    %v5978 = vunpack.c.l.b16 %v4435
    %v5979 = vunpack.c.h.b16 %v4435
    %v5980 = vunpack.c.l.b16 %v4436
    %v5981 = vunpack.c.h.b16 %v4436
    %v5982 = vunpack.c.l.b16 %v4437
    %v5983 = vunpack.c.h.b16 %v4437
    %v5984 = vunpack.c.l.b16 %v4438
    %v5985 = vunpack.c.h.b16 %v4438
    %v5986 = vunpack.c.l.b16 %v4439
    %v5987 = vunpack.c.h.b16 %v4439
    %v5988 = vunpack.c.l.b16 %v4440
    %v5989 = vunpack.c.h.b16 %v4440
    %v5990 = vunpack.c.l.b16 %v4441
    %v5991 = vunpack.c.h.b16 %v4441
    %v5992 = vunpack.c.l.b16 %v4442
    %v5993 = vunpack.c.h.b16 %v4442
    %v5994 = vunpack.c.l.b16 %v4443
    %v5995 = vunpack.c.h.b16 %v4443
    %v5996 = vunpack.c.l.b16 %v4444
    %v5997 = vunpack.c.h.b16 %v4444
    %v5998 = vunpack.c.l.b16 %v4445
    %v5999 = vunpack.c.h.b16 %v4445
    %v6000 = vunpack.c.l.b16 %v4446
    %v6001 = vunpack.c.h.b16 %v4446
    %v6002 = vunpack.c.l.b16 %v4447
    %v6003 = vunpack.c.h.b16 %v4447
    %v6004 = vunpack.c.l.b16 %v4448
    %v6005 = vunpack.c.h.b16 %v4448
    %v6006 = vunpack.c.l.b16 %v4449
    %v6007 = vunpack.c.h.b16 %v4449
    %v6008 = vunpack.c.l.b16 %v4450
    %v6009 = vunpack.c.h.b16 %v4450
    %v6010 = vunpack.c.l.b16 %v4451
    %v6011 = vunpack.c.h.b16 %v4451
    %v6012 = vunpack.c.l.b16 %v4452
    %v6013 = vunpack.c.h.b16 %v4452
    %v6014 = vunpack.c.l.b16 %v4453
    %v6015 = vunpack.c.h.b16 %v4453
    %v6016 = vunpack.c.l.b16 %v4454
    %v6017 = vunpack.c.h.b16 %v4454
    %v6018 = vunpack.c.l.b16 %v4455
    %v6019 = vunpack.c.h.b16 %v4455
    %v6020 = vunpack.c.l.b16 %v4456
    %v6021 = vunpack.c.h.b16 %v4456
    %v6022 = vunpack.c.l.b16 %v4457
    %v6023 = vunpack.c.h.b16 %v4457
    %v6024 = vunpack.c.l.b16 %v4458
    %v6025 = vunpack.c.h.b16 %v4458
    %v6026 = vunpack.c.l.b16 %v4459
    %v6027 = vunpack.c.h.b16 %v4459
    %v6028 = vunpack.c.l.b16 %v4460
    %v6029 = vunpack.c.h.b16 %v4460
    %v6030 = vunpack.c.l.b16 %v4461
    %v6031 = vunpack.c.h.b16 %v4461
    %v6032 = vunpack.c.l.b16 %v4462
    %v6033 = vunpack.c.h.b16 %v4462
    %v6034 = vunpack.c.l.b16 %v4463
    %v6035 = vunpack.c.h.b16 %v4463
    %v6036 = vunpack.c.l.b16 %v4464
    %v6037 = vunpack.c.h.b16 %v4464
    %v6038 = vunpack.c.l.b16 %v4465
    %v6039 = vunpack.c.h.b16 %v4465
    %v6040 = vunpack.c.l.b16 %v4466
    %v6041 = vunpack.c.h.b16 %v4466
    %v6042 = vunpack.c.l.b16 %v4467
    %v6043 = vunpack.c.h.b16 %v4467
    %v6044 = vunpack.c.l.b16 %v4468
    %v6045 = vunpack.c.h.b16 %v4468
    %v6046 = vunpack.c.l.b16 %v4469
    %v6047 = vunpack.c.h.b16 %v4469
    %v6048 = vpack.c.b16 %v5032, %v5024
    %v6049 = vpack.c.b16 %v5033, %v5025
    %v6050 = vpack.c.b16 %v5034, %v5026
    %v6051 = vpack.c.b16 %v5035, %v5027
    %v6052 = vpack.c.b16 %v5036, %v5028
    %v6053 = vpack.c.b16 %v5037, %v5029
    %v6054 = vpack.c.b16 %v5038, %v5030
    %v6055 = vpack.c.b16 %v5039, %v5031
    %v6056 = vpack.c.b16 %v5048, %v5040
    %v6057 = vpack.c.b16 %v5049, %v5041
    %v6058 = vpack.c.b16 %v5050, %v5042
    %v6059 = vpack.c.b16 %v5051, %v5043
    %v6060 = vpack.c.b16 %v5052, %v5044
    %v6061 = vpack.c.b16 %v5053, %v5045
    %v6062 = vpack.c.b16 %v5054, %v5046
    %v6063 = vpack.c.b16 %v5055, %v5047
    %v6064 = vpack.c.b16 %v5064, %v5056
    %v6065 = vpack.c.b16 %v5065, %v5057
    %v6066 = vpack.c.b16 %v5066, %v5058
    %v6067 = vpack.c.b16 %v5067, %v5059
    %v6068 = vpack.c.b16 %v5068, %v5060
    %v6069 = vpack.c.b16 %v5069, %v5061
    %v6070 = vpack.c.b16 %v5070, %v5062
    %v6071 = vpack.c.b16 %v5071, %v5063
    %v6072 = vpack.c.b16 %v5080, %v5072
    %v6073 = vpack.c.b16 %v5081, %v5073
    %v6074 = vpack.c.b16 %v5082, %v5074
    %v6075 = vpack.c.b16 %v5083, %v5075
    %v6076 = vpack.c.b16 %v5084, %v5076
    %v6077 = vpack.c.b16 %v5085, %v5077
    %v6078 = vpack.c.b16 %v5086, %v5078
    %v6079 = vpack.c.b16 %v5087, %v5079
    %v6080 = vpack.c.b16 %v5096, %v5088
    %v6081 = vpack.c.b16 %v5097, %v5089
    %v6082 = vpack.c.b16 %v5098, %v5090
    %v6083 = vpack.c.b16 %v5099, %v5091
    %v6084 = vpack.c.b16 %v5100, %v5092
    %v6085 = vpack.c.b16 %v5101, %v5093
    %v6086 = vpack.c.b16 %v5102, %v5094
    %v6087 = vpack.c.b16 %v5103, %v5095
    %v6088 = vpack.c.b16 %v5112, %v5104
    %v6089 = vpack.c.b16 %v5113, %v5105
    %v6090 = vpack.c.b16 %v5114, %v5106
    %v6091 = vpack.c.b16 %v5115, %v5107
    %v6092 = vpack.c.b16 %v5116, %v5108
    %v6093 = vpack.c.b16 %v5117, %v5109
    %v6094 = vpack.c.b16 %v5118, %v5110
    %v6095 = vpack.c.b16 %v5119, %v5111
    %v6096 = vpack.c.b16 %v5128, %v5120
    %v6097 = vpack.c.b16 %v5129, %v5121
    %v6098 = vpack.c.b16 %v5130, %v5122
    %v6099 = vpack.c.b16 %v5131, %v5123
    %v6100 = vpack.c.b16 %v5132, %v5124
    %v6101 = vpack.c.b16 %v5133, %v5125
    %v6102 = vpack.c.b16 %v5134, %v5126
    %v6103 = vpack.c.b16 %v5135, %v5127
    %v6104 = vpack.c.b16 %v5144, %v5136
    %v6105 = vpack.c.b16 %v5145, %v5137
    %v6106 = vpack.c.b16 %v5146, %v5138
    %v6107 = vpack.c.b16 %v5147, %v5139
    %v6108 = vpack.c.b16 %v5148, %v5140
    %v6109 = vpack.c.b16 %v5149, %v5141
    %v6110 = vpack.c.b16 %v5150, %v5142
    %v6111 = vpack.c.b16 %v5151, %v5143
    %v6112 = vpack.c.b16 %v5160, %v5152
    %v6113 = vpack.c.b16 %v5161, %v5153
    %v6114 = vpack.c.b16 %v5162, %v5154
    %v6115 = vpack.c.b16 %v5163, %v5155
    %v6116 = vpack.c.b16 %v5164, %v5156
    %v6117 = vpack.c.b16 %v5165, %v5157
    %v6118 = vpack.c.b16 %v5166, %v5158
    %v6119 = vpack.c.b16 %v5167, %v5159
    %v6120 = vpack.c.b16 %v5176, %v5168
    %v6121 = vpack.c.b16 %v5177, %v5169
    %v6122 = vpack.c.b16 %v5178, %v5170
    %v6123 = vpack.c.b16 %v5179, %v5171
    %v6124 = vpack.c.b16 %v5180, %v5172
    %v6125 = vpack.c.b16 %v5181, %v5173
    %v6126 = vpack.c.b16 %v5182, %v5174
    %v6127 = vpack.c.b16 %v5183, %v5175
    %v6128 = vpack.c.b16 %v5192, %v5184
    %v6129 = vpack.c.b16 %v5193, %v5185
    %v6130 = vpack.c.b16 %v5194, %v5186
    %v6131 = vpack.c.b16 %v5195, %v5187
    %v6132 = vpack.c.b16 %v5196, %v5188
    %v6133 = vpack.c.b16 %v5197, %v5189
    %v6134 = vpack.c.b16 %v5198, %v5190
    %v6135 = vpack.c.b16 %v5199, %v5191
    %v6136 = vpack.c.b16 %v5208, %v5200
    %v6137 = vpack.c.b16 %v5209, %v5201
    %v6138 = vpack.c.b16 %v5210, %v5202
    %v6139 = vpack.c.b16 %v5211, %v5203
    %v6140 = vpack.c.b16 %v5212, %v5204
    %v6141 = vpack.c.b16 %v5213, %v5205
    %v6142 = vpack.c.b16 %v5214, %v5206
    %v6143 = vpack.c.b16 %v5215, %v5207
    %v6144 = vpack.c.b16 %v5224, %v5216
    %v6145 = vpack.c.b16 %v5225, %v5217
    %v6146 = vpack.c.b16 %v5226, %v5218
    %v6147 = vpack.c.b16 %v5227, %v5219
    %v6148 = vpack.c.b16 %v5228, %v5220
    %v6149 = vpack.c.b16 %v5229, %v5221
    %v6150 = vpack.c.b16 %v5230, %v5222
    %v6151 = vpack.c.b16 %v5231, %v5223
    %v6152 = vpack.c.b16 %v5240, %v5232
    %v6153 = vpack.c.b16 %v5241, %v5233
    %v6154 = vpack.c.b16 %v5242, %v5234
    %v6155 = vpack.c.b16 %v5243, %v5235
    %v6156 = vpack.c.b16 %v5244, %v5236
    %v6157 = vpack.c.b16 %v5245, %v5237
    %v6158 = vpack.c.b16 %v5246, %v5238
    %v6159 = vpack.c.b16 %v5247, %v5239
    %v6160 = vpack.c.b16 %v5256, %v5248
    %v6161 = vpack.c.b16 %v5257, %v5249
    %v6162 = vpack.c.b16 %v5258, %v5250
    %v6163 = vpack.c.b16 %v5259, %v5251
    %v6164 = vpack.c.b16 %v5260, %v5252
    %v6165 = vpack.c.b16 %v5261, %v5253
    %v6166 = vpack.c.b16 %v5262, %v5254
    %v6167 = vpack.c.b16 %v5263, %v5255
    %v6168 = vpack.c.b16 %v5272, %v5264
    %v6169 = vpack.c.b16 %v5273, %v5265
    %v6170 = vpack.c.b16 %v5274, %v5266
    %v6171 = vpack.c.b16 %v5275, %v5267
    %v6172 = vpack.c.b16 %v5276, %v5268
    %v6173 = vpack.c.b16 %v5277, %v5269
    %v6174 = vpack.c.b16 %v5278, %v5270
    %v6175 = vpack.c.b16 %v5279, %v5271
    %v6176 = vpack.c.b16 %v5288, %v5280
    %v6177 = vpack.c.b16 %v5289, %v5281
    %v6178 = vpack.c.b16 %v5290, %v5282
    %v6179 = vpack.c.b16 %v5291, %v5283
    %v6180 = vpack.c.b16 %v5292, %v5284
    %v6181 = vpack.c.b16 %v5293, %v5285
    %v6182 = vpack.c.b16 %v5294, %v5286
    %v6183 = vpack.c.b16 %v5295, %v5287
    %v6184 = vpack.c.b16 %v5304, %v5296
    %v6185 = vpack.c.b16 %v5305, %v5297
    %v6186 = vpack.c.b16 %v5306, %v5298
    %v6187 = vpack.c.b16 %v5307, %v5299
    %v6188 = vpack.c.b16 %v5308, %v5300
    %v6189 = vpack.c.b16 %v5309, %v5301
    %v6190 = vpack.c.b16 %v5310, %v5302
    %v6191 = vpack.c.b16 %v5311, %v5303
    %v6192 = vpack.c.b16 %v5320, %v5312
    %v6193 = vpack.c.b16 %v5321, %v5313
    %v6194 = vpack.c.b16 %v5322, %v5314
    %v6195 = vpack.c.b16 %v5323, %v5315
    %v6196 = vpack.c.b16 %v5324, %v5316
    %v6197 = vpack.c.b16 %v5325, %v5317
    %v6198 = vpack.c.b16 %v5326, %v5318
    %v6199 = vpack.c.b16 %v5327, %v5319
    %v6200 = vpack.c.b16 %v5336, %v5328
    %v6201 = vpack.c.b16 %v5337, %v5329
    %v6202 = vpack.c.b16 %v5338, %v5330
    %v6203 = vpack.c.b16 %v5339, %v5331
    %v6204 = vpack.c.b16 %v5340, %v5332
    %v6205 = vpack.c.b16 %v5341, %v5333
    %v6206 = vpack.c.b16 %v5342, %v5334
    %v6207 = vpack.c.b16 %v5343, %v5335
    %v6208 = vpack.c.b16 %v5352, %v5344
    %v6209 = vpack.c.b16 %v5353, %v5345
    %v6210 = vpack.c.b16 %v5354, %v5346
    %v6211 = vpack.c.b16 %v5355, %v5347
    %v6212 = vpack.c.b16 %v5356, %v5348
    %v6213 = vpack.c.b16 %v5357, %v5349
    %v6214 = vpack.c.b16 %v5358, %v5350
    %v6215 = vpack.c.b16 %v5359, %v5351
    %v6216 = vpack.c.b16 %v5368, %v5360
    %v6217 = vpack.c.b16 %v5369, %v5361
    %v6218 = vpack.c.b16 %v5370, %v5362
    %v6219 = vpack.c.b16 %v5371, %v5363
    %v6220 = vpack.c.b16 %v5372, %v5364
    %v6221 = vpack.c.b16 %v5373, %v5365
    %v6222 = vpack.c.b16 %v5374, %v5366
    %v6223 = vpack.c.b16 %v5375, %v5367
    %v6224 = vpack.c.b16 %v5384, %v5376
    %v6225 = vpack.c.b16 %v5385, %v5377
    %v6226 = vpack.c.b16 %v5386, %v5378
    %v6227 = vpack.c.b16 %v5387, %v5379
    %v6228 = vpack.c.b16 %v5388, %v5380
    %v6229 = vpack.c.b16 %v5389, %v5381
    %v6230 = vpack.c.b16 %v5390, %v5382
    %v6231 = vpack.c.b16 %v5391, %v5383
    %v6232 = vpack.c.b16 %v5400, %v5392
    %v6233 = vpack.c.b16 %v5401, %v5393
    %v6234 = vpack.c.b16 %v5402, %v5394
    %v6235 = vpack.c.b16 %v5403, %v5395
    %v6236 = vpack.c.b16 %v5404, %v5396
    %v6237 = vpack.c.b16 %v5405, %v5397
    %v6238 = vpack.c.b16 %v5406, %v5398
    %v6239 = vpack.c.b16 %v5407, %v5399
    %v6240 = vpack.c.b16 %v5416, %v5408
    %v6241 = vpack.c.b16 %v5417, %v5409
    %v6242 = vpack.c.b16 %v5418, %v5410
    %v6243 = vpack.c.b16 %v5419, %v5411
    %v6244 = vpack.c.b16 %v5420, %v5412
    %v6245 = vpack.c.b16 %v5421, %v5413
    %v6246 = vpack.c.b16 %v5422, %v5414
    %v6247 = vpack.c.b16 %v5423, %v5415
    %v6248 = vpack.c.b16 %v5432, %v5424
    %v6249 = vpack.c.b16 %v5433, %v5425
    %v6250 = vpack.c.b16 %v5434, %v5426
    %v6251 = vpack.c.b16 %v5435, %v5427
    %v6252 = vpack.c.b16 %v5436, %v5428
    %v6253 = vpack.c.b16 %v5437, %v5429
    %v6254 = vpack.c.b16 %v5438, %v5430
    %v6255 = vpack.c.b16 %v5439, %v5431
    %v6256 = vpack.c.b16 %v5448, %v5440
    %v6257 = vpack.c.b16 %v5449, %v5441
    %v6258 = vpack.c.b16 %v5450, %v5442
    %v6259 = vpack.c.b16 %v5451, %v5443
    %v6260 = vpack.c.b16 %v5452, %v5444
    %v6261 = vpack.c.b16 %v5453, %v5445
    %v6262 = vpack.c.b16 %v5454, %v5446
    %v6263 = vpack.c.b16 %v5455, %v5447
    %v6264 = vpack.c.b16 %v5464, %v5456
    %v6265 = vpack.c.b16 %v5465, %v5457
    %v6266 = vpack.c.b16 %v5466, %v5458
    %v6267 = vpack.c.b16 %v5467, %v5459
    %v6268 = vpack.c.b16 %v5468, %v5460
    %v6269 = vpack.c.b16 %v5469, %v5461
    %v6270 = vpack.c.b16 %v5470, %v5462
    %v6271 = vpack.c.b16 %v5471, %v5463
    %v6272 = vpack.c.b16 %v5480, %v5472
    %v6273 = vpack.c.b16 %v5481, %v5473
    %v6274 = vpack.c.b16 %v5482, %v5474
    %v6275 = vpack.c.b16 %v5483, %v5475
    %v6276 = vpack.c.b16 %v5484, %v5476
    %v6277 = vpack.c.b16 %v5485, %v5477
    %v6278 = vpack.c.b16 %v5486, %v5478
    %v6279 = vpack.c.b16 %v5487, %v5479
    %v6280 = vpack.c.b16 %v5496, %v5488
    %v6281 = vpack.c.b16 %v5497, %v5489
    %v6282 = vpack.c.b16 %v5498, %v5490
    %v6283 = vpack.c.b16 %v5499, %v5491
    %v6284 = vpack.c.b16 %v5500, %v5492
    %v6285 = vpack.c.b16 %v5501, %v5493
    %v6286 = vpack.c.b16 %v5502, %v5494
    %v6287 = vpack.c.b16 %v5503, %v5495
    %v6288 = vpack.c.b16 %v5512, %v5504
    %v6289 = vpack.c.b16 %v5513, %v5505
    %v6290 = vpack.c.b16 %v5514, %v5506
    %v6291 = vpack.c.b16 %v5515, %v5507
    %v6292 = vpack.c.b16 %v5516, %v5508
    %v6293 = vpack.c.b16 %v5517, %v5509
    %v6294 = vpack.c.b16 %v5518, %v5510
    %v6295 = vpack.c.b16 %v5519, %v5511
    %v6296 = vpack.c.b16 %v5528, %v5520
    %v6297 = vpack.c.b16 %v5529, %v5521
    %v6298 = vpack.c.b16 %v5530, %v5522
    %v6299 = vpack.c.b16 %v5531, %v5523
    %v6300 = vpack.c.b16 %v5532, %v5524
    %v6301 = vpack.c.b16 %v5533, %v5525
    %v6302 = vpack.c.b16 %v5534, %v5526
    %v6303 = vpack.c.b16 %v5535, %v5527
    %v6304 = vpack.c.b16 %v5544, %v5536
    %v6305 = vpack.c.b16 %v5545, %v5537
    %v6306 = vpack.c.b16 %v5546, %v5538
    %v6307 = vpack.c.b16 %v5547, %v5539
    %v6308 = vpack.c.b16 %v5548, %v5540
    %v6309 = vpack.c.b16 %v5549, %v5541
    %v6310 = vpack.c.b16 %v5550, %v5542
    %v6311 = vpack.c.b16 %v5551, %v5543
    %v6312 = vpack.c.b16 %v5560, %v5552
    %v6313 = vpack.c.b16 %v5561, %v5553
    %v6314 = vpack.c.b16 %v5562, %v5554
    %v6315 = vpack.c.b16 %v5563, %v5555
    %v6316 = vpack.c.b16 %v5564, %v5556
    %v6317 = vpack.c.b16 %v5565, %v5557
    %v6318 = vpack.c.b16 %v5566, %v5558
    %v6319 = vpack.c.b16 %v5567, %v5559
    %v6320 = vpack.c.b16 %v5576, %v5568
    %v6321 = vpack.c.b16 %v5577, %v5569
    %v6322 = vpack.c.b16 %v5578, %v5570
    %v6323 = vpack.c.b16 %v5579, %v5571
    %v6324 = vpack.c.b16 %v5580, %v5572
    %v6325 = vpack.c.b16 %v5581, %v5573
    %v6326 = vpack.c.b16 %v5582, %v5574
    %v6327 = vpack.c.b16 %v5583, %v5575
    %v6328 = vpack.c.b16 %v5592, %v5584
    %v6329 = vpack.c.b16 %v5593, %v5585
    %v6330 = vpack.c.b16 %v5594, %v5586
    %v6331 = vpack.c.b16 %v5595, %v5587
    %v6332 = vpack.c.b16 %v5596, %v5588
    %v6333 = vpack.c.b16 %v5597, %v5589
    %v6334 = vpack.c.b16 %v5598, %v5590
    %v6335 = vpack.c.b16 %v5599, %v5591
    %v6336 = vpack.c.b16 %v5608, %v5600
    %v6337 = vpack.c.b16 %v5609, %v5601
    %v6338 = vpack.c.b16 %v5610, %v5602
    %v6339 = vpack.c.b16 %v5611, %v5603
    %v6340 = vpack.c.b16 %v5612, %v5604
    %v6341 = vpack.c.b16 %v5613, %v5605
    %v6342 = vpack.c.b16 %v5614, %v5606
    %v6343 = vpack.c.b16 %v5615, %v5607
    %v6344 = vpack.c.b16 %v5624, %v5616
    %v6345 = vpack.c.b16 %v5625, %v5617
    %v6346 = vpack.c.b16 %v5626, %v5618
    %v6347 = vpack.c.b16 %v5627, %v5619
    %v6348 = vpack.c.b16 %v5628, %v5620
    %v6349 = vpack.c.b16 %v5629, %v5621
    %v6350 = vpack.c.b16 %v5630, %v5622
    %v6351 = vpack.c.b16 %v5631, %v5623
    %v6352 = vpack.c.b16 %v5640, %v5632
    %v6353 = vpack.c.b16 %v5641, %v5633
    %v6354 = vpack.c.b16 %v5642, %v5634
    %v6355 = vpack.c.b16 %v5643, %v5635
    %v6356 = vpack.c.b16 %v5644, %v5636
    %v6357 = vpack.c.b16 %v5645, %v5637
    %v6358 = vpack.c.b16 %v5646, %v5638
    %v6359 = vpack.c.b16 %v5647, %v5639
    %v6360 = vpack.c.b16 %v5656, %v5648
    %v6361 = vpack.c.b16 %v5657, %v5649
    %v6362 = vpack.c.b16 %v5658, %v5650
    %v6363 = vpack.c.b16 %v5659, %v5651
    %v6364 = vpack.c.b16 %v5660, %v5652
    %v6365 = vpack.c.b16 %v5661, %v5653
    %v6366 = vpack.c.b16 %v5662, %v5654
    %v6367 = vpack.c.b16 %v5663, %v5655
    %v6368 = vpack.c.b16 %v5672, %v5664
    %v6369 = vpack.c.b16 %v5673, %v5665
    %v6370 = vpack.c.b16 %v5674, %v5666
    %v6371 = vpack.c.b16 %v5675, %v5667
    %v6372 = vpack.c.b16 %v5676, %v5668
    %v6373 = vpack.c.b16 %v5677, %v5669
    %v6374 = vpack.c.b16 %v5678, %v5670
    %v6375 = vpack.c.b16 %v5679, %v5671
    %v6376 = vpack.c.b16 %v5688, %v5680
    %v6377 = vpack.c.b16 %v5689, %v5681
    %v6378 = vpack.c.b16 %v5690, %v5682
    %v6379 = vpack.c.b16 %v5691, %v5683
    %v6380 = vpack.c.b16 %v5692, %v5684
    %v6381 = vpack.c.b16 %v5693, %v5685
    %v6382 = vpack.c.b16 %v5694, %v5686
    %v6383 = vpack.c.b16 %v5695, %v5687
    %v6384 = vpack.c.b16 %v5704, %v5696
    %v6385 = vpack.c.b16 %v5705, %v5697
    %v6386 = vpack.c.b16 %v5706, %v5698
    %v6387 = vpack.c.b16 %v5707, %v5699
    %v6388 = vpack.c.b16 %v5708, %v5700
    %v6389 = vpack.c.b16 %v5709, %v5701
    %v6390 = vpack.c.b16 %v5710, %v5702
    %v6391 = vpack.c.b16 %v5711, %v5703
    %v6392 = vpack.c.b16 %v5720, %v5712
    %v6393 = vpack.c.b16 %v5721, %v5713
    %v6394 = vpack.c.b16 %v5722, %v5714
    %v6395 = vpack.c.b16 %v5723, %v5715
    %v6396 = vpack.c.b16 %v5724, %v5716
    %v6397 = vpack.c.b16 %v5725, %v5717
    %v6398 = vpack.c.b16 %v5726, %v5718
    %v6399 = vpack.c.b16 %v5727, %v5719
    %v6400 = vpack.c.b16 %v5736, %v5728
    %v6401 = vpack.c.b16 %v5737, %v5729
    %v6402 = vpack.c.b16 %v5738, %v5730
    %v6403 = vpack.c.b16 %v5739, %v5731
    %v6404 = vpack.c.b16 %v5740, %v5732
    %v6405 = vpack.c.b16 %v5741, %v5733
    %v6406 = vpack.c.b16 %v5742, %v5734
    %v6407 = vpack.c.b16 %v5743, %v5735
    %v6408 = vpack.c.b16 %v5752, %v5744
    %v6409 = vpack.c.b16 %v5753, %v5745
    %v6410 = vpack.c.b16 %v5754, %v5746
    %v6411 = vpack.c.b16 %v5755, %v5747
    %v6412 = vpack.c.b16 %v5756, %v5748
    %v6413 = vpack.c.b16 %v5757, %v5749
    %v6414 = vpack.c.b16 %v5758, %v5750
    %v6415 = vpack.c.b16 %v5759, %v5751
    %v6416 = vpack.c.b16 %v5768, %v5760
    %v6417 = vpack.c.b16 %v5769, %v5761
    %v6418 = vpack.c.b16 %v5770, %v5762
    %v6419 = vpack.c.b16 %v5771, %v5763
    %v6420 = vpack.c.b16 %v5772, %v5764
    %v6421 = vpack.c.b16 %v5773, %v5765
    %v6422 = vpack.c.b16 %v5774, %v5766
    %v6423 = vpack.c.b16 %v5775, %v5767
    %v6424 = vpack.c.b16 %v5784, %v5776
    %v6425 = vpack.c.b16 %v5785, %v5777
    %v6426 = vpack.c.b16 %v5786, %v5778
    %v6427 = vpack.c.b16 %v5787, %v5779
    %v6428 = vpack.c.b16 %v5788, %v5780
    %v6429 = vpack.c.b16 %v5789, %v5781
    %v6430 = vpack.c.b16 %v5790, %v5782
    %v6431 = vpack.c.b16 %v5791, %v5783
    %v6432 = vpack.c.b16 %v5800, %v5792
    %v6433 = vpack.c.b16 %v5801, %v5793
    %v6434 = vpack.c.b16 %v5802, %v5794
    %v6435 = vpack.c.b16 %v5803, %v5795
    %v6436 = vpack.c.b16 %v5804, %v5796
    %v6437 = vpack.c.b16 %v5805, %v5797
    %v6438 = vpack.c.b16 %v5806, %v5798
    %v6439 = vpack.c.b16 %v5807, %v5799
    %v6440 = vpack.c.b16 %v5816, %v5808
    %v6441 = vpack.c.b16 %v5817, %v5809
    %v6442 = vpack.c.b16 %v5818, %v5810
    %v6443 = vpack.c.b16 %v5819, %v5811
    %v6444 = vpack.c.b16 %v5820, %v5812
    %v6445 = vpack.c.b16 %v5821, %v5813
    %v6446 = vpack.c.b16 %v5822, %v5814
    %v6447 = vpack.c.b16 %v5823, %v5815
    %v6448 = vpack.c.b16 %v5832, %v5824
    %v6449 = vpack.c.b16 %v5833, %v5825
    %v6450 = vpack.c.b16 %v5834, %v5826
    %v6451 = vpack.c.b16 %v5835, %v5827
    %v6452 = vpack.c.b16 %v5836, %v5828
    %v6453 = vpack.c.b16 %v5837, %v5829
    %v6454 = vpack.c.b16 %v5838, %v5830
    %v6455 = vpack.c.b16 %v5839, %v5831
    %v6456 = vpack.c.b16 %v5848, %v5840
    %v6457 = vpack.c.b16 %v5849, %v5841
    %v6458 = vpack.c.b16 %v5850, %v5842
    %v6459 = vpack.c.b16 %v5851, %v5843
    %v6460 = vpack.c.b16 %v5852, %v5844
    %v6461 = vpack.c.b16 %v5853, %v5845
    %v6462 = vpack.c.b16 %v5854, %v5846
    %v6463 = vpack.c.b16 %v5855, %v5847
    %v6464 = vpack.c.b16 %v5864, %v5856
    %v6465 = vpack.c.b16 %v5865, %v5857
    %v6466 = vpack.c.b16 %v5866, %v5858
    %v6467 = vpack.c.b16 %v5867, %v5859
    %v6468 = vpack.c.b16 %v5868, %v5860
    %v6469 = vpack.c.b16 %v5869, %v5861
    %v6470 = vpack.c.b16 %v5870, %v5862
    %v6471 = vpack.c.b16 %v5871, %v5863
    %v6472 = vpack.c.b16 %v5880, %v5872
    %v6473 = vpack.c.b16 %v5881, %v5873
    %v6474 = vpack.c.b16 %v5882, %v5874
    %v6475 = vpack.c.b16 %v5883, %v5875
    %v6476 = vpack.c.b16 %v5884, %v5876
    %v6477 = vpack.c.b16 %v5885, %v5877
    %v6478 = vpack.c.b16 %v5886, %v5878
    %v6479 = vpack.c.b16 %v5887, %v5879
    %v6480 = vpack.c.b16 %v5896, %v5888
    %v6481 = vpack.c.b16 %v5897, %v5889
    %v6482 = vpack.c.b16 %v5898, %v5890
    %v6483 = vpack.c.b16 %v5899, %v5891
    %v6484 = vpack.c.b16 %v5900, %v5892
    %v6485 = vpack.c.b16 %v5901, %v5893
    %v6486 = vpack.c.b16 %v5902, %v5894
    %v6487 = vpack.c.b16 %v5903, %v5895
    %v6488 = vpack.c.b16 %v5912, %v5904
    %v6489 = vpack.c.b16 %v5913, %v5905
    %v6490 = vpack.c.b16 %v5914, %v5906
    %v6491 = vpack.c.b16 %v5915, %v5907
    %v6492 = vpack.c.b16 %v5916, %v5908
    %v6493 = vpack.c.b16 %v5917, %v5909
    %v6494 = vpack.c.b16 %v5918, %v5910
    %v6495 = vpack.c.b16 %v5919, %v5911
    %v6496 = vpack.c.b16 %v5928, %v5920
    %v6497 = vpack.c.b16 %v5929, %v5921
    %v6498 = vpack.c.b16 %v5930, %v5922
    %v6499 = vpack.c.b16 %v5931, %v5923
    %v6500 = vpack.c.b16 %v5932, %v5924
    %v6501 = vpack.c.b16 %v5933, %v5925
    %v6502 = vpack.c.b16 %v5934, %v5926
    %v6503 = vpack.c.b16 %v5935, %v5927
    %v6504 = vpack.c.b16 %v5944, %v5936
    %v6505 = vpack.c.b16 %v5945, %v5937
    %v6506 = vpack.c.b16 %v5946, %v5938
    %v6507 = vpack.c.b16 %v5947, %v5939
    %v6508 = vpack.c.b16 %v5948, %v5940
    %v6509 = vpack.c.b16 %v5949, %v5941
    %v6510 = vpack.c.b16 %v5950, %v5942
    %v6511 = vpack.c.b16 %v5951, %v5943
    %v6512 = vpack.c.b16 %v5960, %v5952
    %v6513 = vpack.c.b16 %v5961, %v5953
    %v6514 = vpack.c.b16 %v5962, %v5954
    %v6515 = vpack.c.b16 %v5963, %v5955
    %v6516 = vpack.c.b16 %v5964, %v5956
    %v6517 = vpack.c.b16 %v5965, %v5957
    %v6518 = vpack.c.b16 %v5966, %v5958
    %v6519 = vpack.c.b16 %v5967, %v5959
    %v6520 = vpack.c.b16 %v5976, %v5968
    %v6521 = vpack.c.b16 %v5977, %v5969
    %v6522 = vpack.c.b16 %v5978, %v5970
    %v6523 = vpack.c.b16 %v5979, %v5971
    %v6524 = vpack.c.b16 %v5980, %v5972
    %v6525 = vpack.c.b16 %v5981, %v5973
    %v6526 = vpack.c.b16 %v5982, %v5974
    %v6527 = vpack.c.b16 %v5983, %v5975
    %v6528 = vpack.c.b16 %v5992, %v5984
    %v6529 = vpack.c.b16 %v5993, %v5985
    %v6530 = vpack.c.b16 %v5994, %v5986
    %v6531 = vpack.c.b16 %v5995, %v5987
    %v6532 = vpack.c.b16 %v5996, %v5988
    %v6533 = vpack.c.b16 %v5997, %v5989
    %v6534 = vpack.c.b16 %v5998, %v5990
    %v6535 = vpack.c.b16 %v5999, %v5991
    %v6536 = vpack.c.b16 %v6008, %v6000
    %v6537 = vpack.c.b16 %v6009, %v6001
    %v6538 = vpack.c.b16 %v6010, %v6002
    %v6539 = vpack.c.b16 %v6011, %v6003
    %v6540 = vpack.c.b16 %v6012, %v6004
    %v6541 = vpack.c.b16 %v6013, %v6005
    %v6542 = vpack.c.b16 %v6014, %v6006
    %v6543 = vpack.c.b16 %v6015, %v6007
    %v6544 = vpack.c.b16 %v6024, %v6016
    %v6545 = vpack.c.b16 %v6025, %v6017
    %v6546 = vpack.c.b16 %v6026, %v6018
    %v6547 = vpack.c.b16 %v6027, %v6019
    %v6548 = vpack.c.b16 %v6028, %v6020
    %v6549 = vpack.c.b16 %v6029, %v6021
    %v6550 = vpack.c.b16 %v6030, %v6022
    %v6551 = vpack.c.b16 %v6031, %v6023
    %v6552 = vpack.c.b16 %v6040, %v6032
    %v6553 = vpack.c.b16 %v6041, %v6033
    %v6554 = vpack.c.b16 %v6042, %v6034
    %v6555 = vpack.c.b16 %v6043, %v6035
    %v6556 = vpack.c.b16 %v6044, %v6036
    %v6557 = vpack.c.b16 %v6045, %v6037
    %v6558 = vpack.c.b16 %v6046, %v6038
    %v6559 = vpack.c.b16 %v6047, %v6039
    %7072 = vmatprep.subr.bf16.mxu0 %v6105
    %7073 = vmatpush1.bf16.msra.mxu0 %v6104
    %7074 = vmatprep.subr.bf16.mxu0 %v6097
    %7075 = vmatpush1.bf16.msra.mxu0 %v6096
    %7076 = vmatprep.subr.bf16.mxu0 %v6089
    %7077 = vmatpush1.bf16.msra.mxu0 %v6088
    %7078 = vmatprep.subr.bf16.mxu0 %v6081
    %7079 = vmatpush1.bf16.msra.mxu0 %v6080
    %7080 = vmatprep.subr.bf16.mxu0 %v6073
    %7081 = vmatpush1.bf16.msra.mxu0 %v6072
    %7082 = vmatprep.subr.bf16.mxu0 %v6065
    %7083 = vmatpush1.bf16.msra.mxu0 %v6064
    %7084 = vmatprep.subr.bf16.mxu0 %v6057
    %7085 = vmatpush1.bf16.msra.mxu0 %v6056
    %7086 = vmatprep.subr.bf16.mxu0 %v6049
    %7087 = vmatpush1.bf16.msra.mxu0 %v6048
    %7088 = vmatprep.subr.bf16.mxu0 %v6169
    %7089 = vmatpush2.bf16.msra.mxu0 %v6168
    %7090 = vmatprep.subr.bf16.mxu0 %v6161
    %7091 = vmatpush2.bf16.msra.mxu0 %v6160
    %7092 = vmatprep.subr.bf16.mxu0 %v6153
    %7093 = vmatpush2.bf16.msra.mxu0 %v6152
    %7094 = vmatprep.subr.bf16.mxu0 %v6145
    %7095 = vmatpush2.bf16.msra.mxu0 %v6144
    %7096 = vmatprep.subr.bf16.mxu0 %v6137
    %7097 = vmatpush2.bf16.msra.mxu0 %v6136
    %7098 = vmatprep.subr.bf16.mxu0 %v6129
    %7099 = vmatpush2.bf16.msra.mxu0 %v6128
    %7100 = vmatprep.subr.bf16.mxu0 %v6121
    %7101 = vmatpush2.bf16.msra.mxu0 %v6120
    %7102 = vmatprep.subr.bf16.mxu0 %v6113
    %7103 = vmatpush2.bf16.msra.mxu0 %v6112
    %7104 = vmatprep.mubr.bf16.mxu0 %v3951
    %7105 = vmatmul.mubr.bf16.gmra.mxu0 %v3950
    %v7106 = vpop.f32.mrf.mxu0
    %v7107 = vadd.f32 %v4475, %v7106
    %v7108 = vpop.f32.mrf.mxu0
    %v7109 = vadd.f32 %v4479, %v7108
    %v7110 = vpop.f32.mrf.mxu0
    %v7111 = vpop.f32.mrf.mxu0
    %7112 = vdwg.mxu0
    %7113 = vmatprep.subr.bf16.mxu0 %v6233
    %7114 = vmatpush1.bf16.msra.mxu0 %v6232
    %7115 = vmatprep.subr.bf16.mxu0 %v6225
    %7116 = vmatpush1.bf16.msra.mxu0 %v6224
    %7117 = vmatprep.subr.bf16.mxu0 %v6217
    %7118 = vmatpush1.bf16.msra.mxu0 %v6216
    %7119 = vmatprep.subr.bf16.mxu0 %v6209
    %7120 = vmatpush1.bf16.msra.mxu0 %v6208
    %7121 = vmatprep.subr.bf16.mxu0 %v6201
    %7122 = vmatpush1.bf16.msra.mxu0 %v6200
    %7123 = vmatprep.subr.bf16.mxu0 %v6193
    %7124 = vmatpush1.bf16.msra.mxu0 %v6192
    %7125 = vmatprep.subr.bf16.mxu0 %v6185
    %7126 = vmatpush1.bf16.msra.mxu0 %v6184
    %7127 = vmatprep.subr.bf16.mxu0 %v6177
    %7128 = vmatpush1.bf16.msra.mxu0 %v6176
    %7129 = vmatprep.subr.bf16.mxu0 %v6297
    %7130 = vmatpush2.bf16.msra.mxu0 %v6296
    %7131 = vmatprep.subr.bf16.mxu0 %v6289
    %7132 = vmatpush2.bf16.msra.mxu0 %v6288
    %7133 = vmatprep.subr.bf16.mxu0 %v6281
    %7134 = vmatpush2.bf16.msra.mxu0 %v6280
    %7135 = vmatprep.subr.bf16.mxu0 %v6273
    %7136 = vmatpush2.bf16.msra.mxu0 %v6272
    %7137 = vmatprep.subr.bf16.mxu0 %v6265
    %7138 = vmatpush2.bf16.msra.mxu0 %v6264
    %7139 = vmatprep.subr.bf16.mxu0 %v6257
    %7140 = vmatpush2.bf16.msra.mxu0 %v6256
    %7141 = vmatprep.subr.bf16.mxu0 %v6249
    %7142 = vmatpush2.bf16.msra.mxu0 %v6248
    %7143 = vmatprep.subr.bf16.mxu0 %v6241
    %7144 = vmatpush2.bf16.msra.mxu0 %v6240
    %7145 = vmatprep.mubr.bf16.mxu0 %v3953
    %7146 = vmatmul.mubr.bf16.gmra.mxu0 %v3952
    %v7147 = vpop.f32.mrf.mxu0
    %v7148 = vadd.f32 %v7107, %v7147
    %v7149 = vpop.f32.mrf.mxu0
    %v7150 = vadd.f32 %v7109, %v7149
    %v7151 = vpop.f32.mrf.mxu0
    %v7152 = vpop.f32.mrf.mxu0
    %7153 = vdwg.mxu0
    %7154 = vmatprep.subr.bf16.mxu0 %v6361
    %7155 = vmatpush1.bf16.msra.mxu0 %v6360
    %7156 = vmatprep.subr.bf16.mxu0 %v6353
    %7157 = vmatpush1.bf16.msra.mxu0 %v6352
    %7158 = vmatprep.subr.bf16.mxu0 %v6345
    %7159 = vmatpush1.bf16.msra.mxu0 %v6344
    %7160 = vmatprep.subr.bf16.mxu0 %v6337
    %7161 = vmatpush1.bf16.msra.mxu0 %v6336
    %7162 = vmatprep.subr.bf16.mxu0 %v6329
    %7163 = vmatpush1.bf16.msra.mxu0 %v6328
    %7164 = vmatprep.subr.bf16.mxu0 %v6321
    %7165 = vmatpush1.bf16.msra.mxu0 %v6320
    %7166 = vmatprep.subr.bf16.mxu0 %v6313
    %7167 = vmatpush1.bf16.msra.mxu0 %v6312
    %7168 = vmatprep.subr.bf16.mxu0 %v6305
    %7169 = vmatpush1.bf16.msra.mxu0 %v6304
    %7170 = vmatprep.subr.bf16.mxu0 %v6425
    %7171 = vmatpush2.bf16.msra.mxu0 %v6424
    %7172 = vmatprep.subr.bf16.mxu0 %v6417
    %7173 = vmatpush2.bf16.msra.mxu0 %v6416
    %7174 = vmatprep.subr.bf16.mxu0 %v6409
    %7175 = vmatpush2.bf16.msra.mxu0 %v6408
    %7176 = vmatprep.subr.bf16.mxu0 %v6401
    %7177 = vmatpush2.bf16.msra.mxu0 %v6400
    %7178 = vmatprep.subr.bf16.mxu0 %v6393
    %7179 = vmatpush2.bf16.msra.mxu0 %v6392
    %7180 = vmatprep.subr.bf16.mxu0 %v6385
    %7181 = vmatpush2.bf16.msra.mxu0 %v6384
    %7182 = vmatprep.subr.bf16.mxu0 %v6377
    %7183 = vmatpush2.bf16.msra.mxu0 %v6376
    %7184 = vmatprep.subr.bf16.mxu0 %v6369
    %7185 = vmatpush2.bf16.msra.mxu0 %v6368
    %7186 = vmatprep.mubr.bf16.mxu0 %v3955
    %7187 = vmatmul.mubr.bf16.gmra.mxu0 %v3954
    %v7188 = vpop.f32.mrf.mxu0
    %v7189 = vadd.f32 %v7148, %v7188
    %v7190 = vpop.f32.mrf.mxu0
    %v7191 = vadd.f32 %v7150, %v7190
    %v7192 = vpop.f32.mrf.mxu0
    %v7193 = vpop.f32.mrf.mxu0
    %7194 = vdwg.mxu0
    %7195 = vmatprep.subr.bf16.mxu0 %v6489
    %7196 = vmatpush1.bf16.msra.mxu0 %v6488
    %7197 = vmatprep.subr.bf16.mxu0 %v6481
    %7198 = vmatpush1.bf16.msra.mxu0 %v6480
    %7199 = vmatprep.subr.bf16.mxu0 %v6473
    %7200 = vmatpush1.bf16.msra.mxu0 %v6472
    %7201 = vmatprep.subr.bf16.mxu0 %v6465
    %7202 = vmatpush1.bf16.msra.mxu0 %v6464
    %7203 = vmatprep.subr.bf16.mxu0 %v6457
    %7204 = vmatpush1.bf16.msra.mxu0 %v6456
    %7205 = vmatprep.subr.bf16.mxu0 %v6449
    %7206 = vmatpush1.bf16.msra.mxu0 %v6448
    %7207 = vmatprep.subr.bf16.mxu0 %v6441
    %7208 = vmatpush1.bf16.msra.mxu0 %v6440
    %7209 = vmatprep.subr.bf16.mxu0 %v6433
    %7210 = vmatpush1.bf16.msra.mxu0 %v6432
    %7211 = vmatprep.subr.bf16.mxu0 %v6553
    %7212 = vmatpush2.bf16.msra.mxu0 %v6552
    %7213 = vmatprep.subr.bf16.mxu0 %v6545
    %7214 = vmatpush2.bf16.msra.mxu0 %v6544
    %7215 = vmatprep.subr.bf16.mxu0 %v6537
    %7216 = vmatpush2.bf16.msra.mxu0 %v6536
    %7217 = vmatprep.subr.bf16.mxu0 %v6529
    %7218 = vmatpush2.bf16.msra.mxu0 %v6528
    %7219 = vmatprep.subr.bf16.mxu0 %v6521
    %7220 = vmatpush2.bf16.msra.mxu0 %v6520
    %7221 = vmatprep.subr.bf16.mxu0 %v6513
    %7222 = vmatpush2.bf16.msra.mxu0 %v6512
    %7223 = vmatprep.subr.bf16.mxu0 %v6505
    %7224 = vmatpush2.bf16.msra.mxu0 %v6504
    %7225 = vmatprep.subr.bf16.mxu0 %v6497
    %7226 = vmatpush2.bf16.msra.mxu0 %v6496
    %7227 = vmatprep.mubr.bf16.mxu0 %v3957
    %7228 = vmatmul.mubr.bf16.gmra.mxu0 %v3956
    %v7229 = vpop.f32.mrf.mxu0
    %v7230 = vadd.f32 %v7189, %v7229
    %v7231 = vpop.f32.mrf.mxu0
    %v7232 = vadd.f32 %v7191, %v7231
    %v7233 = vpop.f32.mrf.mxu0
    %v7234 = vpop.f32.mrf.mxu0
    %7235 = vdwg.mxu0
    %7236 = vmatprep.subr.bf16.mxu0 %v6107
    %7237 = vmatpush1.bf16.msra.mxu0 %v6106
    %7238 = vmatprep.subr.bf16.mxu0 %v6099
    %7239 = vmatpush1.bf16.msra.mxu0 %v6098
    %7240 = vmatprep.subr.bf16.mxu0 %v6091
    %7241 = vmatpush1.bf16.msra.mxu0 %v6090
    %7242 = vmatprep.subr.bf16.mxu0 %v6083
    %7243 = vmatpush1.bf16.msra.mxu0 %v6082
    %7244 = vmatprep.subr.bf16.mxu0 %v6075
    %7245 = vmatpush1.bf16.msra.mxu0 %v6074
    %7246 = vmatprep.subr.bf16.mxu0 %v6067
    %7247 = vmatpush1.bf16.msra.mxu0 %v6066
    %7248 = vmatprep.subr.bf16.mxu0 %v6059
    %7249 = vmatpush1.bf16.msra.mxu0 %v6058
    %7250 = vmatprep.subr.bf16.mxu0 %v6051
    %7251 = vmatpush1.bf16.msra.mxu0 %v6050
    %7252 = vmatprep.subr.bf16.mxu0 %v6171
    %7253 = vmatpush2.bf16.msra.mxu0 %v6170
    %7254 = vmatprep.subr.bf16.mxu0 %v6163
    %7255 = vmatpush2.bf16.msra.mxu0 %v6162
    %7256 = vmatprep.subr.bf16.mxu0 %v6155
    %7257 = vmatpush2.bf16.msra.mxu0 %v6154
    %7258 = vmatprep.subr.bf16.mxu0 %v6147
    %7259 = vmatpush2.bf16.msra.mxu0 %v6146
    %7260 = vmatprep.subr.bf16.mxu0 %v6139
    %7261 = vmatpush2.bf16.msra.mxu0 %v6138
    %7262 = vmatprep.subr.bf16.mxu0 %v6131
    %7263 = vmatpush2.bf16.msra.mxu0 %v6130
    %7264 = vmatprep.subr.bf16.mxu0 %v6123
    %7265 = vmatpush2.bf16.msra.mxu0 %v6122
    %7266 = vmatprep.subr.bf16.mxu0 %v6115
    %7267 = vmatpush2.bf16.msra.mxu0 %v6114
    %7268 = vmatprep.mubr.bf16.mxu0 %v3951
    %7269 = vmatmul.mubr.bf16.gmra.mxu0 %v3950
    %v7270 = vpop.f32.mrf.mxu0
    %v7271 = vadd.f32 %v4483, %v7270
    %v7272 = vpop.f32.mrf.mxu0
    %v7273 = vadd.f32 %v4487, %v7272
    %v7274 = vpop.f32.mrf.mxu0
    %v7275 = vpop.f32.mrf.mxu0
    %7276 = vdwg.mxu0
    %7277 = vmatprep.subr.bf16.mxu0 %v6235
    %7278 = vmatpush1.bf16.msra.mxu0 %v6234
    %7279 = vmatprep.subr.bf16.mxu0 %v6227
    %7280 = vmatpush1.bf16.msra.mxu0 %v6226
    %7281 = vmatprep.subr.bf16.mxu0 %v6219
    %7282 = vmatpush1.bf16.msra.mxu0 %v6218
    %7283 = vmatprep.subr.bf16.mxu0 %v6211
    %7284 = vmatpush1.bf16.msra.mxu0 %v6210
    %7285 = vmatprep.subr.bf16.mxu0 %v6203
    %7286 = vmatpush1.bf16.msra.mxu0 %v6202
    %7287 = vmatprep.subr.bf16.mxu0 %v6195
    %7288 = vmatpush1.bf16.msra.mxu0 %v6194
    %7289 = vmatprep.subr.bf16.mxu0 %v6187
    %7290 = vmatpush1.bf16.msra.mxu0 %v6186
    %7291 = vmatprep.subr.bf16.mxu0 %v6179
    %7292 = vmatpush1.bf16.msra.mxu0 %v6178
    %7293 = vmatprep.subr.bf16.mxu0 %v6299
    %7294 = vmatpush2.bf16.msra.mxu0 %v6298
    %7295 = vmatprep.subr.bf16.mxu0 %v6291
    %7296 = vmatpush2.bf16.msra.mxu0 %v6290
    %7297 = vmatprep.subr.bf16.mxu0 %v6283
    %7298 = vmatpush2.bf16.msra.mxu0 %v6282
    %7299 = vmatprep.subr.bf16.mxu0 %v6275
    %7300 = vmatpush2.bf16.msra.mxu0 %v6274
    %7301 = vmatprep.subr.bf16.mxu0 %v6267
    %7302 = vmatpush2.bf16.msra.mxu0 %v6266
    %7303 = vmatprep.subr.bf16.mxu0 %v6259
    %7304 = vmatpush2.bf16.msra.mxu0 %v6258
    %7305 = vmatprep.subr.bf16.mxu0 %v6251
    %7306 = vmatpush2.bf16.msra.mxu0 %v6250
    %7307 = vmatprep.subr.bf16.mxu0 %v6243
    %7308 = vmatpush2.bf16.msra.mxu0 %v6242
    %7309 = vmatprep.mubr.bf16.mxu0 %v3953
    %7310 = vmatmul.mubr.bf16.gmra.mxu0 %v3952
    %v7311 = vpop.f32.mrf.mxu0
    %v7312 = vadd.f32 %v7271, %v7311
    %v7313 = vpop.f32.mrf.mxu0
    %v7314 = vadd.f32 %v7273, %v7313
    %v7315 = vpop.f32.mrf.mxu0
    %v7316 = vpop.f32.mrf.mxu0
    %7317 = vdwg.mxu0
    %7318 = vmatprep.subr.bf16.mxu0 %v6363
    %7319 = vmatpush1.bf16.msra.mxu0 %v6362
    %7320 = vmatprep.subr.bf16.mxu0 %v6355
    %7321 = vmatpush1.bf16.msra.mxu0 %v6354
    %7322 = vmatprep.subr.bf16.mxu0 %v6347
    %7323 = vmatpush1.bf16.msra.mxu0 %v6346
    %7324 = vmatprep.subr.bf16.mxu0 %v6339
    %7325 = vmatpush1.bf16.msra.mxu0 %v6338
    %7326 = vmatprep.subr.bf16.mxu0 %v6331
    %7327 = vmatpush1.bf16.msra.mxu0 %v6330
    %7328 = vmatprep.subr.bf16.mxu0 %v6323
    %7329 = vmatpush1.bf16.msra.mxu0 %v6322
    %7330 = vmatprep.subr.bf16.mxu0 %v6315
    %7331 = vmatpush1.bf16.msra.mxu0 %v6314
    %7332 = vmatprep.subr.bf16.mxu0 %v6307
    %7333 = vmatpush1.bf16.msra.mxu0 %v6306
    %7334 = vmatprep.subr.bf16.mxu0 %v6427
    %7335 = vmatpush2.bf16.msra.mxu0 %v6426
    %7336 = vmatprep.subr.bf16.mxu0 %v6419
    %7337 = vmatpush2.bf16.msra.mxu0 %v6418
    %7338 = vmatprep.subr.bf16.mxu0 %v6411
    %7339 = vmatpush2.bf16.msra.mxu0 %v6410
    %7340 = vmatprep.subr.bf16.mxu0 %v6403
    %7341 = vmatpush2.bf16.msra.mxu0 %v6402
    %7342 = vmatprep.subr.bf16.mxu0 %v6395
    %7343 = vmatpush2.bf16.msra.mxu0 %v6394
    %7344 = vmatprep.subr.bf16.mxu0 %v6387
    %7345 = vmatpush2.bf16.msra.mxu0 %v6386
    %7346 = vmatprep.subr.bf16.mxu0 %v6379
    %7347 = vmatpush2.bf16.msra.mxu0 %v6378
    %7348 = vmatprep.subr.bf16.mxu0 %v6371
    %7349 = vmatpush2.bf16.msra.mxu0 %v6370
    %7350 = vmatprep.mubr.bf16.mxu0 %v3955
    %7351 = vmatmul.mubr.bf16.gmra.mxu0 %v3954
    %v7352 = vpop.f32.mrf.mxu0
    %v7353 = vadd.f32 %v7312, %v7352
    %v7354 = vpop.f32.mrf.mxu0
    %v7355 = vadd.f32 %v7314, %v7354
    %v7356 = vpop.f32.mrf.mxu0
    %v7357 = vpop.f32.mrf.mxu0
    %7358 = vdwg.mxu0
    %7359 = vmatprep.subr.bf16.mxu0 %v6491
    %7360 = vmatpush1.bf16.msra.mxu0 %v6490
    %7361 = vmatprep.subr.bf16.mxu0 %v6483
    %7362 = vmatpush1.bf16.msra.mxu0 %v6482
    %7363 = vmatprep.subr.bf16.mxu0 %v6475
    %7364 = vmatpush1.bf16.msra.mxu0 %v6474
    %7365 = vmatprep.subr.bf16.mxu0 %v6467
    %7366 = vmatpush1.bf16.msra.mxu0 %v6466
    %7367 = vmatprep.subr.bf16.mxu0 %v6459
    %7368 = vmatpush1.bf16.msra.mxu0 %v6458
    %7369 = vmatprep.subr.bf16.mxu0 %v6451
    %7370 = vmatpush1.bf16.msra.mxu0 %v6450
    %7371 = vmatprep.subr.bf16.mxu0 %v6443
    %7372 = vmatpush1.bf16.msra.mxu0 %v6442
    %7373 = vmatprep.subr.bf16.mxu0 %v6435
    %7374 = vmatpush1.bf16.msra.mxu0 %v6434
    %7375 = vmatprep.subr.bf16.mxu0 %v6555
    %7376 = vmatpush2.bf16.msra.mxu0 %v6554
    %7377 = vmatprep.subr.bf16.mxu0 %v6547
    %7378 = vmatpush2.bf16.msra.mxu0 %v6546
    %7379 = vmatprep.subr.bf16.mxu0 %v6539
    %7380 = vmatpush2.bf16.msra.mxu0 %v6538
    %7381 = vmatprep.subr.bf16.mxu0 %v6531
    %7382 = vmatpush2.bf16.msra.mxu0 %v6530
    %7383 = vmatprep.subr.bf16.mxu0 %v6523
    %7384 = vmatpush2.bf16.msra.mxu0 %v6522
    %7385 = vmatprep.subr.bf16.mxu0 %v6515
    %7386 = vmatpush2.bf16.msra.mxu0 %v6514
    %7387 = vmatprep.subr.bf16.mxu0 %v6507
    %7388 = vmatpush2.bf16.msra.mxu0 %v6506
    %7389 = vmatprep.subr.bf16.mxu0 %v6499
    %7390 = vmatpush2.bf16.msra.mxu0 %v6498
    %7391 = vmatprep.mubr.bf16.mxu0 %v3957
    %7392 = vmatmul.mubr.bf16.gmra.mxu0 %v3956
    %v7393 = vpop.f32.mrf.mxu0
    %v7394 = vadd.f32 %v7353, %v7393
    %v7395 = vpop.f32.mrf.mxu0
    %v7396 = vadd.f32 %v7355, %v7395
    %v7397 = vpop.f32.mrf.mxu0
    %v7398 = vpop.f32.mrf.mxu0
    %7399 = vdwg.mxu0
    %7400 = vmatprep.subr.bf16.mxu0 %v6109
    %7401 = vmatpush1.bf16.msra.mxu0 %v6108
    %7402 = vmatprep.subr.bf16.mxu0 %v6101
    %7403 = vmatpush1.bf16.msra.mxu0 %v6100
    %7404 = vmatprep.subr.bf16.mxu0 %v6093
    %7405 = vmatpush1.bf16.msra.mxu0 %v6092
    %7406 = vmatprep.subr.bf16.mxu0 %v6085
    %7407 = vmatpush1.bf16.msra.mxu0 %v6084
    %7408 = vmatprep.subr.bf16.mxu0 %v6077
    %7409 = vmatpush1.bf16.msra.mxu0 %v6076
    %7410 = vmatprep.subr.bf16.mxu0 %v6069
    %7411 = vmatpush1.bf16.msra.mxu0 %v6068
    %7412 = vmatprep.subr.bf16.mxu0 %v6061
    %7413 = vmatpush1.bf16.msra.mxu0 %v6060
    %7414 = vmatprep.subr.bf16.mxu0 %v6053
    %7415 = vmatpush1.bf16.msra.mxu0 %v6052
    %7416 = vmatprep.subr.bf16.mxu0 %v6173
    %7417 = vmatpush2.bf16.msra.mxu0 %v6172
    %7418 = vmatprep.subr.bf16.mxu0 %v6165
    %7419 = vmatpush2.bf16.msra.mxu0 %v6164
    %7420 = vmatprep.subr.bf16.mxu0 %v6157
    %7421 = vmatpush2.bf16.msra.mxu0 %v6156
    %7422 = vmatprep.subr.bf16.mxu0 %v6149
    %7423 = vmatpush2.bf16.msra.mxu0 %v6148
    %7424 = vmatprep.subr.bf16.mxu0 %v6141
    %7425 = vmatpush2.bf16.msra.mxu0 %v6140
    %7426 = vmatprep.subr.bf16.mxu0 %v6133
    %7427 = vmatpush2.bf16.msra.mxu0 %v6132
    %7428 = vmatprep.subr.bf16.mxu0 %v6125
    %7429 = vmatpush2.bf16.msra.mxu0 %v6124
    %7430 = vmatprep.subr.bf16.mxu0 %v6117
    %7431 = vmatpush2.bf16.msra.mxu0 %v6116
    %7432 = vmatprep.mubr.bf16.mxu0 %v3951
    %7433 = vmatmul.mubr.bf16.gmra.mxu0 %v3950
    %v7434 = vpop.f32.mrf.mxu0
    %v7435 = vadd.f32 %v4491, %v7434
    %v7436 = vpop.f32.mrf.mxu0
    %v7437 = vadd.f32 %v4495, %v7436
    %v7438 = vpop.f32.mrf.mxu0
    %v7439 = vpop.f32.mrf.mxu0
    %7440 = vdwg.mxu0
    %7441 = vmatprep.subr.bf16.mxu0 %v6237
    %7442 = vmatpush1.bf16.msra.mxu0 %v6236
    %7443 = vmatprep.subr.bf16.mxu0 %v6229
    %7444 = vmatpush1.bf16.msra.mxu0 %v6228
    %7445 = vmatprep.subr.bf16.mxu0 %v6221
    %7446 = vmatpush1.bf16.msra.mxu0 %v6220
    %7447 = vmatprep.subr.bf16.mxu0 %v6213
    %7448 = vmatpush1.bf16.msra.mxu0 %v6212
    %7449 = vmatprep.subr.bf16.mxu0 %v6205
    %7450 = vmatpush1.bf16.msra.mxu0 %v6204
    %7451 = vmatprep.subr.bf16.mxu0 %v6197
    %7452 = vmatpush1.bf16.msra.mxu0 %v6196
    %7453 = vmatprep.subr.bf16.mxu0 %v6189
    %7454 = vmatpush1.bf16.msra.mxu0 %v6188
    %7455 = vmatprep.subr.bf16.mxu0 %v6181
    %7456 = vmatpush1.bf16.msra.mxu0 %v6180
    %7457 = vmatprep.subr.bf16.mxu0 %v6301
    %7458 = vmatpush2.bf16.msra.mxu0 %v6300
    %7459 = vmatprep.subr.bf16.mxu0 %v6293
    %7460 = vmatpush2.bf16.msra.mxu0 %v6292
    %7461 = vmatprep.subr.bf16.mxu0 %v6285
    %7462 = vmatpush2.bf16.msra.mxu0 %v6284
    %7463 = vmatprep.subr.bf16.mxu0 %v6277
    %7464 = vmatpush2.bf16.msra.mxu0 %v6276
    %7465 = vmatprep.subr.bf16.mxu0 %v6269
    %7466 = vmatpush2.bf16.msra.mxu0 %v6268
    %7467 = vmatprep.subr.bf16.mxu0 %v6261
    %7468 = vmatpush2.bf16.msra.mxu0 %v6260
    %7469 = vmatprep.subr.bf16.mxu0 %v6253
    %7470 = vmatpush2.bf16.msra.mxu0 %v6252
    %7471 = vmatprep.subr.bf16.mxu0 %v6245
    %7472 = vmatpush2.bf16.msra.mxu0 %v6244
    %7473 = vmatprep.mubr.bf16.mxu0 %v3953
    %7474 = vmatmul.mubr.bf16.gmra.mxu0 %v3952
    %v7475 = vpop.f32.mrf.mxu0
    %v7476 = vadd.f32 %v7435, %v7475
    %v7477 = vpop.f32.mrf.mxu0
    %v7478 = vadd.f32 %v7437, %v7477
    %v7479 = vpop.f32.mrf.mxu0
    %v7480 = vpop.f32.mrf.mxu0
    %7481 = vdwg.mxu0
    %7482 = vmatprep.subr.bf16.mxu0 %v6365
    %7483 = vmatpush1.bf16.msra.mxu0 %v6364
    %7484 = vmatprep.subr.bf16.mxu0 %v6357
    %7485 = vmatpush1.bf16.msra.mxu0 %v6356
    %7486 = vmatprep.subr.bf16.mxu0 %v6349
    %7487 = vmatpush1.bf16.msra.mxu0 %v6348
    %7488 = vmatprep.subr.bf16.mxu0 %v6341
    %7489 = vmatpush1.bf16.msra.mxu0 %v6340
    %7490 = vmatprep.subr.bf16.mxu0 %v6333
    %7491 = vmatpush1.bf16.msra.mxu0 %v6332
    %7492 = vmatprep.subr.bf16.mxu0 %v6325
    %7493 = vmatpush1.bf16.msra.mxu0 %v6324
    %7494 = vmatprep.subr.bf16.mxu0 %v6317
    %7495 = vmatpush1.bf16.msra.mxu0 %v6316
    %7496 = vmatprep.subr.bf16.mxu0 %v6309
    %7497 = vmatpush1.bf16.msra.mxu0 %v6308
    %7498 = vmatprep.subr.bf16.mxu0 %v6429
    %7499 = vmatpush2.bf16.msra.mxu0 %v6428
    %7500 = vmatprep.subr.bf16.mxu0 %v6421
    %7501 = vmatpush2.bf16.msra.mxu0 %v6420
    %7502 = vmatprep.subr.bf16.mxu0 %v6413
    %7503 = vmatpush2.bf16.msra.mxu0 %v6412
    %7504 = vmatprep.subr.bf16.mxu0 %v6405
    %7505 = vmatpush2.bf16.msra.mxu0 %v6404
    %7506 = vmatprep.subr.bf16.mxu0 %v6397
    %7507 = vmatpush2.bf16.msra.mxu0 %v6396
    %7508 = vmatprep.subr.bf16.mxu0 %v6389
    %7509 = vmatpush2.bf16.msra.mxu0 %v6388
    %7510 = vmatprep.subr.bf16.mxu0 %v6381
    %7511 = vmatpush2.bf16.msra.mxu0 %v6380
    %7512 = vmatprep.subr.bf16.mxu0 %v6373
    %7513 = vmatpush2.bf16.msra.mxu0 %v6372
    %7514 = vmatprep.mubr.bf16.mxu0 %v3955
    %7515 = vmatmul.mubr.bf16.gmra.mxu0 %v3954
    %v7516 = vpop.f32.mrf.mxu0
    %v7517 = vadd.f32 %v7476, %v7516
    %v7518 = vpop.f32.mrf.mxu0
    %v7519 = vadd.f32 %v7478, %v7518
    %v7520 = vpop.f32.mrf.mxu0
    %v7521 = vpop.f32.mrf.mxu0
    %7522 = vdwg.mxu0
    %7523 = vmatprep.subr.bf16.mxu0 %v6493
    %7524 = vmatpush1.bf16.msra.mxu0 %v6492
    %7525 = vmatprep.subr.bf16.mxu0 %v6485
    %7526 = vmatpush1.bf16.msra.mxu0 %v6484
    %7527 = vmatprep.subr.bf16.mxu0 %v6477
    %7528 = vmatpush1.bf16.msra.mxu0 %v6476
    %7529 = vmatprep.subr.bf16.mxu0 %v6469
    %7530 = vmatpush1.bf16.msra.mxu0 %v6468
    %7531 = vmatprep.subr.bf16.mxu0 %v6461
    %7532 = vmatpush1.bf16.msra.mxu0 %v6460
    %7533 = vmatprep.subr.bf16.mxu0 %v6453
    %7534 = vmatpush1.bf16.msra.mxu0 %v6452
    %7535 = vmatprep.subr.bf16.mxu0 %v6445
    %7536 = vmatpush1.bf16.msra.mxu0 %v6444
    %7537 = vmatprep.subr.bf16.mxu0 %v6437
    %7538 = vmatpush1.bf16.msra.mxu0 %v6436
    %7539 = vmatprep.subr.bf16.mxu0 %v6557
    %7540 = vmatpush2.bf16.msra.mxu0 %v6556
    %7541 = vmatprep.subr.bf16.mxu0 %v6549
    %7542 = vmatpush2.bf16.msra.mxu0 %v6548
    %7543 = vmatprep.subr.bf16.mxu0 %v6541
    %7544 = vmatpush2.bf16.msra.mxu0 %v6540
    %7545 = vmatprep.subr.bf16.mxu0 %v6533
    %7546 = vmatpush2.bf16.msra.mxu0 %v6532
    %7547 = vmatprep.subr.bf16.mxu0 %v6525
    %7548 = vmatpush2.bf16.msra.mxu0 %v6524
    %7549 = vmatprep.subr.bf16.mxu0 %v6517
    %7550 = vmatpush2.bf16.msra.mxu0 %v6516
    %7551 = vmatprep.subr.bf16.mxu0 %v6509
    %7552 = vmatpush2.bf16.msra.mxu0 %v6508
    %7553 = vmatprep.subr.bf16.mxu0 %v6501
    %7554 = vmatpush2.bf16.msra.mxu0 %v6500
    %7555 = vmatprep.mubr.bf16.mxu0 %v3957
    %7556 = vmatmul.mubr.bf16.gmra.mxu0 %v3956
    %v7557 = vpop.f32.mrf.mxu0
    %v7558 = vadd.f32 %v7517, %v7557
    %v7559 = vpop.f32.mrf.mxu0
    %v7560 = vadd.f32 %v7519, %v7559
    %v7561 = vpop.f32.mrf.mxu0
    %v7562 = vpop.f32.mrf.mxu0
    %7563 = vdwg.mxu0
    %7564 = vmatprep.subr.bf16.mxu0 %v6111
    %7565 = vmatpush1.bf16.msra.mxu0 %v6110
    %7566 = vmatprep.subr.bf16.mxu0 %v6103
    %7567 = vmatpush1.bf16.msra.mxu0 %v6102
    %7568 = vmatprep.subr.bf16.mxu0 %v6095
    %7569 = vmatpush1.bf16.msra.mxu0 %v6094
    %7570 = vmatprep.subr.bf16.mxu0 %v6087
    %7571 = vmatpush1.bf16.msra.mxu0 %v6086
    %7572 = vmatprep.subr.bf16.mxu0 %v6079
    %7573 = vmatpush1.bf16.msra.mxu0 %v6078
    %7574 = vmatprep.subr.bf16.mxu0 %v6071
    %7575 = vmatpush1.bf16.msra.mxu0 %v6070
    %7576 = vmatprep.subr.bf16.mxu0 %v6063
    %7577 = vmatpush1.bf16.msra.mxu0 %v6062
    %7578 = vmatprep.subr.bf16.mxu0 %v6055
    %7579 = vmatpush1.bf16.msra.mxu0 %v6054
    %7580 = vmatprep.subr.bf16.mxu0 %v6175
    %7581 = vmatpush2.bf16.msra.mxu0 %v6174
    %7582 = vmatprep.subr.bf16.mxu0 %v6167
    %7583 = vmatpush2.bf16.msra.mxu0 %v6166
    %7584 = vmatprep.subr.bf16.mxu0 %v6159
    %7585 = vmatpush2.bf16.msra.mxu0 %v6158
    %7586 = vmatprep.subr.bf16.mxu0 %v6151
    %7587 = vmatpush2.bf16.msra.mxu0 %v6150
    %7588 = vmatprep.subr.bf16.mxu0 %v6143
    %7589 = vmatpush2.bf16.msra.mxu0 %v6142
    %7590 = vmatprep.subr.bf16.mxu0 %v6135
    %7591 = vmatpush2.bf16.msra.mxu0 %v6134
    %7592 = vmatprep.subr.bf16.mxu0 %v6127
    %7593 = vmatpush2.bf16.msra.mxu0 %v6126
    %7594 = vmatprep.subr.bf16.mxu0 %v6119
    %7595 = vmatpush2.bf16.msra.mxu0 %v6118
    %7596 = vmatprep.mubr.bf16.mxu0 %v3951
    %7597 = vmatmul.mubr.bf16.gmra.mxu0 %v3950
    %v7598 = vpop.f32.mrf.mxu0
    %v7599 = vadd.f32 %v4499, %v7598
    %v7600 = vpop.f32.mrf.mxu0
    %v7601 = vadd.f32 %v4503, %v7600
    %v7602 = vpop.f32.mrf.mxu0
    %v7603 = vpop.f32.mrf.mxu0
    %7604 = vdwg.mxu0
    %7605 = vmatprep.subr.bf16.mxu0 %v6239
    %7606 = vmatpush1.bf16.msra.mxu0 %v6238
    %7607 = vmatprep.subr.bf16.mxu0 %v6231
    %7608 = vmatpush1.bf16.msra.mxu0 %v6230
    %7609 = vmatprep.subr.bf16.mxu0 %v6223
    %7610 = vmatpush1.bf16.msra.mxu0 %v6222
    %7611 = vmatprep.subr.bf16.mxu0 %v6215
    %7612 = vmatpush1.bf16.msra.mxu0 %v6214
    %7613 = vmatprep.subr.bf16.mxu0 %v6207
    %7614 = vmatpush1.bf16.msra.mxu0 %v6206
    %7615 = vmatprep.subr.bf16.mxu0 %v6199
    %7616 = vmatpush1.bf16.msra.mxu0 %v6198
    %7617 = vmatprep.subr.bf16.mxu0 %v6191
    %7618 = vmatpush1.bf16.msra.mxu0 %v6190
    %7619 = vmatprep.subr.bf16.mxu0 %v6183
    %7620 = vmatpush1.bf16.msra.mxu0 %v6182
    %7621 = vmatprep.subr.bf16.mxu0 %v6303
    %7622 = vmatpush2.bf16.msra.mxu0 %v6302
    %7623 = vmatprep.subr.bf16.mxu0 %v6295
    %7624 = vmatpush2.bf16.msra.mxu0 %v6294
    %7625 = vmatprep.subr.bf16.mxu0 %v6287
    %7626 = vmatpush2.bf16.msra.mxu0 %v6286
    %7627 = vmatprep.subr.bf16.mxu0 %v6279
    %7628 = vmatpush2.bf16.msra.mxu0 %v6278
    %7629 = vmatprep.subr.bf16.mxu0 %v6271
    %7630 = vmatpush2.bf16.msra.mxu0 %v6270
    %7631 = vmatprep.subr.bf16.mxu0 %v6263
    %7632 = vmatpush2.bf16.msra.mxu0 %v6262
    %7633 = vmatprep.subr.bf16.mxu0 %v6255
    %7634 = vmatpush2.bf16.msra.mxu0 %v6254
    %7635 = vmatprep.subr.bf16.mxu0 %v6247
    %7636 = vmatpush2.bf16.msra.mxu0 %v6246
    %7637 = vmatprep.mubr.bf16.mxu0 %v3953
    %7638 = vmatmul.mubr.bf16.gmra.mxu0 %v3952
    %v7639 = vpop.f32.mrf.mxu0
    %v7640 = vadd.f32 %v7599, %v7639
    %v7641 = vpop.f32.mrf.mxu0
    %v7642 = vadd.f32 %v7601, %v7641
    %v7643 = vpop.f32.mrf.mxu0
    %v7644 = vpop.f32.mrf.mxu0
    %7645 = vdwg.mxu0
    %7646 = vmatprep.subr.bf16.mxu0 %v6367
    %7647 = vmatpush1.bf16.msra.mxu0 %v6366
    %7648 = vmatprep.subr.bf16.mxu0 %v6359
    %7649 = vmatpush1.bf16.msra.mxu0 %v6358
    %7650 = vmatprep.subr.bf16.mxu0 %v6351
    %7651 = vmatpush1.bf16.msra.mxu0 %v6350
    %7652 = vmatprep.subr.bf16.mxu0 %v6343
    %7653 = vmatpush1.bf16.msra.mxu0 %v6342
    %7654 = vmatprep.subr.bf16.mxu0 %v6335
    %7655 = vmatpush1.bf16.msra.mxu0 %v6334
    %7656 = vmatprep.subr.bf16.mxu0 %v6327
    %7657 = vmatpush1.bf16.msra.mxu0 %v6326
    %7658 = vmatprep.subr.bf16.mxu0 %v6319
    %7659 = vmatpush1.bf16.msra.mxu0 %v6318
    %7660 = vmatprep.subr.bf16.mxu0 %v6311
    %7661 = vmatpush1.bf16.msra.mxu0 %v6310
    %7662 = vmatprep.subr.bf16.mxu0 %v6431
    %7663 = vmatpush2.bf16.msra.mxu0 %v6430
    %7664 = vmatprep.subr.bf16.mxu0 %v6423
    %7665 = vmatpush2.bf16.msra.mxu0 %v6422
    %7666 = vmatprep.subr.bf16.mxu0 %v6415
    %7667 = vmatpush2.bf16.msra.mxu0 %v6414
    %7668 = vmatprep.subr.bf16.mxu0 %v6407
    %7669 = vmatpush2.bf16.msra.mxu0 %v6406
    %7670 = vmatprep.subr.bf16.mxu0 %v6399
    %7671 = vmatpush2.bf16.msra.mxu0 %v6398
    %7672 = vmatprep.subr.bf16.mxu0 %v6391
    %7673 = vmatpush2.bf16.msra.mxu0 %v6390
    %7674 = vmatprep.subr.bf16.mxu0 %v6383
    %7675 = vmatpush2.bf16.msra.mxu0 %v6382
    %7676 = vmatprep.subr.bf16.mxu0 %v6375
    %7677 = vmatpush2.bf16.msra.mxu0 %v6374
    %7678 = vmatprep.mubr.bf16.mxu0 %v3955
    %7679 = vmatmul.mubr.bf16.gmra.mxu0 %v3954
    %v7680 = vpop.f32.mrf.mxu0
    %v7681 = vadd.f32 %v7640, %v7680
    %v7682 = vpop.f32.mrf.mxu0
    %v7683 = vadd.f32 %v7642, %v7682
    %v7684 = vpop.f32.mrf.mxu0
    %v7685 = vpop.f32.mrf.mxu0
    %7686 = vdwg.mxu0
    %7687 = vmatprep.subr.bf16.mxu0 %v6495
    %7688 = vmatpush1.bf16.msra.mxu0 %v6494
    %7689 = vmatprep.subr.bf16.mxu0 %v6487
    %7690 = vmatpush1.bf16.msra.mxu0 %v6486
    %7691 = vmatprep.subr.bf16.mxu0 %v6479
    %7692 = vmatpush1.bf16.msra.mxu0 %v6478
    %7693 = vmatprep.subr.bf16.mxu0 %v6471
    %7694 = vmatpush1.bf16.msra.mxu0 %v6470
    %7695 = vmatprep.subr.bf16.mxu0 %v6463
    %7696 = vmatpush1.bf16.msra.mxu0 %v6462
    %7697 = vmatprep.subr.bf16.mxu0 %v6455
    %7698 = vmatpush1.bf16.msra.mxu0 %v6454
    %7699 = vmatprep.subr.bf16.mxu0 %v6447
    %7700 = vmatpush1.bf16.msra.mxu0 %v6446
    %7701 = vmatprep.subr.bf16.mxu0 %v6439
    %7702 = vmatpush1.bf16.msra.mxu0 %v6438
    %7703 = vmatprep.subr.bf16.mxu0 %v6559
    %7704 = vmatpush2.bf16.msra.mxu0 %v6558
    %7705 = vmatprep.subr.bf16.mxu0 %v6551
    %7706 = vmatpush2.bf16.msra.mxu0 %v6550
    %7707 = vmatprep.subr.bf16.mxu0 %v6543
    %7708 = vmatpush2.bf16.msra.mxu0 %v6542
    %7709 = vmatprep.subr.bf16.mxu0 %v6535
    %7710 = vmatpush2.bf16.msra.mxu0 %v6534
    %7711 = vmatprep.subr.bf16.mxu0 %v6527
    %7712 = vmatpush2.bf16.msra.mxu0 %v6526
    %7713 = vmatprep.subr.bf16.mxu0 %v6519
    %7714 = vmatpush2.bf16.msra.mxu0 %v6518
    %7715 = vmatprep.subr.bf16.mxu0 %v6511
    %7716 = vmatpush2.bf16.msra.mxu0 %v6510
    %7717 = vmatprep.subr.bf16.mxu0 %v6503
    %7718 = vmatpush2.bf16.msra.mxu0 %v6502
    %7719 = vmatprep.mubr.bf16.mxu0 %v3957
    %7720 = vmatmul.mubr.bf16.gmra.mxu0 %v3956
    %v7721 = vpop.f32.mrf.mxu0
    %v7722 = vadd.f32 %v7681, %v7721
    %v7723 = vpop.f32.mrf.mxu0
    %v7724 = vadd.f32 %v7683, %v7723
    %v7725 = vpop.f32.mrf.mxu0
    %v7726 = vpop.f32.mrf.mxu0
    %7727 = vdwg.mxu0
    %v7728 = vmax.f32 %v7230, 0.0
    %v7729 = vmax.f32 %v7232, 0.0
    %v7730 = vmax.f32 %v7394, 0.0
    %v7731 = vmax.f32 %v7396, 0.0
    %v7732 = vmax.f32 %v7558, 0.0
    %v7733 = vmax.f32 %v7560, 0.0
    %v7734 = vmax.f32 %v7722, 0.0
    %v7735 = vmax.f32 %v7724, 0.0
    %v7744 = vcombine.low %v7728, %v7729
    %v7745 = vcombine.low %v7730, %v7731
    %v7747 = vunpack.c.l.s4 1983009808
    %v7748 = vunpack.c.0.s8 %v7747
    %v7749 = vlaneseq
    %v7750 = vshrl.u32 %v7749, 7
    %v7751 = vsub.s32 %v7748, %v7750
    %v7752 = vrot.slane %v7744, %v7751
    %v7754 = vunpack.c.l.s4 1983009808
    %v7755 = vunpack.c.0.s8 %v7754
    %v7756 = vlaneseq
    %v7757 = vshrl.u32 %v7756, 7
    %v7758 = vsub.s32 %v7755, %v7757
    %v7759 = vrot.slane %v7745, %v7758
    %v7760 = vcombine.low %v7752, %v7759
    %v7761 = vcombine.low %v7732, %v7733
    %v7762 = vcombine.low %v7734, %v7735
    %v7764 = vunpack.c.l.s4 1983009808
    %v7765 = vunpack.c.0.s8 %v7764
    %v7766 = vlaneseq
    %v7767 = vshrl.u32 %v7766, 7
    %v7768 = vsub.s32 %v7765, %v7767
    %v7769 = vrot.slane %v7761, %v7768
    %v7771 = vunpack.c.l.s4 1983009808
    %v7772 = vunpack.c.0.s8 %v7771
    %v7773 = vlaneseq
    %v7774 = vshrl.u32 %v7773, 7
    %v7775 = vsub.s32 %v7772, %v7774
    %v7776 = vrot.slane %v7762, %v7775
    %v7777 = vcombine.low %v7769, %v7776
    %7780 = vst [vmem:[#allocation15] sm:$0xff] %v7760
    %7781 = vst [vmem:[#allocation15 + $0x8] sm:$0xff] %v7777
    %v7782 = vpack.c.bf16 %v7728, %v7728
    %v7783 = vpack.c.bf16 %v7729, %v7729
    %v7784 = vpack.c.bf16 %v7730, %v7730
    %v7785 = vpack.c.bf16 %v7731, %v7731
    %v7786 = vpack.c.bf16 %v7732, %v7732
    %v7787 = vpack.c.bf16 %v7733, %v7733
    %v7788 = vpack.c.bf16 %v7734, %v7734
    %v7789 = vpack.c.bf16 %v7735, %v7735
    %v7790 = vld [vmem:[#allocation11] sm:$0xf]
    %v7791 = vld [vmem:[#allocation11 + $0x4] sm:$0xf]
    %v7792 = vld [vmem:[#allocation11 + $0x8] sm:$0xf]
    %v7793 = vld [vmem:[#allocation11 + $0xc] sm:$0xf]
    %v7794 = vld [vmem:[#allocation11 + $0x10] sm:$0xf]
    %v7795 = vld [vmem:[#allocation11 + $0x14] sm:$0xf]
    %v7796 = vld [vmem:[#allocation11 + $0x18] sm:$0xf]
    %v7797 = vld [vmem:[#allocation11 + $0x1c] sm:$0xf]
    %v7798 = vld [vmem:[#allocation11 + $0x20] sm:$0xf]
    %v7799 = vld [vmem:[#allocation11 + $0x24] sm:$0xf]
    %v7800 = vld [vmem:[#allocation11 + $0x28] sm:$0xf]
    %v7801 = vld [vmem:[#allocation11 + $0x2c] sm:$0xf]
    %v7802 = vld [vmem:[#allocation11 + $0x30] sm:$0xf]
    %v7803 = vld [vmem:[#allocation11 + $0x34] sm:$0xf]
    %v7804 = vld [vmem:[#allocation11 + $0x38] sm:$0xf]
    %v7805 = vld [vmem:[#allocation11 + $0x3c] sm:$0xf]
    %v7806 = vld [vmem:[#allocation11 + $0x40] sm:$0xf]
    %v7807 = vld [vmem:[#allocation11 + $0x44] sm:$0xf]
    %v7808 = vld [vmem:[#allocation11 + $0x48] sm:$0xf]
    %v7809 = vld [vmem:[#allocation11 + $0x4c] sm:$0xf]
    %v7810 = vld [vmem:[#allocation11 + $0x50] sm:$0xf]
    %v7811 = vld [vmem:[#allocation11 + $0x54] sm:$0xf]
    %v7812 = vld [vmem:[#allocation11 + $0x58] sm:$0xf]
    %v7813 = vld [vmem:[#allocation11 + $0x5c] sm:$0xf]
    %v7814 = vld [vmem:[#allocation11 + $0x60] sm:$0xf]
    %v7815 = vld [vmem:[#allocation11 + $0x64] sm:$0xf]
    %v7816 = vld [vmem:[#allocation11 + $0x68] sm:$0xf]
    %v7817 = vld [vmem:[#allocation11 + $0x6c] sm:$0xf]
    %v7818 = vld [vmem:[#allocation11 + $0x70] sm:$0xf]
    %v7819 = vld [vmem:[#allocation11 + $0x74] sm:$0xf]
    %v7820 = vld [vmem:[#allocation11 + $0x78] sm:$0xf]
    %v7821 = vld [vmem:[#allocation11 + $0x7c] sm:$0xf]
    %v7822 = vld [vmem:[#allocation11 + $0x80] sm:$0xf]
    %v7823 = vld [vmem:[#allocation11 + $0x84] sm:$0xf]
    %v7824 = vld [vmem:[#allocation11 + $0x88] sm:$0xf]
    %v7825 = vld [vmem:[#allocation11 + $0x8c] sm:$0xf]
    %v7826 = vld [vmem:[#allocation11 + $0x90] sm:$0xf]
    %v7827 = vld [vmem:[#allocation11 + $0x94] sm:$0xf]
    %v7828 = vld [vmem:[#allocation11 + $0x98] sm:$0xf]
    %v7829 = vld [vmem:[#allocation11 + $0x9c] sm:$0xf]
    %v7830 = vld [vmem:[#allocation11 + $0xa0] sm:$0xf]
    %v7831 = vld [vmem:[#allocation11 + $0xa4] sm:$0xf]
    %v7832 = vld [vmem:[#allocation11 + $0xa8] sm:$0xf]
    %v7833 = vld [vmem:[#allocation11 + $0xac] sm:$0xf]
    %v7834 = vld [vmem:[#allocation11 + $0xb0] sm:$0xf]
    %v7835 = vld [vmem:[#allocation11 + $0xb4] sm:$0xf]
    %v7836 = vld [vmem:[#allocation11 + $0xb8] sm:$0xf]
    %v7837 = vld [vmem:[#allocation11 + $0xbc] sm:$0xf]
    %v7838 = vld [vmem:[#allocation11 + $0xc0] sm:$0xf]
    %v7839 = vld [vmem:[#allocation11 + $0xc4] sm:$0xf]
    %v7840 = vld [vmem:[#allocation11 + $0xc8] sm:$0xf]
    %v7841 = vld [vmem:[#allocation11 + $0xcc] sm:$0xf]
    %v7842 = vld [vmem:[#allocation11 + $0xd0] sm:$0xf]
    %v7843 = vld [vmem:[#allocation11 + $0xd4] sm:$0xf]
    %v7844 = vld [vmem:[#allocation11 + $0xd8] sm:$0xf]
    %v7845 = vld [vmem:[#allocation11 + $0xdc] sm:$0xf]
    %v7846 = vld [vmem:[#allocation11 + $0xe0] sm:$0xf]
    %v7847 = vld [vmem:[#allocation11 + $0xe4] sm:$0xf]
    %v7848 = vld [vmem:[#allocation11 + $0xe8] sm:$0xf]
    %v7849 = vld [vmem:[#allocation11 + $0xec] sm:$0xf]
    %v7850 = vld [vmem:[#allocation11 + $0xf0] sm:$0xf]
    %v7851 = vld [vmem:[#allocation11 + $0xf4] sm:$0xf]
    %v7852 = vld [vmem:[#allocation11 + $0xf8] sm:$0xf]
    %v7853 = vld [vmem:[#allocation11 + $0xfc] sm:$0xf]
    %v7854 = vld [vmem:[#allocation11 + $0x100] sm:$0xf]
    %v7855 = vld [vmem:[#allocation11 + $0x104] sm:$0xf]
    %v7856 = vld [vmem:[#allocation11 + $0x108] sm:$0xf]
    %v7857 = vld [vmem:[#allocation11 + $0x10c] sm:$0xf]
    %v7858 = vld [vmem:[#allocation11 + $0x110] sm:$0xf]
    %v7859 = vld [vmem:[#allocation11 + $0x114] sm:$0xf]
    %v7860 = vld [vmem:[#allocation11 + $0x118] sm:$0xf]
    %v7861 = vld [vmem:[#allocation11 + $0x11c] sm:$0xf]
    %v7862 = vld [vmem:[#allocation11 + $0x120] sm:$0xf]
    %v7863 = vld [vmem:[#allocation11 + $0x124] sm:$0xf]
    %v7864 = vld [vmem:[#allocation11 + $0x128] sm:$0xf]
    %v7865 = vld [vmem:[#allocation11 + $0x12c] sm:$0xf]
    %v7866 = vld [vmem:[#allocation11 + $0x130] sm:$0xf]
    %v7867 = vld [vmem:[#allocation11 + $0x134] sm:$0xf]
    %v7868 = vld [vmem:[#allocation11 + $0x138] sm:$0xf]
    %v7869 = vld [vmem:[#allocation11 + $0x13c] sm:$0xf]
    %v7870 = vld [vmem:[#allocation11 + $0x140] sm:$0xf]
    %v7871 = vld [vmem:[#allocation11 + $0x144] sm:$0xf]
    %v7872 = vld [vmem:[#allocation11 + $0x148] sm:$0xf]
    %v7873 = vld [vmem:[#allocation11 + $0x14c] sm:$0xf]
    %v7874 = vld [vmem:[#allocation11 + $0x150] sm:$0xf]
    %v7875 = vld [vmem:[#allocation11 + $0x154] sm:$0xf]
    %v7876 = vld [vmem:[#allocation11 + $0x158] sm:$0xf]
    %v7877 = vld [vmem:[#allocation11 + $0x15c] sm:$0xf]
    %v7878 = vld [vmem:[#allocation11 + $0x160] sm:$0xf]
    %v7879 = vld [vmem:[#allocation11 + $0x164] sm:$0xf]
    %v7880 = vld [vmem:[#allocation11 + $0x168] sm:$0xf]
    %v7881 = vld [vmem:[#allocation11 + $0x16c] sm:$0xf]
    %v7882 = vld [vmem:[#allocation11 + $0x170] sm:$0xf]
    %v7883 = vld [vmem:[#allocation11 + $0x174] sm:$0xf]
    %v7884 = vld [vmem:[#allocation11 + $0x178] sm:$0xf]
    %v7885 = vld [vmem:[#allocation11 + $0x17c] sm:$0xf]
    %v7886 = vld [vmem:[#allocation11 + $0x180] sm:$0xf]
    %v7887 = vld [vmem:[#allocation11 + $0x184] sm:$0xf]
    %v7888 = vld [vmem:[#allocation11 + $0x188] sm:$0xf]
    %v7889 = vld [vmem:[#allocation11 + $0x18c] sm:$0xf]
    %v7890 = vld [vmem:[#allocation11 + $0x190] sm:$0xf]
    %v7891 = vld [vmem:[#allocation11 + $0x194] sm:$0xf]
    %v7892 = vld [vmem:[#allocation11 + $0x198] sm:$0xf]
    %v7893 = vld [vmem:[#allocation11 + $0x19c] sm:$0xf]
    %v7894 = vld [vmem:[#allocation11 + $0x1a0] sm:$0xf]
    %v7895 = vld [vmem:[#allocation11 + $0x1a4] sm:$0xf]
    %v7896 = vld [vmem:[#allocation11 + $0x1a8] sm:$0xf]
    %v7897 = vld [vmem:[#allocation11 + $0x1ac] sm:$0xf]
    %v7898 = vld [vmem:[#allocation11 + $0x1b0] sm:$0xf]
    %v7899 = vld [vmem:[#allocation11 + $0x1b4] sm:$0xf]
    %v7900 = vld [vmem:[#allocation11 + $0x1b8] sm:$0xf]
    %v7901 = vld [vmem:[#allocation11 + $0x1bc] sm:$0xf]
    %v7902 = vld [vmem:[#allocation11 + $0x1c0] sm:$0xf]
    %v7903 = vld [vmem:[#allocation11 + $0x1c4] sm:$0xf]
    %v7904 = vld [vmem:[#allocation11 + $0x1c8] sm:$0xf]
    %v7905 = vld [vmem:[#allocation11 + $0x1cc] sm:$0xf]
    %v7906 = vld [vmem:[#allocation11 + $0x1d0] sm:$0xf]
    %v7907 = vld [vmem:[#allocation11 + $0x1d4] sm:$0xf]
    %v7908 = vld [vmem:[#allocation11 + $0x1d8] sm:$0xf]
    %v7909 = vld [vmem:[#allocation11 + $0x1dc] sm:$0xf]
    %v7910 = vld [vmem:[#allocation11 + $0x1e0] sm:$0xf]
    %v7911 = vld [vmem:[#allocation11 + $0x1e4] sm:$0xf]
    %v7912 = vld [vmem:[#allocation11 + $0x1e8] sm:$0xf]
    %v7913 = vld [vmem:[#allocation11 + $0x1ec] sm:$0xf]
    %v7914 = vld [vmem:[#allocation11 + $0x1f0] sm:$0xf]
    %v7915 = vld [vmem:[#allocation11 + $0x1f4] sm:$0xf]
    %v7916 = vld [vmem:[#allocation11 + $0x1f8] sm:$0xf]
    %v7917 = vld [vmem:[#allocation11 + $0x1fc] sm:$0xf]
    %v7918 = vld [vmem:[#allocation13] sm:$0x1]
    %v7920 = vlaneseq
    %v7921 = vshrl.u32 %v7920, 7
    %v7922 = vsub.s32 0, %v7921
    %v7923 = vrot.slane %v7918, %v7922
    %v8053 = vunpack.c.l.b16 %v7790
    %v8054 = vunpack.c.l.b16 %v7791
    %v8055 = vunpack.c.l.b16 %v7792
    %v8056 = vunpack.c.l.b16 %v7793
    %v8057 = vunpack.c.l.b16 %v7794
    %v8058 = vunpack.c.l.b16 %v7795
    %v8059 = vunpack.c.l.b16 %v7796
    %v8060 = vunpack.c.l.b16 %v7797
    %v8061 = vunpack.c.l.b16 %v7798
    %v8062 = vunpack.c.l.b16 %v7799
    %v8063 = vunpack.c.l.b16 %v7800
    %v8064 = vunpack.c.l.b16 %v7801
    %v8065 = vunpack.c.l.b16 %v7802
    %v8066 = vunpack.c.l.b16 %v7803
    %v8067 = vunpack.c.l.b16 %v7804
    %v8068 = vunpack.c.l.b16 %v7805
    %v8069 = vunpack.c.l.b16 %v7806
    %v8070 = vunpack.c.l.b16 %v7807
    %v8071 = vunpack.c.l.b16 %v7808
    %v8072 = vunpack.c.l.b16 %v7809
    %v8073 = vunpack.c.l.b16 %v7810
    %v8074 = vunpack.c.l.b16 %v7811
    %v8075 = vunpack.c.l.b16 %v7812
    %v8076 = vunpack.c.l.b16 %v7813
    %v8077 = vunpack.c.l.b16 %v7814
    %v8078 = vunpack.c.l.b16 %v7815
    %v8079 = vunpack.c.l.b16 %v7816
    %v8080 = vunpack.c.l.b16 %v7817
    %v8081 = vunpack.c.l.b16 %v7818
    %v8082 = vunpack.c.l.b16 %v7819
    %v8083 = vunpack.c.l.b16 %v7820
    %v8084 = vunpack.c.l.b16 %v7821
    %v8085 = vunpack.c.l.b16 %v7822
    %v8086 = vunpack.c.l.b16 %v7823
    %v8087 = vunpack.c.l.b16 %v7824
    %v8088 = vunpack.c.l.b16 %v7825
    %v8089 = vunpack.c.l.b16 %v7826
    %v8090 = vunpack.c.l.b16 %v7827
    %v8091 = vunpack.c.l.b16 %v7828
    %v8092 = vunpack.c.l.b16 %v7829
    %v8093 = vunpack.c.l.b16 %v7830
    %v8094 = vunpack.c.l.b16 %v7831
    %v8095 = vunpack.c.l.b16 %v7832
    %v8096 = vunpack.c.l.b16 %v7833
    %v8097 = vunpack.c.l.b16 %v7834
    %v8098 = vunpack.c.l.b16 %v7835
    %v8099 = vunpack.c.l.b16 %v7836
    %v8100 = vunpack.c.l.b16 %v7837
    %v8101 = vunpack.c.l.b16 %v7838
    %v8102 = vunpack.c.l.b16 %v7839
    %v8103 = vunpack.c.l.b16 %v7840
    %v8104 = vunpack.c.l.b16 %v7841
    %v8105 = vunpack.c.l.b16 %v7842
    %v8106 = vunpack.c.l.b16 %v7843
    %v8107 = vunpack.c.l.b16 %v7844
    %v8108 = vunpack.c.l.b16 %v7845
    %v8109 = vunpack.c.l.b16 %v7846
    %v8110 = vunpack.c.l.b16 %v7847
    %v8111 = vunpack.c.l.b16 %v7848
    %v8112 = vunpack.c.l.b16 %v7849
    %v8113 = vunpack.c.l.b16 %v7850
    %v8114 = vunpack.c.l.b16 %v7851
    %v8115 = vunpack.c.l.b16 %v7852
    %v8116 = vunpack.c.l.b16 %v7853
    %v8117 = vunpack.c.l.b16 %v7854
    %v8118 = vunpack.c.l.b16 %v7855
    %v8119 = vunpack.c.l.b16 %v7856
    %v8120 = vunpack.c.l.b16 %v7857
    %v8121 = vunpack.c.l.b16 %v7858
    %v8122 = vunpack.c.l.b16 %v7859
    %v8123 = vunpack.c.l.b16 %v7860
    %v8124 = vunpack.c.l.b16 %v7861
    %v8125 = vunpack.c.l.b16 %v7862
    %v8126 = vunpack.c.l.b16 %v7863
    %v8127 = vunpack.c.l.b16 %v7864
    %v8128 = vunpack.c.l.b16 %v7865
    %v8129 = vunpack.c.l.b16 %v7866
    %v8130 = vunpack.c.l.b16 %v7867
    %v8131 = vunpack.c.l.b16 %v7868
    %v8132 = vunpack.c.l.b16 %v7869
    %v8133 = vunpack.c.l.b16 %v7870
    %v8134 = vunpack.c.l.b16 %v7871
    %v8135 = vunpack.c.l.b16 %v7872
    %v8136 = vunpack.c.l.b16 %v7873
    %v8137 = vunpack.c.l.b16 %v7874
    %v8138 = vunpack.c.l.b16 %v7875
    %v8139 = vunpack.c.l.b16 %v7876
    %v8140 = vunpack.c.l.b16 %v7877
    %v8141 = vunpack.c.l.b16 %v7878
    %v8142 = vunpack.c.l.b16 %v7879
    %v8143 = vunpack.c.l.b16 %v7880
    %v8144 = vunpack.c.l.b16 %v7881
    %v8145 = vunpack.c.l.b16 %v7882
    %v8146 = vunpack.c.l.b16 %v7883
    %v8147 = vunpack.c.l.b16 %v7884
    %v8148 = vunpack.c.l.b16 %v7885
    %v8149 = vunpack.c.l.b16 %v7886
    %v8150 = vunpack.c.l.b16 %v7887
    %v8151 = vunpack.c.l.b16 %v7888
    %v8152 = vunpack.c.l.b16 %v7889
    %v8153 = vunpack.c.l.b16 %v7890
    %v8154 = vunpack.c.l.b16 %v7891
    %v8155 = vunpack.c.l.b16 %v7892
    %v8156 = vunpack.c.l.b16 %v7893
    %v8157 = vunpack.c.l.b16 %v7894
    %v8158 = vunpack.c.l.b16 %v7895
    %v8159 = vunpack.c.l.b16 %v7896
    %v8160 = vunpack.c.l.b16 %v7897
    %v8161 = vunpack.c.l.b16 %v7898
    %v8162 = vunpack.c.l.b16 %v7899
    %v8163 = vunpack.c.l.b16 %v7900
    %v8164 = vunpack.c.l.b16 %v7901
    %v8165 = vunpack.c.l.b16 %v7902
    %v8166 = vunpack.c.l.b16 %v7903
    %v8167 = vunpack.c.l.b16 %v7904
    %v8168 = vunpack.c.l.b16 %v7905
    %v8169 = vunpack.c.l.b16 %v7906
    %v8170 = vunpack.c.l.b16 %v7907
    %v8171 = vunpack.c.l.b16 %v7908
    %v8172 = vunpack.c.l.b16 %v7909
    %v8173 = vunpack.c.l.b16 %v7910
    %v8174 = vunpack.c.l.b16 %v7911
    %v8175 = vunpack.c.l.b16 %v7912
    %v8176 = vunpack.c.l.b16 %v7913
    %v8177 = vunpack.c.l.b16 %v7914
    %v8178 = vunpack.c.l.b16 %v7915
    %v8179 = vunpack.c.l.b16 %v7916
    %v8180 = vunpack.c.l.b16 %v7917
    %v8181 = vpack.c.b16 %v8054, %v8053
    %v8182 = vpack.c.b16 %v8056, %v8055
    %v8183 = vpack.c.b16 %v8058, %v8057
    %v8184 = vpack.c.b16 %v8060, %v8059
    %v8185 = vpack.c.b16 %v8062, %v8061
    %v8186 = vpack.c.b16 %v8064, %v8063
    %v8187 = vpack.c.b16 %v8066, %v8065
    %v8188 = vpack.c.b16 %v8068, %v8067
    %v8189 = vpack.c.b16 %v8070, %v8069
    %v8190 = vpack.c.b16 %v8072, %v8071
    %v8191 = vpack.c.b16 %v8074, %v8073
    %v8192 = vpack.c.b16 %v8076, %v8075
    %v8193 = vpack.c.b16 %v8078, %v8077
    %v8194 = vpack.c.b16 %v8080, %v8079
    %v8195 = vpack.c.b16 %v8082, %v8081
    %v8196 = vpack.c.b16 %v8084, %v8083
    %v8197 = vpack.c.b16 %v8086, %v8085
    %v8198 = vpack.c.b16 %v8088, %v8087
    %v8199 = vpack.c.b16 %v8090, %v8089
    %v8200 = vpack.c.b16 %v8092, %v8091
    %v8201 = vpack.c.b16 %v8094, %v8093
    %v8202 = vpack.c.b16 %v8096, %v8095
    %v8203 = vpack.c.b16 %v8098, %v8097
    %v8204 = vpack.c.b16 %v8100, %v8099
    %v8205 = vpack.c.b16 %v8102, %v8101
    %v8206 = vpack.c.b16 %v8104, %v8103
    %v8207 = vpack.c.b16 %v8106, %v8105
    %v8208 = vpack.c.b16 %v8108, %v8107
    %v8209 = vpack.c.b16 %v8110, %v8109
    %v8210 = vpack.c.b16 %v8112, %v8111
    %v8211 = vpack.c.b16 %v8114, %v8113
    %v8212 = vpack.c.b16 %v8116, %v8115
    %v8213 = vpack.c.b16 %v8118, %v8117
    %v8214 = vpack.c.b16 %v8120, %v8119
    %v8215 = vpack.c.b16 %v8122, %v8121
    %v8216 = vpack.c.b16 %v8124, %v8123
    %v8217 = vpack.c.b16 %v8126, %v8125
    %v8218 = vpack.c.b16 %v8128, %v8127
    %v8219 = vpack.c.b16 %v8130, %v8129
    %v8220 = vpack.c.b16 %v8132, %v8131
    %v8221 = vpack.c.b16 %v8134, %v8133
    %v8222 = vpack.c.b16 %v8136, %v8135
    %v8223 = vpack.c.b16 %v8138, %v8137
    %v8224 = vpack.c.b16 %v8140, %v8139
    %v8225 = vpack.c.b16 %v8142, %v8141
    %v8226 = vpack.c.b16 %v8144, %v8143
    %v8227 = vpack.c.b16 %v8146, %v8145
    %v8228 = vpack.c.b16 %v8148, %v8147
    %v8229 = vpack.c.b16 %v8150, %v8149
    %v8230 = vpack.c.b16 %v8152, %v8151
    %v8231 = vpack.c.b16 %v8154, %v8153
    %v8232 = vpack.c.b16 %v8156, %v8155
    %v8233 = vpack.c.b16 %v8158, %v8157
    %v8234 = vpack.c.b16 %v8160, %v8159
    %v8235 = vpack.c.b16 %v8162, %v8161
    %v8236 = vpack.c.b16 %v8164, %v8163
    %v8237 = vpack.c.b16 %v8166, %v8165
    %v8238 = vpack.c.b16 %v8168, %v8167
    %v8239 = vpack.c.b16 %v8170, %v8169
    %v8240 = vpack.c.b16 %v8172, %v8171
    %v8241 = vpack.c.b16 %v8174, %v8173
    %v8242 = vpack.c.b16 %v8176, %v8175
    %v8243 = vpack.c.b16 %v8178, %v8177
    %v8244 = vpack.c.b16 %v8180, %v8179
    %8309 = vmatprep.subr.bf16.mxu0 0
    %8310 = vmatpush1.bf16.msra.mxu0 %v8188
    %8311 = vmatprep.subr.bf16.mxu0 0
    %8312 = vmatpush1.bf16.msra.mxu0 %v8187
    %8313 = vmatprep.subr.bf16.mxu0 0
    %8314 = vmatpush1.bf16.msra.mxu0 %v8186
    %8315 = vmatprep.subr.bf16.mxu0 0
    %8316 = vmatpush1.bf16.msra.mxu0 %v8185
    %8317 = vmatprep.subr.bf16.mxu0 0
    %8318 = vmatpush1.bf16.msra.mxu0 %v8184
    %8319 = vmatprep.subr.bf16.mxu0 0
    %8320 = vmatpush1.bf16.msra.mxu0 %v8183
    %8321 = vmatprep.subr.bf16.mxu0 0
    %8322 = vmatpush1.bf16.msra.mxu0 %v8182
    %8323 = vmatprep.subr.bf16.mxu0 0
    %8324 = vmatpush1.bf16.msra.mxu0 %v8181
    %8325 = vmatprep.subr.bf16.mxu0 0
    %8326 = vmatpush2.bf16.msra.mxu0 %v8196
    %8327 = vmatprep.subr.bf16.mxu0 0
    %8328 = vmatpush2.bf16.msra.mxu0 %v8195
    %8329 = vmatprep.subr.bf16.mxu0 0
    %8330 = vmatpush2.bf16.msra.mxu0 %v8194
    %8331 = vmatprep.subr.bf16.mxu0 0
    %8332 = vmatpush2.bf16.msra.mxu0 %v8193
    %8333 = vmatprep.subr.bf16.mxu0 0
    %8334 = vmatpush2.bf16.msra.mxu0 %v8192
    %8335 = vmatprep.subr.bf16.mxu0 0
    %8336 = vmatpush2.bf16.msra.mxu0 %v8191
    %8337 = vmatprep.subr.bf16.mxu0 0
    %8338 = vmatpush2.bf16.msra.mxu0 %v8190
    %8339 = vmatprep.subr.bf16.mxu0 0
    %8340 = vmatpush2.bf16.msra.mxu0 %v8189
    %8341 = vmatprep.mubr.bf16.mxu0 %v7783
    %8342 = vmatmul.mubr.bf16.gmra.mxu0 %v7782
    %v8343 = vpop.f32.mrf.mxu0
    %v8344 = vadd.f32 %v7923, %v8343
    %v8345 = vpop.f32.mrf.mxu0
    %v8346 = vpop.f32.mrf.mxu0
    %v8347 = vpop.f32.mrf.mxu0
    %8348 = vdwg.mxu0
    %8349 = vmatprep.subr.bf16.mxu0 0
    %8350 = vmatpush1.bf16.msra.mxu0 %v8204
    %8351 = vmatprep.subr.bf16.mxu0 0
    %8352 = vmatpush1.bf16.msra.mxu0 %v8203
    %8353 = vmatprep.subr.bf16.mxu0 0
    %8354 = vmatpush1.bf16.msra.mxu0 %v8202
    %8355 = vmatprep.subr.bf16.mxu0 0
    %8356 = vmatpush1.bf16.msra.mxu0 %v8201
    %8357 = vmatprep.subr.bf16.mxu0 0
    %8358 = vmatpush1.bf16.msra.mxu0 %v8200
    %8359 = vmatprep.subr.bf16.mxu0 0
    %8360 = vmatpush1.bf16.msra.mxu0 %v8199
    %8361 = vmatprep.subr.bf16.mxu0 0
    %8362 = vmatpush1.bf16.msra.mxu0 %v8198
    %8363 = vmatprep.subr.bf16.mxu0 0
    %8364 = vmatpush1.bf16.msra.mxu0 %v8197
    %8365 = vmatprep.subr.bf16.mxu0 0
    %8366 = vmatpush2.bf16.msra.mxu0 %v8212
    %8367 = vmatprep.subr.bf16.mxu0 0
    %8368 = vmatpush2.bf16.msra.mxu0 %v8211
    %8369 = vmatprep.subr.bf16.mxu0 0
    %8370 = vmatpush2.bf16.msra.mxu0 %v8210
    %8371 = vmatprep.subr.bf16.mxu0 0
    %8372 = vmatpush2.bf16.msra.mxu0 %v8209
    %8373 = vmatprep.subr.bf16.mxu0 0
    %8374 = vmatpush2.bf16.msra.mxu0 %v8208
    %8375 = vmatprep.subr.bf16.mxu0 0
    %8376 = vmatpush2.bf16.msra.mxu0 %v8207
    %8377 = vmatprep.subr.bf16.mxu0 0
    %8378 = vmatpush2.bf16.msra.mxu0 %v8206
    %8379 = vmatprep.subr.bf16.mxu0 0
    %8380 = vmatpush2.bf16.msra.mxu0 %v8205
    %8381 = vmatprep.mubr.bf16.mxu0 %v7785
    %8382 = vmatmul.mubr.bf16.gmra.mxu0 %v7784
    %v8383 = vpop.f32.mrf.mxu0
    %v8384 = vadd.f32 %v8344, %v8383
    %v8385 = vpop.f32.mrf.mxu0
    %v8386 = vpop.f32.mrf.mxu0
    %v8387 = vpop.f32.mrf.mxu0
    %8388 = vdwg.mxu0
    %8389 = vmatprep.subr.bf16.mxu0 0
    %8390 = vmatpush1.bf16.msra.mxu0 %v8220
    %8391 = vmatprep.subr.bf16.mxu0 0
    %8392 = vmatpush1.bf16.msra.mxu0 %v8219
    %8393 = vmatprep.subr.bf16.mxu0 0
    %8394 = vmatpush1.bf16.msra.mxu0 %v8218
    %8395 = vmatprep.subr.bf16.mxu0 0
    %8396 = vmatpush1.bf16.msra.mxu0 %v8217
    %8397 = vmatprep.subr.bf16.mxu0 0
    %8398 = vmatpush1.bf16.msra.mxu0 %v8216
    %8399 = vmatprep.subr.bf16.mxu0 0
    %8400 = vmatpush1.bf16.msra.mxu0 %v8215
    %8401 = vmatprep.subr.bf16.mxu0 0
    %8402 = vmatpush1.bf16.msra.mxu0 %v8214
    %8403 = vmatprep.subr.bf16.mxu0 0
    %8404 = vmatpush1.bf16.msra.mxu0 %v8213
    %8405 = vmatprep.subr.bf16.mxu0 0
    %8406 = vmatpush2.bf16.msra.mxu0 %v8228
    %8407 = vmatprep.subr.bf16.mxu0 0
    %8408 = vmatpush2.bf16.msra.mxu0 %v8227
    %8409 = vmatprep.subr.bf16.mxu0 0
    %8410 = vmatpush2.bf16.msra.mxu0 %v8226
    %8411 = vmatprep.subr.bf16.mxu0 0
    %8412 = vmatpush2.bf16.msra.mxu0 %v8225
    %8413 = vmatprep.subr.bf16.mxu0 0
    %8414 = vmatpush2.bf16.msra.mxu0 %v8224
    %8415 = vmatprep.subr.bf16.mxu0 0
    %8416 = vmatpush2.bf16.msra.mxu0 %v8223
    %8417 = vmatprep.subr.bf16.mxu0 0
    %8418 = vmatpush2.bf16.msra.mxu0 %v8222
    %8419 = vmatprep.subr.bf16.mxu0 0
    %8420 = vmatpush2.bf16.msra.mxu0 %v8221
    %8421 = vmatprep.mubr.bf16.mxu0 %v7787
    %8422 = vmatmul.mubr.bf16.gmra.mxu0 %v7786
    %v8423 = vpop.f32.mrf.mxu0
    %v8424 = vadd.f32 %v8384, %v8423
    %v8425 = vpop.f32.mrf.mxu0
    %v8426 = vpop.f32.mrf.mxu0
    %v8427 = vpop.f32.mrf.mxu0
    %8428 = vdwg.mxu0
    %8429 = vmatprep.subr.bf16.mxu0 0
    %8430 = vmatpush1.bf16.msra.mxu0 %v8236
    %8431 = vmatprep.subr.bf16.mxu0 0
    %8432 = vmatpush1.bf16.msra.mxu0 %v8235
    %8433 = vmatprep.subr.bf16.mxu0 0
    %8434 = vmatpush1.bf16.msra.mxu0 %v8234
    %8435 = vmatprep.subr.bf16.mxu0 0
    %8436 = vmatpush1.bf16.msra.mxu0 %v8233
    %8437 = vmatprep.subr.bf16.mxu0 0
    %8438 = vmatpush1.bf16.msra.mxu0 %v8232
    %8439 = vmatprep.subr.bf16.mxu0 0
    %8440 = vmatpush1.bf16.msra.mxu0 %v8231
    %8441 = vmatprep.subr.bf16.mxu0 0
    %8442 = vmatpush1.bf16.msra.mxu0 %v8230
    %8443 = vmatprep.subr.bf16.mxu0 0
    %8444 = vmatpush1.bf16.msra.mxu0 %v8229
    %8445 = vmatprep.subr.bf16.mxu0 0
    %8446 = vmatpush2.bf16.msra.mxu0 %v8244
    %8447 = vmatprep.subr.bf16.mxu0 0
    %8448 = vmatpush2.bf16.msra.mxu0 %v8243
    %8449 = vmatprep.subr.bf16.mxu0 0
    %8450 = vmatpush2.bf16.msra.mxu0 %v8242
    %8451 = vmatprep.subr.bf16.mxu0 0
    %8452 = vmatpush2.bf16.msra.mxu0 %v8241
    %8453 = vmatprep.subr.bf16.mxu0 0
    %8454 = vmatpush2.bf16.msra.mxu0 %v8240
    %8455 = vmatprep.subr.bf16.mxu0 0
    %8456 = vmatpush2.bf16.msra.mxu0 %v8239
    %8457 = vmatprep.subr.bf16.mxu0 0
    %8458 = vmatpush2.bf16.msra.mxu0 %v8238
    %8459 = vmatprep.subr.bf16.mxu0 0
    %8460 = vmatpush2.bf16.msra.mxu0 %v8237
    %8461 = vmatprep.mubr.bf16.mxu0 %v7789
    %8462 = vmatmul.mubr.bf16.gmra.mxu0 %v7788
    %v8463 = vpop.f32.mrf.mxu0
    %v8464 = vadd.f32 %v8424, %v8463
    %v8465 = vpop.f32.mrf.mxu0
    %v8466 = vpop.f32.mrf.mxu0
    %v8467 = vpop.f32.mrf.mxu0
    %8468 = vdwg.mxu0
    %8469 = vst [vmem:[#allocation14] sm:$0x3] %v8464
    // Predicated region
    $region58: #{tpu_custom_call.1} parent=1 // pred_check
      _
    $region59: #{tpu_custom_call.1} parent=1 // pred_check_branch
      %8471 = sbr.rel (0) target = $region61
    $region60: #{tpu_custom_call.1} parent=1 // pred_region
      %s8473 = ssub.s32 32, 32
      %8474 = vsyncadd [#allocation4], %s8473
      %s8476 = sshll.u32 [#allocation14], 4
      %s8477 = int_to_ptr.vmem [resolvable:$true] %s8476
      %8479 = dma.vmem_to_hbm [thread:$0]  %s8477, 32, %s7, [#allocation4]
    $region61: #{tpu_custom_call.1} parent=1 // pred_fallthru
      _
    // Predicated region
    $region62: #{tpu_custom_call.1} parent=1 // pred_check
      _
    $region63: #{tpu_custom_call.1} parent=1 // pred_check_branch
      %8481 = sbr.rel (0) target = $region65
    $region64: #{tpu_custom_call.1} parent=1 // pred_region
      %s8483 = ssub.s32 256, 256
      %8484 = vsyncadd [#allocation16], %s8483
      %s8486 = sshll.u32 [#allocation15], 4
      %s8487 = int_to_ptr.vmem [resolvable:$true] %s8486
      %8489 = dma.vmem_to_hbm [thread:$0]  %s8487, 256, %s8, [#allocation16]
    $region65: #{tpu_custom_call.1} parent=1 // pred_fallthru
      _
    // Predicated region
    $region66: #{tpu_custom_call.1} parent=1 // pred_check
      _
    $region67: #{tpu_custom_call.1} parent=1 // pred_check_branch
      %8491 = sbr.rel (0) target = $region69
    $region68: #{tpu_custom_call.1} parent=1 // pred_region
      %8492 = dma.done [#allocation4], 32
    $region69: #{tpu_custom_call.1} parent=1 // pred_fallthru
      _
    // Predicated region
    $region70: #{tpu_custom_call.1} parent=1 // pred_check
      _
    $region71: #{tpu_custom_call.1} parent=1 // pred_check_branch
      %8494 = sbr.rel (0) target = $region73
    $region72: #{tpu_custom_call.1} parent=1 // pred_region
      %8495 = dma.done [#allocation16], 256
    $region73: #{tpu_custom_call.1} parent=1 // pred_fallthru
      _
    %8496 = vsyncpa [#allocation3], 1
    %8497 = vsyncpa [#allocation6], 1
    %8498 = vsyncpa [#allocation9], 1
    %8499 = vsyncpa [#allocation12], 1
    %8500 = vsyncpa [#allocation4], 1
    %8501 = vsyncpa [#allocation16], 1

</llo_original>
